<compile_context>
chip_gen: v7x
topology: tpu7x:2x2x1
jax: 0.10.0
libtpu: 0.0.40
codegen_flags: <defaults>
</compile_context>

<pallas_src>
import functools

import jax
import jax.numpy as jnp
from jax.experimental import pallas as pl
from jax.experimental.pallas import tpu as pltpu

_LN_EPS = 1e-5


# ------------------------------- small helpers -------------------------------

def _const_spec(shape):
    """Whole-array block whose index never changes -> VMEM-resident across the grid."""
    shape = tuple(shape)
    return pl.BlockSpec(shape, lambda *_: (0,) * len(shape))


def _vmem_limit_bytes():
    """Generation-aware VMEM budget: ~3/4 of physical, capped at 100 MiB.
    v5e/v6e (128 MiB physical) -> 96 MiB; v7x (64 MiB) -> 48 MiB."""
    try:
        cap = int(pltpu.get_tpu_info().vmem_capacity_bytes)
    except Exception:   # conservative fallback if the query is unavailable
        cap = 64 * 1024 * 1024
    return min(cap * 3 // 4, 100 * 1024 * 1024)


def _compiler_params():
    return pltpu.CompilerParams(dimension_semantics=("parallel",),
                                vmem_limit_bytes=_vmem_limit_bytes())


def _pick_batch_block(batch, rows_per_item, target_rows=256):
    """Batch-block size: largest divisor of `batch` whose block keeps <= target MXU
    rows per grid step; prefer leaving >= 2 'parallel' grid steps (v7x has two
    TensorCores) when the smaller block still fills >= 128 MXU rows."""
    divisors = [c for c in range(1, batch + 1) if batch % c == 0]
    fitting = [c for c in divisors if c * rows_per_item <= target_rows] or [1]
    best = max(fitting)
    if best == batch and batch > 1:
        smaller = [c for c in fitting if c < batch and c * rows_per_item >= 128]
        if smaller:
            best = max(smaller)
    return best


# --------------------------- in-kernel math helpers ---------------------------

def _ln(x, w, b):
    mean = jnp.mean(x, axis=-1, keepdims=True)
    var = jnp.mean((x - mean) ** 2, axis=-1, keepdims=True)
    return (x - mean) * jax.lax.rsqrt(var + _LN_EPS) * w + b


def _softmax_rows(sim):
    sim = sim - jnp.max(sim, axis=-1, keepdims=True)
    p = jnp.exp(sim)
    # EUP approx reciprocal: separate issue slot (~free); tiny normalization error.
    return p * pl.reciprocal(jnp.sum(p, axis=-1, keepdims=True), approx=True)


def _geglu_ff(xn, w1a, b1a, w1g, b1g, w2, b2):
    """FeedForward with GEGLU; W1/b1 were pre-split into value/gate halves."""
    xb = xn.astype(jnp.bfloat16)
    a = jnp.dot(xb, w1a, preferred_element_type=jnp.float32) + b1a
    g = jnp.dot(xb, w1g, preferred_element_type=jnp.float32) + b1g
    # TODO(synk): exact erf GELU to match PyTorch nn.GELU bit-for-bit (tanh approx).
    gelu_g = 0.5 * g * (1.0 + jnp.tanh(0.7978845608028654 * (g + 0.044715 * g * g * g)))
    y = (a * gelu_g).astype(jnp.bfloat16)
    return jnp.dot(y, w2, preferred_element_type=jnp.float32) + b2


def _attend_accumulate(q_bh, k_bh, v_bh, wo_h):
    """softmax(q k^T) v -> out-projection contribution of one head (scale already
    folded into q). All matmul operands bf16, f32 MXU accumulation."""
    sim = jax.lax.dot_general(q_bh, k_bh, (((1,), (1,)), ((), ())),
                              preferred_element_type=jnp.float32)
    p = _softmax_rows(sim).astype(jnp.bfloat16)
    oh = jnp.dot(p, v_bh, preferred_element_type=jnp.float32).astype(jnp.bfloat16)
    return jnp.dot(oh, wo_h, preferred_element_type=jnp.float32)


# ------------------------------- Pallas kernels -------------------------------

def _latent_block_kernel(x_ref, anw, anb, wq, wk, wv, wo, bo,
                         fnw, fnb, w1a, b1a, w1g, b1g, w2, b2,
                         o_ref, *, heads, blk, n, d):
    """Self-attention block for `blk` batch elements per grid step.
    Projections / out-proj / FFN matmuls run on flattened (blk*n, d) rows; only the
    softmax / P@V inner part is per batch element."""
    x = x_ref[0].astype(jnp.float32).reshape(blk * n, d)
    xn = _ln(x, anw[...], anb[...]).astype(jnp.bfloat16)

    # Per-head projections with pre-split weights: no sub-128 lane slicing of
    # activations, no lane concatenation of head outputs.
    qs = [jnp.dot(xn, wq[h], preferred_element_type=jnp.float32).astype(jnp.bfloat16)
          for h in range(heads)]
    ks = [jnp.dot(xn, wk[h], preferred_element_type=jnp.float32).astype(jnp.bfloat16)
          for h in range(heads)]
    vs = [jnp.dot(xn, wv[h], preferred_element_type=jnp.float32).astype(jnp.bfloat16)
          for h in range(heads)]
    wos = [wo[h] for h in range(heads)]

    bo_full = jnp.broadcast_to(bo[...], (n, d))          # hoisted out of the loops
    rows = []
    for bi in range(blk):                                # static unroll, blk is small
        r0 = bi * n
        o_b = bo_full
        for h in range(heads):
            o_b = o_b + _attend_accumulate(qs[h][r0:r0 + n], ks[h][r0:r0 + n],
                                           vs[h][r0:r0 + n], wos[h])
        rows.append(o_b)
    attn = rows[0] if blk == 1 else jnp.concatenate(rows, axis=0)

    x = x + attn                                                        # residual 1
    fn = _ln(x, fnw[...], fnb[...])
    x = x + _geglu_ff(fn, w1a[...], b1a[...], w1g[...], b1g[...],
                      w2[...], b2[...])                                 # residual 2
    o_ref[0] = x.reshape(blk, n, d).astype(o_ref.dtype)


def _cross_block_kernel(c_ref, lat_ref, q_ref, cnw, cnb, wk, wv, wo, bo,
                        fnw, fnb, w1a, b1a, w1g, b1g, w2, b2,
                        o_ref, *, heads, blk, nq, nk, dq, dc):
    """Cross-attention block. LN(latents) and q = LN(latents)@Wq are batch-invariant
    and were precomputed (scale folded) at parameter-preprocessing time -> q_ref."""
    c = c_ref[0].astype(jnp.float32).reshape(blk * nk, dc)
    cn = _ln(c, cnw[...], cnb[...]).astype(jnp.bfloat16)
    lat = lat_ref[...].astype(jnp.float32)               # (nq, dq), shared per batch

    ks = [jnp.dot(cn, wk[h], preferred_element_type=jnp.float32).astype(jnp.bfloat16)
          for h in range(heads)]
    vs = [jnp.dot(cn, wv[h], preferred_element_type=jnp.float32).astype(jnp.bfloat16)
          for h in range(heads)]
    qhs = [q_ref[h] for h in range(heads)]
    wos = [wo[h] for h in range(heads)]

    base = lat + jnp.broadcast_to(bo[...], (nq, dq))     # residual + out-proj bias
    rows = []
    for bi in range(blk):
        r0 = bi * nk
        x_b = base
        for h in range(heads):
            x_b = x_b + _attend_accumulate(qhs[h], ks[h][r0:r0 + nk],
                                           vs[h][r0:r0 + nk], wos[h])
        rows.append(x_b)
    x = rows[0] if blk == 1 else jnp.concatenate(rows, axis=0)          # (blk*nq, dq)

    fn = _ln(x, fnw[...], fnb[...])
    x = x + _geglu_ff(fn, w1a[...], b1a[...], w1g[...], b1g[...],
                      w2[...], b2[...])
    o_ref[0] = x.reshape(blk, nq, dq).astype(o_ref.dtype)


# --------------------------------- wrappers -----------------------------------

def cross_block(data, prep, heads, blk):
    B, Nk, Dc = data.shape
    Nq, Dq = prep["latents"].shape
    nb = B // blk
    data_b = data.reshape(nb, blk, Nk, Dc)           # leading-dim split only (free)
    ff = prep["ff"]

    # TODO(synk): K-tile the context (second grid axis + online softmax) for very
    #             long Nk; the full (blk, Nk, Dc) block is fine at these sizes.
    args = (data_b, prep["latents"], prep["q_heads"], prep["cnw"], prep["cnb"],
            prep["wk"], prep["wv"], prep["wo"], prep["bo"],
            ff["nw"], ff["nb"], ff["w1a"], ff["b1a"], ff["w1g"], ff["b1g"],
            ff["w2"], ff["b2"])

    in_specs = ([pl.BlockSpec((1, blk, Nk, Dc), lambda b: (b, 0, 0, 0))]
                + [_const_spec(a.shape) for a in args[1:]])

    kernel = functools.partial(_cross_block_kernel, heads=heads, blk=blk,
                               nq=Nq, nk=Nk, dq=Dq, dc=Dc)
    return pl.pallas_call(
        kernel,
        out_shape=jax.ShapeDtypeStruct((nb, blk, Nq, Dq), data.dtype),
        grid=(nb,),
        in_specs=in_specs,
        out_specs=pl.BlockSpec((1, blk, Nq, Dq), lambda b: (b, 0, 0, 0)),
        compiler_params=_compiler_params(),
    )(*args)


def latent_block(x, layer, heads):
    nb, blk, N, D = x.shape
    ff = layer["ff"]
    args = (x, layer["anw"], layer["anb"], layer["wq"], layer["wk"], layer["wv"],
            layer["wo"], layer["bo"],
            ff["nw"], ff["nb"], ff["w1a"], ff["b1a"], ff["w1g"], ff["b1g"],
            ff["w2"], ff["b2"])

    in_specs = ([pl.BlockSpec((1, blk, N, D), lambda b: (b, 0, 0, 0))]
                + [_const_spec(a.shape) for a in args[1:]])

    kernel = functools.partial(_latent_block_kernel, heads=heads, blk=blk, n=N, d=D)
    return pl.pallas_call(
        kernel,
        out_shape=jax.ShapeDtypeStruct(x.shape, x.dtype),
        grid=(nb,),
        in_specs=in_specs,
        out_specs=pl.BlockSpec((1, blk, N, D), lambda b: (b, 0, 0, 0)),
        compiler_params=_compiler_params(),
    )(*args)


# ----------------------- one-time parameter preprocessing ----------------------

def _prep_ff(ff, d):
    dm = ff["w2"].shape[0]
    w1a, w1g = jnp.split(ff["w1"], 2, axis=-1)
    b1a, b1g = jnp.split(ff["b1"], 2, axis=-1)
    return dict(
        nw=ff["norm_w"].reshape(1, d).astype(jnp.float32),
        nb=ff["norm_b"].reshape(1, d).astype(jnp.float32),
        w1a=w1a.astype(jnp.bfloat16), b1a=b1a.reshape(1, dm).astype(jnp.float32),
        w1g=w1g.astype(jnp.bfloat16), b1g=b1g.reshape(1, dm).astype(jnp.float32),
        w2=ff["w2"].astype(jnp.bfloat16), b2=ff["b2"].reshape(1, d).astype(jnp.float32),
    )


def _split_heads_in(w, heads, dim_head):
    """(Din, heads*dim_head) -> (heads, Din, dim_head); columns are (h d) ordered."""
    din = w.shape[0]
    return w.reshape(din, heads, dim_head).transpose(1, 0, 2)


def _split_heads_out(w, heads, dim_head):
    """(heads*dim_head, Dout) -> (heads, dim_head, Dout); rows are (h d) ordered."""
    dout = w.shape[1]
    return w.reshape(heads, dim_head, dout)


def preprocess_params(params, *, cross_heads, cross_dim_head,
                      latent_heads, latent_dim_head):
    """One-time preprocessing: bf16 casts, kv / GEGLU / per-head splits, bias
    reshapes, attention scale folded into Wq, and the batch-invariant cross-attn
    query (LN(latents) @ Wq * scale) fully precomputed."""
    lat = params["latents"].astype(jnp.float32)
    nq, dq = lat.shape

    ca = params["cross_attn"]
    dc = ca["norm_ctx_w"].shape[0]
    qn = _ln(lat, ca["norm_w"].astype(jnp.float32), ca["norm_b"].astype(jnp.float32))
    q = (qn @ ca["wq"].astype(jnp.float32)) * (cross_dim_head ** -0.5)
    q_heads = q.reshape(nq, cross_heads, cross_dim_head).transpose(1, 0, 2)
    wk_c, wv_c = jnp.split(ca["wkv"], 2, axis=-1)

    cross = dict(
        latents=lat,
        q_heads=q_heads.astype(jnp.bfloat16),
        cnw=ca["norm_ctx_w"].reshape(1, dc).astype(jnp.float32),
        cnb=ca["norm_ctx_b"].reshape(1, dc).astype(jnp.float32),
        wk=_split_heads_in(wk_c, cross_heads, cross_dim_head).astype(jnp.bfloat16),
        wv=_split_heads_in(wv_c, cross_heads, cross_dim_head).astype(jnp.bfloat16),
        wo=_split_heads_out(ca["wo"], cross_heads, cross_dim_head).astype(jnp.bfloat16),
        bo=ca["bo"].reshape(1, dq).astype(jnp.float32),
        ff=_prep_ff(params["cross_ff"], dq),
    )

    scale_l = latent_dim_head ** -0.5
    layers = []
    for lyr in params["layers"]:
        a = lyr["attn"]
        d = a["norm_w"].shape[0]
        wk_l, wv_l = jnp.split(a["wkv"], 2, axis=-1)
        layers.append(dict(
            anw=a["norm_w"].reshape(1, d).astype(jnp.float32),
            anb=a["norm_b"].reshape(1, d).astype(jnp.float32),
            wq=(_split_heads_in(a["wq"], latent_heads, latent_dim_head)
                * scale_l).astype(jnp.bfloat16),
            wk=_split_heads_in(wk_l, latent_heads, latent_dim_head).astype(jnp.bfloat16),
            wv=_split_heads_in(wv_l, latent_heads, latent_dim_head).astype(jnp.bfloat16),
            wo=_split_heads_out(a["wo"], latent_heads, latent_dim_head).astype(jnp.bfloat16),
            bo=a["bo"].reshape(1, d).astype(jnp.float32),
            ff=_prep_ff(lyr["ff"], d),
        ))
    return dict(cross=cross, layers=layers)


# ----------------------------------- model ------------------------------------

def init_params(key, *, num_layers, dim, num_latents, latent_dim,
                cross_heads, latent_heads, cross_dim_head, latent_dim_head,
                ff_mult=4, dtype=jnp.float32):
    keys = iter(jax.random.split(key, 256))

    def lin(din, dout):
        return (jax.random.normal(next(keys), (din, dout), dtype)
                * (1.0 / jnp.sqrt(jnp.asarray(din, dtype))))

    def ln(d):
        return jnp.ones((d,), dtype), jnp.zeros((d,), dtype)

    params = {"latents": jax.random.normal(next(keys), (num_latents, latent_dim), dtype)}

    nw, nb = ln(latent_dim)
    ncw, ncb = ln(dim)
    inner_c = cross_heads * cross_dim_head
    params["cross_attn"] = dict(
        norm_w=nw, norm_b=nb, norm_ctx_w=ncw, norm_ctx_b=ncb,
        wq=lin(latent_dim, inner_c),
        wkv=lin(dim, inner_c * 2),
        wo=lin(inner_c, latent_dim),
        bo=jnp.zeros((latent_dim,), dtype),
    )
    fw, fb = ln(latent_dim)
    params["cross_ff"] = dict(
        norm_w=fw, norm_b=fb,
        w1=lin(latent_dim, latent_dim * ff_mult * 2),
        b1=jnp.zeros((latent_dim * ff_mult * 2,), dtype),
        w2=lin(latent_dim * ff_mult, latent_dim),
        b2=jnp.zeros((latent_dim,), dtype),
    )
    inner_l = latent_heads * latent_dim_head
    layers = []
    for _ in range(num_layers):
        aw, ab = ln(latent_dim)
        sw, sb = ln(latent_dim)
        layers.append(dict(
            attn=dict(norm_w=aw, norm_b=ab,
                      wq=lin(latent_dim, inner_l),
                      wkv=lin(latent_dim, inner_l * 2),
                      wo=lin(inner_l, latent_dim),
                      bo=jnp.zeros((latent_dim,), dtype)),
            ff=dict(norm_w=sw, norm_b=sb,
                    w1=lin(latent_dim, latent_dim * ff_mult * 2),
                    b1=jnp.zeros((latent_dim * ff_mult * 2,), dtype),
                    w2=lin(latent_dim * ff_mult, latent_dim),
                    b2=jnp.zeros((latent_dim,), dtype)),
        ))
    params["layers"] = layers
    return params


def perceiver_io_encoder(data, prep, *, cross_heads, latent_heads):
    """PerceiverIOEncoder.forward:
       x = cross_attn(PreNorm(latents), context=PreNorm(data)) + latents
       x = cross_ff(PreNorm(x)) + x
       repeat: x = self_attn(PreNorm(x)) + x ; x = self_ff(PreNorm(x)) + x
    One fused pallas_call per block; `prep` comes from preprocess_params."""
    b = data.shape[0]
    nq, dq = prep["cross"]["latents"].shape
    blk = _pick_batch_block(b, nq)

    x = cross_block(data, prep["cross"], cross_heads, blk)   # (b//blk, blk, nq, dq)
    for layer in prep["layers"]:
        x = latent_block(x, layer, latent_heads)
    return x.reshape(b, nq, dq)


# ------------------------------------ main -------------------------------------

if __name__ == "__main__":
    cfg = dict(
        num_layers=2,
        dim=32,              # input data feature dim
        num_latents=16,
        latent_dim=32,
        cross_heads=1,
        latent_heads=4,
        cross_dim_head=16,
        latent_dim_head=16,
    )
    batch, seq = 2, 8

    key = jax.random.PRNGKey(0)
    pkey, dkey = jax.random.split(key)
    params = init_params(pkey, **cfg)

    # One-time parameter preprocessing (bf16 casts, per-head splits, scale folding,
    # precomputed cross-attention query).
    prep = preprocess_params(
        params,
        cross_heads=cfg["cross_heads"], cross_dim_head=cfg["cross_dim_head"],
        latent_heads=cfg["latent_heads"], latent_dim_head=cfg["latent_dim_head"])

    data = jax.random.normal(dkey, (batch, seq, cfg["dim"]), jnp.float32)

    fwd = jax.jit(functools.partial(
        perceiver_io_encoder,
        cross_heads=cfg["cross_heads"], latent_heads=cfg["latent_heads"]))

    out = fwd(data, prep)
    jax.block_until_ready(out)
    assert out.shape == (batch, cfg["num_latents"], cfg["latent_dim"])
    assert bool(jnp.all(jnp.isfinite(out)))
    print("KERNEL_OK")
</pallas_src>

<mosaic_0001>
module attributes {stable_mosaic.version = 11 : i64} {
  func.func @_cross_block_kernel(%arg0: i32, %arg1: memref<1x2x8x32xf32, #tpu.memory_space<vmem>>, %arg2: memref<16x32xf32, #tpu.memory_space<vmem>>, %arg3: memref<1x16x16xbf16, #tpu.memory_space<vmem>>, %arg4: memref<1x32xf32, #tpu.memory_space<vmem>>, %arg5: memref<1x32xf32, #tpu.memory_space<vmem>>, %arg6: memref<1x32x16xbf16, #tpu.memory_space<vmem>>, %arg7: memref<1x32x16xbf16, #tpu.memory_space<vmem>>, %arg8: memref<1x16x32xbf16, #tpu.memory_space<vmem>>, %arg9: memref<1x32xf32, #tpu.memory_space<vmem>>, %arg10: memref<1x32xf32, #tpu.memory_space<vmem>>, %arg11: memref<1x32xf32, #tpu.memory_space<vmem>>, %arg12: memref<32x128xbf16, #tpu.memory_space<vmem>>, %arg13: memref<1x128xf32, #tpu.memory_space<vmem>>, %arg14: memref<32x128xbf16, #tpu.memory_space<vmem>>, %arg15: memref<1x128xf32, #tpu.memory_space<vmem>>, %arg16: memref<128x32xbf16, #tpu.memory_space<vmem>>, %arg17: memref<1x32xf32, #tpu.memory_space<vmem>>, %arg18: memref<1x2x16x32xf32, #tpu.memory_space<vmem>>) attributes {dimension_semantics = [#tpu.dimension_semantics<parallel>], iteration_bounds = array<i64: 1>, scalar_prefetch = 0 : i64, scratch_operands = 0 : i64, tpu.core_type = #tpu.core_type<tc>, window_params = [{transform_indices = @transform_0, window_bounds = array<i64: 1, 2, 8, 32>}, {pipeline_mode = #tpu.pipeline_mode<synchronous>, transform_indices = @transform_1, window_bounds = array<i64: 16, 32>}, {pipeline_mode = #tpu.pipeline_mode<synchronous>, transform_indices = @transform_2, window_bounds = array<i64: 1, 16, 16>}, {pipeline_mode = #tpu.pipeline_mode<synchronous>, transform_indices = @transform_3, window_bounds = array<i64: 1, 32>}, {pipeline_mode = #tpu.pipeline_mode<synchronous>, transform_indices = @transform_4, window_bounds = array<i64: 1, 32>}, {pipeline_mode = #tpu.pipeline_mode<synchronous>, transform_indices = @transform_5, window_bounds = array<i64: 1, 32, 16>}, {pipeline_mode = #tpu.pipeline_mode<synchronous>, transform_indices = @transform_6, window_bounds = array<i64: 1, 32, 16>}, {pipeline_mode = #tpu.pipeline_mode<synchronous>, transform_indices = @transform_7, window_bounds = array<i64: 1, 16, 32>}, {pipeline_mode = #tpu.pipeline_mode<synchronous>, transform_indices = @transform_8, window_bounds = array<i64: 1, 32>}, {pipeline_mode = #tpu.pipeline_mode<synchronous>, transform_indices = @transform_9, window_bounds = array<i64: 1, 32>}, {pipeline_mode = #tpu.pipeline_mode<synchronous>, transform_indices = @transform_10, window_bounds = array<i64: 1, 32>}, {pipeline_mode = #tpu.pipeline_mode<synchronous>, transform_indices = @transform_11, window_bounds = array<i64: 32, 128>}, {pipeline_mode = #tpu.pipeline_mode<synchronous>, transform_indices = @transform_12, window_bounds = array<i64: 1, 128>}, {pipeline_mode = #tpu.pipeline_mode<synchronous>, transform_indices = @transform_13, window_bounds = array<i64: 32, 128>}, {pipeline_mode = #tpu.pipeline_mode<synchronous>, transform_indices = @transform_14, window_bounds = array<i64: 1, 128>}, {pipeline_mode = #tpu.pipeline_mode<synchronous>, transform_indices = @transform_15, window_bounds = array<i64: 128, 32>}, {pipeline_mode = #tpu.pipeline_mode<synchronous>, transform_indices = @transform_16, window_bounds = array<i64: 1, 32>}, {transform_indices = @transform_17, window_bounds = array<i64: 1, 2, 16, 32>}]} {
    %c0 = arith.constant 0 : index
    %c0_0 = arith.constant 0 : index
    %c0_1 = arith.constant 0 : index
    %c0_2 = arith.constant 0 : index
    %0 = vector.load %arg1[%c0, %c0_0, %c0_1, %c0_2] : memref<1x2x8x32xf32, #tpu.memory_space<vmem>>, vector<1x2x8x32xf32>
    %1 = vector.shape_cast %0 : vector<1x2x8x32xf32> to vector<2x8x32xf32>
    %2 = vector.shape_cast %1 : vector<2x8x32xf32> to vector<16x32xf32>
    %c0_3 = arith.constant 0 : index
    %c0_4 = arith.constant 0 : index
    %3 = vector.load %arg4[%c0_3, %c0_4] : memref<1x32xf32, #tpu.memory_space<vmem>>, vector<1x32xf32>
    %c0_5 = arith.constant 0 : index
    %c0_6 = arith.constant 0 : index
    %4 = vector.load %arg5[%c0_5, %c0_6] : memref<1x32xf32, #tpu.memory_space<vmem>>, vector<1x32xf32>
    %cst = arith.constant dense<0.000000e+00> : vector<16xf32>
    %5 = vector.multi_reduction <add>, %2, %cst [1] : vector<16x32xf32> to vector<16xf32>
    %6 = vector.shape_cast %5 : vector<16xf32> to vector<16x1xf32>
    %cst_7 = arith.constant 3.200000e+01 : f32
    %7 = vector.broadcast %cst_7 : f32 to vector<16x1xf32>
    %8 = arith.divf %6, %7 : vector<16x1xf32>
    %9 = vector.broadcast %8 : vector<16x1xf32> to vector<16x32xf32>
    %10 = arith.subf %2, %9 : vector<16x32xf32>
    %11 = arith.mulf %10, %10 : vector<16x32xf32>
    %cst_8 = arith.constant dense<0.000000e+00> : vector<16xf32>
    %12 = vector.multi_reduction <add>, %11, %cst_8 [1] : vector<16x32xf32> to vector<16xf32>
    %13 = vector.shape_cast %12 : vector<16xf32> to vector<16x1xf32>
    %cst_9 = arith.constant 3.200000e+01 : f32
    %14 = vector.broadcast %cst_9 : f32 to vector<16x1xf32>
    %15 = arith.divf %13, %14 : vector<16x1xf32>
    %16 = vector.broadcast %8 : vector<16x1xf32> to vector<16x32xf32>
    %17 = arith.subf %2, %16 : vector<16x32xf32>
    %cst_10 = arith.constant 9.99999974E-6 : f32
    %18 = vector.broadcast %cst_10 : f32 to vector<16x1xf32>
    %19 = arith.addf %15, %18 : vector<16x1xf32>
    %20 = math.rsqrt %19 : vector<16x1xf32>
    %21 = vector.broadcast %20 : vector<16x1xf32> to vector<16x32xf32>
    %22 = arith.mulf %17, %21 : vector<16x32xf32>
    %23 = vector.broadcast %3 : vector<1x32xf32> to vector<16x32xf32>
    %24 = arith.mulf %22, %23 : vector<16x32xf32>
    %25 = vector.broadcast %4 : vector<1x32xf32> to vector<16x32xf32>
    %26 = arith.addf %24, %25 : vector<16x32xf32>
    %27 = arith.truncf %26 : vector<16x32xf32> to vector<16x32xbf16>
    %c0_11 = arith.constant 0 : index
    %c0_12 = arith.constant 0 : index
    %28 = vector.load %arg2[%c0_11, %c0_12] : memref<16x32xf32, #tpu.memory_space<vmem>>, vector<16x32xf32>
    %c0_13 = arith.constant 0 : index
    %c0_14 = arith.constant 0 : index
    %c0_15 = arith.constant 0 : index
    %29 = vector.load %arg6[%c0_13, %c0_14, %c0_15] : memref<1x32x16xbf16, #tpu.memory_space<vmem>>, vector<1x32x16xbf16>
    %30 = vector.shape_cast %29 : vector<1x32x16xbf16> to vector<32x16xbf16>
    %cst_16 = arith.constant dense<0.000000e+00> : vector<16x16xf32>
    %31 = tpu.matmul %27, %30, %cst_16 {dimension_numbers = #tpu.dot_dimension_numbers<[1], [0], [0], [1], [0, 0, 1, 1], [], []>} : vector<16x32xbf16>, vector<32x16xbf16>, vector<16x16xf32> -> vector<16x16xf32>
    %32 = arith.truncf %31 : vector<16x16xf32> to vector<16x16xbf16>
    %c0_17 = arith.constant 0 : index
    %c0_18 = arith.constant 0 : index
    %c0_19 = arith.constant 0 : index
    %33 = vector.load %arg7[%c0_17, %c0_18, %c0_19] : memref<1x32x16xbf16, #tpu.memory_space<vmem>>, vector<1x32x16xbf16>
    %34 = vector.shape_cast %33 : vector<1x32x16xbf16> to vector<32x16xbf16>
    %cst_20 = arith.constant dense<0.000000e+00> : vector<16x16xf32>
    %35 = tpu.matmul %27, %34, %cst_20 {dimension_numbers = #tpu.dot_dimension_numbers<[1], [0], [0], [1], [0, 0, 1, 1], [], []>} : vector<16x32xbf16>, vector<32x16xbf16>, vector<16x16xf32> -> vector<16x16xf32>
    %36 = arith.truncf %35 : vector<16x16xf32> to vector<16x16xbf16>
    %c0_21 = arith.constant 0 : index
    %c0_22 = arith.constant 0 : index
    %c0_23 = arith.constant 0 : index
    %37 = vector.load %arg3[%c0_21, %c0_22, %c0_23] : memref<1x16x16xbf16, #tpu.memory_space<vmem>>, vector<1x16x16xbf16>
    %38 = vector.shape_cast %37 : vector<1x16x16xbf16> to vector<16x16xbf16>
    %c0_24 = arith.constant 0 : index
    %c0_25 = arith.constant 0 : index
    %c0_26 = arith.constant 0 : index
    %39 = vector.load %arg8[%c0_24, %c0_25, %c0_26] : memref<1x16x32xbf16, #tpu.memory_space<vmem>>, vector<1x16x32xbf16>
    %40 = vector.shape_cast %39 : vector<1x16x32xbf16> to vector<16x32xbf16>
    %c0_27 = arith.constant 0 : index
    %c0_28 = arith.constant 0 : index
    %41 = vector.load %arg9[%c0_27, %c0_28] : memref<1x32xf32, #tpu.memory_space<vmem>>, vector<1x32xf32>
    %42 = vector.shape_cast %41 : vector<1x32xf32> to vector<1x32xf32>
    %43 = vector.broadcast %42 : vector<1x32xf32> to vector<16x32xf32>
    %44 = arith.addf %28, %43 : vector<16x32xf32>
    %45 = vector.extract_strided_slice %32 {offsets = [0, 0], sizes = [8, 16], strides = [1, 1]} : vector<16x16xbf16> to vector<8x16xbf16>
    %46 = vector.extract_strided_slice %36 {offsets = [0, 0], sizes = [8, 16], strides = [1, 1]} : vector<16x16xbf16> to vector<8x16xbf16>
    %cst_29 = arith.constant dense<0.000000e+00> : vector<16x8xf32>
    %47 = tpu.matmul %38, %45, %cst_29 {dimension_numbers = #tpu.dot_dimension_numbers<[1], [1], [0], [0], [0, 0, 1, 0], [], []>} : vector<16x16xbf16>, vector<8x16xbf16>, vector<16x8xf32> -> vector<16x8xf32>
    %cst_30 = arith.constant dense<0xFF800000> : vector<16xf32>
    %48 = vector.multi_reduction <maximumf>, %47, %cst_30 [1] : vector<16x8xf32> to vector<16xf32>
    %49 = vector.shape_cast %48 : vector<16xf32> to vector<16x1xf32>
    %50 = vector.broadcast %49 : vector<16x1xf32> to vector<16x8xf32>
    %51 = arith.subf %47, %50 : vector<16x8xf32>
    %52 = math.exp %51 : vector<16x8xf32>
    %cst_31 = arith.constant dense<0.000000e+00> : vector<16xf32>
    %53 = vector.multi_reduction <add>, %52, %cst_31 [1] : vector<16x8xf32> to vector<16xf32>
    %54 = vector.shape_cast %53 : vector<16xf32> to vector<16x1xf32>
    %55 = tpu.reciprocal %54 {approx = true} : vector<16x1xf32> -> vector<16x1xf32>
    %56 = vector.broadcast %55 : vector<16x1xf32> to vector<16x8xf32>
    %57 = arith.mulf %52, %56 : vector<16x8xf32>
    %58 = arith.truncf %57 : vector<16x8xf32> to vector<16x8xbf16>
    %cst_32 = arith.constant dense<0.000000e+00> : vector<16x16xf32>
    %59 = tpu.matmul %58, %46, %cst_32 {dimension_numbers = #tpu.dot_dimension_numbers<[1], [0], [0], [1], [0, 0, 1, 1], [], []>} : vector<16x8xbf16>, vector<8x16xbf16>, vector<16x16xf32> -> vector<16x16xf32>
    %60 = arith.truncf %59 : vector<16x16xf32> to vector<16x16xbf16>
    %cst_33 = arith.constant dense<0.000000e+00> : vector<16x32xf32>
    %61 = tpu.matmul %60, %40, %cst_33 {dimension_numbers = #tpu.dot_dimension_numbers<[1], [0], [0], [1], [0, 0, 1, 1], [], []>} : vector<16x16xbf16>, vector<16x32xbf16>, vector<16x32xf32> -> vector<16x32xf32>
    %62 = arith.addf %44, %61 : vector<16x32xf32>
    %63 = vector.extract_strided_slice %32 {offsets = [8, 0], sizes = [8, 16], strides = [1, 1]} : vector<16x16xbf16> to vector<8x16xbf16>
    %64 = vector.extract_strided_slice %36 {offsets = [8, 0], sizes = [8, 16], strides = [1, 1]} : vector<16x16xbf16> to vector<8x16xbf16>
    %cst_34 = arith.constant dense<0.000000e+00> : vector<16x8xf32>
    %65 = tpu.matmul %38, %63, %cst_34 {dimension_numbers = #tpu.dot_dimension_numbers<[1], [1], [0], [0], [0, 0, 1, 0], [], []>} : vector<16x16xbf16>, vector<8x16xbf16>, vector<16x8xf32> -> vector<16x8xf32>
    %cst_35 = arith.constant dense<0xFF800000> : vector<16xf32>
    %66 = vector.multi_reduction <maximumf>, %65, %cst_35 [1] : vector<16x8xf32> to vector<16xf32>
    %67 = vector.shape_cast %66 : vector<16xf32> to vector<16x1xf32>
    %68 = vector.broadcast %67 : vector<16x1xf32> to vector<16x8xf32>
    %69 = arith.subf %65, %68 : vector<16x8xf32>
    %70 = math.exp %69 : vector<16x8xf32>
    %cst_36 = arith.constant dense<0.000000e+00> : vector<16xf32>
    %71 = vector.multi_reduction <add>, %70, %cst_36 [1] : vector<16x8xf32> to vector<16xf32>
    %72 = vector.shape_cast %71 : vector<16xf32> to vector<16x1xf32>
    %73 = tpu.reciprocal %72 {approx = true} : vector<16x1xf32> -> vector<16x1xf32>
    %74 = vector.broadcast %73 : vector<16x1xf32> to vector<16x8xf32>
    %75 = arith.mulf %70, %74 : vector<16x8xf32>
    %76 = arith.truncf %75 : vector<16x8xf32> to vector<16x8xbf16>
    %cst_37 = arith.constant dense<0.000000e+00> : vector<16x16xf32>
    %77 = tpu.matmul %76, %64, %cst_37 {dimension_numbers = #tpu.dot_dimension_numbers<[1], [0], [0], [1], [0, 0, 1, 1], [], []>} : vector<16x8xbf16>, vector<8x16xbf16>, vector<16x16xf32> -> vector<16x16xf32>
    %78 = arith.truncf %77 : vector<16x16xf32> to vector<16x16xbf16>
    %cst_38 = arith.constant dense<0.000000e+00> : vector<16x32xf32>
    %79 = tpu.matmul %78, %40, %cst_38 {dimension_numbers = #tpu.dot_dimension_numbers<[1], [0], [0], [1], [0, 0, 1, 1], [], []>} : vector<16x16xbf16>, vector<16x32xbf16>, vector<16x32xf32> -> vector<16x32xf32>
    %80 = arith.addf %44, %79 : vector<16x32xf32>
    %81 = tpu.concatenate %62, %80 in 0 : vector<16x32xf32>, vector<16x32xf32> -> vector<32x32xf32>
    %c0_39 = arith.constant 0 : index
    %c0_40 = arith.constant 0 : index
    %82 = vector.load %arg10[%c0_39, %c0_40] : memref<1x32xf32, #tpu.memory_space<vmem>>, vector<1x32xf32>
    %c0_41 = arith.constant 0 : index
    %c0_42 = arith.constant 0 : index
    %83 = vector.load %arg11[%c0_41, %c0_42] : memref<1x32xf32, #tpu.memory_space<vmem>>, vector<1x32xf32>
    %cst_43 = arith.constant dense<0.000000e+00> : vector<32xf32>
    %84 = vector.multi_reduction <add>, %81, %cst_43 [1] : vector<32x32xf32> to vector<32xf32>
    %85 = vector.shape_cast %84 : vector<32xf32> to vector<32x1xf32>
    %cst_44 = arith.constant 3.200000e+01 : f32
    %86 = vector.broadcast %cst_44 : f32 to vector<32x1xf32>
    %87 = arith.divf %85, %86 : vector<32x1xf32>
    %88 = vector.broadcast %87 : vector<32x1xf32> to vector<32x32xf32>
    %89 = arith.subf %81, %88 : vector<32x32xf32>
    %90 = arith.mulf %89, %89 : vector<32x32xf32>
    %cst_45 = arith.constant dense<0.000000e+00> : vector<32xf32>
    %91 = vector.multi_reduction <add>, %90, %cst_45 [1] : vector<32x32xf32> to vector<32xf32>
    %92 = vector.shape_cast %91 : vector<32xf32> to vector<32x1xf32>
    %cst_46 = arith.constant 3.200000e+01 : f32
    %93 = vector.broadcast %cst_46 : f32 to vector<32x1xf32>
    %94 = arith.divf %92, %93 : vector<32x1xf32>
    %95 = vector.broadcast %87 : vector<32x1xf32> to vector<32x32xf32>
    %96 = arith.subf %81, %95 : vector<32x32xf32>
    %cst_47 = arith.constant 9.99999974E-6 : f32
    %97 = vector.broadcast %cst_47 : f32 to vector<32x1xf32>
    %98 = arith.addf %94, %97 : vector<32x1xf32>
    %99 = math.rsqrt %98 : vector<32x1xf32>
    %100 = vector.broadcast %99 : vector<32x1xf32> to vector<32x32xf32>
    %101 = arith.mulf %96, %100 : vector<32x32xf32>
    %102 = vector.broadcast %82 : vector<1x32xf32> to vector<32x32xf32>
    %103 = arith.mulf %101, %102 : vector<32x32xf32>
    %104 = vector.broadcast %83 : vector<1x32xf32> to vector<32x32xf32>
    %105 = arith.addf %103, %104 : vector<32x32xf32>
    %c0_48 = arith.constant 0 : index
    %c0_49 = arith.constant 0 : index
    %106 = vector.load %arg12[%c0_48, %c0_49] : memref<32x128xbf16, #tpu.memory_space<vmem>>, vector<32x128xbf16>
    %c0_50 = arith.constant 0 : index
    %c0_51 = arith.constant 0 : index
    %107 = vector.load %arg13[%c0_50, %c0_51] : memref<1x128xf32, #tpu.memory_space<vmem>>, vector<1x128xf32>
    %c0_52 = arith.constant 0 : index
    %c0_53 = arith.constant 0 : index
    %108 = vector.load %arg14[%c0_52, %c0_53] : memref<32x128xbf16, #tpu.memory_space<vmem>>, vector<32x128xbf16>
    %c0_54 = arith.constant 0 : index
    %c0_55 = arith.constant 0 : index
    %109 = vector.load %arg15[%c0_54, %c0_55] : memref<1x128xf32, #tpu.memory_space<vmem>>, vector<1x128xf32>
    %c0_56 = arith.constant 0 : index
    %c0_57 = arith.constant 0 : index
    %110 = vector.load %arg16[%c0_56, %c0_57] : memref<128x32xbf16, #tpu.memory_space<vmem>>, vector<128x32xbf16>
    %c0_58 = arith.constant 0 : index
    %c0_59 = arith.constant 0 : index
    %111 = vector.load %arg17[%c0_58, %c0_59] : memref<1x32xf32, #tpu.memory_space<vmem>>, vector<1x32xf32>
    %112 = arith.truncf %105 : vector<32x32xf32> to vector<32x32xbf16>
    %cst_60 = arith.constant dense<0.000000e+00> : vector<32x128xf32>
    %113 = tpu.matmul %112, %106, %cst_60 {dimension_numbers = #tpu.dot_dimension_numbers<[1], [0], [0], [1], [0, 0, 1, 1], [], []>} : vector<32x32xbf16>, vector<32x128xbf16>, vector<32x128xf32> -> vector<32x128xf32>
    %114 = vector.broadcast %107 : vector<1x128xf32> to vector<32x128xf32>
    %115 = arith.addf %113, %114 : vector<32x128xf32>
    %cst_61 = arith.constant dense<0.000000e+00> : vector<32x128xf32>
    %116 = tpu.matmul %112, %108, %cst_61 {dimension_numbers = #tpu.dot_dimension_numbers<[1], [0], [0], [1], [0, 0, 1, 1], [], []>} : vector<32x32xbf16>, vector<32x128xbf16>, vector<32x128xf32> -> vector<32x128xf32>
    %117 = vector.broadcast %109 : vector<1x128xf32> to vector<32x128xf32>
    %118 = arith.addf %116, %117 : vector<32x128xf32>
    %cst_62 = arith.constant 5.000000e-01 : f32
    %119 = vector.broadcast %cst_62 : f32 to vector<32x128xf32>
    %120 = arith.mulf %119, %118 : vector<32x128xf32>
    %cst_63 = arith.constant 4.471500e-02 : f32
    %121 = vector.broadcast %cst_63 : f32 to vector<32x128xf32>
    %122 = arith.mulf %121, %118 : vector<32x128xf32>
    %123 = arith.mulf %122, %118 : vector<32x128xf32>
    %124 = arith.mulf %123, %118 : vector<32x128xf32>
    %125 = arith.addf %118, %124 : vector<32x128xf32>
    %cst_64 = arith.constant 0.797884583 : f32
    %126 = vector.broadcast %cst_64 : f32 to vector<32x128xf32>
    %127 = arith.mulf %126, %125 : vector<32x128xf32>
    %128 = math.tanh %127 : vector<32x128xf32>
    %cst_65 = arith.constant 1.000000e+00 : f32
    %129 = vector.broadcast %cst_65 : f32 to vector<32x128xf32>
    %130 = arith.addf %129, %128 : vector<32x128xf32>
    %131 = arith.mulf %120, %130 : vector<32x128xf32>
    %132 = arith.mulf %115, %131 : vector<32x128xf32>
    %133 = arith.truncf %132 : vector<32x128xf32> to vector<32x128xbf16>
    %cst_66 = arith.constant dense<0.000000e+00> : vector<32x32xf32>
    %134 = tpu.matmul %133, %110, %cst_66 {dimension_numbers = #tpu.dot_dimension_numbers<[1], [0], [0], [1], [0, 0, 1, 1], [], []>} : vector<32x128xbf16>, vector<128x32xbf16>, vector<32x32xf32> -> vector<32x32xf32>
    %135 = vector.broadcast %111 : vector<1x32xf32> to vector<32x32xf32>
    %136 = arith.addf %134, %135 : vector<32x32xf32>
    %137 = arith.addf %81, %136 : vector<32x32xf32>
    %138 = vector.shape_cast %137 : vector<32x32xf32> to vector<2x16x32xf32>
    %c0_67 = arith.constant 0 : index
    %c0_68 = arith.constant 0 : index
    %c0_69 = arith.constant 0 : index
    %c0_70 = arith.constant 0 : index
    %139 = vector.load %arg18[%c0_67, %c0_68, %c0_69, %c0_70] : memref<1x2x16x32xf32, #tpu.memory_space<vmem>>, vector<1x2x16x32xf32>
    %140 = vector.shape_cast %139 : vector<1x2x16x32xf32> to vector<2x16x32xf32>
    %141 = vector.shape_cast %138 : vector<2x16x32xf32> to vector<1x2x16x32xf32>
    tpu.vector_store %arg18[%c0_67, %c0_68, %c0_69, %c0_70], %141 {strides = array<i32>} : memref<1x2x16x32xf32, #tpu.memory_space<vmem>>, vector<1x2x16x32xf32>,
    return
  }
  func.func @transform_0(%arg0: i32) -> (i32, i32, i32, i32) {
    %c0_i32 = arith.constant 0 : i32
    %c0_i32_0 = arith.constant 0 : i32
    %c0_i32_1 = arith.constant 0 : i32
    %c0_i32_2 = arith.constant 0 : i32
    return %arg0, %c0_i32, %c0_i32_0, %c0_i32_1 : i32, i32, i32, i32
  }
  func.func @transform_1(%arg0: i32) -> (i32, i32) {
    %c0_i32 = arith.constant 0 : i32
    %c0_i32_0 = arith.constant 0 : i32
    %c0_i32_1 = arith.constant 0 : i32
    return %c0_i32, %c0_i32_0 : i32, i32
  }
  func.func @transform_2(%arg0: i32) -> (i32, i32, i32) {
    %c0_i32 = arith.constant 0 : i32
    %c0_i32_0 = arith.constant 0 : i32
    %c0_i32_1 = arith.constant 0 : i32
    %c0_i32_2 = arith.constant 0 : i32
    return %c0_i32, %c0_i32_0, %c0_i32_1 : i32, i32, i32
  }
  func.func @transform_3(%arg0: i32) -> (i32, i32) {
    %c0_i32 = arith.constant 0 : i32
    %c0_i32_0 = arith.constant 0 : i32
    %c0_i32_1 = arith.constant 0 : i32
    return %c0_i32, %c0_i32_0 : i32, i32
  }
  func.func @transform_4(%arg0: i32) -> (i32, i32) {
    %c0_i32 = arith.constant 0 : i32
    %c0_i32_0 = arith.constant 0 : i32
    %c0_i32_1 = arith.constant 0 : i32
    return %c0_i32, %c0_i32_0 : i32, i32
  }
  func.func @transform_5(%arg0: i32) -> (i32, i32, i32) {
    %c0_i32 = arith.constant 0 : i32
    %c0_i32_0 = arith.constant 0 : i32
    %c0_i32_1 = arith.constant 0 : i32
    %c0_i32_2 = arith.constant 0 : i32
    return %c0_i32, %c0_i32_0, %c0_i32_1 : i32, i32, i32
  }
  func.func @transform_6(%arg0: i32) -> (i32, i32, i32) {
    %c0_i32 = arith.constant 0 : i32
    %c0_i32_0 = arith.constant 0 : i32
    %c0_i32_1 = arith.constant 0 : i32
    %c0_i32_2 = arith.constant 0 : i32
    return %c0_i32, %c0_i32_0, %c0_i32_1 : i32, i32, i32
  }
  func.func @transform_7(%arg0: i32) -> (i32, i32, i32) {
    %c0_i32 = arith.constant 0 : i32
    %c0_i32_0 = arith.constant 0 : i32
    %c0_i32_1 = arith.constant 0 : i32
    %c0_i32_2 = arith.constant 0 : i32
    return %c0_i32, %c0_i32_0, %c0_i32_1 : i32, i32, i32
  }
  func.func @transform_8(%arg0: i32) -> (i32, i32) {
    %c0_i32 = arith.constant 0 : i32
    %c0_i32_0 = arith.constant 0 : i32
    %c0_i32_1 = arith.constant 0 : i32
    return %c0_i32, %c0_i32_0 : i32, i32
  }
  func.func @transform_9(%arg0: i32) -> (i32, i32) {
    %c0_i32 = arith.constant 0 : i32
    %c0_i32_0 = arith.constant 0 : i32
    %c0_i32_1 = arith.constant 0 : i32
    return %c0_i32, %c0_i32_0 : i32, i32
  }
  func.func @transform_10(%arg0: i32) -> (i32, i32) {
    %c0_i32 = arith.constant 0 : i32
    %c0_i32_0 = arith.constant 0 : i32
    %c0_i32_1 = arith.constant 0 : i32
    return %c0_i32, %c0_i32_0 : i32, i32
  }
  func.func @transform_11(%arg0: i32) -> (i32, i32) {
    %c0_i32 = arith.constant 0 : i32
    %c0_i32_0 = arith.constant 0 : i32
    %c0_i32_1 = arith.constant 0 : i32
    return %c0_i32, %c0_i32_0 : i32, i32
  }
  func.func @transform_12(%arg0: i32) -> (i32, i32) {
    %c0_i32 = arith.constant 0 : i32
    %c0_i32_0 = arith.constant 0 : i32
    %c0_i32_1 = arith.constant 0 : i32
    return %c0_i32, %c0_i32_0 : i32, i32
  }
  func.func @transform_13(%arg0: i32) -> (i32, i32) {
    %c0_i32 = arith.constant 0 : i32
    %c0_i32_0 = arith.constant 0 : i32
    %c0_i32_1 = arith.constant 0 : i32
    return %c0_i32, %c0_i32_0 : i32, i32
  }
  func.func @transform_14(%arg0: i32) -> (i32, i32) {
    %c0_i32 = arith.constant 0 : i32
    %c0_i32_0 = arith.constant 0 : i32
    %c0_i32_1 = arith.constant 0 : i32
    return %c0_i32, %c0_i32_0 : i32, i32
  }
  func.func @transform_15(%arg0: i32) -> (i32, i32) {
    %c0_i32 = arith.constant 0 : i32
    %c0_i32_0 = arith.constant 0 : i32
    %c0_i32_1 = arith.constant 0 : i32
    return %c0_i32, %c0_i32_0 : i32, i32
  }
  func.func @transform_16(%arg0: i32) -> (i32, i32) {
    %c0_i32 = arith.constant 0 : i32
    %c0_i32_0 = arith.constant 0 : i32
    %c0_i32_1 = arith.constant 0 : i32
    return %c0_i32, %c0_i32_0 : i32, i32
  }
  func.func @transform_17(%arg0: i32) -> (i32, i32, i32, i32) {
    %c0_i32 = arith.constant 0 : i32
    %c0_i32_0 = arith.constant 0 : i32
    %c0_i32_1 = arith.constant 0 : i32
    %c0_i32_2 = arith.constant 0 : i32
    return %arg0, %c0_i32, %c0_i32_0, %c0_i32_1 : i32, i32, i32, i32
  }
}

module attributes {stable_mosaic.version = 11 : i64} {
  func.func @_latent_block_kernel(%arg0: i32, %arg1: memref<1x2x16x32xf32, #tpu.memory_space<vmem>>, %arg2: memref<1x32xf32, #tpu.memory_space<vmem>>, %arg3: memref<1x32xf32, #tpu.memory_space<vmem>>, %arg4: memref<4x32x16xbf16, #tpu.memory_space<vmem>>, %arg5: memref<4x32x16xbf16, #tpu.memory_space<vmem>>, %arg6: memref<4x32x16xbf16, #tpu.memory_space<vmem>>, %arg7: memref<4x16x32xbf16, #tpu.memory_space<vmem>>, %arg8: memref<1x32xf32, #tpu.memory_space<vmem>>, %arg9: memref<1x32xf32, #tpu.memory_space<vmem>>, %arg10: memref<1x32xf32, #tpu.memory_space<vmem>>, %arg11: memref<32x128xbf16, #tpu.memory_space<vmem>>, %arg12: memref<1x128xf32, #tpu.memory_space<vmem>>, %arg13: memref<32x128xbf16, #tpu.memory_space<vmem>>, %arg14: memref<1x128xf32, #tpu.memory_space<vmem>>, %arg15: memref<128x32xbf16, #tpu.memory_space<vmem>>, %arg16: memref<1x32xf32, #tpu.memory_space<vmem>>, %arg17: memref<1x2x16x32xf32, #tpu.memory_space<vmem>>) attributes {dimension_semantics = [#tpu.dimension_semantics<parallel>], iteration_bounds = array<i64: 1>, scalar_prefetch = 0 : i64, scratch_operands = 0 : i64, tpu.core_type = #tpu.core_type<tc>, window_params = [{transform_indices = @transform_0, window_bounds = array<i64: 1, 2, 16, 32>}, {pipeline_mode = #tpu.pipeline_mode<synchronous>, transform_indices = @transform_1, window_bounds = array<i64: 1, 32>}, {pipeline_mode = #tpu.pipeline_mode<synchronous>, transform_indices = @transform_2, window_bounds = array<i64: 1, 32>}, {pipeline_mode = #tpu.pipeline_mode<synchronous>, transform_indices = @transform_3, window_bounds = array<i64: 4, 32, 16>}, {pipeline_mode = #tpu.pipeline_mode<synchronous>, transform_indices = @transform_4, window_bounds = array<i64: 4, 32, 16>}, {pipeline_mode = #tpu.pipeline_mode<synchronous>, transform_indices = @transform_5, window_bounds = array<i64: 4, 32, 16>}, {pipeline_mode = #tpu.pipeline_mode<synchronous>, transform_indices = @transform_6, window_bounds = array<i64: 4, 16, 32>}, {pipeline_mode = #tpu.pipeline_mode<synchronous>, transform_indices = @transform_7, window_bounds = array<i64: 1, 32>}, {pipeline_mode = #tpu.pipeline_mode<synchronous>, transform_indices = @transform_8, window_bounds = array<i64: 1, 32>}, {pipeline_mode = #tpu.pipeline_mode<synchronous>, transform_indices = @transform_9, window_bounds = array<i64: 1, 32>}, {pipeline_mode = #tpu.pipeline_mode<synchronous>, transform_indices = @transform_10, window_bounds = array<i64: 32, 128>}, {pipeline_mode = #tpu.pipeline_mode<synchronous>, transform_indices = @transform_11, window_bounds = array<i64: 1, 128>}, {pipeline_mode = #tpu.pipeline_mode<synchronous>, transform_indices = @transform_12, window_bounds = array<i64: 32, 128>}, {pipeline_mode = #tpu.pipeline_mode<synchronous>, transform_indices = @transform_13, window_bounds = array<i64: 1, 128>}, {pipeline_mode = #tpu.pipeline_mode<synchronous>, transform_indices = @transform_14, window_bounds = array<i64: 128, 32>}, {pipeline_mode = #tpu.pipeline_mode<synchronous>, transform_indices = @transform_15, window_bounds = array<i64: 1, 32>}, {transform_indices = @transform_16, window_bounds = array<i64: 1, 2, 16, 32>}]} {
    %c0 = arith.constant 0 : index
    %c0_0 = arith.constant 0 : index
    %c0_1 = arith.constant 0 : index
    %c0_2 = arith.constant 0 : index
    %0 = vector.load %arg1[%c0, %c0_0, %c0_1, %c0_2] : memref<1x2x16x32xf32, #tpu.memory_space<vmem>>, vector<1x2x16x32xf32>
    %1 = vector.shape_cast %0 : vector<1x2x16x32xf32> to vector<2x16x32xf32>
    %2 = vector.shape_cast %1 : vector<2x16x32xf32> to vector<32x32xf32>
    %c0_3 = arith.constant 0 : index
    %c0_4 = arith.constant 0 : index
    %3 = vector.load %arg2[%c0_3, %c0_4] : memref<1x32xf32, #tpu.memory_space<vmem>>, vector<1x32xf32>
    %c0_5 = arith.constant 0 : index
    %c0_6 = arith.constant 0 : index
    %4 = vector.load %arg3[%c0_5, %c0_6] : memref<1x32xf32, #tpu.memory_space<vmem>>, vector<1x32xf32>
    %cst = arith.constant dense<0.000000e+00> : vector<32xf32>
    %5 = vector.multi_reduction <add>, %2, %cst [1] : vector<32x32xf32> to vector<32xf32>
    %6 = vector.shape_cast %5 : vector<32xf32> to vector<32x1xf32>
    %cst_7 = arith.constant 3.200000e+01 : f32
    %7 = vector.broadcast %cst_7 : f32 to vector<32x1xf32>
    %8 = arith.divf %6, %7 : vector<32x1xf32>
    %9 = vector.broadcast %8 : vector<32x1xf32> to vector<32x32xf32>
    %10 = arith.subf %2, %9 : vector<32x32xf32>
    %11 = arith.mulf %10, %10 : vector<32x32xf32>
    %cst_8 = arith.constant dense<0.000000e+00> : vector<32xf32>
    %12 = vector.multi_reduction <add>, %11, %cst_8 [1] : vector<32x32xf32> to vector<32xf32>
    %13 = vector.shape_cast %12 : vector<32xf32> to vector<32x1xf32>
    %cst_9 = arith.constant 3.200000e+01 : f32
    %14 = vector.broadcast %cst_9 : f32 to vector<32x1xf32>
    %15 = arith.divf %13, %14 : vector<32x1xf32>
    %16 = vector.broadcast %8 : vector<32x1xf32> to vector<32x32xf32>
    %17 = arith.subf %2, %16 : vector<32x32xf32>
    %cst_10 = arith.constant 9.99999974E-6 : f32
    %18 = vector.broadcast %cst_10 : f32 to vector<32x1xf32>
    %19 = arith.addf %15, %18 : vector<32x1xf32>
    %20 = math.rsqrt %19 : vector<32x1xf32>
    %21 = vector.broadcast %20 : vector<32x1xf32> to vector<32x32xf32>
    %22 = arith.mulf %17, %21 : vector<32x32xf32>
    %23 = vector.broadcast %3 : vector<1x32xf32> to vector<32x32xf32>
    %24 = arith.mulf %22, %23 : vector<32x32xf32>
    %25 = vector.broadcast %4 : vector<1x32xf32> to vector<32x32xf32>
    %26 = arith.addf %24, %25 : vector<32x32xf32>
    %27 = arith.truncf %26 : vector<32x32xf32> to vector<32x32xbf16>
    %c0_11 = arith.constant 0 : index
    %c0_12 = arith.constant 0 : index
    %c0_13 = arith.constant 0 : index
    %28 = vector.load %arg4[%c0_11, %c0_12, %c0_13] : memref<4x32x16xbf16, #tpu.memory_space<vmem>>, vector<1x32x16xbf16>
    %29 = vector.shape_cast %28 : vector<1x32x16xbf16> to vector<32x16xbf16>
    %cst_14 = arith.constant dense<0.000000e+00> : vector<32x16xf32>
    %30 = tpu.matmul %27, %29, %cst_14 {dimension_numbers = #tpu.dot_dimension_numbers<[1], [0], [0], [1], [0, 0, 1, 1], [], []>} : vector<32x32xbf16>, vector<32x16xbf16>, vector<32x16xf32> -> vector<32x16xf32>
    %31 = arith.truncf %30 : vector<32x16xf32> to vector<32x16xbf16>
    %c1 = arith.constant 1 : index
    %c0_15 = arith.constant 0 : index
    %c0_16 = arith.constant 0 : index
    %32 = vector.load %arg4[%c1, %c0_15, %c0_16] : memref<4x32x16xbf16, #tpu.memory_space<vmem>>, vector<1x32x16xbf16>
    %33 = vector.shape_cast %32 : vector<1x32x16xbf16> to vector<32x16xbf16>
    %cst_17 = arith.constant dense<0.000000e+00> : vector<32x16xf32>
    %34 = tpu.matmul %27, %33, %cst_17 {dimension_numbers = #tpu.dot_dimension_numbers<[1], [0], [0], [1], [0, 0, 1, 1], [], []>} : vector<32x32xbf16>, vector<32x16xbf16>, vector<32x16xf32> -> vector<32x16xf32>
    %35 = arith.truncf %34 : vector<32x16xf32> to vector<32x16xbf16>
    %c2 = arith.constant 2 : index
    %c0_18 = arith.constant 0 : index
    %c0_19 = arith.constant 0 : index
    %36 = vector.load %arg4[%c2, %c0_18, %c0_19] : memref<4x32x16xbf16, #tpu.memory_space<vmem>>, vector<1x32x16xbf16>
    %37 = vector.shape_cast %36 : vector<1x32x16xbf16> to vector<32x16xbf16>
    %cst_20 = arith.constant dense<0.000000e+00> : vector<32x16xf32>
    %38 = tpu.matmul %27, %37, %cst_20 {dimension_numbers = #tpu.dot_dimension_numbers<[1], [0], [0], [1], [0, 0, 1, 1], [], []>} : vector<32x32xbf16>, vector<32x16xbf16>, vector<32x16xf32> -> vector<32x16xf32>
    %39 = arith.truncf %38 : vector<32x16xf32> to vector<32x16xbf16>
    %c3 = arith.constant 3 : index
    %c0_21 = arith.constant 0 : index
    %c0_22 = arith.constant 0 : index
    %40 = vector.load %arg4[%c3, %c0_21, %c0_22] : memref<4x32x16xbf16, #tpu.memory_space<vmem>>, vector<1x32x16xbf16>
    %41 = vector.shape_cast %40 : vector<1x32x16xbf16> to vector<32x16xbf16>
    %cst_23 = arith.constant dense<0.000000e+00> : vector<32x16xf32>
    %42 = tpu.matmul %27, %41, %cst_23 {dimension_numbers = #tpu.dot_dimension_numbers<[1], [0], [0], [1], [0, 0, 1, 1], [], []>} : vector<32x32xbf16>, vector<32x16xbf16>, vector<32x16xf32> -> vector<32x16xf32>
    %43 = arith.truncf %42 : vector<32x16xf32> to vector<32x16xbf16>
    %c0_24 = arith.constant 0 : index
    %c0_25 = arith.constant 0 : index
    %c0_26 = arith.constant 0 : index
    %44 = vector.load %arg5[%c0_24, %c0_25, %c0_26] : memref<4x32x16xbf16, #tpu.memory_space<vmem>>, vector<1x32x16xbf16>
    %45 = vector.shape_cast %44 : vector<1x32x16xbf16> to vector<32x16xbf16>
    %cst_27 = arith.constant dense<0.000000e+00> : vector<32x16xf32>
    %46 = tpu.matmul %27, %45, %cst_27 {dimension_numbers = #tpu.dot_dimension_numbers<[1], [0], [0], [1], [0, 0, 1, 1], [], []>} : vector<32x32xbf16>, vector<32x16xbf16>, vector<32x16xf32> -> vector<32x16xf32>
    %47 = arith.truncf %46 : vector<32x16xf32> to vector<32x16xbf16>
    %c1_28 = arith.constant 1 : index
    %c0_29 = arith.constant 0 : index
    %c0_30 = arith.constant 0 : index
    %48 = vector.load %arg5[%c1_28, %c0_29, %c0_30] : memref<4x32x16xbf16, #tpu.memory_space<vmem>>, vector<1x32x16xbf16>
    %49 = vector.shape_cast %48 : vector<1x32x16xbf16> to vector<32x16xbf16>
    %cst_31 = arith.constant dense<0.000000e+00> : vector<32x16xf32>
    %50 = tpu.matmul %27, %49, %cst_31 {dimension_numbers = #tpu.dot_dimension_numbers<[1], [0], [0], [1], [0, 0, 1, 1], [], []>} : vector<32x32xbf16>, vector<32x16xbf16>, vector<32x16xf32> -> vector<32x16xf32>
    %51 = arith.truncf %50 : vector<32x16xf32> to vector<32x16xbf16>
    %c2_32 = arith.constant 2 : index
    %c0_33 = arith.constant 0 : index
    %c0_34 = arith.constant 0 : index
    %52 = vector.load %arg5[%c2_32, %c0_33, %c0_34] : memref<4x32x16xbf16, #tpu.memory_space<vmem>>, vector<1x32x16xbf16>
    %53 = vector.shape_cast %52 : vector<1x32x16xbf16> to vector<32x16xbf16>
    %cst_35 = arith.constant dense<0.000000e+00> : vector<32x16xf32>
    %54 = tpu.matmul %27, %53, %cst_35 {dimension_numbers = #tpu.dot_dimension_numbers<[1], [0], [0], [1], [0, 0, 1, 1], [], []>} : vector<32x32xbf16>, vector<32x16xbf16>, vector<32x16xf32> -> vector<32x16xf32>
    %55 = arith.truncf %54 : vector<32x16xf32> to vector<32x16xbf16>
    %c3_36 = arith.constant 3 : index
    %c0_37 = arith.constant 0 : index
    %c0_38 = arith.constant 0 : index
    %56 = vector.load %arg5[%c3_36, %c0_37, %c0_38] : memref<4x32x16xbf16, #tpu.memory_space<vmem>>, vector<1x32x16xbf16>
    %57 = vector.shape_cast %56 : vector<1x32x16xbf16> to vector<32x16xbf16>
    %cst_39 = arith.constant dense<0.000000e+00> : vector<32x16xf32>
    %58 = tpu.matmul %27, %57, %cst_39 {dimension_numbers = #tpu.dot_dimension_numbers<[1], [0], [0], [1], [0, 0, 1, 1], [], []>} : vector<32x32xbf16>, vector<32x16xbf16>, vector<32x16xf32> -> vector<32x16xf32>
    %59 = arith.truncf %58 : vector<32x16xf32> to vector<32x16xbf16>
    %c0_40 = arith.constant 0 : index
    %c0_41 = arith.constant 0 : index
    %c0_42 = arith.constant 0 : index
    %60 = vector.load %arg6[%c0_40, %c0_41, %c0_42] : memref<4x32x16xbf16, #tpu.memory_space<vmem>>, vector<1x32x16xbf16>
    %61 = vector.shape_cast %60 : vector<1x32x16xbf16> to vector<32x16xbf16>
    %cst_43 = arith.constant dense<0.000000e+00> : vector<32x16xf32>
    %62 = tpu.matmul %27, %61, %cst_43 {dimension_numbers = #tpu.dot_dimension_numbers<[1], [0], [0], [1], [0, 0, 1, 1], [], []>} : vector<32x32xbf16>, vector<32x16xbf16>, vector<32x16xf32> -> vector<32x16xf32>
    %63 = arith.truncf %62 : vector<32x16xf32> to vector<32x16xbf16>
    %c1_44 = arith.constant 1 : index
    %c0_45 = arith.constant 0 : index
    %c0_46 = arith.constant 0 : index
    %64 = vector.load %arg6[%c1_44, %c0_45, %c0_46] : memref<4x32x16xbf16, #tpu.memory_space<vmem>>, vector<1x32x16xbf16>
    %65 = vector.shape_cast %64 : vector<1x32x16xbf16> to vector<32x16xbf16>
    %cst_47 = arith.constant dense<0.000000e+00> : vector<32x16xf32>
    %66 = tpu.matmul %27, %65, %cst_47 {dimension_numbers = #tpu.dot_dimension_numbers<[1], [0], [0], [1], [0, 0, 1, 1], [], []>} : vector<32x32xbf16>, vector<32x16xbf16>, vector<32x16xf32> -> vector<32x16xf32>
    %67 = arith.truncf %66 : vector<32x16xf32> to vector<32x16xbf16>
    %c2_48 = arith.constant 2 : index
    %c0_49 = arith.constant 0 : index
    %c0_50 = arith.constant 0 : index
    %68 = vector.load %arg6[%c2_48, %c0_49, %c0_50] : memref<4x32x16xbf16, #tpu.memory_space<vmem>>, vector<1x32x16xbf16>
    %69 = vector.shape_cast %68 : vector<1x32x16xbf16> to vector<32x16xbf16>
    %cst_51 = arith.constant dense<0.000000e+00> : vector<32x16xf32>
    %70 = tpu.matmul %27, %69, %cst_51 {dimension_numbers = #tpu.dot_dimension_numbers<[1], [0], [0], [1], [0, 0, 1, 1], [], []>} : vector<32x32xbf16>, vector<32x16xbf16>, vector<32x16xf32> -> vector<32x16xf32>
    %71 = arith.truncf %70 : vector<32x16xf32> to vector<32x16xbf16>
    %c3_52 = arith.constant 3 : index
    %c0_53 = arith.constant 0 : index
    %c0_54 = arith.constant 0 : index
    %72 = vector.load %arg6[%c3_52, %c0_53, %c0_54] : memref<4x32x16xbf16, #tpu.memory_space<vmem>>, vector<1x32x16xbf16>
    %73 = vector.shape_cast %72 : vector<1x32x16xbf16> to vector<32x16xbf16>
    %cst_55 = arith.constant dense<0.000000e+00> : vector<32x16xf32>
    %74 = tpu.matmul %27, %73, %cst_55 {dimension_numbers = #tpu.dot_dimension_numbers<[1], [0], [0], [1], [0, 0, 1, 1], [], []>} : vector<32x32xbf16>, vector<32x16xbf16>, vector<32x16xf32> -> vector<32x16xf32>
    %75 = arith.truncf %74 : vector<32x16xf32> to vector<32x16xbf16>
    %c0_56 = arith.constant 0 : index
    %c0_57 = arith.constant 0 : index
    %c0_58 = arith.constant 0 : index
    %76 = vector.load %arg7[%c0_56, %c0_57, %c0_58] : memref<4x16x32xbf16, #tpu.memory_space<vmem>>, vector<1x16x32xbf16>
    %77 = vector.shape_cast %76 : vector<1x16x32xbf16> to vector<16x32xbf16>
    %c1_59 = arith.constant 1 : index
    %c0_60 = arith.constant 0 : index
    %c0_61 = arith.constant 0 : index
    %78 = vector.load %arg7[%c1_59, %c0_60, %c0_61] : memref<4x16x32xbf16, #tpu.memory_space<vmem>>, vector<1x16x32xbf16>
    %79 = vector.shape_cast %78 : vector<1x16x32xbf16> to vector<16x32xbf16>
    %c2_62 = arith.constant 2 : index
    %c0_63 = arith.constant 0 : index
    %c0_64 = arith.constant 0 : index
    %80 = vector.load %arg7[%c2_62, %c0_63, %c0_64] : memref<4x16x32xbf16, #tpu.memory_space<vmem>>, vector<1x16x32xbf16>
    %81 = vector.shape_cast %80 : vector<1x16x32xbf16> to vector<16x32xbf16>
    %c3_65 = arith.constant 3 : index
    %c0_66 = arith.constant 0 : index
    %c0_67 = arith.constant 0 : index
    %82 = vector.load %arg7[%c3_65, %c0_66, %c0_67] : memref<4x16x32xbf16, #tpu.memory_space<vmem>>, vector<1x16x32xbf16>
    %83 = vector.shape_cast %82 : vector<1x16x32xbf16> to vector<16x32xbf16>
    %c0_68 = arith.constant 0 : index
    %c0_69 = arith.constant 0 : index
    %84 = vector.load %arg8[%c0_68, %c0_69] : memref<1x32xf32, #tpu.memory_space<vmem>>, vector<1x32xf32>
    %85 = vector.shape_cast %84 : vector<1x32xf32> to vector<1x32xf32>
    %86 = vector.broadcast %85 : vector<1x32xf32> to vector<16x32xf32>
    %87 = vector.extract_strided_slice %31 {offsets = [0, 0], sizes = [16, 16], strides = [1, 1]} : vector<32x16xbf16> to vector<16x16xbf16>
    %88 = vector.extract_strided_slice %47 {offsets = [0, 0], sizes = [16, 16], strides = [1, 1]} : vector<32x16xbf16> to vector<16x16xbf16>
    %89 = vector.extract_strided_slice %63 {offsets = [0, 0], sizes = [16, 16], strides = [1, 1]} : vector<32x16xbf16> to vector<16x16xbf16>
    %cst_70 = arith.constant dense<0.000000e+00> : vector<16x16xf32>
    %90 = tpu.matmul %87, %88, %cst_70 {dimension_numbers = #tpu.dot_dimension_numbers<[1], [1], [0], [0], [0, 0, 1, 0], [], []>} : vector<16x16xbf16>, vector<16x16xbf16>, vector<16x16xf32> -> vector<16x16xf32>
    %cst_71 = arith.constant dense<0xFF800000> : vector<16xf32>
    %91 = vector.multi_reduction <maximumf>, %90, %cst_71 [1] : vector<16x16xf32> to vector<16xf32>
    %92 = vector.shape_cast %91 : vector<16xf32> to vector<16x1xf32>
    %93 = vector.broadcast %92 : vector<16x1xf32> to vector<16x16xf32>
    %94 = arith.subf %90, %93 : vector<16x16xf32>
    %95 = math.exp %94 : vector<16x16xf32>
    %cst_72 = arith.constant dense<0.000000e+00> : vector<16xf32>
    %96 = vector.multi_reduction <add>, %95, %cst_72 [1] : vector<16x16xf32> to vector<16xf32>
    %97 = vector.shape_cast %96 : vector<16xf32> to vector<16x1xf32>
    %98 = tpu.reciprocal %97 {approx = true} : vector<16x1xf32> -> vector<16x1xf32>
    %99 = vector.broadcast %98 : vector<16x1xf32> to vector<16x16xf32>
    %100 = arith.mulf %95, %99 : vector<16x16xf32>
    %101 = arith.truncf %100 : vector<16x16xf32> to vector<16x16xbf16>
    %cst_73 = arith.constant dense<0.000000e+00> : vector<16x16xf32>
    %102 = tpu.matmul %101, %89, %cst_73 {dimension_numbers = #tpu.dot_dimension_numbers<[1], [0], [0], [1], [0, 0, 1, 1], [], []>} : vector<16x16xbf16>, vector<16x16xbf16>, vector<16x16xf32> -> vector<16x16xf32>
    %103 = arith.truncf %102 : vector<16x16xf32> to vector<16x16xbf16>
    %cst_74 = arith.constant dense<0.000000e+00> : vector<16x32xf32>
    %104 = tpu.matmul %103, %77, %cst_74 {dimension_numbers = #tpu.dot_dimension_numbers<[1], [0], [0], [1], [0, 0, 1, 1], [], []>} : vector<16x16xbf16>, vector<16x32xbf16>, vector<16x32xf32> -> vector<16x32xf32>
    %105 = arith.addf %86, %104 : vector<16x32xf32>
    %106 = vector.extract_strided_slice %35 {offsets = [0, 0], sizes = [16, 16], strides = [1, 1]} : vector<32x16xbf16> to vector<16x16xbf16>
    %107 = vector.extract_strided_slice %51 {offsets = [0, 0], sizes = [16, 16], strides = [1, 1]} : vector<32x16xbf16> to vector<16x16xbf16>
    %108 = vector.extract_strided_slice %67 {offsets = [0, 0], sizes = [16, 16], strides = [1, 1]} : vector<32x16xbf16> to vector<16x16xbf16>
    %cst_75 = arith.constant dense<0.000000e+00> : vector<16x16xf32>
    %109 = tpu.matmul %106, %107, %cst_75 {dimension_numbers = #tpu.dot_dimension_numbers<[1], [1], [0], [0], [0, 0, 1, 0], [], []>} : vector<16x16xbf16>, vector<16x16xbf16>, vector<16x16xf32> -> vector<16x16xf32>
    %cst_76 = arith.constant dense<0xFF800000> : vector<16xf32>
    %110 = vector.multi_reduction <maximumf>, %109, %cst_76 [1] : vector<16x16xf32> to vector<16xf32>
    %111 = vector.shape_cast %110 : vector<16xf32> to vector<16x1xf32>
    %112 = vector.broadcast %111 : vector<16x1xf32> to vector<16x16xf32>
    %113 = arith.subf %109, %112 : vector<16x16xf32>
    %114 = math.exp %113 : vector<16x16xf32>
    %cst_77 = arith.constant dense<0.000000e+00> : vector<16xf32>
    %115 = vector.multi_reduction <add>, %114, %cst_77 [1] : vector<16x16xf32> to vector<16xf32>
    %116 = vector.shape_cast %115 : vector<16xf32> to vector<16x1xf32>
    %117 = tpu.reciprocal %116 {approx = true} : vector<16x1xf32> -> vector<16x1xf32>
    %118 = vector.broadcast %117 : vector<16x1xf32> to vector<16x16xf32>
    %119 = arith.mulf %114, %118 : vector<16x16xf32>
    %120 = arith.truncf %119 : vector<16x16xf32> to vector<16x16xbf16>
    %cst_78 = arith.constant dense<0.000000e+00> : vector<16x16xf32>
    %121 = tpu.matmul %120, %108, %cst_78 {dimension_numbers = #tpu.dot_dimension_numbers<[1], [0], [0], [1], [0, 0, 1, 1], [], []>} : vector<16x16xbf16>, vector<16x16xbf16>, vector<16x16xf32> -> vector<16x16xf32>
    %122 = arith.truncf %121 : vector<16x16xf32> to vector<16x16xbf16>
    %cst_79 = arith.constant dense<0.000000e+00> : vector<16x32xf32>
    %123 = tpu.matmul %122, %79, %cst_79 {dimension_numbers = #tpu.dot_dimension_numbers<[1], [0], [0], [1], [0, 0, 1, 1], [], []>} : vector<16x16xbf16>, vector<16x32xbf16>, vector<16x32xf32> -> vector<16x32xf32>
    %124 = arith.addf %105, %123 : vector<16x32xf32>
    %125 = vector.extract_strided_slice %39 {offsets = [0, 0], sizes = [16, 16], strides = [1, 1]} : vector<32x16xbf16> to vector<16x16xbf16>
    %126 = vector.extract_strided_slice %55 {offsets = [0, 0], sizes = [16, 16], strides = [1, 1]} : vector<32x16xbf16> to vector<16x16xbf16>
    %127 = vector.extract_strided_slice %71 {offsets = [0, 0], sizes = [16, 16], strides = [1, 1]} : vector<32x16xbf16> to vector<16x16xbf16>
    %cst_80 = arith.constant dense<0.000000e+00> : vector<16x16xf32>
    %128 = tpu.matmul %125, %126, %cst_80 {dimension_numbers = #tpu.dot_dimension_numbers<[1], [1], [0], [0], [0, 0, 1, 0], [], []>} : vector<16x16xbf16>, vector<16x16xbf16>, vector<16x16xf32> -> vector<16x16xf32>
    %cst_81 = arith.constant dense<0xFF800000> : vector<16xf32>
    %129 = vector.multi_reduction <maximumf>, %128, %cst_81 [1] : vector<16x16xf32> to vector<16xf32>
    %130 = vector.shape_cast %129 : vector<16xf32> to vector<16x1xf32>
    %131 = vector.broadcast %130 : vector<16x1xf32> to vector<16x16xf32>
    %132 = arith.subf %128, %131 : vector<16x16xf32>
    %133 = math.exp %132 : vector<16x16xf32>
    %cst_82 = arith.constant dense<0.000000e+00> : vector<16xf32>
    %134 = vector.multi_reduction <add>, %133, %cst_82 [1] : vector<16x16xf32> to vector<16xf32>
    %135 = vector.shape_cast %134 : vector<16xf32> to vector<16x1xf32>
    %136 = tpu.reciprocal %135 {approx = true} : vector<16x1xf32> -> vector<16x1xf32>
    %137 = vector.broadcast %136 : vector<16x1xf32> to vector<16x16xf32>
    %138 = arith.mulf %133, %137 : vector<16x16xf32>
    %139 = arith.truncf %138 : vector<16x16xf32> to vector<16x16xbf16>
    %cst_83 = arith.constant dense<0.000000e+00> : vector<16x16xf32>
    %140 = tpu.matmul %139, %127, %cst_83 {dimension_numbers = #tpu.dot_dimension_numbers<[1], [0], [0], [1], [0, 0, 1, 1], [], []>} : vector<16x16xbf16>, vector<16x16xbf16>, vector<16x16xf32> -> vector<16x16xf32>
    %141 = arith.truncf %140 : vector<16x16xf32> to vector<16x16xbf16>
    %cst_84 = arith.constant dense<0.000000e+00> : vector<16x32xf32>
    %142 = tpu.matmul %141, %81, %cst_84 {dimension_numbers = #tpu.dot_dimension_numbers<[1], [0], [0], [1], [0, 0, 1, 1], [], []>} : vector<16x16xbf16>, vector<16x32xbf16>, vector<16x32xf32> -> vector<16x32xf32>
    %143 = arith.addf %124, %142 : vector<16x32xf32>
    %144 = vector.extract_strided_slice %43 {offsets = [0, 0], sizes = [16, 16], strides = [1, 1]} : vector<32x16xbf16> to vector<16x16xbf16>
    %145 = vector.extract_strided_slice %59 {offsets = [0, 0], sizes = [16, 16], strides = [1, 1]} : vector<32x16xbf16> to vector<16x16xbf16>
    %146 = vector.extract_strided_slice %75 {offsets = [0, 0], sizes = [16, 16], strides = [1, 1]} : vector<32x16xbf16> to vector<16x16xbf16>
    %cst_85 = arith.constant dense<0.000000e+00> : vector<16x16xf32>
    %147 = tpu.matmul %144, %145, %cst_85 {dimension_numbers = #tpu.dot_dimension_numbers<[1], [1], [0], [0], [0, 0, 1, 0], [], []>} : vector<16x16xbf16>, vector<16x16xbf16>, vector<16x16xf32> -> vector<16x16xf32>
    %cst_86 = arith.constant dense<0xFF800000> : vector<16xf32>
    %148 = vector.multi_reduction <maximumf>, %147, %cst_86 [1] : vector<16x16xf32> to vector<16xf32>
    %149 = vector.shape_cast %148 : vector<16xf32> to vector<16x1xf32>
    %150 = vector.broadcast %149 : vector<16x1xf32> to vector<16x16xf32>
    %151 = arith.subf %147, %150 : vector<16x16xf32>
    %152 = math.exp %151 : vector<16x16xf32>
    %cst_87 = arith.constant dense<0.000000e+00> : vector<16xf32>
    %153 = vector.multi_reduction <add>, %152, %cst_87 [1] : vector<16x16xf32> to vector<16xf32>
    %154 = vector.shape_cast %153 : vector<16xf32> to vector<16x1xf32>
    %155 = tpu.reciprocal %154 {approx = true} : vector<16x1xf32> -> vector<16x1xf32>
    %156 = vector.broadcast %155 : vector<16x1xf32> to vector<16x16xf32>
    %157 = arith.mulf %152, %156 : vector<16x16xf32>
    %158 = arith.truncf %157 : vector<16x16xf32> to vector<16x16xbf16>
    %cst_88 = arith.constant dense<0.000000e+00> : vector<16x16xf32>
    %159 = tpu.matmul %158, %146, %cst_88 {dimension_numbers = #tpu.dot_dimension_numbers<[1], [0], [0], [1], [0, 0, 1, 1], [], []>} : vector<16x16xbf16>, vector<16x16xbf16>, vector<16x16xf32> -> vector<16x16xf32>
    %160 = arith.truncf %159 : vector<16x16xf32> to vector<16x16xbf16>
    %cst_89 = arith.constant dense<0.000000e+00> : vector<16x32xf32>
    %161 = tpu.matmul %160, %83, %cst_89 {dimension_numbers = #tpu.dot_dimension_numbers<[1], [0], [0], [1], [0, 0, 1, 1], [], []>} : vector<16x16xbf16>, vector<16x32xbf16>, vector<16x32xf32> -> vector<16x32xf32>
    %162 = arith.addf %143, %161 : vector<16x32xf32>
    %163 = vector.extract_strided_slice %31 {offsets = [16, 0], sizes = [16, 16], strides = [1, 1]} : vector<32x16xbf16> to vector<16x16xbf16>
    %164 = vector.extract_strided_slice %47 {offsets = [16, 0], sizes = [16, 16], strides = [1, 1]} : vector<32x16xbf16> to vector<16x16xbf16>
    %165 = vector.extract_strided_slice %63 {offsets = [16, 0], sizes = [16, 16], strides = [1, 1]} : vector<32x16xbf16> to vector<16x16xbf16>
    %cst_90 = arith.constant dense<0.000000e+00> : vector<16x16xf32>
    %166 = tpu.matmul %163, %164, %cst_90 {dimension_numbers = #tpu.dot_dimension_numbers<[1], [1], [0], [0], [0, 0, 1, 0], [], []>} : vector<16x16xbf16>, vector<16x16xbf16>, vector<16x16xf32> -> vector<16x16xf32>
    %cst_91 = arith.constant dense<0xFF800000> : vector<16xf32>
    %167 = vector.multi_reduction <maximumf>, %166, %cst_91 [1] : vector<16x16xf32> to vector<16xf32>
    %168 = vector.shape_cast %167 : vector<16xf32> to vector<16x1xf32>
    %169 = vector.broadcast %168 : vector<16x1xf32> to vector<16x16xf32>
    %170 = arith.subf %166, %169 : vector<16x16xf32>
    %171 = math.exp %170 : vector<16x16xf32>
    %cst_92 = arith.constant dense<0.000000e+00> : vector<16xf32>
    %172 = vector.multi_reduction <add>, %171, %cst_92 [1] : vector<16x16xf32> to vector<16xf32>
    %173 = vector.shape_cast %172 : vector<16xf32> to vector<16x1xf32>
    %174 = tpu.reciprocal %173 {approx = true} : vector<16x1xf32> -> vector<16x1xf32>
    %175 = vector.broadcast %174 : vector<16x1xf32> to vector<16x16xf32>
    %176 = arith.mulf %171, %175 : vector<16x16xf32>
    %177 = arith.truncf %176 : vector<16x16xf32> to vector<16x16xbf16>
    %cst_93 = arith.constant dense<0.000000e+00> : vector<16x16xf32>
    %178 = tpu.matmul %177, %165, %cst_93 {dimension_numbers = #tpu.dot_dimension_numbers<[1], [0], [0], [1], [0, 0, 1, 1], [], []>} : vector<16x16xbf16>, vector<16x16xbf16>, vector<16x16xf32> -> vector<16x16xf32>
    %179 = arith.truncf %178 : vector<16x16xf32> to vector<16x16xbf16>
    %cst_94 = arith.constant dense<0.000000e+00> : vector<16x32xf32>
    %180 = tpu.matmul %179, %77, %cst_94 {dimension_numbers = #tpu.dot_dimension_numbers<[1], [0], [0], [1], [0, 0, 1, 1], [], []>} : vector<16x16xbf16>, vector<16x32xbf16>, vector<16x32xf32> -> vector<16x32xf32>
    %181 = arith.addf %86, %180 : vector<16x32xf32>
    %182 = vector.extract_strided_slice %35 {offsets = [16, 0], sizes = [16, 16], strides = [1, 1]} : vector<32x16xbf16> to vector<16x16xbf16>
    %183 = vector.extract_strided_slice %51 {offsets = [16, 0], sizes = [16, 16], strides = [1, 1]} : vector<32x16xbf16> to vector<16x16xbf16>
    %184 = vector.extract_strided_slice %67 {offsets = [16, 0], sizes = [16, 16], strides = [1, 1]} : vector<32x16xbf16> to vector<16x16xbf16>
    %cst_95 = arith.constant dense<0.000000e+00> : vector<16x16xf32>
    %185 = tpu.matmul %182, %183, %cst_95 {dimension_numbers = #tpu.dot_dimension_numbers<[1], [1], [0], [0], [0, 0, 1, 0], [], []>} : vector<16x16xbf16>, vector<16x16xbf16>, vector<16x16xf32> -> vector<16x16xf32>
    %cst_96 = arith.constant dense<0xFF800000> : vector<16xf32>
    %186 = vector.multi_reduction <maximumf>, %185, %cst_96 [1] : vector<16x16xf32> to vector<16xf32>
    %187 = vector.shape_cast %186 : vector<16xf32> to vector<16x1xf32>
    %188 = vector.broadcast %187 : vector<16x1xf32> to vector<16x16xf32>
    %189 = arith.subf %185, %188 : vector<16x16xf32>
    %190 = math.exp %189 : vector<16x16xf32>
    %cst_97 = arith.constant dense<0.000000e+00> : vector<16xf32>
    %191 = vector.multi_reduction <add>, %190, %cst_97 [1] : vector<16x16xf32> to vector<16xf32>
    %192 = vector.shape_cast %191 : vector<16xf32> to vector<16x1xf32>
    %193 = tpu.reciprocal %192 {approx = true} : vector<16x1xf32> -> vector<16x1xf32>
    %194 = vector.broadcast %193 : vector<16x1xf32> to vector<16x16xf32>
    %195 = arith.mulf %190, %194 : vector<16x16xf32>
    %196 = arith.truncf %195 : vector<16x16xf32> to vector<16x16xbf16>
    %cst_98 = arith.constant dense<0.000000e+00> : vector<16x16xf32>
    %197 = tpu.matmul %196, %184, %cst_98 {dimension_numbers = #tpu.dot_dimension_numbers<[1], [0], [0], [1], [0, 0, 1, 1], [], []>} : vector<16x16xbf16>, vector<16x16xbf16>, vector<16x16xf32> -> vector<16x16xf32>
    %198 = arith.truncf %197 : vector<16x16xf32> to vector<16x16xbf16>
    %cst_99 = arith.constant dense<0.000000e+00> : vector<16x32xf32>
    %199 = tpu.matmul %198, %79, %cst_99 {dimension_numbers = #tpu.dot_dimension_numbers<[1], [0], [0], [1], [0, 0, 1, 1], [], []>} : vector<16x16xbf16>, vector<16x32xbf16>, vector<16x32xf32> -> vector<16x32xf32>
    %200 = arith.addf %181, %199 : vector<16x32xf32>
    %201 = vector.extract_strided_slice %39 {offsets = [16, 0], sizes = [16, 16], strides = [1, 1]} : vector<32x16xbf16> to vector<16x16xbf16>
    %202 = vector.extract_strided_slice %55 {offsets = [16, 0], sizes = [16, 16], strides = [1, 1]} : vector<32x16xbf16> to vector<16x16xbf16>
    %203 = vector.extract_strided_slice %71 {offsets = [16, 0], sizes = [16, 16], strides = [1, 1]} : vector<32x16xbf16> to vector<16x16xbf16>
    %cst_100 = arith.constant dense<0.000000e+00> : vector<16x16xf32>
    %204 = tpu.matmul %201, %202, %cst_100 {dimension_numbers = #tpu.dot_dimension_numbers<[1], [1], [0], [0], [0, 0, 1, 0], [], []>} : vector<16x16xbf16>, vector<16x16xbf16>, vector<16x16xf32> -> vector<16x16xf32>
    %cst_101 = arith.constant dense<0xFF800000> : vector<16xf32>
    %205 = vector.multi_reduction <maximumf>, %204, %cst_101 [1] : vector<16x16xf32> to vector<16xf32>
    %206 = vector.shape_cast %205 : vector<16xf32> to vector<16x1xf32>
    %207 = vector.broadcast %206 : vector<16x1xf32> to vector<16x16xf32>
    %208 = arith.subf %204, %207 : vector<16x16xf32>
    %209 = math.exp %208 : vector<16x16xf32>
    %cst_102 = arith.constant dense<0.000000e+00> : vector<16xf32>
    %210 = vector.multi_reduction <add>, %209, %cst_102 [1] : vector<16x16xf32> to vector<16xf32>
    %211 = vector.shape_cast %210 : vector<16xf32> to vector<16x1xf32>
    %212 = tpu.reciprocal %211 {approx = true} : vector<16x1xf32> -> vector<16x1xf32>
    %213 = vector.broadcast %212 : vector<16x1xf32> to vector<16x16xf32>
    %214 = arith.mulf %209, %213 : vector<16x16xf32>
    %215 = arith.truncf %214 : vector<16x16xf32> to vector<16x16xbf16>
    %cst_103 = arith.constant dense<0.000000e+00> : vector<16x16xf32>
    %216 = tpu.matmul %215, %203, %cst_103 {dimension_numbers = #tpu.dot_dimension_numbers<[1], [0], [0], [1], [0, 0, 1, 1], [], []>} : vector<16x16xbf16>, vector<16x16xbf16>, vector<16x16xf32> -> vector<16x16xf32>
    %217 = arith.truncf %216 : vector<16x16xf32> to vector<16x16xbf16>
    %cst_104 = arith.constant dense<0.000000e+00> : vector<16x32xf32>
    %218 = tpu.matmul %217, %81, %cst_104 {dimension_numbers = #tpu.dot_dimension_numbers<[1], [0], [0], [1], [0, 0, 1, 1], [], []>} : vector<16x16xbf16>, vector<16x32xbf16>, vector<16x32xf32> -> vector<16x32xf32>
    %219 = arith.addf %200, %218 : vector<16x32xf32>
    %220 = vector.extract_strided_slice %43 {offsets = [16, 0], sizes = [16, 16], strides = [1, 1]} : vector<32x16xbf16> to vector<16x16xbf16>
    %221 = vector.extract_strided_slice %59 {offsets = [16, 0], sizes = [16, 16], strides = [1, 1]} : vector<32x16xbf16> to vector<16x16xbf16>
    %222 = vector.extract_strided_slice %75 {offsets = [16, 0], sizes = [16, 16], strides = [1, 1]} : vector<32x16xbf16> to vector<16x16xbf16>
    %cst_105 = arith.constant dense<0.000000e+00> : vector<16x16xf32>
    %223 = tpu.matmul %220, %221, %cst_105 {dimension_numbers = #tpu.dot_dimension_numbers<[1], [1], [0], [0], [0, 0, 1, 0], [], []>} : vector<16x16xbf16>, vector<16x16xbf16>, vector<16x16xf32> -> vector<16x16xf32>
    %cst_106 = arith.constant dense<0xFF800000> : vector<16xf32>
    %224 = vector.multi_reduction <maximumf>, %223, %cst_106 [1] : vector<16x16xf32> to vector<16xf32>
    %225 = vector.shape_cast %224 : vector<16xf32> to vector<16x1xf32>
    %226 = vector.broadcast %225 : vector<16x1xf32> to vector<16x16xf32>
    %227 = arith.subf %223, %226 : vector<16x16xf32>
    %228 = math.exp %227 : vector<16x16xf32>
    %cst_107 = arith.constant dense<0.000000e+00> : vector<16xf32>
    %229 = vector.multi_reduction <add>, %228, %cst_107 [1] : vector<16x16xf32> to vector<16xf32>
    %230 = vector.shape_cast %229 : vector<16xf32> to vector<16x1xf32>
    %231 = tpu.reciprocal %230 {approx = true} : vector<16x1xf32> -> vector<16x1xf32>
    %232 = vector.broadcast %231 : vector<16x1xf32> to vector<16x16xf32>
    %233 = arith.mulf %228, %232 : vector<16x16xf32>
    %234 = arith.truncf %233 : vector<16x16xf32> to vector<16x16xbf16>
    %cst_108 = arith.constant dense<0.000000e+00> : vector<16x16xf32>
    %235 = tpu.matmul %234, %222, %cst_108 {dimension_numbers = #tpu.dot_dimension_numbers<[1], [0], [0], [1], [0, 0, 1, 1], [], []>} : vector<16x16xbf16>, vector<16x16xbf16>, vector<16x16xf32> -> vector<16x16xf32>
    %236 = arith.truncf %235 : vector<16x16xf32> to vector<16x16xbf16>
    %cst_109 = arith.constant dense<0.000000e+00> : vector<16x32xf32>
    %237 = tpu.matmul %236, %83, %cst_109 {dimension_numbers = #tpu.dot_dimension_numbers<[1], [0], [0], [1], [0, 0, 1, 1], [], []>} : vector<16x16xbf16>, vector<16x32xbf16>, vector<16x32xf32> -> vector<16x32xf32>
    %238 = arith.addf %219, %237 : vector<16x32xf32>
    %239 = tpu.concatenate %162, %238 in 0 : vector<16x32xf32>, vector<16x32xf32> -> vector<32x32xf32>
    %240 = arith.addf %2, %239 : vector<32x32xf32>
    %c0_110 = arith.constant 0 : index
    %c0_111 = arith.constant 0 : index
    %241 = vector.load %arg9[%c0_110, %c0_111] : memref<1x32xf32, #tpu.memory_space<vmem>>, vector<1x32xf32>
    %c0_112 = arith.constant 0 : index
    %c0_113 = arith.constant 0 : index
    %242 = vector.load %arg10[%c0_112, %c0_113] : memref<1x32xf32, #tpu.memory_space<vmem>>, vector<1x32xf32>
    %cst_114 = arith.constant dense<0.000000e+00> : vector<32xf32>
    %243 = vector.multi_reduction <add>, %240, %cst_114 [1] : vector<32x32xf32> to vector<32xf32>
    %244 = vector.shape_cast %243 : vector<32xf32> to vector<32x1xf32>
    %cst_115 = arith.constant 3.200000e+01 : f32
    %245 = vector.broadcast %cst_115 : f32 to vector<32x1xf32>
    %246 = arith.divf %244, %245 : vector<32x1xf32>
    %247 = vector.broadcast %246 : vector<32x1xf32> to vector<32x32xf32>
    %248 = arith.subf %240, %247 : vector<32x32xf32>
    %249 = arith.mulf %248, %248 : vector<32x32xf32>
    %cst_116 = arith.constant dense<0.000000e+00> : vector<32xf32>
    %250 = vector.multi_reduction <add>, %249, %cst_116 [1] : vector<32x32xf32> to vector<32xf32>
    %251 = vector.shape_cast %250 : vector<32xf32> to vector<32x1xf32>
    %cst_117 = arith.constant 3.200000e+01 : f32
    %252 = vector.broadcast %cst_117 : f32 to vector<32x1xf32>
    %253 = arith.divf %251, %252 : vector<32x1xf32>
    %254 = vector.broadcast %246 : vector<32x1xf32> to vector<32x32xf32>
    %255 = arith.subf %240, %254 : vector<32x32xf32>
    %cst_118 = arith.constant 9.99999974E-6 : f32
    %256 = vector.broadcast %cst_118 : f32 to vector<32x1xf32>
    %257 = arith.addf %253, %256 : vector<32x1xf32>
    %258 = math.rsqrt %257 : vector<32x1xf32>
    %259 = vector.broadcast %258 : vector<32x1xf32> to vector<32x32xf32>
    %260 = arith.mulf %255, %259 : vector<32x32xf32>
    %261 = vector.broadcast %241 : vector<1x32xf32> to vector<32x32xf32>
    %262 = arith.mulf %260, %261 : vector<32x32xf32>
    %263 = vector.broadcast %242 : vector<1x32xf32> to vector<32x32xf32>
    %264 = arith.addf %262, %263 : vector<32x32xf32>
    %c0_119 = arith.constant 0 : index
    %c0_120 = arith.constant 0 : index
    %265 = vector.load %arg11[%c0_119, %c0_120] : memref<32x128xbf16, #tpu.memory_space<vmem>>, vector<32x128xbf16>
    %c0_121 = arith.constant 0 : index
    %c0_122 = arith.constant 0 : index
    %266 = vector.load %arg12[%c0_121, %c0_122] : memref<1x128xf32, #tpu.memory_space<vmem>>, vector<1x128xf32>
    %c0_123 = arith.constant 0 : index
    %c0_124 = arith.constant 0 : index
    %267 = vector.load %arg13[%c0_123, %c0_124] : memref<32x128xbf16, #tpu.memory_space<vmem>>, vector<32x128xbf16>
    %c0_125 = arith.constant 0 : index
    %c0_126 = arith.constant 0 : index
    %268 = vector.load %arg14[%c0_125, %c0_126] : memref<1x128xf32, #tpu.memory_space<vmem>>, vector<1x128xf32>
    %c0_127 = arith.constant 0 : index
    %c0_128 = arith.constant 0 : index
    %269 = vector.load %arg15[%c0_127, %c0_128] : memref<128x32xbf16, #tpu.memory_space<vmem>>, vector<128x32xbf16>
    %c0_129 = arith.constant 0 : index
    %c0_130 = arith.constant 0 : index
    %270 = vector.load %arg16[%c0_129, %c0_130] : memref<1x32xf32, #tpu.memory_space<vmem>>, vector<1x32xf32>
    %271 = arith.truncf %264 : vector<32x32xf32> to vector<32x32xbf16>
    %cst_131 = arith.constant dense<0.000000e+00> : vector<32x128xf32>
    %272 = tpu.matmul %271, %265, %cst_131 {dimension_numbers = #tpu.dot_dimension_numbers<[1], [0], [0], [1], [0, 0, 1, 1], [], []>} : vector<32x32xbf16>, vector<32x128xbf16>, vector<32x128xf32> -> vector<32x128xf32>
    %273 = vector.broadcast %266 : vector<1x128xf32> to vector<32x128xf32>
    %274 = arith.addf %272, %273 : vector<32x128xf32>
    %cst_132 = arith.constant dense<0.000000e+00> : vector<32x128xf32>
    %275 = tpu.matmul %271, %267, %cst_132 {dimension_numbers = #tpu.dot_dimension_numbers<[1], [0], [0], [1], [0, 0, 1, 1], [], []>} : vector<32x32xbf16>, vector<32x128xbf16>, vector<32x128xf32> -> vector<32x128xf32>
    %276 = vector.broadcast %268 : vector<1x128xf32> to vector<32x128xf32>
    %277 = arith.addf %275, %276 : vector<32x128xf32>
    %cst_133 = arith.constant 5.000000e-01 : f32
    %278 = vector.broadcast %cst_133 : f32 to vector<32x128xf32>
    %279 = arith.mulf %278, %277 : vector<32x128xf32>
    %cst_134 = arith.constant 4.471500e-02 : f32
    %280 = vector.broadcast %cst_134 : f32 to vector<32x128xf32>
    %281 = arith.mulf %280, %277 : vector<32x128xf32>
    %282 = arith.mulf %281, %277 : vector<32x128xf32>
    %283 = arith.mulf %282, %277 : vector<32x128xf32>
    %284 = arith.addf %277, %283 : vector<32x128xf32>
    %cst_135 = arith.constant 0.797884583 : f32
    %285 = vector.broadcast %cst_135 : f32 to vector<32x128xf32>
    %286 = arith.mulf %285, %284 : vector<32x128xf32>
    %287 = math.tanh %286 : vector<32x128xf32>
    %cst_136 = arith.constant 1.000000e+00 : f32
    %288 = vector.broadcast %cst_136 : f32 to vector<32x128xf32>
    %289 = arith.addf %288, %287 : vector<32x128xf32>
    %290 = arith.mulf %279, %289 : vector<32x128xf32>
    %291 = arith.mulf %274, %290 : vector<32x128xf32>
    %292 = arith.truncf %291 : vector<32x128xf32> to vector<32x128xbf16>
    %cst_137 = arith.constant dense<0.000000e+00> : vector<32x32xf32>
    %293 = tpu.matmul %292, %269, %cst_137 {dimension_numbers = #tpu.dot_dimension_numbers<[1], [0], [0], [1], [0, 0, 1, 1], [], []>} : vector<32x128xbf16>, vector<128x32xbf16>, vector<32x32xf32> -> vector<32x32xf32>
    %294 = vector.broadcast %270 : vector<1x32xf32> to vector<32x32xf32>
    %295 = arith.addf %293, %294 : vector<32x32xf32>
    %296 = arith.addf %240, %295 : vector<32x32xf32>
    %297 = vector.shape_cast %296 : vector<32x32xf32> to vector<2x16x32xf32>
    %c0_138 = arith.constant 0 : index
    %c0_139 = arith.constant 0 : index
    %c0_140 = arith.constant 0 : index
    %c0_141 = arith.constant 0 : index
    %298 = vector.load %arg17[%c0_138, %c0_139, %c0_140, %c0_141] : memref<1x2x16x32xf32, #tpu.memory_space<vmem>>, vector<1x2x16x32xf32>
    %299 = vector.shape_cast %298 : vector<1x2x16x32xf32> to vector<2x16x32xf32>
    %300 = vector.shape_cast %297 : vector<2x16x32xf32> to vector<1x2x16x32xf32>
    tpu.vector_store %arg17[%c0_138, %c0_139, %c0_140, %c0_141], %300 {strides = array<i32>} : memref<1x2x16x32xf32, #tpu.memory_space<vmem>>, vector<1x2x16x32xf32>,
    return
  }
  func.func @transform_0(%arg0: i32) -> (i32, i32, i32, i32) {
    %c0_i32 = arith.constant 0 : i32
    %c0_i32_0 = arith.constant 0 : i32
    %c0_i32_1 = arith.constant 0 : i32
    %c0_i32_2 = arith.constant 0 : i32
    return %arg0, %c0_i32, %c0_i32_0, %c0_i32_1 : i32, i32, i32, i32
  }
  func.func @transform_1(%arg0: i32) -> (i32, i32) {
    %c0_i32 = arith.constant 0 : i32
    %c0_i32_0 = arith.constant 0 : i32
    %c0_i32_1 = arith.constant 0 : i32
    return %c0_i32, %c0_i32_0 : i32, i32
  }
  func.func @transform_2(%arg0: i32) -> (i32, i32) {
    %c0_i32 = arith.constant 0 : i32
    %c0_i32_0 = arith.constant 0 : i32
    %c0_i32_1 = arith.constant 0 : i32
    return %c0_i32, %c0_i32_0 : i32, i32
  }
  func.func @transform_3(%arg0: i32) -> (i32, i32, i32) {
    %c0_i32 = arith.constant 0 : i32
    %c0_i32_0 = arith.constant 0 : i32
    %c0_i32_1 = arith.constant 0 : i32
    %c0_i32_2 = arith.constant 0 : i32
    return %c0_i32, %c0_i32_0, %c0_i32_1 : i32, i32, i32
  }
  func.func @transform_4(%arg0: i32) -> (i32, i32, i32) {
    %c0_i32 = arith.constant 0 : i32
    %c0_i32_0 = arith.constant 0 : i32
    %c0_i32_1 = arith.constant 0 : i32
    %c0_i32_2 = arith.constant 0 : i32
    return %c0_i32, %c0_i32_0, %c0_i32_1 : i32, i32, i32
  }
  func.func @transform_5(%arg0: i32) -> (i32, i32, i32) {
    %c0_i32 = arith.constant 0 : i32
    %c0_i32_0 = arith.constant 0 : i32
    %c0_i32_1 = arith.constant 0 : i32
    %c0_i32_2 = arith.constant 0 : i32
    return %c0_i32, %c0_i32_0, %c0_i32_1 : i32, i32, i32
  }
  func.func @transform_6(%arg0: i32) -> (i32, i32, i32) {
    %c0_i32 = arith.constant 0 : i32
    %c0_i32_0 = arith.constant 0 : i32
    %c0_i32_1 = arith.constant 0 : i32
    %c0_i32_2 = arith.constant 0 : i32
    return %c0_i32, %c0_i32_0, %c0_i32_1 : i32, i32, i32
  }
  func.func @transform_7(%arg0: i32) -> (i32, i32) {
    %c0_i32 = arith.constant 0 : i32
    %c0_i32_0 = arith.constant 0 : i32
    %c0_i32_1 = arith.constant 0 : i32
    return %c0_i32, %c0_i32_0 : i32, i32
  }
  func.func @transform_8(%arg0: i32) -> (i32, i32) {
    %c0_i32 = arith.constant 0 : i32
    %c0_i32_0 = arith.constant 0 : i32
    %c0_i32_1 = arith.constant 0 : i32
    return %c0_i32, %c0_i32_0 : i32, i32
  }
  func.func @transform_9(%arg0: i32) -> (i32, i32) {
    %c0_i32 = arith.constant 0 : i32
    %c0_i32_0 = arith.constant 0 : i32
    %c0_i32_1 = arith.constant 0 : i32
    return %c0_i32, %c0_i32_0 : i32, i32
  }
  func.func @transform_10(%arg0: i32) -> (i32, i32) {
    %c0_i32 = arith.constant 0 : i32
    %c0_i32_0 = arith.constant 0 : i32
    %c0_i32_1 = arith.constant 0 : i32
    return %c0_i32, %c0_i32_0 : i32, i32
  }
  func.func @transform_11(%arg0: i32) -> (i32, i32) {
    %c0_i32 = arith.constant 0 : i32
    %c0_i32_0 = arith.constant 0 : i32
    %c0_i32_1 = arith.constant 0 : i32
    return %c0_i32, %c0_i32_0 : i32, i32
  }
  func.func @transform_12(%arg0: i32) -> (i32, i32) {
    %c0_i32 = arith.constant 0 : i32
    %c0_i32_0 = arith.constant 0 : i32
    %c0_i32_1 = arith.constant 0 : i32
    return %c0_i32, %c0_i32_0 : i32, i32
  }
  func.func @transform_13(%arg0: i32) -> (i32, i32) {
    %c0_i32 = arith.constant 0 : i32
    %c0_i32_0 = arith.constant 0 : i32
    %c0_i32_1 = arith.constant 0 : i32
    return %c0_i32, %c0_i32_0 : i32, i32
  }
  func.func @transform_14(%arg0: i32) -> (i32, i32) {
    %c0_i32 = arith.constant 0 : i32
    %c0_i32_0 = arith.constant 0 : i32
    %c0_i32_1 = arith.constant 0 : i32
    return %c0_i32, %c0_i32_0 : i32, i32
  }
  func.func @transform_15(%arg0: i32) -> (i32, i32) {
    %c0_i32 = arith.constant 0 : i32
    %c0_i32_0 = arith.constant 0 : i32
    %c0_i32_1 = arith.constant 0 : i32
    return %c0_i32, %c0_i32_0 : i32, i32
  }
  func.func @transform_16(%arg0: i32) -> (i32, i32, i32, i32) {
    %c0_i32 = arith.constant 0 : i32
    %c0_i32_0 = arith.constant 0 : i32
    %c0_i32_1 = arith.constant 0 : i32
    %c0_i32_2 = arith.constant 0 : i32
    return %arg0, %c0_i32, %c0_i32_0, %c0_i32_1 : i32, i32, i32, i32
  }
}

module attributes {stable_mosaic.version = 11 : i64} {
  func.func @_latent_block_kernel(%arg0: i32, %arg1: memref<1x2x16x32xf32, #tpu.memory_space<vmem>>, %arg2: memref<1x32xf32, #tpu.memory_space<vmem>>, %arg3: memref<1x32xf32, #tpu.memory_space<vmem>>, %arg4: memref<4x32x16xbf16, #tpu.memory_space<vmem>>, %arg5: memref<4x32x16xbf16, #tpu.memory_space<vmem>>, %arg6: memref<4x32x16xbf16, #tpu.memory_space<vmem>>, %arg7: memref<4x16x32xbf16, #tpu.memory_space<vmem>>, %arg8: memref<1x32xf32, #tpu.memory_space<vmem>>, %arg9: memref<1x32xf32, #tpu.memory_space<vmem>>, %arg10: memref<1x32xf32, #tpu.memory_space<vmem>>, %arg11: memref<32x128xbf16, #tpu.memory_space<vmem>>, %arg12: memref<1x128xf32, #tpu.memory_space<vmem>>, %arg13: memref<32x128xbf16, #tpu.memory_space<vmem>>, %arg14: memref<1x128xf32, #tpu.memory_space<vmem>>, %arg15: memref<128x32xbf16, #tpu.memory_space<vmem>>, %arg16: memref<1x32xf32, #tpu.memory_space<vmem>>, %arg17: memref<1x2x16x32xf32, #tpu.memory_space<vmem>>) attributes {dimension_semantics = [#tpu.dimension_semantics<parallel>], iteration_bounds = array<i64: 1>, scalar_prefetch = 0 : i64, scratch_operands = 0 : i64, tpu.core_type = #tpu.core_type<tc>, window_params = [{transform_indices = @transform_0, window_bounds = array<i64: 1, 2, 16, 32>}, {pipeline_mode = #tpu.pipeline_mode<synchronous>, transform_indices = @transform_1, window_bounds = array<i64: 1, 32>}, {pipeline_mode = #tpu.pipeline_mode<synchronous>, transform_indices = @transform_2, window_bounds = array<i64: 1, 32>}, {pipeline_mode = #tpu.pipeline_mode<synchronous>, transform_indices = @transform_3, window_bounds = array<i64: 4, 32, 16>}, {pipeline_mode = #tpu.pipeline_mode<synchronous>, transform_indices = @transform_4, window_bounds = array<i64: 4, 32, 16>}, {pipeline_mode = #tpu.pipeline_mode<synchronous>, transform_indices = @transform_5, window_bounds = array<i64: 4, 32, 16>}, {pipeline_mode = #tpu.pipeline_mode<synchronous>, transform_indices = @transform_6, window_bounds = array<i64: 4, 16, 32>}, {pipeline_mode = #tpu.pipeline_mode<synchronous>, transform_indices = @transform_7, window_bounds = array<i64: 1, 32>}, {pipeline_mode = #tpu.pipeline_mode<synchronous>, transform_indices = @transform_8, window_bounds = array<i64: 1, 32>}, {pipeline_mode = #tpu.pipeline_mode<synchronous>, transform_indices = @transform_9, window_bounds = array<i64: 1, 32>}, {pipeline_mode = #tpu.pipeline_mode<synchronous>, transform_indices = @transform_10, window_bounds = array<i64: 32, 128>}, {pipeline_mode = #tpu.pipeline_mode<synchronous>, transform_indices = @transform_11, window_bounds = array<i64: 1, 128>}, {pipeline_mode = #tpu.pipeline_mode<synchronous>, transform_indices = @transform_12, window_bounds = array<i64: 32, 128>}, {pipeline_mode = #tpu.pipeline_mode<synchronous>, transform_indices = @transform_13, window_bounds = array<i64: 1, 128>}, {pipeline_mode = #tpu.pipeline_mode<synchronous>, transform_indices = @transform_14, window_bounds = array<i64: 128, 32>}, {pipeline_mode = #tpu.pipeline_mode<synchronous>, transform_indices = @transform_15, window_bounds = array<i64: 1, 32>}, {transform_indices = @transform_16, window_bounds = array<i64: 1, 2, 16, 32>}]} {
    %c0 = arith.constant 0 : index
    %c0_0 = arith.constant 0 : index
    %c0_1 = arith.constant 0 : index
    %c0_2 = arith.constant 0 : index
    %0 = vector.load %arg1[%c0, %c0_0, %c0_1, %c0_2] : memref<1x2x16x32xf32, #tpu.memory_space<vmem>>, vector<1x2x16x32xf32>
    %1 = vector.shape_cast %0 : vector<1x2x16x32xf32> to vector<2x16x32xf32>
    %2 = vector.shape_cast %1 : vector<2x16x32xf32> to vector<32x32xf32>
    %c0_3 = arith.constant 0 : index
    %c0_4 = arith.constant 0 : index
    %3 = vector.load %arg2[%c0_3, %c0_4] : memref<1x32xf32, #tpu.memory_space<vmem>>, vector<1x32xf32>
    %c0_5 = arith.constant 0 : index
    %c0_6 = arith.constant 0 : index
    %4 = vector.load %arg3[%c0_5, %c0_6] : memref<1x32xf32, #tpu.memory_space<vmem>>, vector<1x32xf32>
    %cst = arith.constant dense<0.000000e+00> : vector<32xf32>
    %5 = vector.multi_reduction <add>, %2, %cst [1] : vector<32x32xf32> to vector<32xf32>
    %6 = vector.shape_cast %5 : vector<32xf32> to vector<32x1xf32>
    %cst_7 = arith.constant 3.200000e+01 : f32
    %7 = vector.broadcast %cst_7 : f32 to vector<32x1xf32>
    %8 = arith.divf %6, %7 : vector<32x1xf32>
    %9 = vector.broadcast %8 : vector<32x1xf32> to vector<32x32xf32>
    %10 = arith.subf %2, %9 : vector<32x32xf32>
    %11 = arith.mulf %10, %10 : vector<32x32xf32>
    %cst_8 = arith.constant dense<0.000000e+00> : vector<32xf32>
    %12 = vector.multi_reduction <add>, %11, %cst_8 [1] : vector<32x32xf32> to vector<32xf32>
    %13 = vector.shape_cast %12 : vector<32xf32> to vector<32x1xf32>
    %cst_9 = arith.constant 3.200000e+01 : f32
    %14 = vector.broadcast %cst_9 : f32 to vector<32x1xf32>
    %15 = arith.divf %13, %14 : vector<32x1xf32>
    %16 = vector.broadcast %8 : vector<32x1xf32> to vector<32x32xf32>
    %17 = arith.subf %2, %16 : vector<32x32xf32>
    %cst_10 = arith.constant 9.99999974E-6 : f32
    %18 = vector.broadcast %cst_10 : f32 to vector<32x1xf32>
    %19 = arith.addf %15, %18 : vector<32x1xf32>
    %20 = math.rsqrt %19 : vector<32x1xf32>
    %21 = vector.broadcast %20 : vector<32x1xf32> to vector<32x32xf32>
    %22 = arith.mulf %17, %21 : vector<32x32xf32>
    %23 = vector.broadcast %3 : vector<1x32xf32> to vector<32x32xf32>
    %24 = arith.mulf %22, %23 : vector<32x32xf32>
    %25 = vector.broadcast %4 : vector<1x32xf32> to vector<32x32xf32>
    %26 = arith.addf %24, %25 : vector<32x32xf32>
    %27 = arith.truncf %26 : vector<32x32xf32> to vector<32x32xbf16>
    %c0_11 = arith.constant 0 : index
    %c0_12 = arith.constant 0 : index
    %c0_13 = arith.constant 0 : index
    %28 = vector.load %arg4[%c0_11, %c0_12, %c0_13] : memref<4x32x16xbf16, #tpu.memory_space<vmem>>, vector<1x32x16xbf16>
    %29 = vector.shape_cast %28 : vector<1x32x16xbf16> to vector<32x16xbf16>
    %cst_14 = arith.constant dense<0.000000e+00> : vector<32x16xf32>
    %30 = tpu.matmul %27, %29, %cst_14 {dimension_numbers = #tpu.dot_dimension_numbers<[1], [0], [0], [1], [0, 0, 1, 1], [], []>} : vector<32x32xbf16>, vector<32x16xbf16>, vector<32x16xf32> -> vector<32x16xf32>
    %31 = arith.truncf %30 : vector<32x16xf32> to vector<32x16xbf16>
    %c1 = arith.constant 1 : index
    %c0_15 = arith.constant 0 : index
    %c0_16 = arith.constant 0 : index
    %32 = vector.load %arg4[%c1, %c0_15, %c0_16] : memref<4x32x16xbf16, #tpu.memory_space<vmem>>, vector<1x32x16xbf16>
    %33 = vector.shape_cast %32 : vector<1x32x16xbf16> to vector<32x16xbf16>
    %cst_17 = arith.constant dense<0.000000e+00> : vector<32x16xf32>
    %34 = tpu.matmul %27, %33, %cst_17 {dimension_numbers = #tpu.dot_dimension_numbers<[1], [0], [0], [1], [0, 0, 1, 1], [], []>} : vector<32x32xbf16>, vector<32x16xbf16>, vector<32x16xf32> -> vector<32x16xf32>
    %35 = arith.truncf %34 : vector<32x16xf32> to vector<32x16xbf16>
    %c2 = arith.constant 2 : index
    %c0_18 = arith.constant 0 : index
    %c0_19 = arith.constant 0 : index
    %36 = vector.load %arg4[%c2, %c0_18, %c0_19] : memref<4x32x16xbf16, #tpu.memory_space<vmem>>, vector<1x32x16xbf16>
    %37 = vector.shape_cast %36 : vector<1x32x16xbf16> to vector<32x16xbf16>
    %cst_20 = arith.constant dense<0.000000e+00> : vector<32x16xf32>
    %38 = tpu.matmul %27, %37, %cst_20 {dimension_numbers = #tpu.dot_dimension_numbers<[1], [0], [0], [1], [0, 0, 1, 1], [], []>} : vector<32x32xbf16>, vector<32x16xbf16>, vector<32x16xf32> -> vector<32x16xf32>
    %39 = arith.truncf %38 : vector<32x16xf32> to vector<32x16xbf16>
    %c3 = arith.constant 3 : index
    %c0_21 = arith.constant 0 : index
    %c0_22 = arith.constant 0 : index
    %40 = vector.load %arg4[%c3, %c0_21, %c0_22] : memref<4x32x16xbf16, #tpu.memory_space<vmem>>, vector<1x32x16xbf16>
    %41 = vector.shape_cast %40 : vector<1x32x16xbf16> to vector<32x16xbf16>
    %cst_23 = arith.constant dense<0.000000e+00> : vector<32x16xf32>
    %42 = tpu.matmul %27, %41, %cst_23 {dimension_numbers = #tpu.dot_dimension_numbers<[1], [0], [0], [1], [0, 0, 1, 1], [], []>} : vector<32x32xbf16>, vector<32x16xbf16>, vector<32x16xf32> -> vector<32x16xf32>
    %43 = arith.truncf %42 : vector<32x16xf32> to vector<32x16xbf16>
    %c0_24 = arith.constant 0 : index
    %c0_25 = arith.constant 0 : index
    %c0_26 = arith.constant 0 : index
    %44 = vector.load %arg5[%c0_24, %c0_25, %c0_26] : memref<4x32x16xbf16, #tpu.memory_space<vmem>>, vector<1x32x16xbf16>
    %45 = vector.shape_cast %44 : vector<1x32x16xbf16> to vector<32x16xbf16>
    %cst_27 = arith.constant dense<0.000000e+00> : vector<32x16xf32>
    %46 = tpu.matmul %27, %45, %cst_27 {dimension_numbers = #tpu.dot_dimension_numbers<[1], [0], [0], [1], [0, 0, 1, 1], [], []>} : vector<32x32xbf16>, vector<32x16xbf16>, vector<32x16xf32> -> vector<32x16xf32>
    %47 = arith.truncf %46 : vector<32x16xf32> to vector<32x16xbf16>
    %c1_28 = arith.constant 1 : index
    %c0_29 = arith.constant 0 : index
    %c0_30 = arith.constant 0 : index
    %48 = vector.load %arg5[%c1_28, %c0_29, %c0_30] : memref<4x32x16xbf16, #tpu.memory_space<vmem>>, vector<1x32x16xbf16>
    %49 = vector.shape_cast %48 : vector<1x32x16xbf16> to vector<32x16xbf16>
    %cst_31 = arith.constant dense<0.000000e+00> : vector<32x16xf32>
    %50 = tpu.matmul %27, %49, %cst_31 {dimension_numbers = #tpu.dot_dimension_numbers<[1], [0], [0], [1], [0, 0, 1, 1], [], []>} : vector<32x32xbf16>, vector<32x16xbf16>, vector<32x16xf32> -> vector<32x16xf32>
    %51 = arith.truncf %50 : vector<32x16xf32> to vector<32x16xbf16>
    %c2_32 = arith.constant 2 : index
    %c0_33 = arith.constant 0 : index
    %c0_34 = arith.constant 0 : index
    %52 = vector.load %arg5[%c2_32, %c0_33, %c0_34] : memref<4x32x16xbf16, #tpu.memory_space<vmem>>, vector<1x32x16xbf16>
    %53 = vector.shape_cast %52 : vector<1x32x16xbf16> to vector<32x16xbf16>
    %cst_35 = arith.constant dense<0.000000e+00> : vector<32x16xf32>
    %54 = tpu.matmul %27, %53, %cst_35 {dimension_numbers = #tpu.dot_dimension_numbers<[1], [0], [0], [1], [0, 0, 1, 1], [], []>} : vector<32x32xbf16>, vector<32x16xbf16>, vector<32x16xf32> -> vector<32x16xf32>
    %55 = arith.truncf %54 : vector<32x16xf32> to vector<32x16xbf16>
    %c3_36 = arith.constant 3 : index
    %c0_37 = arith.constant 0 : index
    %c0_38 = arith.constant 0 : index
    %56 = vector.load %arg5[%c3_36, %c0_37, %c0_38] : memref<4x32x16xbf16, #tpu.memory_space<vmem>>, vector<1x32x16xbf16>
    %57 = vector.shape_cast %56 : vector<1x32x16xbf16> to vector<32x16xbf16>
    %cst_39 = arith.constant dense<0.000000e+00> : vector<32x16xf32>
    %58 = tpu.matmul %27, %57, %cst_39 {dimension_numbers = #tpu.dot_dimension_numbers<[1], [0], [0], [1], [0, 0, 1, 1], [], []>} : vector<32x32xbf16>, vector<32x16xbf16>, vector<32x16xf32> -> vector<32x16xf32>
    %59 = arith.truncf %58 : vector<32x16xf32> to vector<32x16xbf16>
    %c0_40 = arith.constant 0 : index
    %c0_41 = arith.constant 0 : index
    %c0_42 = arith.constant 0 : index
    %60 = vector.load %arg6[%c0_40, %c0_41, %c0_42] : memref<4x32x16xbf16, #tpu.memory_space<vmem>>, vector<1x32x16xbf16>
    %61 = vector.shape_cast %60 : vector<1x32x16xbf16> to vector<32x16xbf16>
    %cst_43 = arith.constant dense<0.000000e+00> : vector<32x16xf32>
    %62 = tpu.matmul %27, %61, %cst_43 {dimension_numbers = #tpu.dot_dimension_numbers<[1], [0], [0], [1], [0, 0, 1, 1], [], []>} : vector<32x32xbf16>, vector<32x16xbf16>, vector<32x16xf32> -> vector<32x16xf32>
    %63 = arith.truncf %62 : vector<32x16xf32> to vector<32x16xbf16>
    %c1_44 = arith.constant 1 : index
    %c0_45 = arith.constant 0 : index
    %c0_46 = arith.constant 0 : index
    %64 = vector.load %arg6[%c1_44, %c0_45, %c0_46] : memref<4x32x16xbf16, #tpu.memory_space<vmem>>, vector<1x32x16xbf16>
    %65 = vector.shape_cast %64 : vector<1x32x16xbf16> to vector<32x16xbf16>
    %cst_47 = arith.constant dense<0.000000e+00> : vector<32x16xf32>
    %66 = tpu.matmul %27, %65, %cst_47 {dimension_numbers = #tpu.dot_dimension_numbers<[1], [0], [0], [1], [0, 0, 1, 1], [], []>} : vector<32x32xbf16>, vector<32x16xbf16>, vector<32x16xf32> -> vector<32x16xf32>
    %67 = arith.truncf %66 : vector<32x16xf32> to vector<32x16xbf16>
    %c2_48 = arith.constant 2 : index
    %c0_49 = arith.constant 0 : index
    %c0_50 = arith.constant 0 : index
    %68 = vector.load %arg6[%c2_48, %c0_49, %c0_50] : memref<4x32x16xbf16, #tpu.memory_space<vmem>>, vector<1x32x16xbf16>
    %69 = vector.shape_cast %68 : vector<1x32x16xbf16> to vector<32x16xbf16>
    %cst_51 = arith.constant dense<0.000000e+00> : vector<32x16xf32>
    %70 = tpu.matmul %27, %69, %cst_51 {dimension_numbers = #tpu.dot_dimension_numbers<[1], [0], [0], [1], [0, 0, 1, 1], [], []>} : vector<32x32xbf16>, vector<32x16xbf16>, vector<32x16xf32> -> vector<32x16xf32>
    %71 = arith.truncf %70 : vector<32x16xf32> to vector<32x16xbf16>
    %c3_52 = arith.constant 3 : index
    %c0_53 = arith.constant 0 : index
    %c0_54 = arith.constant 0 : index
    %72 = vector.load %arg6[%c3_52, %c0_53, %c0_54] : memref<4x32x16xbf16, #tpu.memory_space<vmem>>, vector<1x32x16xbf16>
    %73 = vector.shape_cast %72 : vector<1x32x16xbf16> to vector<32x16xbf16>
    %cst_55 = arith.constant dense<0.000000e+00> : vector<32x16xf32>
    %74 = tpu.matmul %27, %73, %cst_55 {dimension_numbers = #tpu.dot_dimension_numbers<[1], [0], [0], [1], [0, 0, 1, 1], [], []>} : vector<32x32xbf16>, vector<32x16xbf16>, vector<32x16xf32> -> vector<32x16xf32>
    %75 = arith.truncf %74 : vector<32x16xf32> to vector<32x16xbf16>
    %c0_56 = arith.constant 0 : index
    %c0_57 = arith.constant 0 : index
    %c0_58 = arith.constant 0 : index
    %76 = vector.load %arg7[%c0_56, %c0_57, %c0_58] : memref<4x16x32xbf16, #tpu.memory_space<vmem>>, vector<1x16x32xbf16>
    %77 = vector.shape_cast %76 : vector<1x16x32xbf16> to vector<16x32xbf16>
    %c1_59 = arith.constant 1 : index
    %c0_60 = arith.constant 0 : index
    %c0_61 = arith.constant 0 : index
    %78 = vector.load %arg7[%c1_59, %c0_60, %c0_61] : memref<4x16x32xbf16, #tpu.memory_space<vmem>>, vector<1x16x32xbf16>
    %79 = vector.shape_cast %78 : vector<1x16x32xbf16> to vector<16x32xbf16>
    %c2_62 = arith.constant 2 : index
    %c0_63 = arith.constant 0 : index
    %c0_64 = arith.constant 0 : index
    %80 = vector.load %arg7[%c2_62, %c0_63, %c0_64] : memref<4x16x32xbf16, #tpu.memory_space<vmem>>, vector<1x16x32xbf16>
    %81 = vector.shape_cast %80 : vector<1x16x32xbf16> to vector<16x32xbf16>
    %c3_65 = arith.constant 3 : index
    %c0_66 = arith.constant 0 : index
    %c0_67 = arith.constant 0 : index
    %82 = vector.load %arg7[%c3_65, %c0_66, %c0_67] : memref<4x16x32xbf16, #tpu.memory_space<vmem>>, vector<1x16x32xbf16>
    %83 = vector.shape_cast %82 : vector<1x16x32xbf16> to vector<16x32xbf16>
    %c0_68 = arith.constant 0 : index
    %c0_69 = arith.constant 0 : index
    %84 = vector.load %arg8[%c0_68, %c0_69] : memref<1x32xf32, #tpu.memory_space<vmem>>, vector<1x32xf32>
    %85 = vector.shape_cast %84 : vector<1x32xf32> to vector<1x32xf32>
    %86 = vector.broadcast %85 : vector<1x32xf32> to vector<16x32xf32>
    %87 = vector.extract_strided_slice %31 {offsets = [0, 0], sizes = [16, 16], strides = [1, 1]} : vector<32x16xbf16> to vector<16x16xbf16>
    %88 = vector.extract_strided_slice %47 {offsets = [0, 0], sizes = [16, 16], strides = [1, 1]} : vector<32x16xbf16> to vector<16x16xbf16>
    %89 = vector.extract_strided_slice %63 {offsets = [0, 0], sizes = [16, 16], strides = [1, 1]} : vector<32x16xbf16> to vector<16x16xbf16>
    %cst_70 = arith.constant dense<0.000000e+00> : vector<16x16xf32>
    %90 = tpu.matmul %87, %88, %cst_70 {dimension_numbers = #tpu.dot_dimension_numbers<[1], [1], [0], [0], [0, 0, 1, 0], [], []>} : vector<16x16xbf16>, vector<16x16xbf16>, vector<16x16xf32> -> vector<16x16xf32>
    %cst_71 = arith.constant dense<0xFF800000> : vector<16xf32>
    %91 = vector.multi_reduction <maximumf>, %90, %cst_71 [1] : vector<16x16xf32> to vector<16xf32>
    %92 = vector.shape_cast %91 : vector<16xf32> to vector<16x1xf32>
    %93 = vector.broadcast %92 : vector<16x1xf32> to vector<16x16xf32>
    %94 = arith.subf %90, %93 : vector<16x16xf32>
    %95 = math.exp %94 : vector<16x16xf32>
    %cst_72 = arith.constant dense<0.000000e+00> : vector<16xf32>
    %96 = vector.multi_reduction <add>, %95, %cst_72 [1] : vector<16x16xf32> to vector<16xf32>
    %97 = vector.shape_cast %96 : vector<16xf32> to vector<16x1xf32>
    %98 = tpu.reciprocal %97 {approx = true} : vector<16x1xf32> -> vector<16x1xf32>
    %99 = vector.broadcast %98 : vector<16x1xf32> to vector<16x16xf32>
    %100 = arith.mulf %95, %99 : vector<16x16xf32>
    %101 = arith.truncf %100 : vector<16x16xf32> to vector<16x16xbf16>
    %cst_73 = arith.constant dense<0.000000e+00> : vector<16x16xf32>
    %102 = tpu.matmul %101, %89, %cst_73 {dimension_numbers = #tpu.dot_dimension_numbers<[1], [0], [0], [1], [0, 0, 1, 1], [], []>} : vector<16x16xbf16>, vector<16x16xbf16>, vector<16x16xf32> -> vector<16x16xf32>
    %103 = arith.truncf %102 : vector<16x16xf32> to vector<16x16xbf16>
    %cst_74 = arith.constant dense<0.000000e+00> : vector<16x32xf32>
    %104 = tpu.matmul %103, %77, %cst_74 {dimension_numbers = #tpu.dot_dimension_numbers<[1], [0], [0], [1], [0, 0, 1, 1], [], []>} : vector<16x16xbf16>, vector<16x32xbf16>, vector<16x32xf32> -> vector<16x32xf32>
    %105 = arith.addf %86, %104 : vector<16x32xf32>
    %106 = vector.extract_strided_slice %35 {offsets = [0, 0], sizes = [16, 16], strides = [1, 1]} : vector<32x16xbf16> to vector<16x16xbf16>
    %107 = vector.extract_strided_slice %51 {offsets = [0, 0], sizes = [16, 16], strides = [1, 1]} : vector<32x16xbf16> to vector<16x16xbf16>
    %108 = vector.extract_strided_slice %67 {offsets = [0, 0], sizes = [16, 16], strides = [1, 1]} : vector<32x16xbf16> to vector<16x16xbf16>
    %cst_75 = arith.constant dense<0.000000e+00> : vector<16x16xf32>
    %109 = tpu.matmul %106, %107, %cst_75 {dimension_numbers = #tpu.dot_dimension_numbers<[1], [1], [0], [0], [0, 0, 1, 0], [], []>} : vector<16x16xbf16>, vector<16x16xbf16>, vector<16x16xf32> -> vector<16x16xf32>
    %cst_76 = arith.constant dense<0xFF800000> : vector<16xf32>
    %110 = vector.multi_reduction <maximumf>, %109, %cst_76 [1] : vector<16x16xf32> to vector<16xf32>
    %111 = vector.shape_cast %110 : vector<16xf32> to vector<16x1xf32>
    %112 = vector.broadcast %111 : vector<16x1xf32> to vector<16x16xf32>
    %113 = arith.subf %109, %112 : vector<16x16xf32>
    %114 = math.exp %113 : vector<16x16xf32>
    %cst_77 = arith.constant dense<0.000000e+00> : vector<16xf32>
    %115 = vector.multi_reduction <add>, %114, %cst_77 [1] : vector<16x16xf32> to vector<16xf32>
    %116 = vector.shape_cast %115 : vector<16xf32> to vector<16x1xf32>
    %117 = tpu.reciprocal %116 {approx = true} : vector<16x1xf32> -> vector<16x1xf32>
    %118 = vector.broadcast %117 : vector<16x1xf32> to vector<16x16xf32>
    %119 = arith.mulf %114, %118 : vector<16x16xf32>
    %120 = arith.truncf %119 : vector<16x16xf32> to vector<16x16xbf16>
    %cst_78 = arith.constant dense<0.000000e+00> : vector<16x16xf32>
    %121 = tpu.matmul %120, %108, %cst_78 {dimension_numbers = #tpu.dot_dimension_numbers<[1], [0], [0], [1], [0, 0, 1, 1], [], []>} : vector<16x16xbf16>, vector<16x16xbf16>, vector<16x16xf32> -> vector<16x16xf32>
    %122 = arith.truncf %121 : vector<16x16xf32> to vector<16x16xbf16>
    %cst_79 = arith.constant dense<0.000000e+00> : vector<16x32xf32>
    %123 = tpu.matmul %122, %79, %cst_79 {dimension_numbers = #tpu.dot_dimension_numbers<[1], [0], [0], [1], [0, 0, 1, 1], [], []>} : vector<16x16xbf16>, vector<16x32xbf16>, vector<16x32xf32> -> vector<16x32xf32>
    %124 = arith.addf %105, %123 : vector<16x32xf32>
    %125 = vector.extract_strided_slice %39 {offsets = [0, 0], sizes = [16, 16], strides = [1, 1]} : vector<32x16xbf16> to vector<16x16xbf16>
    %126 = vector.extract_strided_slice %55 {offsets = [0, 0], sizes = [16, 16], strides = [1, 1]} : vector<32x16xbf16> to vector<16x16xbf16>
    %127 = vector.extract_strided_slice %71 {offsets = [0, 0], sizes = [16, 16], strides = [1, 1]} : vector<32x16xbf16> to vector<16x16xbf16>
    %cst_80 = arith.constant dense<0.000000e+00> : vector<16x16xf32>
    %128 = tpu.matmul %125, %126, %cst_80 {dimension_numbers = #tpu.dot_dimension_numbers<[1], [1], [0], [0], [0, 0, 1, 0], [], []>} : vector<16x16xbf16>, vector<16x16xbf16>, vector<16x16xf32> -> vector<16x16xf32>
    %cst_81 = arith.constant dense<0xFF800000> : vector<16xf32>
    %129 = vector.multi_reduction <maximumf>, %128, %cst_81 [1] : vector<16x16xf32> to vector<16xf32>
    %130 = vector.shape_cast %129 : vector<16xf32> to vector<16x1xf32>
    %131 = vector.broadcast %130 : vector<16x1xf32> to vector<16x16xf32>
    %132 = arith.subf %128, %131 : vector<16x16xf32>
    %133 = math.exp %132 : vector<16x16xf32>
    %cst_82 = arith.constant dense<0.000000e+00> : vector<16xf32>
    %134 = vector.multi_reduction <add>, %133, %cst_82 [1] : vector<16x16xf32> to vector<16xf32>
    %135 = vector.shape_cast %134 : vector<16xf32> to vector<16x1xf32>
    %136 = tpu.reciprocal %135 {approx = true} : vector<16x1xf32> -> vector<16x1xf32>
    %137 = vector.broadcast %136 : vector<16x1xf32> to vector<16x16xf32>
    %138 = arith.mulf %133, %137 : vector<16x16xf32>
    %139 = arith.truncf %138 : vector<16x16xf32> to vector<16x16xbf16>
    %cst_83 = arith.constant dense<0.000000e+00> : vector<16x16xf32>
    %140 = tpu.matmul %139, %127, %cst_83 {dimension_numbers = #tpu.dot_dimension_numbers<[1], [0], [0], [1], [0, 0, 1, 1], [], []>} : vector<16x16xbf16>, vector<16x16xbf16>, vector<16x16xf32> -> vector<16x16xf32>
    %141 = arith.truncf %140 : vector<16x16xf32> to vector<16x16xbf16>
    %cst_84 = arith.constant dense<0.000000e+00> : vector<16x32xf32>
    %142 = tpu.matmul %141, %81, %cst_84 {dimension_numbers = #tpu.dot_dimension_numbers<[1], [0], [0], [1], [0, 0, 1, 1], [], []>} : vector<16x16xbf16>, vector<16x32xbf16>, vector<16x32xf32> -> vector<16x32xf32>
    %143 = arith.addf %124, %142 : vector<16x32xf32>
    %144 = vector.extract_strided_slice %43 {offsets = [0, 0], sizes = [16, 16], strides = [1, 1]} : vector<32x16xbf16> to vector<16x16xbf16>
    %145 = vector.extract_strided_slice %59 {offsets = [0, 0], sizes = [16, 16], strides = [1, 1]} : vector<32x16xbf16> to vector<16x16xbf16>
    %146 = vector.extract_strided_slice %75 {offsets = [0, 0], sizes = [16, 16], strides = [1, 1]} : vector<32x16xbf16> to vector<16x16xbf16>
    %cst_85 = arith.constant dense<0.000000e+00> : vector<16x16xf32>
    %147 = tpu.matmul %144, %145, %cst_85 {dimension_numbers = #tpu.dot_dimension_numbers<[1], [1], [0], [0], [0, 0, 1, 0], [], []>} : vector<16x16xbf16>, vector<16x16xbf16>, vector<16x16xf32> -> vector<16x16xf32>
    %cst_86 = arith.constant dense<0xFF800000> : vector<16xf32>
    %148 = vector.multi_reduction <maximumf>, %147, %cst_86 [1] : vector<16x16xf32> to vector<16xf32>
    %149 = vector.shape_cast %148 : vector<16xf32> to vector<16x1xf32>
    %150 = vector.broadcast %149 : vector<16x1xf32> to vector<16x16xf32>
    %151 = arith.subf %147, %150 : vector<16x16xf32>
    %152 = math.exp %151 : vector<16x16xf32>
    %cst_87 = arith.constant dense<0.000000e+00> : vector<16xf32>
    %153 = vector.multi_reduction <add>, %152, %cst_87 [1] : vector<16x16xf32> to vector<16xf32>
    %154 = vector.shape_cast %153 : vector<16xf32> to vector<16x1xf32>
    %155 = tpu.reciprocal %154 {approx = true} : vector<16x1xf32> -> vector<16x1xf32>
    %156 = vector.broadcast %155 : vector<16x1xf32> to vector<16x16xf32>
    %157 = arith.mulf %152, %156 : vector<16x16xf32>
    %158 = arith.truncf %157 : vector<16x16xf32> to vector<16x16xbf16>
    %cst_88 = arith.constant dense<0.000000e+00> : vector<16x16xf32>
    %159 = tpu.matmul %158, %146, %cst_88 {dimension_numbers = #tpu.dot_dimension_numbers<[1], [0], [0], [1], [0, 0, 1, 1], [], []>} : vector<16x16xbf16>, vector<16x16xbf16>, vector<16x16xf32> -> vector<16x16xf32>
    %160 = arith.truncf %159 : vector<16x16xf32> to vector<16x16xbf16>
    %cst_89 = arith.constant dense<0.000000e+00> : vector<16x32xf32>
    %161 = tpu.matmul %160, %83, %cst_89 {dimension_numbers = #tpu.dot_dimension_numbers<[1], [0], [0], [1], [0, 0, 1, 1], [], []>} : vector<16x16xbf16>, vector<16x32xbf16>, vector<16x32xf32> -> vector<16x32xf32>
    %162 = arith.addf %143, %161 : vector<16x32xf32>
    %163 = vector.extract_strided_slice %31 {offsets = [16, 0], sizes = [16, 16], strides = [1, 1]} : vector<32x16xbf16> to vector<16x16xbf16>
    %164 = vector.extract_strided_slice %47 {offsets = [16, 0], sizes = [16, 16], strides = [1, 1]} : vector<32x16xbf16> to vector<16x16xbf16>
    %165 = vector.extract_strided_slice %63 {offsets = [16, 0], sizes = [16, 16], strides = [1, 1]} : vector<32x16xbf16> to vector<16x16xbf16>
    %cst_90 = arith.constant dense<0.000000e+00> : vector<16x16xf32>
    %166 = tpu.matmul %163, %164, %cst_90 {dimension_numbers = #tpu.dot_dimension_numbers<[1], [1], [0], [0], [0, 0, 1, 0], [], []>} : vector<16x16xbf16>, vector<16x16xbf16>, vector<16x16xf32> -> vector<16x16xf32>
    %cst_91 = arith.constant dense<0xFF800000> : vector<16xf32>
    %167 = vector.multi_reduction <maximumf>, %166, %cst_91 [1] : vector<16x16xf32> to vector<16xf32>
    %168 = vector.shape_cast %167 : vector<16xf32> to vector<16x1xf32>
    %169 = vector.broadcast %168 : vector<16x1xf32> to vector<16x16xf32>
    %170 = arith.subf %166, %169 : vector<16x16xf32>
    %171 = math.exp %170 : vector<16x16xf32>
    %cst_92 = arith.constant dense<0.000000e+00> : vector<16xf32>
    %172 = vector.multi_reduction <add>, %171, %cst_92 [1] : vector<16x16xf32> to vector<16xf32>
    %173 = vector.shape_cast %172 : vector<16xf32> to vector<16x1xf32>
    %174 = tpu.reciprocal %173 {approx = true} : vector<16x1xf32> -> vector<16x1xf32>
    %175 = vector.broadcast %174 : vector<16x1xf32> to vector<16x16xf32>
    %176 = arith.mulf %171, %175 : vector<16x16xf32>
    %177 = arith.truncf %176 : vector<16x16xf32> to vector<16x16xbf16>
    %cst_93 = arith.constant dense<0.000000e+00> : vector<16x16xf32>
    %178 = tpu.matmul %177, %165, %cst_93 {dimension_numbers = #tpu.dot_dimension_numbers<[1], [0], [0], [1], [0, 0, 1, 1], [], []>} : vector<16x16xbf16>, vector<16x16xbf16>, vector<16x16xf32> -> vector<16x16xf32>
    %179 = arith.truncf %178 : vector<16x16xf32> to vector<16x16xbf16>
    %cst_94 = arith.constant dense<0.000000e+00> : vector<16x32xf32>
    %180 = tpu.matmul %179, %77, %cst_94 {dimension_numbers = #tpu.dot_dimension_numbers<[1], [0], [0], [1], [0, 0, 1, 1], [], []>} : vector<16x16xbf16>, vector<16x32xbf16>, vector<16x32xf32> -> vector<16x32xf32>
    %181 = arith.addf %86, %180 : vector<16x32xf32>
    %182 = vector.extract_strided_slice %35 {offsets = [16, 0], sizes = [16, 16], strides = [1, 1]} : vector<32x16xbf16> to vector<16x16xbf16>
    %183 = vector.extract_strided_slice %51 {offsets = [16, 0], sizes = [16, 16], strides = [1, 1]} : vector<32x16xbf16> to vector<16x16xbf16>
    %184 = vector.extract_strided_slice %67 {offsets = [16, 0], sizes = [16, 16], strides = [1, 1]} : vector<32x16xbf16> to vector<16x16xbf16>
    %cst_95 = arith.constant dense<0.000000e+00> : vector<16x16xf32>
    %185 = tpu.matmul %182, %183, %cst_95 {dimension_numbers = #tpu.dot_dimension_numbers<[1], [1], [0], [0], [0, 0, 1, 0], [], []>} : vector<16x16xbf16>, vector<16x16xbf16>, vector<16x16xf32> -> vector<16x16xf32>
    %cst_96 = arith.constant dense<0xFF800000> : vector<16xf32>
    %186 = vector.multi_reduction <maximumf>, %185, %cst_96 [1] : vector<16x16xf32> to vector<16xf32>
    %187 = vector.shape_cast %186 : vector<16xf32> to vector<16x1xf32>
    %188 = vector.broadcast %187 : vector<16x1xf32> to vector<16x16xf32>
    %189 = arith.subf %185, %188 : vector<16x16xf32>
    %190 = math.exp %189 : vector<16x16xf32>
    %cst_97 = arith.constant dense<0.000000e+00> : vector<16xf32>
    %191 = vector.multi_reduction <add>, %190, %cst_97 [1] : vector<16x16xf32> to vector<16xf32>
    %192 = vector.shape_cast %191 : vector<16xf32> to vector<16x1xf32>
    %193 = tpu.reciprocal %192 {approx = true} : vector<16x1xf32> -> vector<16x1xf32>
    %194 = vector.broadcast %193 : vector<16x1xf32> to vector<16x16xf32>
    %195 = arith.mulf %190, %194 : vector<16x16xf32>
    %196 = arith.truncf %195 : vector<16x16xf32> to vector<16x16xbf16>
    %cst_98 = arith.constant dense<0.000000e+00> : vector<16x16xf32>
    %197 = tpu.matmul %196, %184, %cst_98 {dimension_numbers = #tpu.dot_dimension_numbers<[1], [0], [0], [1], [0, 0, 1, 1], [], []>} : vector<16x16xbf16>, vector<16x16xbf16>, vector<16x16xf32> -> vector<16x16xf32>
    %198 = arith.truncf %197 : vector<16x16xf32> to vector<16x16xbf16>
    %cst_99 = arith.constant dense<0.000000e+00> : vector<16x32xf32>
    %199 = tpu.matmul %198, %79, %cst_99 {dimension_numbers = #tpu.dot_dimension_numbers<[1], [0], [0], [1], [0, 0, 1, 1], [], []>} : vector<16x16xbf16>, vector<16x32xbf16>, vector<16x32xf32> -> vector<16x32xf32>
    %200 = arith.addf %181, %199 : vector<16x32xf32>
    %201 = vector.extract_strided_slice %39 {offsets = [16, 0], sizes = [16, 16], strides = [1, 1]} : vector<32x16xbf16> to vector<16x16xbf16>
    %202 = vector.extract_strided_slice %55 {offsets = [16, 0], sizes = [16, 16], strides = [1, 1]} : vector<32x16xbf16> to vector<16x16xbf16>
    %203 = vector.extract_strided_slice %71 {offsets = [16, 0], sizes = [16, 16], strides = [1, 1]} : vector<32x16xbf16> to vector<16x16xbf16>
    %cst_100 = arith.constant dense<0.000000e+00> : vector<16x16xf32>
    %204 = tpu.matmul %201, %202, %cst_100 {dimension_numbers = #tpu.dot_dimension_numbers<[1], [1], [0], [0], [0, 0, 1, 0], [], []>} : vector<16x16xbf16>, vector<16x16xbf16>, vector<16x16xf32> -> vector<16x16xf32>
    %cst_101 = arith.constant dense<0xFF800000> : vector<16xf32>
    %205 = vector.multi_reduction <maximumf>, %204, %cst_101 [1] : vector<16x16xf32> to vector<16xf32>
    %206 = vector.shape_cast %205 : vector<16xf32> to vector<16x1xf32>
    %207 = vector.broadcast %206 : vector<16x1xf32> to vector<16x16xf32>
    %208 = arith.subf %204, %207 : vector<16x16xf32>
    %209 = math.exp %208 : vector<16x16xf32>
    %cst_102 = arith.constant dense<0.000000e+00> : vector<16xf32>
    %210 = vector.multi_reduction <add>, %209, %cst_102 [1] : vector<16x16xf32> to vector<16xf32>
    %211 = vector.shape_cast %210 : vector<16xf32> to vector<16x1xf32>
    %212 = tpu.reciprocal %211 {approx = true} : vector<16x1xf32> -> vector<16x1xf32>
    %213 = vector.broadcast %212 : vector<16x1xf32> to vector<16x16xf32>
    %214 = arith.mulf %209, %213 : vector<16x16xf32>
    %215 = arith.truncf %214 : vector<16x16xf32> to vector<16x16xbf16>
    %cst_103 = arith.constant dense<0.000000e+00> : vector<16x16xf32>
    %216 = tpu.matmul %215, %203, %cst_103 {dimension_numbers = #tpu.dot_dimension_numbers<[1], [0], [0], [1], [0, 0, 1, 1], [], []>} : vector<16x16xbf16>, vector<16x16xbf16>, vector<16x16xf32> -> vector<16x16xf32>
    %217 = arith.truncf %216 : vector<16x16xf32> to vector<16x16xbf16>
    %cst_104 = arith.constant dense<0.000000e+00> : vector<16x32xf32>
    %218 = tpu.matmul %217, %81, %cst_104 {dimension_numbers = #tpu.dot_dimension_numbers<[1], [0], [0], [1], [0, 0, 1, 1], [], []>} : vector<16x16xbf16>, vector<16x32xbf16>, vector<16x32xf32> -> vector<16x32xf32>
    %219 = arith.addf %200, %218 : vector<16x32xf32>
    %220 = vector.extract_strided_slice %43 {offsets = [16, 0], sizes = [16, 16], strides = [1, 1]} : vector<32x16xbf16> to vector<16x16xbf16>
    %221 = vector.extract_strided_slice %59 {offsets = [16, 0], sizes = [16, 16], strides = [1, 1]} : vector<32x16xbf16> to vector<16x16xbf16>
    %222 = vector.extract_strided_slice %75 {offsets = [16, 0], sizes = [16, 16], strides = [1, 1]} : vector<32x16xbf16> to vector<16x16xbf16>
    %cst_105 = arith.constant dense<0.000000e+00> : vector<16x16xf32>
    %223 = tpu.matmul %220, %221, %cst_105 {dimension_numbers = #tpu.dot_dimension_numbers<[1], [1], [0], [0], [0, 0, 1, 0], [], []>} : vector<16x16xbf16>, vector<16x16xbf16>, vector<16x16xf32> -> vector<16x16xf32>
    %cst_106 = arith.constant dense<0xFF800000> : vector<16xf32>
    %224 = vector.multi_reduction <maximumf>, %223, %cst_106 [1] : vector<16x16xf32> to vector<16xf32>
    %225 = vector.shape_cast %224 : vector<16xf32> to vector<16x1xf32>
    %226 = vector.broadcast %225 : vector<16x1xf32> to vector<16x16xf32>
    %227 = arith.subf %223, %226 : vector<16x16xf32>
    %228 = math.exp %227 : vector<16x16xf32>
    %cst_107 = arith.constant dense<0.000000e+00> : vector<16xf32>
    %229 = vector.multi_reduction <add>, %228, %cst_107 [1] : vector<16x16xf32> to vector<16xf32>
    %230 = vector.shape_cast %229 : vector<16xf32> to vector<16x1xf32>
    %231 = tpu.reciprocal %230 {approx = true} : vector<16x1xf32> -> vector<16x1xf32>
    %232 = vector.broadcast %231 : vector<16x1xf32> to vector<16x16xf32>
    %233 = arith.mulf %228, %232 : vector<16x16xf32>
    %234 = arith.truncf %233 : vector<16x16xf32> to vector<16x16xbf16>
    %cst_108 = arith.constant dense<0.000000e+00> : vector<16x16xf32>
    %235 = tpu.matmul %234, %222, %cst_108 {dimension_numbers = #tpu.dot_dimension_numbers<[1], [0], [0], [1], [0, 0, 1, 1], [], []>} : vector<16x16xbf16>, vector<16x16xbf16>, vector<16x16xf32> -> vector<16x16xf32>
    %236 = arith.truncf %235 : vector<16x16xf32> to vector<16x16xbf16>
    %cst_109 = arith.constant dense<0.000000e+00> : vector<16x32xf32>
    %237 = tpu.matmul %236, %83, %cst_109 {dimension_numbers = #tpu.dot_dimension_numbers<[1], [0], [0], [1], [0, 0, 1, 1], [], []>} : vector<16x16xbf16>, vector<16x32xbf16>, vector<16x32xf32> -> vector<16x32xf32>
    %238 = arith.addf %219, %237 : vector<16x32xf32>
    %239 = tpu.concatenate %162, %238 in 0 : vector<16x32xf32>, vector<16x32xf32> -> vector<32x32xf32>
    %240 = arith.addf %2, %239 : vector<32x32xf32>
    %c0_110 = arith.constant 0 : index
    %c0_111 = arith.constant 0 : index
    %241 = vector.load %arg9[%c0_110, %c0_111] : memref<1x32xf32, #tpu.memory_space<vmem>>, vector<1x32xf32>
    %c0_112 = arith.constant 0 : index
    %c0_113 = arith.constant 0 : index
    %242 = vector.load %arg10[%c0_112, %c0_113] : memref<1x32xf32, #tpu.memory_space<vmem>>, vector<1x32xf32>
    %cst_114 = arith.constant dense<0.000000e+00> : vector<32xf32>
    %243 = vector.multi_reduction <add>, %240, %cst_114 [1] : vector<32x32xf32> to vector<32xf32>
    %244 = vector.shape_cast %243 : vector<32xf32> to vector<32x1xf32>
    %cst_115 = arith.constant 3.200000e+01 : f32
    %245 = vector.broadcast %cst_115 : f32 to vector<32x1xf32>
    %246 = arith.divf %244, %245 : vector<32x1xf32>
    %247 = vector.broadcast %246 : vector<32x1xf32> to vector<32x32xf32>
    %248 = arith.subf %240, %247 : vector<32x32xf32>
    %249 = arith.mulf %248, %248 : vector<32x32xf32>
    %cst_116 = arith.constant dense<0.000000e+00> : vector<32xf32>
    %250 = vector.multi_reduction <add>, %249, %cst_116 [1] : vector<32x32xf32> to vector<32xf32>
    %251 = vector.shape_cast %250 : vector<32xf32> to vector<32x1xf32>
    %cst_117 = arith.constant 3.200000e+01 : f32
    %252 = vector.broadcast %cst_117 : f32 to vector<32x1xf32>
    %253 = arith.divf %251, %252 : vector<32x1xf32>
    %254 = vector.broadcast %246 : vector<32x1xf32> to vector<32x32xf32>
    %255 = arith.subf %240, %254 : vector<32x32xf32>
    %cst_118 = arith.constant 9.99999974E-6 : f32
    %256 = vector.broadcast %cst_118 : f32 to vector<32x1xf32>
    %257 = arith.addf %253, %256 : vector<32x1xf32>
    %258 = math.rsqrt %257 : vector<32x1xf32>
    %259 = vector.broadcast %258 : vector<32x1xf32> to vector<32x32xf32>
    %260 = arith.mulf %255, %259 : vector<32x32xf32>
    %261 = vector.broadcast %241 : vector<1x32xf32> to vector<32x32xf32>
    %262 = arith.mulf %260, %261 : vector<32x32xf32>
    %263 = vector.broadcast %242 : vector<1x32xf32> to vector<32x32xf32>
    %264 = arith.addf %262, %263 : vector<32x32xf32>
    %c0_119 = arith.constant 0 : index
    %c0_120 = arith.constant 0 : index
    %265 = vector.load %arg11[%c0_119, %c0_120] : memref<32x128xbf16, #tpu.memory_space<vmem>>, vector<32x128xbf16>
    %c0_121 = arith.constant 0 : index
    %c0_122 = arith.constant 0 : index
    %266 = vector.load %arg12[%c0_121, %c0_122] : memref<1x128xf32, #tpu.memory_space<vmem>>, vector<1x128xf32>
    %c0_123 = arith.constant 0 : index
    %c0_124 = arith.constant 0 : index
    %267 = vector.load %arg13[%c0_123, %c0_124] : memref<32x128xbf16, #tpu.memory_space<vmem>>, vector<32x128xbf16>
    %c0_125 = arith.constant 0 : index
    %c0_126 = arith.constant 0 : index
    %268 = vector.load %arg14[%c0_125, %c0_126] : memref<1x128xf32, #tpu.memory_space<vmem>>, vector<1x128xf32>
    %c0_127 = arith.constant 0 : index
    %c0_128 = arith.constant 0 : index
    %269 = vector.load %arg15[%c0_127, %c0_128] : memref<128x32xbf16, #tpu.memory_space<vmem>>, vector<128x32xbf16>
    %c0_129 = arith.constant 0 : index
    %c0_130 = arith.constant 0 : index
    %270 = vector.load %arg16[%c0_129, %c0_130] : memref<1x32xf32, #tpu.memory_space<vmem>>, vector<1x32xf32>
    %271 = arith.truncf %264 : vector<32x32xf32> to vector<32x32xbf16>
    %cst_131 = arith.constant dense<0.000000e+00> : vector<32x128xf32>
    %272 = tpu.matmul %271, %265, %cst_131 {dimension_numbers = #tpu.dot_dimension_numbers<[1], [0], [0], [1], [0, 0, 1, 1], [], []>} : vector<32x32xbf16>, vector<32x128xbf16>, vector<32x128xf32> -> vector<32x128xf32>
    %273 = vector.broadcast %266 : vector<1x128xf32> to vector<32x128xf32>
    %274 = arith.addf %272, %273 : vector<32x128xf32>
    %cst_132 = arith.constant dense<0.000000e+00> : vector<32x128xf32>
    %275 = tpu.matmul %271, %267, %cst_132 {dimension_numbers = #tpu.dot_dimension_numbers<[1], [0], [0], [1], [0, 0, 1, 1], [], []>} : vector<32x32xbf16>, vector<32x128xbf16>, vector<32x128xf32> -> vector<32x128xf32>
    %276 = vector.broadcast %268 : vector<1x128xf32> to vector<32x128xf32>
    %277 = arith.addf %275, %276 : vector<32x128xf32>
    %cst_133 = arith.constant 5.000000e-01 : f32
    %278 = vector.broadcast %cst_133 : f32 to vector<32x128xf32>
    %279 = arith.mulf %278, %277 : vector<32x128xf32>
    %cst_134 = arith.constant 4.471500e-02 : f32
    %280 = vector.broadcast %cst_134 : f32 to vector<32x128xf32>
    %281 = arith.mulf %280, %277 : vector<32x128xf32>
    %282 = arith.mulf %281, %277 : vector<32x128xf32>
    %283 = arith.mulf %282, %277 : vector<32x128xf32>
    %284 = arith.addf %277, %283 : vector<32x128xf32>
    %cst_135 = arith.constant 0.797884583 : f32
    %285 = vector.broadcast %cst_135 : f32 to vector<32x128xf32>
    %286 = arith.mulf %285, %284 : vector<32x128xf32>
    %287 = math.tanh %286 : vector<32x128xf32>
    %cst_136 = arith.constant 1.000000e+00 : f32
    %288 = vector.broadcast %cst_136 : f32 to vector<32x128xf32>
    %289 = arith.addf %288, %287 : vector<32x128xf32>
    %290 = arith.mulf %279, %289 : vector<32x128xf32>
    %291 = arith.mulf %274, %290 : vector<32x128xf32>
    %292 = arith.truncf %291 : vector<32x128xf32> to vector<32x128xbf16>
    %cst_137 = arith.constant dense<0.000000e+00> : vector<32x32xf32>
    %293 = tpu.matmul %292, %269, %cst_137 {dimension_numbers = #tpu.dot_dimension_numbers<[1], [0], [0], [1], [0, 0, 1, 1], [], []>} : vector<32x128xbf16>, vector<128x32xbf16>, vector<32x32xf32> -> vector<32x32xf32>
    %294 = vector.broadcast %270 : vector<1x32xf32> to vector<32x32xf32>
    %295 = arith.addf %293, %294 : vector<32x32xf32>
    %296 = arith.addf %240, %295 : vector<32x32xf32>
    %297 = vector.shape_cast %296 : vector<32x32xf32> to vector<2x16x32xf32>
    %c0_138 = arith.constant 0 : index
    %c0_139 = arith.constant 0 : index
    %c0_140 = arith.constant 0 : index
    %c0_141 = arith.constant 0 : index
    %298 = vector.load %arg17[%c0_138, %c0_139, %c0_140, %c0_141] : memref<1x2x16x32xf32, #tpu.memory_space<vmem>>, vector<1x2x16x32xf32>
    %299 = vector.shape_cast %298 : vector<1x2x16x32xf32> to vector<2x16x32xf32>
    %300 = vector.shape_cast %297 : vector<2x16x32xf32> to vector<1x2x16x32xf32>
    tpu.vector_store %arg17[%c0_138, %c0_139, %c0_140, %c0_141], %300 {strides = array<i32>} : memref<1x2x16x32xf32, #tpu.memory_space<vmem>>, vector<1x2x16x32xf32>,
    return
  }
  func.func @transform_0(%arg0: i32) -> (i32, i32, i32, i32) {
    %c0_i32 = arith.constant 0 : i32
    %c0_i32_0 = arith.constant 0 : i32
    %c0_i32_1 = arith.constant 0 : i32
    %c0_i32_2 = arith.constant 0 : i32
    return %arg0, %c0_i32, %c0_i32_0, %c0_i32_1 : i32, i32, i32, i32
  }
  func.func @transform_1(%arg0: i32) -> (i32, i32) {
    %c0_i32 = arith.constant 0 : i32
    %c0_i32_0 = arith.constant 0 : i32
    %c0_i32_1 = arith.constant 0 : i32
    return %c0_i32, %c0_i32_0 : i32, i32
  }
  func.func @transform_2(%arg0: i32) -> (i32, i32) {
    %c0_i32 = arith.constant 0 : i32
    %c0_i32_0 = arith.constant 0 : i32
    %c0_i32_1 = arith.constant 0 : i32
    return %c0_i32, %c0_i32_0 : i32, i32
  }
  func.func @transform_3(%arg0: i32) -> (i32, i32, i32) {
    %c0_i32 = arith.constant 0 : i32
    %c0_i32_0 = arith.constant 0 : i32
    %c0_i32_1 = arith.constant 0 : i32
    %c0_i32_2 = arith.constant 0 : i32
    return %c0_i32, %c0_i32_0, %c0_i32_1 : i32, i32, i32
  }
  func.func @transform_4(%arg0: i32) -> (i32, i32, i32) {
    %c0_i32 = arith.constant 0 : i32
    %c0_i32_0 = arith.constant 0 : i32
    %c0_i32_1 = arith.constant 0 : i32
    %c0_i32_2 = arith.constant 0 : i32
    return %c0_i32, %c0_i32_0, %c0_i32_1 : i32, i32, i32
  }
  func.func @transform_5(%arg0: i32) -> (i32, i32, i32) {
    %c0_i32 = arith.constant 0 : i32
    %c0_i32_0 = arith.constant 0 : i32
    %c0_i32_1 = arith.constant 0 : i32
    %c0_i32_2 = arith.constant 0 : i32
    return %c0_i32, %c0_i32_0, %c0_i32_1 : i32, i32, i32
  }
  func.func @transform_6(%arg0: i32) -> (i32, i32, i32) {
    %c0_i32 = arith.constant 0 : i32
    %c0_i32_0 = arith.constant 0 : i32
    %c0_i32_1 = arith.constant 0 : i32
    %c0_i32_2 = arith.constant 0 : i32
    return %c0_i32, %c0_i32_0, %c0_i32_1 : i32, i32, i32
  }
  func.func @transform_7(%arg0: i32) -> (i32, i32) {
    %c0_i32 = arith.constant 0 : i32
    %c0_i32_0 = arith.constant 0 : i32
    %c0_i32_1 = arith.constant 0 : i32
    return %c0_i32, %c0_i32_0 : i32, i32
  }
  func.func @transform_8(%arg0: i32) -> (i32, i32) {
    %c0_i32 = arith.constant 0 : i32
    %c0_i32_0 = arith.constant 0 : i32
    %c0_i32_1 = arith.constant 0 : i32
    return %c0_i32, %c0_i32_0 : i32, i32
  }
  func.func @transform_9(%arg0: i32) -> (i32, i32) {
    %c0_i32 = arith.constant 0 : i32
    %c0_i32_0 = arith.constant 0 : i32
    %c0_i32_1 = arith.constant 0 : i32
    return %c0_i32, %c0_i32_0 : i32, i32
  }
  func.func @transform_10(%arg0: i32) -> (i32, i32) {
    %c0_i32 = arith.constant 0 : i32
    %c0_i32_0 = arith.constant 0 : i32
    %c0_i32_1 = arith.constant 0 : i32
    return %c0_i32, %c0_i32_0 : i32, i32
  }
  func.func @transform_11(%arg0: i32) -> (i32, i32) {
    %c0_i32 = arith.constant 0 : i32
    %c0_i32_0 = arith.constant 0 : i32
    %c0_i32_1 = arith.constant 0 : i32
    return %c0_i32, %c0_i32_0 : i32, i32
  }
  func.func @transform_12(%arg0: i32) -> (i32, i32) {
    %c0_i32 = arith.constant 0 : i32
    %c0_i32_0 = arith.constant 0 : i32
    %c0_i32_1 = arith.constant 0 : i32
    return %c0_i32, %c0_i32_0 : i32, i32
  }
  func.func @transform_13(%arg0: i32) -> (i32, i32) {
    %c0_i32 = arith.constant 0 : i32
    %c0_i32_0 = arith.constant 0 : i32
    %c0_i32_1 = arith.constant 0 : i32
    return %c0_i32, %c0_i32_0 : i32, i32
  }
  func.func @transform_14(%arg0: i32) -> (i32, i32) {
    %c0_i32 = arith.constant 0 : i32
    %c0_i32_0 = arith.constant 0 : i32
    %c0_i32_1 = arith.constant 0 : i32
    return %c0_i32, %c0_i32_0 : i32, i32
  }
  func.func @transform_15(%arg0: i32) -> (i32, i32) {
    %c0_i32 = arith.constant 0 : i32
    %c0_i32_0 = arith.constant 0 : i32
    %c0_i32_1 = arith.constant 0 : i32
    return %c0_i32, %c0_i32_0 : i32, i32
  }
  func.func @transform_16(%arg0: i32) -> (i32, i32, i32, i32) {
    %c0_i32 = arith.constant 0 : i32
    %c0_i32_0 = arith.constant 0 : i32
    %c0_i32_1 = arith.constant 0 : i32
    %c0_i32_2 = arith.constant 0 : i32
    return %arg0, %c0_i32, %c0_i32_0, %c0_i32_1 : i32, i32, i32, i32
  }
}

</mosaic_0001>

<llo_original>
// kernel: perceiver_io_encoder.3
$region0: #{perceiver_io_encoder.3}
  #allocation0 [shape = 'u32[]', space=smem, size = 0x4, offset = 0x4, fixed_abs, tag = 'smem constant byte address 0x4 - core index']
  #allocation1 [shape = 'u32[144,128]{1,0:T(1,128)}', space=vmem, size = 0x12000, scoped, tag = 'internal scratch']
  %s0 = inlined_call_operand.vmem [shape: f32[1,2,8,32], index: 0, kind: input, shape index: {}]
  %s1 = inlined_call_operand.vmem [shape: f32[16,32], index: 1, kind: input, shape index: {}]
  %s2 = inlined_call_operand.vmem [shape: bf16[1,16,16], index: 2, kind: input, shape index: {}]
  %s3 = inlined_call_operand.vmem [shape: f32[1,32], index: 3, kind: input, shape index: {}]
  %s4 = inlined_call_operand.vmem [shape: f32[1,32], index: 4, kind: input, shape index: {}]
  %s5 = inlined_call_operand.vmem [shape: bf16[1,32,16], index: 5, kind: input, shape index: {}]
  %s6 = inlined_call_operand.vmem [shape: bf16[1,32,16], index: 6, kind: input, shape index: {}]
  %s7 = inlined_call_operand.vmem [shape: bf16[1,16,32], index: 7, kind: input, shape index: {}]
  %s8 = inlined_call_operand.vmem [shape: f32[1,32], index: 8, kind: input, shape index: {}]
  %s9 = inlined_call_operand.vmem [shape: f32[1,32], index: 9, kind: input, shape index: {}]
  %s10 = inlined_call_operand.vmem [shape: f32[1,32], index: 10, kind: input, shape index: {}]
  %s11 = inlined_call_operand.vmem [shape: bf16[32,128], index: 11, kind: input, shape index: {}]
  %s12 = inlined_call_operand.vmem [shape: f32[1,128], index: 12, kind: input, shape index: {}]
  %s13 = inlined_call_operand.vmem [shape: bf16[32,128], index: 13, kind: input, shape index: {}]
  %s14 = inlined_call_operand.vmem [shape: f32[1,128], index: 14, kind: input, shape index: {}]
  %s15 = inlined_call_operand.vmem [shape: bf16[128,32], index: 15, kind: input, shape index: {}]
  %s16 = inlined_call_operand.vmem [shape: f32[1,32], index: 16, kind: input, shape index: {}]
  %s17 = inlined_call_operand.vmem [shape: f32[1,2,16,32], index: 17, kind: output, shape index: {}]
  %s18 = sld [smem:[#allocation0]]
  $region78: #{perceiver_io_encoder.3} parent=0
    _
  %s20 = ssub.s32 1, %s18
  %s21 = scalar_select 0, %s20, %s18
  // Predicated region
  $region2: #{perceiver_io_encoder.3} parent=0 // pred_check
    _
  $region3: #{perceiver_io_encoder.3} parent=0 // pred_check_branch
    %23 = sbr.rel (0) target = $region5
  $region4: #{perceiver_io_encoder.3} parent=0 // pred_region
    _
  $region5: #{perceiver_io_encoder.3} parent=0 // pred_fallthru
    _
  // Predicated region
  $region6: #{perceiver_io_encoder.3} parent=0 // pred_check
    _
  $region7: #{perceiver_io_encoder.3} parent=0 // pred_check_branch
    %25 = sbr.rel (0) target = $region9
  $region8: #{perceiver_io_encoder.3} parent=0 // pred_region
    _
  $region9: #{perceiver_io_encoder.3} parent=0 // pred_fallthru
    _
  // Predicated region
  $region10: #{perceiver_io_encoder.3} parent=0 // pred_check
    _
  $region11: #{perceiver_io_encoder.3} parent=0 // pred_check_branch
    %27 = sbr.rel (0) target = $region13
  $region12: #{perceiver_io_encoder.3} parent=0 // pred_region
    _
  $region13: #{perceiver_io_encoder.3} parent=0 // pred_fallthru
    _
  // Predicated region
  $region14: #{perceiver_io_encoder.3} parent=0 // pred_check
    _
  $region15: #{perceiver_io_encoder.3} parent=0 // pred_check_branch
    %29 = sbr.rel (0) target = $region17
  $region16: #{perceiver_io_encoder.3} parent=0 // pred_region
    _
  $region17: #{perceiver_io_encoder.3} parent=0 // pred_fallthru
    _
  // Predicated region
  $region18: #{perceiver_io_encoder.3} parent=0 // pred_check
    _
  $region19: #{perceiver_io_encoder.3} parent=0 // pred_check_branch
    %31 = sbr.rel (0) target = $region21
  $region20: #{perceiver_io_encoder.3} parent=0 // pred_region
    _
  $region21: #{perceiver_io_encoder.3} parent=0 // pred_fallthru
    _
  // Predicated region
  $region22: #{perceiver_io_encoder.3} parent=0 // pred_check
    _
  $region23: #{perceiver_io_encoder.3} parent=0 // pred_check_branch
    %33 = sbr.rel (0) target = $region25
  $region24: #{perceiver_io_encoder.3} parent=0 // pred_region
    _
  $region25: #{perceiver_io_encoder.3} parent=0 // pred_fallthru
    _
  // Predicated region
  $region26: #{perceiver_io_encoder.3} parent=0 // pred_check
    _
  $region27: #{perceiver_io_encoder.3} parent=0 // pred_check_branch
    %35 = sbr.rel (0) target = $region29
  $region28: #{perceiver_io_encoder.3} parent=0 // pred_region
    _
  $region29: #{perceiver_io_encoder.3} parent=0 // pred_fallthru
    _
  // Predicated region
  $region30: #{perceiver_io_encoder.3} parent=0 // pred_check
    _
  $region31: #{perceiver_io_encoder.3} parent=0 // pred_check_branch
    %37 = sbr.rel (0) target = $region33
  $region32: #{perceiver_io_encoder.3} parent=0 // pred_region
    _
  $region33: #{perceiver_io_encoder.3} parent=0 // pred_fallthru
    _
  // Predicated region
  $region34: #{perceiver_io_encoder.3} parent=0 // pred_check
    _
  $region35: #{perceiver_io_encoder.3} parent=0 // pred_check_branch
    %39 = sbr.rel (0) target = $region37
  $region36: #{perceiver_io_encoder.3} parent=0 // pred_region
    _
  $region37: #{perceiver_io_encoder.3} parent=0 // pred_fallthru
    _
  // Predicated region
  $region38: #{perceiver_io_encoder.3} parent=0 // pred_check
    _
  $region39: #{perceiver_io_encoder.3} parent=0 // pred_check_branch
    %41 = sbr.rel (0) target = $region41
  $region40: #{perceiver_io_encoder.3} parent=0 // pred_region
    _
  $region41: #{perceiver_io_encoder.3} parent=0 // pred_fallthru
    _
  // Predicated region
  $region42: #{perceiver_io_encoder.3} parent=0 // pred_check
    _
  $region43: #{perceiver_io_encoder.3} parent=0 // pred_check_branch
    %43 = sbr.rel (0) target = $region45
  $region44: #{perceiver_io_encoder.3} parent=0 // pred_region
    _
  $region45: #{perceiver_io_encoder.3} parent=0 // pred_fallthru
    _
  // Predicated region
  $region46: #{perceiver_io_encoder.3} parent=0 // pred_check
    _
  $region47: #{perceiver_io_encoder.3} parent=0 // pred_check_branch
    %45 = sbr.rel (0) target = $region49
  $region48: #{perceiver_io_encoder.3} parent=0 // pred_region
    _
  $region49: #{perceiver_io_encoder.3} parent=0 // pred_fallthru
    _
  // Predicated region
  $region50: #{perceiver_io_encoder.3} parent=0 // pred_check
    _
  $region51: #{perceiver_io_encoder.3} parent=0 // pred_check_branch
    %47 = sbr.rel (0) target = $region53
  $region52: #{perceiver_io_encoder.3} parent=0 // pred_region
    _
  $region53: #{perceiver_io_encoder.3} parent=0 // pred_fallthru
    _
  // Predicated region
  $region54: #{perceiver_io_encoder.3} parent=0 // pred_check
    _
  $region55: #{perceiver_io_encoder.3} parent=0 // pred_check_branch
    %49 = sbr.rel (0) target = $region57
  $region56: #{perceiver_io_encoder.3} parent=0 // pred_region
    _
  $region57: #{perceiver_io_encoder.3} parent=0 // pred_fallthru
    _
  // Predicated region
  $region58: #{perceiver_io_encoder.3} parent=0 // pred_check
    _
  $region59: #{perceiver_io_encoder.3} parent=0 // pred_check_branch
    %51 = sbr.rel (0) target = $region61
  $region60: #{perceiver_io_encoder.3} parent=0 // pred_region
    _
  $region61: #{perceiver_io_encoder.3} parent=0 // pred_fallthru
    _
  // Predicated region
  $region62: #{perceiver_io_encoder.3} parent=0 // pred_check
    _
  $region63: #{perceiver_io_encoder.3} parent=0 // pred_check_branch
    %53 = sbr.rel (0) target = $region65
  $region64: #{perceiver_io_encoder.3} parent=0 // pred_region
    _
  $region65: #{perceiver_io_encoder.3} parent=0 // pred_fallthru
    _
  // Predicated region
  $region66: #{perceiver_io_encoder.3} parent=0 // pred_check
    _
  $region67: #{perceiver_io_encoder.3} parent=0 // pred_check_branch
    %55 = sbr.rel (0) target = $region69
  $region68: #{perceiver_io_encoder.3} parent=0 // pred_region
    _
  $region69: #{perceiver_io_encoder.3} parent=0 // pred_fallthru
    _
  %v57 = vld [vmem:[%s0] sm:$0xff]
  %v58 = vld [vmem:[%s0 + $0x8] sm:$0xff]
  %v59 = vld [vmem:[%s3] sm:$0x1]
  %v60 = vld [vmem:[%s4] sm:$0x1]
  %vm61 = vcmask 261120
  %v62 = vsel %vm61, %v57, 0.0
  %63 = vadd.xlane.f32.xlu0 %v62
  %v64 = vpop.xlane.xlu0 %63
  %v65 = vsel %vm61, %v58, 0.0
  %66 = vadd.xlane.f32.xlu0 %v65
  %v67 = vpop.xlane.xlu0 %66
  %v68 = vrcp.pop 32.0
  %v69 = vmul.f32 %v64, %v68
  %v70 = vmul.f32 %v67, %v68
  %v71 = vsub.f32 %v57, %v69
  %v72 = vsub.f32 %v58, %v70
  %v73 = vmul.f32 %v71, %v71
  %v74 = vmul.f32 %v72, %v72
  %v75 = vsel %vm61, %v73, 0.0
  %76 = vadd.xlane.f32.xlu0 %v75
  %v77 = vpop.xlane.xlu0 %76
  %v78 = vsel %vm61, %v74, 0.0
  %79 = vadd.xlane.f32.xlu0 %v78
  %v80 = vpop.xlane.xlu0 %79
  %v81 = vmul.f32 %v77, %v68
  %v82 = vmul.f32 %v80, %v68
  %v83 = vadd.f32 %v81, 1e-05
  %v84 = vadd.f32 %v82, 1e-05
  %v85 = vrsqrt.pop %v83
  %v86 = vrsqrt.pop %v84
  %v87 = vmul.f32 %v71, %v85
  %v88 = vmul.f32 %v72, %v86
  %v90 = vlaneseq
  %v91 = vshrl.u32 %v90, 7
  %v92 = vsub.s32 0, %v91
  %v93 = vrot.slane %v59, %v92
  %v95 = vmul.f32 %v87, %v93
  %v96 = vmul.f32 %v88, %v93
  %v98 = vlaneseq
  %v99 = vshrl.u32 %v98, 7
  %v100 = vsub.s32 0, %v99
  %v101 = vrot.slane %v60, %v100
  %v103 = vadd.f32 %v95, %v101
  %v104 = vadd.f32 %v96, %v101
  %v105 = vpack.c.bf16 %v104, %v103
  %v106 = vld [vmem:[%s1] sm:$0xff]
  %v107 = vld [vmem:[%s1 + $0x8] sm:$0xff]
  %v108 = vld [vmem:[%s5] sm:$0xf]
  %v109 = vld [vmem:[%s5 + $0x4] sm:$0xf]
  %v110 = vld [vmem:[%s5 + $0x8] sm:$0xf]
  %v111 = vld [vmem:[%s5 + $0xc] sm:$0xf]
  %v116 = vunpack.c.l.b16 %v108
  %v117 = vunpack.c.l.b16 %v109
  %v118 = vunpack.c.l.b16 %v110
  %v119 = vunpack.c.l.b16 %v111
  %v120 = vpack.c.b16 %v117, %v116
  %v121 = vpack.c.b16 %v119, %v118
  %v125 = vsel %vm61, %v105, 0
  %127 = vmatprep.subr.bf16.mxu0 0
  %128 = vmatpush1.bf16.msra.mxu0 %v120
  %129 = vmatprep.subr.bf16.mxu0 0
  %130 = vmatpush1.bf16.msra.mxu0 %v121
  %131 = vmatprep.subr.bf16.mxu0 0
  %132 = vmatpush1.bf16.msra.mxu0 0
  %133 = vmatprep.subr.bf16.mxu0 0
  %134 = vmatpush1.bf16.msra.mxu0 0
  %135 = vmatprep.subr.bf16.mxu0 0
  %136 = vmatpush1.bf16.msra.mxu0 0
  %137 = vmatprep.subr.bf16.mxu0 0
  %138 = vmatpush1.bf16.msra.mxu0 0
  %139 = vmatprep.subr.bf16.mxu0 0
  %140 = vmatpush1.bf16.msra.mxu0 0
  %141 = vmatprep.subr.bf16.mxu0 0
  %142 = vmatpush1.bf16.msra.mxu0 0
  %143 = vmatprep.subr.bf16.mxu0 0
  %144 = vmatpush1.bf16.msra.mxu0 0
  %145 = vmatprep.subr.bf16.mxu0 0
  %146 = vmatpush1.bf16.msra.mxu0 0
  %147 = vmatprep.subr.bf16.mxu0 0
  %148 = vmatpush1.bf16.msra.mxu0 0
  %149 = vmatprep.subr.bf16.mxu0 0
  %150 = vmatpush1.bf16.msra.mxu0 0
  %151 = vmatprep.subr.bf16.mxu0 0
  %152 = vmatpush1.bf16.msra.mxu0 0
  %153 = vmatprep.subr.bf16.mxu0 0
  %154 = vmatpush1.bf16.msra.mxu0 0
  %155 = vmatprep.subr.bf16.mxu0 0
  %156 = vmatpush1.bf16.msra.mxu0 0
  %157 = vmatprep.subr.bf16.mxu0 0
  %158 = vmatpush1.bf16.msra.mxu0 0
  %159 = vmatprep.mubr.bf16.mxu0 0
  %160 = vmatmul.mubr.bf16.gmra.mrb[0].mxu0 %v125
  %v161 = vpop.f32.mrb[0].mxu0
  %v162 = vadd.f32 0.0, %v161
  %v163 = vpop.f32.mrb[0].mxu0
  %v164 = vpop.f32.mrb[0].mxu0
  %v165 = vadd.f32 0.0, %v164
  %v166 = vpop.f32.mrb[0].mxu0
  %167 = vdwg.mxu0
  %v168 = vpack.c.bf16 %v165, %v162
  %v169 = vld [vmem:[%s6] sm:$0xf]
  %v170 = vld [vmem:[%s6 + $0x4] sm:$0xf]
  %v171 = vld [vmem:[%s6 + $0x8] sm:$0xf]
  %v172 = vld [vmem:[%s6 + $0xc] sm:$0xf]
  %v177 = vunpack.c.l.b16 %v169
  %v178 = vunpack.c.l.b16 %v170
  %v179 = vunpack.c.l.b16 %v171
  %v180 = vunpack.c.l.b16 %v172
  %v181 = vpack.c.b16 %v178, %v177
  %v182 = vpack.c.b16 %v180, %v179
  %185 = vmatprep.subr.bf16.mxu0 0
  %186 = vmatpush1.bf16.msra.mxu0 %v181
  %187 = vmatprep.subr.bf16.mxu0 0
  %188 = vmatpush1.bf16.msra.mxu0 %v182
  %189 = vmatprep.subr.bf16.mxu0 0
  %190 = vmatpush1.bf16.msra.mxu0 0
  %191 = vmatprep.subr.bf16.mxu0 0
  %192 = vmatpush1.bf16.msra.mxu0 0
  %193 = vmatprep.subr.bf16.mxu0 0
  %194 = vmatpush1.bf16.msra.mxu0 0
  %195 = vmatprep.subr.bf16.mxu0 0
  %196 = vmatpush1.bf16.msra.mxu0 0
  %197 = vmatprep.subr.bf16.mxu0 0
  %198 = vmatpush1.bf16.msra.mxu0 0
  %199 = vmatprep.subr.bf16.mxu0 0
  %200 = vmatpush1.bf16.msra.mxu0 0
  %201 = vmatprep.subr.bf16.mxu0 0
  %202 = vmatpush1.bf16.msra.mxu0 0
  %203 = vmatprep.subr.bf16.mxu0 0
  %204 = vmatpush1.bf16.msra.mxu0 0
  %205 = vmatprep.subr.bf16.mxu0 0
  %206 = vmatpush1.bf16.msra.mxu0 0
  %207 = vmatprep.subr.bf16.mxu0 0
  %208 = vmatpush1.bf16.msra.mxu0 0
  %209 = vmatprep.subr.bf16.mxu0 0
  %210 = vmatpush1.bf16.msra.mxu0 0
  %211 = vmatprep.subr.bf16.mxu0 0
  %212 = vmatpush1.bf16.msra.mxu0 0
  %213 = vmatprep.subr.bf16.mxu0 0
  %214 = vmatpush1.bf16.msra.mxu0 0
  %215 = vmatprep.subr.bf16.mxu0 0
  %216 = vmatpush1.bf16.msra.mxu0 0
  %217 = vmatprep.mubr.bf16.mxu0 0
  %218 = vmatmul.mubr.bf16.gmra.mrb[0].mxu0 %v125
  %v219 = vpop.f32.mrb[0].mxu0
  %v220 = vadd.f32 0.0, %v219
  %v221 = vpop.f32.mrb[0].mxu0
  %v222 = vpop.f32.mrb[0].mxu0
  %v223 = vadd.f32 0.0, %v222
  %v224 = vpop.f32.mrb[0].mxu0
  %225 = vdwg.mxu0
  %v226 = vpack.c.bf16 %v223, %v220
  %v227 = vld [vmem:[%s2] sm:$0xf]
  %v228 = vld [vmem:[%s2 + $0x4] sm:$0xf]
  %v229 = vld [vmem:[%s7] sm:$0xf]
  %v230 = vld [vmem:[%s7 + $0x4] sm:$0xf]
  %v231 = vld [vmem:[%s8] sm:$0x1]
  %v233 = vlaneseq
  %v234 = vshrl.u32 %v233, 7
  %v235 = vsub.s32 0, %v234
  %v236 = vrot.slane %v231, %v235
  %v238 = vadd.f32 %v106, %v236
  %v239 = vadd.f32 %v107, %v236
  %v242 = vunpack.c.l.b16 %v227
  %v243 = vunpack.c.l.b16 %v228
  %v244 = vpack.c.b16 %v243, %v242
  %vm245 = vcmask 130048
  %v247 = vsel %vm245, %v244, 0
  %v250 = vsel %vm245, %v168, 0
  %252 = vmatprep.subr.bf16.mxu0 0
  %253 = vmatpush1.bf16.xpose.msra.mxu0 %v250
  %254 = vmatprep.subr.bf16.mxu0 0
  %255 = vmatpush1.bf16.xpose.msra.mxu0 0
  %256 = vmatprep.subr.bf16.mxu0 0
  %257 = vmatpush1.bf16.xpose.msra.mxu0 0
  %258 = vmatprep.subr.bf16.mxu0 0
  %259 = vmatpush1.bf16.xpose.msra.mxu0 0
  %260 = vmatprep.subr.bf16.mxu0 0
  %261 = vmatpush1.bf16.xpose.msra.mxu0 0
  %262 = vmatprep.subr.bf16.mxu0 0
  %263 = vmatpush1.bf16.xpose.msra.mxu0 0
  %264 = vmatprep.subr.bf16.mxu0 0
  %265 = vmatpush1.bf16.xpose.msra.mxu0 0
  %266 = vmatprep.subr.bf16.mxu0 0
  %267 = vmatpush1.bf16.xpose.msra.mxu0 0
  %268 = vmatprep.subr.bf16.mxu0 0
  %269 = vmatpush1.bf16.xpose.msra.mxu0 0
  %270 = vmatprep.subr.bf16.mxu0 0
  %271 = vmatpush1.bf16.xpose.msra.mxu0 0
  %272 = vmatprep.subr.bf16.mxu0 0
  %273 = vmatpush1.bf16.xpose.msra.mxu0 0
  %274 = vmatprep.subr.bf16.mxu0 0
  %275 = vmatpush1.bf16.xpose.msra.mxu0 0
  %276 = vmatprep.subr.bf16.mxu0 0
  %277 = vmatpush1.bf16.xpose.msra.mxu0 0
  %278 = vmatprep.subr.bf16.mxu0 0
  %279 = vmatpush1.bf16.xpose.msra.mxu0 0
  %280 = vmatprep.subr.bf16.mxu0 0
  %281 = vmatpush1.bf16.xpose.msra.mxu0 0
  %282 = vmatprep.subr.bf16.mxu0 0
  %283 = vmatpush1.bf16.xpose.msra.mxu0 0
  %284 = vmatprep.mubr.bf16.mxu0 0
  %285 = vmatmul.mubr.bf16.gmra.mrb[0].mxu0 %v247
  %v286 = vpop.f32.mrb[0].mxu0
  %v287 = vadd.f32 0.0, %v286
  %v288 = vpop.f32.mrb[0].mxu0
  %v289 = vpop.f32.mrb[0].mxu0
  %v290 = vadd.f32 0.0, %v289
  %v291 = vpop.f32.mrb[0].mxu0
  %292 = vdwg.mxu0
  %vm293 = vcmask 64512
  %v294 = vsel %vm293, %v287, -inf
  %295 = vmax.xlane.f32.xlu0 %v294
  %v296 = vpop.xlane.xlu0 %295
  %v297 = vsel %vm293, %v290, -inf
  %298 = vmax.xlane.f32.xlu0 %v297
  %v299 = vpop.xlane.xlu0 %298
  %v300 = vsub.f32 %v287, %v296
  %v301 = vsub.f32 %v290, %v299
  %v302 = vmul.f32 %v300, 1.442695
  %v303 = vpow.pop %v302
  %v304 = vmul.f32 %v301, 1.442695
  %v305 = vpow.pop %v304
  %v306 = vsel %vm293, %v303, 0.0
  %307 = vadd.xlane.f32.xlu0 %v306
  %v308 = vpop.xlane.xlu0 %307
  %v309 = vsel %vm293, %v305, 0.0
  %310 = vadd.xlane.f32.xlu0 %v309
  %v311 = vpop.xlane.xlu0 %310
  %v312 = vrcp.pop %v308
  %v313 = vrcp.pop %v311
  %v314 = vmul.f32 %v303, %v312
  %v315 = vmul.f32 %v305, %v313
  %v316 = vpack.c.bf16 %v315, %v314
  %v318 = vsel %vm293, %v316, 0
  %vm320 = vcmask 1043456
  %v322 = vsel %vm320, %v226, 0
  %324 = vmatprep.subr.bf16.mxu0 0
  %325 = vmatpush1.bf16.msra.mxu0 %v322
  %326 = vmatprep.subr.bf16.mxu0 0
  %327 = vmatpush1.bf16.msra.mxu0 0
  %328 = vmatprep.subr.bf16.mxu0 0
  %329 = vmatpush1.bf16.msra.mxu0 0
  %330 = vmatprep.subr.bf16.mxu0 0
  %331 = vmatpush1.bf16.msra.mxu0 0
  %332 = vmatprep.subr.bf16.mxu0 0
  %333 = vmatpush1.bf16.msra.mxu0 0
  %334 = vmatprep.subr.bf16.mxu0 0
  %335 = vmatpush1.bf16.msra.mxu0 0
  %336 = vmatprep.subr.bf16.mxu0 0
  %337 = vmatpush1.bf16.msra.mxu0 0
  %338 = vmatprep.subr.bf16.mxu0 0
  %339 = vmatpush1.bf16.msra.mxu0 0
  %340 = vmatprep.subr.bf16.mxu0 0
  %341 = vmatpush1.bf16.msra.mxu0 0
  %342 = vmatprep.subr.bf16.mxu0 0
  %343 = vmatpush1.bf16.msra.mxu0 0
  %344 = vmatprep.subr.bf16.mxu0 0
  %345 = vmatpush1.bf16.msra.mxu0 0
  %346 = vmatprep.subr.bf16.mxu0 0
  %347 = vmatpush1.bf16.msra.mxu0 0
  %348 = vmatprep.subr.bf16.mxu0 0
  %349 = vmatpush1.bf16.msra.mxu0 0
  %350 = vmatprep.subr.bf16.mxu0 0
  %351 = vmatpush1.bf16.msra.mxu0 0
  %352 = vmatprep.subr.bf16.mxu0 0
  %353 = vmatpush1.bf16.msra.mxu0 0
  %354 = vmatprep.subr.bf16.mxu0 0
  %355 = vmatpush1.bf16.msra.mxu0 0
  %356 = vmatprep.mubr.bf16.mxu0 0
  %357 = vmatmul.mubr.bf16.gmra.mrb[0].mxu0 %v318
  %v358 = vpop.f32.mrb[0].mxu0
  %v359 = vadd.f32 0.0, %v358
  %v360 = vpop.f32.mrb[0].mxu0
  %v361 = vpop.f32.mrb[0].mxu0
  %v362 = vadd.f32 0.0, %v361
  %v363 = vpop.f32.mrb[0].mxu0
  %364 = vdwg.mxu0
  %v365 = vpack.c.bf16 %v362, %v359
  %v368 = vunpack.c.l.b16 %v229
  %v369 = vunpack.c.l.b16 %v230
  %v370 = vpack.c.b16 %v369, %v368
  %v373 = vsel %vm245, %v365, 0
  %375 = vmatprep.subr.bf16.mxu0 0
  %376 = vmatpush1.bf16.msra.mxu0 %v370
  %377 = vmatprep.subr.bf16.mxu0 0
  %378 = vmatpush1.bf16.msra.mxu0 0
  %379 = vmatprep.subr.bf16.mxu0 0
  %380 = vmatpush1.bf16.msra.mxu0 0
  %381 = vmatprep.subr.bf16.mxu0 0
  %382 = vmatpush1.bf16.msra.mxu0 0
  %383 = vmatprep.subr.bf16.mxu0 0
  %384 = vmatpush1.bf16.msra.mxu0 0
  %385 = vmatprep.subr.bf16.mxu0 0
  %386 = vmatpush1.bf16.msra.mxu0 0
  %387 = vmatprep.subr.bf16.mxu0 0
  %388 = vmatpush1.bf16.msra.mxu0 0
  %389 = vmatprep.subr.bf16.mxu0 0
  %390 = vmatpush1.bf16.msra.mxu0 0
  %391 = vmatprep.subr.bf16.mxu0 0
  %392 = vmatpush1.bf16.msra.mxu0 0
  %393 = vmatprep.subr.bf16.mxu0 0
  %394 = vmatpush1.bf16.msra.mxu0 0
  %395 = vmatprep.subr.bf16.mxu0 0
  %396 = vmatpush1.bf16.msra.mxu0 0
  %397 = vmatprep.subr.bf16.mxu0 0
  %398 = vmatpush1.bf16.msra.mxu0 0
  %399 = vmatprep.subr.bf16.mxu0 0
  %400 = vmatpush1.bf16.msra.mxu0 0
  %401 = vmatprep.subr.bf16.mxu0 0
  %402 = vmatpush1.bf16.msra.mxu0 0
  %403 = vmatprep.subr.bf16.mxu0 0
  %404 = vmatpush1.bf16.msra.mxu0 0
  %405 = vmatprep.subr.bf16.mxu0 0
  %406 = vmatpush1.bf16.msra.mxu0 0
  %407 = vmatprep.mubr.bf16.mxu0 0
  %408 = vmatmul.mubr.bf16.gmra.mrb[0].mxu0 %v373
  %v409 = vpop.f32.mrb[0].mxu0
  %v410 = vadd.f32 0.0, %v409
  %v411 = vpop.f32.mrb[0].mxu0
  %v412 = vpop.f32.mrb[0].mxu0
  %v413 = vadd.f32 0.0, %v412
  %v414 = vpop.f32.mrb[0].mxu0
  %415 = vdwg.mxu0
  %v416 = vadd.f32 %v238, %v410
  %v417 = vadd.f32 %v239, %v413
  %v419 = vrot.slane %v168, 4
  %v421 = vsel %vm245, %v419, 0
  %423 = vmatprep.subr.bf16.mxu0 0
  %424 = vmatpush1.bf16.xpose.msra.mxu0 %v421
  %425 = vmatprep.subr.bf16.mxu0 0
  %426 = vmatpush1.bf16.xpose.msra.mxu0 0
  %427 = vmatprep.subr.bf16.mxu0 0
  %428 = vmatpush1.bf16.xpose.msra.mxu0 0
  %429 = vmatprep.subr.bf16.mxu0 0
  %430 = vmatpush1.bf16.xpose.msra.mxu0 0
  %431 = vmatprep.subr.bf16.mxu0 0
  %432 = vmatpush1.bf16.xpose.msra.mxu0 0
  %433 = vmatprep.subr.bf16.mxu0 0
  %434 = vmatpush1.bf16.xpose.msra.mxu0 0
  %435 = vmatprep.subr.bf16.mxu0 0
  %436 = vmatpush1.bf16.xpose.msra.mxu0 0
  %437 = vmatprep.subr.bf16.mxu0 0
  %438 = vmatpush1.bf16.xpose.msra.mxu0 0
  %439 = vmatprep.subr.bf16.mxu0 0
  %440 = vmatpush1.bf16.xpose.msra.mxu0 0
  %441 = vmatprep.subr.bf16.mxu0 0
  %442 = vmatpush1.bf16.xpose.msra.mxu0 0
  %443 = vmatprep.subr.bf16.mxu0 0
  %444 = vmatpush1.bf16.xpose.msra.mxu0 0
  %445 = vmatprep.subr.bf16.mxu0 0
  %446 = vmatpush1.bf16.xpose.msra.mxu0 0
  %447 = vmatprep.subr.bf16.mxu0 0
  %448 = vmatpush1.bf16.xpose.msra.mxu0 0
  %449 = vmatprep.subr.bf16.mxu0 0
  %450 = vmatpush1.bf16.xpose.msra.mxu0 0
  %451 = vmatprep.subr.bf16.mxu0 0
  %452 = vmatpush1.bf16.xpose.msra.mxu0 0
  %453 = vmatprep.subr.bf16.mxu0 0
  %454 = vmatpush1.bf16.xpose.msra.mxu0 0
  %455 = vmatprep.mubr.bf16.mxu0 0
  %456 = vmatmul.mubr.bf16.gmra.mrb[0].mxu0 %v247
  %v457 = vpop.f32.mrb[0].mxu0
  %v458 = vadd.f32 0.0, %v457
  %v459 = vpop.f32.mrb[0].mxu0
  %v460 = vpop.f32.mrb[0].mxu0
  %v461 = vadd.f32 0.0, %v460
  %v462 = vpop.f32.mrb[0].mxu0
  %463 = vdwg.mxu0
  %v464 = vsel %vm293, %v458, -inf
  %465 = vmax.xlane.f32.xlu0 %v464
  %v466 = vpop.xlane.xlu0 %465
  %v467 = vsel %vm293, %v461, -inf
  %468 = vmax.xlane.f32.xlu0 %v467
  %v469 = vpop.xlane.xlu0 %468
  %v470 = vsub.f32 %v458, %v466
  %v471 = vsub.f32 %v461, %v469
  %v472 = vmul.f32 %v470, 1.442695
  %v473 = vpow.pop %v472
  %v474 = vmul.f32 %v471, 1.442695
  %v475 = vpow.pop %v474
  %v476 = vsel %vm293, %v473, 0.0
  %477 = vadd.xlane.f32.xlu0 %v476
  %v478 = vpop.xlane.xlu0 %477
  %v479 = vsel %vm293, %v475, 0.0
  %480 = vadd.xlane.f32.xlu0 %v479
  %v481 = vpop.xlane.xlu0 %480
  %v482 = vrcp.pop %v478
  %v483 = vrcp.pop %v481
  %v484 = vmul.f32 %v473, %v482
  %v485 = vmul.f32 %v475, %v483
  %v486 = vpack.c.bf16 %v485, %v484
  %v488 = vrot.slane %v226, 4
  %v490 = vsel %vm293, %v486, 0
  %v493 = vsel %vm320, %v488, 0
  %495 = vmatprep.subr.bf16.mxu0 0
  %496 = vmatpush1.bf16.msra.mxu0 %v493
  %497 = vmatprep.subr.bf16.mxu0 0
  %498 = vmatpush1.bf16.msra.mxu0 0
  %499 = vmatprep.subr.bf16.mxu0 0
  %500 = vmatpush1.bf16.msra.mxu0 0
  %501 = vmatprep.subr.bf16.mxu0 0
  %502 = vmatpush1.bf16.msra.mxu0 0
  %503 = vmatprep.subr.bf16.mxu0 0
  %504 = vmatpush1.bf16.msra.mxu0 0
  %505 = vmatprep.subr.bf16.mxu0 0
  %506 = vmatpush1.bf16.msra.mxu0 0
  %507 = vmatprep.subr.bf16.mxu0 0
  %508 = vmatpush1.bf16.msra.mxu0 0
  %509 = vmatprep.subr.bf16.mxu0 0
  %510 = vmatpush1.bf16.msra.mxu0 0
  %511 = vmatprep.subr.bf16.mxu0 0
  %512 = vmatpush1.bf16.msra.mxu0 0
  %513 = vmatprep.subr.bf16.mxu0 0
  %514 = vmatpush1.bf16.msra.mxu0 0
  %515 = vmatprep.subr.bf16.mxu0 0
  %516 = vmatpush1.bf16.msra.mxu0 0
  %517 = vmatprep.subr.bf16.mxu0 0
  %518 = vmatpush1.bf16.msra.mxu0 0
  %519 = vmatprep.subr.bf16.mxu0 0
  %520 = vmatpush1.bf16.msra.mxu0 0
  %521 = vmatprep.subr.bf16.mxu0 0
  %522 = vmatpush1.bf16.msra.mxu0 0
  %523 = vmatprep.subr.bf16.mxu0 0
  %524 = vmatpush1.bf16.msra.mxu0 0
  %525 = vmatprep.subr.bf16.mxu0 0
  %526 = vmatpush1.bf16.msra.mxu0 0
  %527 = vmatprep.mubr.bf16.mxu0 0
  %528 = vmatmul.mubr.bf16.gmra.mrb[0].mxu0 %v490
  %v529 = vpop.f32.mrb[0].mxu0
  %v530 = vadd.f32 0.0, %v529
  %v531 = vpop.f32.mrb[0].mxu0
  %v532 = vpop.f32.mrb[0].mxu0
  %v533 = vadd.f32 0.0, %v532
  %v534 = vpop.f32.mrb[0].mxu0
  %535 = vdwg.mxu0
  %v536 = vpack.c.bf16 %v533, %v530
  %v538 = vsel %vm245, %v536, 0
  %540 = vmatprep.subr.bf16.mxu0 0
  %541 = vmatpush1.bf16.msra.mxu0 %v370
  %542 = vmatprep.subr.bf16.mxu0 0
  %543 = vmatpush1.bf16.msra.mxu0 0
  %544 = vmatprep.subr.bf16.mxu0 0
  %545 = vmatpush1.bf16.msra.mxu0 0
  %546 = vmatprep.subr.bf16.mxu0 0
  %547 = vmatpush1.bf16.msra.mxu0 0
  %548 = vmatprep.subr.bf16.mxu0 0
  %549 = vmatpush1.bf16.msra.mxu0 0
  %550 = vmatprep.subr.bf16.mxu0 0
  %551 = vmatpush1.bf16.msra.mxu0 0
  %552 = vmatprep.subr.bf16.mxu0 0
  %553 = vmatpush1.bf16.msra.mxu0 0
  %554 = vmatprep.subr.bf16.mxu0 0
  %555 = vmatpush1.bf16.msra.mxu0 0
  %556 = vmatprep.subr.bf16.mxu0 0
  %557 = vmatpush1.bf16.msra.mxu0 0
  %558 = vmatprep.subr.bf16.mxu0 0
  %559 = vmatpush1.bf16.msra.mxu0 0
  %560 = vmatprep.subr.bf16.mxu0 0
  %561 = vmatpush1.bf16.msra.mxu0 0
  %562 = vmatprep.subr.bf16.mxu0 0
  %563 = vmatpush1.bf16.msra.mxu0 0
  %564 = vmatprep.subr.bf16.mxu0 0
  %565 = vmatpush1.bf16.msra.mxu0 0
  %566 = vmatprep.subr.bf16.mxu0 0
  %567 = vmatpush1.bf16.msra.mxu0 0
  %568 = vmatprep.subr.bf16.mxu0 0
  %569 = vmatpush1.bf16.msra.mxu0 0
  %570 = vmatprep.subr.bf16.mxu0 0
  %571 = vmatpush1.bf16.msra.mxu0 0
  %572 = vmatprep.mubr.bf16.mxu0 0
  %573 = vmatmul.mubr.bf16.gmra.mrb[0].mxu0 %v538
  %v574 = vpop.f32.mrb[0].mxu0
  %v575 = vadd.f32 0.0, %v574
  %v576 = vpop.f32.mrb[0].mxu0
  %v577 = vpop.f32.mrb[0].mxu0
  %v578 = vadd.f32 0.0, %v577
  %v579 = vpop.f32.mrb[0].mxu0
  %580 = vdwg.mxu0
  %v581 = vadd.f32 %v238, %v575
  %v582 = vadd.f32 %v239, %v578
  %v583 = vld [vmem:[%s9] sm:$0x1]
  %v584 = vld [vmem:[%s10] sm:$0x1]
  %v585 = vsel %vm61, %v416, 0.0
  %586 = vadd.xlane.f32.xlu0 %v585
  %v587 = vpop.xlane.xlu0 %586
  %v588 = vsel %vm61, %v417, 0.0
  %589 = vadd.xlane.f32.xlu0 %v588
  %v590 = vpop.xlane.xlu0 %589
  %v591 = vsel %vm61, %v581, 0.0
  %592 = vadd.xlane.f32.xlu0 %v591
  %v593 = vpop.xlane.xlu0 %592
  %v594 = vsel %vm61, %v582, 0.0
  %595 = vadd.xlane.f32.xlu0 %v594
  %v596 = vpop.xlane.xlu0 %595
  %v597 = vmul.f32 %v587, %v68
  %v598 = vmul.f32 %v590, %v68
  %v599 = vmul.f32 %v593, %v68
  %v600 = vmul.f32 %v596, %v68
  %v601 = vsub.f32 %v416, %v597
  %v602 = vsub.f32 %v417, %v598
  %v603 = vsub.f32 %v581, %v599
  %v604 = vsub.f32 %v582, %v600
  %v605 = vmul.f32 %v601, %v601
  %v606 = vmul.f32 %v602, %v602
  %v607 = vmul.f32 %v603, %v603
  %v608 = vmul.f32 %v604, %v604
  %v609 = vsel %vm61, %v605, 0.0
  %610 = vadd.xlane.f32.xlu0 %v609
  %v611 = vpop.xlane.xlu0 %610
  %v612 = vsel %vm61, %v606, 0.0
  %613 = vadd.xlane.f32.xlu0 %v612
  %v614 = vpop.xlane.xlu0 %613
  %v615 = vsel %vm61, %v607, 0.0
  %616 = vadd.xlane.f32.xlu0 %v615
  %v617 = vpop.xlane.xlu0 %616
  %v618 = vsel %vm61, %v608, 0.0
  %619 = vadd.xlane.f32.xlu0 %v618
  %v620 = vpop.xlane.xlu0 %619
  %v621 = vmul.f32 %v611, %v68
  %v622 = vmul.f32 %v614, %v68
  %v623 = vmul.f32 %v617, %v68
  %v624 = vmul.f32 %v620, %v68
  %v625 = vadd.f32 %v621, 1e-05
  %v626 = vadd.f32 %v622, 1e-05
  %v627 = vadd.f32 %v623, 1e-05
  %v628 = vadd.f32 %v624, 1e-05
  %v629 = vrsqrt.pop %v625
  %v630 = vrsqrt.pop %v626
  %v631 = vrsqrt.pop %v627
  %v632 = vrsqrt.pop %v628
  %v633 = vmul.f32 %v601, %v629
  %v634 = vmul.f32 %v602, %v630
  %v635 = vmul.f32 %v603, %v631
  %v636 = vmul.f32 %v604, %v632
  %v638 = vlaneseq
  %v639 = vshrl.u32 %v638, 7
  %v640 = vsub.s32 0, %v639
  %v641 = vrot.slane %v583, %v640
  %v643 = vmul.f32 %v633, %v641
  %v644 = vmul.f32 %v634, %v641
  %v645 = vmul.f32 %v635, %v641
  %v646 = vmul.f32 %v636, %v641
  %v648 = vlaneseq
  %v649 = vshrl.u32 %v648, 7
  %v650 = vsub.s32 0, %v649
  %v651 = vrot.slane %v584, %v650
  %v653 = vadd.f32 %v643, %v651
  %v654 = vadd.f32 %v644, %v651
  %v655 = vadd.f32 %v645, %v651
  %v656 = vadd.f32 %v646, %v651
  %v657 = vld [vmem:[%s11] sm:$0xf]
  %v658 = vld [vmem:[%s11 + $0x4] sm:$0xf]
  %v659 = vld [vmem:[%s11 + $0x8] sm:$0xf]
  %v660 = vld [vmem:[%s11 + $0xc] sm:$0xf]
  %v661 = vld [vmem:[%s12] sm:$0x1]
  %v662 = vld [vmem:[%s13] sm:$0xf]
  %v663 = vld [vmem:[%s13 + $0x4] sm:$0xf]
  %v664 = vld [vmem:[%s13 + $0x8] sm:$0xf]
  %v665 = vld [vmem:[%s13 + $0xc] sm:$0xf]
  %v666 = vld [vmem:[%s14] sm:$0x1]
  %v667 = vld [vmem:[%s15] sm:$0xf]
  %v668 = vld [vmem:[%s15 + $0x4] sm:$0xf]
  %v669 = vld [vmem:[%s15 + $0x8] sm:$0xf]
  %v670 = vld [vmem:[%s15 + $0xc] sm:$0xf]
  %v671 = vld [vmem:[%s15 + $0x10] sm:$0xf]
  %v672 = vld [vmem:[%s15 + $0x14] sm:$0xf]
  %v673 = vld [vmem:[%s15 + $0x18] sm:$0xf]
  %v674 = vld [vmem:[%s15 + $0x1c] sm:$0xf]
  %v675 = vld [vmem:[%s15 + $0x20] sm:$0xf]
  %v676 = vld [vmem:[%s15 + $0x24] sm:$0xf]
  %v677 = vld [vmem:[%s15 + $0x28] sm:$0xf]
  %v678 = vld [vmem:[%s15 + $0x2c] sm:$0xf]
  %v679 = vld [vmem:[%s15 + $0x30] sm:$0xf]
  %v680 = vld [vmem:[%s15 + $0x34] sm:$0xf]
  %v681 = vld [vmem:[%s15 + $0x38] sm:$0xf]
  %v682 = vld [vmem:[%s15 + $0x3c] sm:$0xf]
  %v683 = vld [vmem:[%s16] sm:$0x1]
  %v684 = vpack.c.bf16 %v654, %v653
  %v685 = vpack.c.bf16 %v656, %v655
  %v687 = vlaneseq
  %v688 = vshrl.u32 %v687, 7
  %v689 = vsub.s32 0, %v688
  %v690 = vrot.slane %v661, %v689
  %v696 = vunpack.c.l.b16 %v657
  %v697 = vunpack.c.l.b16 %v658
  %v698 = vunpack.c.l.b16 %v659
  %v699 = vunpack.c.l.b16 %v660
  %v700 = vpack.c.b16 %v697, %v696
  %v701 = vpack.c.b16 %v699, %v698
  %v705 = vsel %vm61, %v684, 0
  %v708 = vsel %vm61, %v685, 0
  %710 = vmatprep.subr.bf16.mxu0 0
  %711 = vmatpush1.bf16.msra.mxu0 %v700
  %712 = vmatprep.subr.bf16.mxu0 0
  %713 = vmatpush1.bf16.msra.mxu0 %v701
  %714 = vmatprep.subr.bf16.mxu0 0
  %715 = vmatpush1.bf16.msra.mxu0 0
  %716 = vmatprep.subr.bf16.mxu0 0
  %717 = vmatpush1.bf16.msra.mxu0 0
  %718 = vmatprep.subr.bf16.mxu0 0
  %719 = vmatpush1.bf16.msra.mxu0 0
  %720 = vmatprep.subr.bf16.mxu0 0
  %721 = vmatpush1.bf16.msra.mxu0 0
  %722 = vmatprep.subr.bf16.mxu0 0
  %723 = vmatpush1.bf16.msra.mxu0 0
  %724 = vmatprep.subr.bf16.mxu0 0
  %725 = vmatpush1.bf16.msra.mxu0 0
  %726 = vmatprep.subr.bf16.mxu0 0
  %727 = vmatpush1.bf16.msra.mxu0 0
  %728 = vmatprep.subr.bf16.mxu0 0
  %729 = vmatpush1.bf16.msra.mxu0 0
  %730 = vmatprep.subr.bf16.mxu0 0
  %731 = vmatpush1.bf16.msra.mxu0 0
  %732 = vmatprep.subr.bf16.mxu0 0
  %733 = vmatpush1.bf16.msra.mxu0 0
  %734 = vmatprep.subr.bf16.mxu0 0
  %735 = vmatpush1.bf16.msra.mxu0 0
  %736 = vmatprep.subr.bf16.mxu0 0
  %737 = vmatpush1.bf16.msra.mxu0 0
  %738 = vmatprep.subr.bf16.mxu0 0
  %739 = vmatpush1.bf16.msra.mxu0 0
  %740 = vmatprep.subr.bf16.mxu0 0
  %741 = vmatpush1.bf16.msra.mxu0 0
  %742 = vmatprep.mubr.bf16.mxu0 0
  %743 = vmatmul.mubr.bf16.gmra.mrb[0].mxu0 %v705
  %v744 = vpop.f32.mrb[0].mxu0
  %v745 = vadd.f32 %v690, %v744
  %v746 = vpop.f32.mrb[0].mxu0
  %v747 = vpop.f32.mrb[0].mxu0
  %v748 = vadd.f32 %v690, %v747
  %v749 = vpop.f32.mrb[0].mxu0
  %750 = vmatprep.mubr.bf16.mxu0 0
  %751 = vmatmul.mubr.bf16.gmra.mrb[0].mxu0 %v708
  %v752 = vpop.f32.mrb[0].mxu0
  %v753 = vadd.f32 %v690, %v752
  %v754 = vpop.f32.mrb[0].mxu0
  %v755 = vpop.f32.mrb[0].mxu0
  %v756 = vadd.f32 %v690, %v755
  %v757 = vpop.f32.mrb[0].mxu0
  %758 = vdwg.mxu0
  %v760 = vlaneseq
  %v761 = vshrl.u32 %v760, 7
  %v762 = vsub.s32 0, %v761
  %v763 = vrot.slane %v666, %v762
  %v769 = vunpack.c.l.b16 %v662
  %v770 = vunpack.c.l.b16 %v663
  %v771 = vunpack.c.l.b16 %v664
  %v772 = vunpack.c.l.b16 %v665
  %v773 = vpack.c.b16 %v770, %v769
  %v774 = vpack.c.b16 %v772, %v771
  %777 = vmatprep.subr.bf16.mxu0 0
  %778 = vmatpush1.bf16.msra.mxu0 %v773
  %779 = vmatprep.subr.bf16.mxu0 0
  %780 = vmatpush1.bf16.msra.mxu0 %v774
  %781 = vmatprep.subr.bf16.mxu0 0
  %782 = vmatpush1.bf16.msra.mxu0 0
  %783 = vmatprep.subr.bf16.mxu0 0
  %784 = vmatpush1.bf16.msra.mxu0 0
  %785 = vmatprep.subr.bf16.mxu0 0
  %786 = vmatpush1.bf16.msra.mxu0 0
  %787 = vmatprep.subr.bf16.mxu0 0
  %788 = vmatpush1.bf16.msra.mxu0 0
  %789 = vmatprep.subr.bf16.mxu0 0
  %790 = vmatpush1.bf16.msra.mxu0 0
  %791 = vmatprep.subr.bf16.mxu0 0
  %792 = vmatpush1.bf16.msra.mxu0 0
  %793 = vmatprep.subr.bf16.mxu0 0
  %794 = vmatpush1.bf16.msra.mxu0 0
  %795 = vmatprep.subr.bf16.mxu0 0
  %796 = vmatpush1.bf16.msra.mxu0 0
  %797 = vmatprep.subr.bf16.mxu0 0
  %798 = vmatpush1.bf16.msra.mxu0 0
  %799 = vmatprep.subr.bf16.mxu0 0
  %800 = vmatpush1.bf16.msra.mxu0 0
  %801 = vmatprep.subr.bf16.mxu0 0
  %802 = vmatpush1.bf16.msra.mxu0 0
  %803 = vmatprep.subr.bf16.mxu0 0
  %804 = vmatpush1.bf16.msra.mxu0 0
  %805 = vmatprep.subr.bf16.mxu0 0
  %806 = vmatpush1.bf16.msra.mxu0 0
  %807 = vmatprep.subr.bf16.mxu0 0
  %808 = vmatpush1.bf16.msra.mxu0 0
  %809 = vmatprep.mubr.bf16.mxu0 0
  %810 = vmatmul.mubr.bf16.gmra.mrb[0].mxu0 %v705
  %v811 = vpop.f32.mrb[0].mxu0
  %v812 = vadd.f32 %v763, %v811
  %v813 = vpop.f32.mrb[0].mxu0
  %v814 = vpop.f32.mrb[0].mxu0
  %v815 = vadd.f32 %v763, %v814
  %v816 = vpop.f32.mrb[0].mxu0
  %817 = vmatprep.mubr.bf16.mxu0 0
  %818 = vmatmul.mubr.bf16.gmra.mrb[0].mxu0 %v708
  %v819 = vpop.f32.mrb[0].mxu0
  %v820 = vadd.f32 %v763, %v819
  %v821 = vpop.f32.mrb[0].mxu0
  %v822 = vpop.f32.mrb[0].mxu0
  %v823 = vadd.f32 %v763, %v822
  %v824 = vpop.f32.mrb[0].mxu0
  %825 = vdwg.mxu0
  %v826 = vmul.f32 %v812, 0.5
  %v827 = vmul.f32 %v815, 0.5
  %v828 = vmul.f32 %v820, 0.5
  %v829 = vmul.f32 %v823, 0.5
  %v830 = vmul.f32 %v812, 0.044715
  %v831 = vmul.f32 %v815, 0.044715
  %v832 = vmul.f32 %v820, 0.044715
  %v833 = vmul.f32 %v823, 0.044715
  %v834 = vmul.f32 %v830, %v812
  %v835 = vmul.f32 %v831, %v815
  %v836 = vmul.f32 %v832, %v820
  %v837 = vmul.f32 %v833, %v823
  %v838 = vmul.f32 %v834, %v812
  %v839 = vmul.f32 %v835, %v815
  %v840 = vmul.f32 %v836, %v820
  %v841 = vmul.f32 %v837, %v823
  %v842 = vadd.f32 %v812, %v838
  %v843 = vadd.f32 %v815, %v839
  %v844 = vadd.f32 %v820, %v840
  %v845 = vadd.f32 %v823, %v841
  %v846 = vmul.f32 %v842, 0.7978846
  %v847 = vmul.f32 %v843, 0.7978846
  %v848 = vmul.f32 %v844, 0.7978846
  %v849 = vmul.f32 %v845, 0.7978846
  %v850 = vtanh.pop %v846
  %v851 = vtanh.pop %v847
  %v852 = vtanh.pop %v848
  %v853 = vtanh.pop %v849
  %v854 = vadd.f32 %v850, 1.0
  %v855 = vadd.f32 %v851, 1.0
  %v856 = vadd.f32 %v852, 1.0
  %v857 = vadd.f32 %v853, 1.0
  %v858 = vmul.f32 %v826, %v854
  %v859 = vmul.f32 %v827, %v855
  %v860 = vmul.f32 %v828, %v856
  %v861 = vmul.f32 %v829, %v857
  %v862 = vmul.f32 %v745, %v858
  %v863 = vmul.f32 %v748, %v859
  %v864 = vmul.f32 %v753, %v860
  %v865 = vmul.f32 %v756, %v861
  %v866 = vpack.c.bf16 %v863, %v862
  %v867 = vpack.c.bf16 %v865, %v864
  %v869 = vlaneseq
  %v870 = vshrl.u32 %v869, 7
  %v871 = vsub.s32 0, %v870
  %v872 = vrot.slane %v683, %v871
  %v890 = vunpack.c.l.b16 %v667
  %v891 = vunpack.c.l.b16 %v668
  %v892 = vunpack.c.l.b16 %v669
  %v893 = vunpack.c.l.b16 %v670
  %v894 = vunpack.c.l.b16 %v671
  %v895 = vunpack.c.l.b16 %v672
  %v896 = vunpack.c.l.b16 %v673
  %v897 = vunpack.c.l.b16 %v674
  %v898 = vunpack.c.l.b16 %v675
  %v899 = vunpack.c.l.b16 %v676
  %v900 = vunpack.c.l.b16 %v677
  %v901 = vunpack.c.l.b16 %v678
  %v902 = vunpack.c.l.b16 %v679
  %v903 = vunpack.c.l.b16 %v680
  %v904 = vunpack.c.l.b16 %v681
  %v905 = vunpack.c.l.b16 %v682
  %v906 = vpack.c.b16 %v891, %v890
  %v907 = vpack.c.b16 %v893, %v892
  %v908 = vpack.c.b16 %v895, %v894
  %v909 = vpack.c.b16 %v897, %v896
  %v910 = vpack.c.b16 %v899, %v898
  %v911 = vpack.c.b16 %v901, %v900
  %v912 = vpack.c.b16 %v903, %v902
  %v913 = vpack.c.b16 %v905, %v904
  %922 = vmatprep.subr.bf16.mxu0 0
  %923 = vmatpush1.bf16.msra.mxu0 %v906
  %924 = vmatprep.subr.bf16.mxu0 0
  %925 = vmatpush1.bf16.msra.mxu0 %v907
  %926 = vmatprep.subr.bf16.mxu0 0
  %927 = vmatpush1.bf16.msra.mxu0 %v908
  %928 = vmatprep.subr.bf16.mxu0 0
  %929 = vmatpush1.bf16.msra.mxu0 %v909
  %930 = vmatprep.subr.bf16.mxu0 0
  %931 = vmatpush1.bf16.msra.mxu0 %v910
  %932 = vmatprep.subr.bf16.mxu0 0
  %933 = vmatpush1.bf16.msra.mxu0 %v911
  %934 = vmatprep.subr.bf16.mxu0 0
  %935 = vmatpush1.bf16.msra.mxu0 %v912
  %936 = vmatprep.subr.bf16.mxu0 0
  %937 = vmatpush1.bf16.msra.mxu0 %v913
  %938 = vmatprep.subr.bf16.mxu0 0
  %939 = vmatpush1.bf16.msra.mxu0 0
  %940 = vmatprep.subr.bf16.mxu0 0
  %941 = vmatpush1.bf16.msra.mxu0 0
  %942 = vmatprep.subr.bf16.mxu0 0
  %943 = vmatpush1.bf16.msra.mxu0 0
  %944 = vmatprep.subr.bf16.mxu0 0
  %945 = vmatpush1.bf16.msra.mxu0 0
  %946 = vmatprep.subr.bf16.mxu0 0
  %947 = vmatpush1.bf16.msra.mxu0 0
  %948 = vmatprep.subr.bf16.mxu0 0
  %949 = vmatpush1.bf16.msra.mxu0 0
  %950 = vmatprep.subr.bf16.mxu0 0
  %951 = vmatpush1.bf16.msra.mxu0 0
  %952 = vmatprep.subr.bf16.mxu0 0
  %953 = vmatpush1.bf16.msra.mxu0 0
  %954 = vmatprep.mubr.bf16.mxu0 0
  %955 = vmatmul.mubr.bf16.gmra.mrb[0].mxu0 %v866
  %v956 = vpop.f32.mrb[0].mxu0
  %v957 = vadd.f32 %v872, %v956
  %v958 = vpop.f32.mrb[0].mxu0
  %v959 = vpop.f32.mrb[0].mxu0
  %v960 = vadd.f32 %v872, %v959
  %v961 = vpop.f32.mrb[0].mxu0
  %962 = vmatprep.mubr.bf16.mxu0 0
  %963 = vmatmul.mubr.bf16.gmra.mrb[0].mxu0 %v867
  %v964 = vpop.f32.mrb[0].mxu0
  %v965 = vadd.f32 %v872, %v964
  %v966 = vpop.f32.mrb[0].mxu0
  %v967 = vpop.f32.mrb[0].mxu0
  %v968 = vadd.f32 %v872, %v967
  %v969 = vpop.f32.mrb[0].mxu0
  %970 = vdwg.mxu0
  %v971 = vadd.f32 %v416, %v957
  %v972 = vadd.f32 %v417, %v960
  %v973 = vadd.f32 %v581, %v965
  %v974 = vadd.f32 %v582, %v968
  %975 = vst.msk [vmem:[%s17] sm:$0xff] %vm61, %v971
  %976 = vst.msk [vmem:[%s17 + $0x8] sm:$0xff] %vm61, %v972
  %977 = vst.msk [vmem:[%s17 + $0x10] sm:$0xff] %vm61, %v973
  %978 = vst.msk [vmem:[%s17 + $0x18] sm:$0xff] %vm61, %v974
  // Predicated region
  $region70: #{perceiver_io_encoder.3} parent=0 // pred_check
    _
  $region71: #{perceiver_io_encoder.3} parent=0 // pred_check_branch
    %980 = sbr.rel (0) target = $region73
  $region72: #{perceiver_io_encoder.3} parent=0 // pred_region
    _
  $region73: #{perceiver_io_encoder.3} parent=0 // pred_fallthru
    _
  // Predicated region
  $region74: #{perceiver_io_encoder.3} parent=0 // pred_check
    _
  $region75: #{perceiver_io_encoder.3} parent=0 // pred_check_branch
    %982 = sbr.rel (0) target = $region77
  $region76: #{perceiver_io_encoder.3} parent=0 // pred_region
    _
  $region77: #{perceiver_io_encoder.3} parent=0 // pred_fallthru
    _

// kernel: perceiver_io_encoder.4
$region0: #{perceiver_io_encoder.4}
  #allocation0 [shape = 'u32[]', space=smem, size = 0x4, offset = 0x4, fixed_abs, tag = 'smem constant byte address 0x4 - core index']
  #allocation1 [shape = 'u32[144,128]{1,0:T(1,128)}', space=vmem, size = 0x12000, scoped, tag = 'internal scratch']
  %s0 = inlined_call_operand.vmem [shape: f32[1,2,16,32], index: 0, kind: input, shape index: {}]
  %s1 = inlined_call_operand.vmem [shape: f32[1,32], index: 1, kind: input, shape index: {}]
  %s2 = inlined_call_operand.vmem [shape: f32[1,32], index: 2, kind: input, shape index: {}]
  %s3 = inlined_call_operand.vmem [shape: bf16[4,32,16], index: 3, kind: input, shape index: {}]
  %s4 = inlined_call_operand.vmem [shape: bf16[4,32,16], index: 4, kind: input, shape index: {}]
  %s5 = inlined_call_operand.vmem [shape: bf16[4,32,16], index: 5, kind: input, shape index: {}]
  %s6 = inlined_call_operand.vmem [shape: bf16[4,16,32], index: 6, kind: input, shape index: {}]
  %s7 = inlined_call_operand.vmem [shape: f32[1,32], index: 7, kind: input, shape index: {}]
  %s8 = inlined_call_operand.vmem [shape: f32[1,32], index: 8, kind: input, shape index: {}]
  %s9 = inlined_call_operand.vmem [shape: f32[1,32], index: 9, kind: input, shape index: {}]
  %s10 = inlined_call_operand.vmem [shape: bf16[32,128], index: 10, kind: input, shape index: {}]
  %s11 = inlined_call_operand.vmem [shape: f32[1,128], index: 11, kind: input, shape index: {}]
  %s12 = inlined_call_operand.vmem [shape: bf16[32,128], index: 12, kind: input, shape index: {}]
  %s13 = inlined_call_operand.vmem [shape: f32[1,128], index: 13, kind: input, shape index: {}]
  %s14 = inlined_call_operand.vmem [shape: bf16[128,32], index: 14, kind: input, shape index: {}]
  %s15 = inlined_call_operand.vmem [shape: f32[1,32], index: 15, kind: input, shape index: {}]
  %s16 = inlined_call_operand.vmem [shape: f32[1,2,16,32], index: 16, kind: output, shape index: {}]
  %s17 = sld [smem:[#allocation0]]
  $region74: #{perceiver_io_encoder.4} parent=0
    _
  %s19 = ssub.s32 1, %s17
  %s20 = scalar_select 0, %s19, %s17
  // Predicated region
  $region2: #{perceiver_io_encoder.4} parent=0 // pred_check
    _
  $region3: #{perceiver_io_encoder.4} parent=0 // pred_check_branch
    %22 = sbr.rel (0) target = $region5
  $region4: #{perceiver_io_encoder.4} parent=0 // pred_region
    _
  $region5: #{perceiver_io_encoder.4} parent=0 // pred_fallthru
    _
  // Predicated region
  $region6: #{perceiver_io_encoder.4} parent=0 // pred_check
    _
  $region7: #{perceiver_io_encoder.4} parent=0 // pred_check_branch
    %24 = sbr.rel (0) target = $region9
  $region8: #{perceiver_io_encoder.4} parent=0 // pred_region
    _
  $region9: #{perceiver_io_encoder.4} parent=0 // pred_fallthru
    _
  // Predicated region
  $region10: #{perceiver_io_encoder.4} parent=0 // pred_check
    _
  $region11: #{perceiver_io_encoder.4} parent=0 // pred_check_branch
    %26 = sbr.rel (0) target = $region13
  $region12: #{perceiver_io_encoder.4} parent=0 // pred_region
    _
  $region13: #{perceiver_io_encoder.4} parent=0 // pred_fallthru
    _
  // Predicated region
  $region14: #{perceiver_io_encoder.4} parent=0 // pred_check
    _
  $region15: #{perceiver_io_encoder.4} parent=0 // pred_check_branch
    %28 = sbr.rel (0) target = $region17
  $region16: #{perceiver_io_encoder.4} parent=0 // pred_region
    _
  $region17: #{perceiver_io_encoder.4} parent=0 // pred_fallthru
    _
  // Predicated region
  $region18: #{perceiver_io_encoder.4} parent=0 // pred_check
    _
  $region19: #{perceiver_io_encoder.4} parent=0 // pred_check_branch
    %30 = sbr.rel (0) target = $region21
  $region20: #{perceiver_io_encoder.4} parent=0 // pred_region
    _
  $region21: #{perceiver_io_encoder.4} parent=0 // pred_fallthru
    _
  // Predicated region
  $region22: #{perceiver_io_encoder.4} parent=0 // pred_check
    _
  $region23: #{perceiver_io_encoder.4} parent=0 // pred_check_branch
    %32 = sbr.rel (0) target = $region25
  $region24: #{perceiver_io_encoder.4} parent=0 // pred_region
    _
  $region25: #{perceiver_io_encoder.4} parent=0 // pred_fallthru
    _
  // Predicated region
  $region26: #{perceiver_io_encoder.4} parent=0 // pred_check
    _
  $region27: #{perceiver_io_encoder.4} parent=0 // pred_check_branch
    %34 = sbr.rel (0) target = $region29
  $region28: #{perceiver_io_encoder.4} parent=0 // pred_region
    _
  $region29: #{perceiver_io_encoder.4} parent=0 // pred_fallthru
    _
  // Predicated region
  $region30: #{perceiver_io_encoder.4} parent=0 // pred_check
    _
  $region31: #{perceiver_io_encoder.4} parent=0 // pred_check_branch
    %36 = sbr.rel (0) target = $region33
  $region32: #{perceiver_io_encoder.4} parent=0 // pred_region
    _
  $region33: #{perceiver_io_encoder.4} parent=0 // pred_fallthru
    _
  // Predicated region
  $region34: #{perceiver_io_encoder.4} parent=0 // pred_check
    _
  $region35: #{perceiver_io_encoder.4} parent=0 // pred_check_branch
    %38 = sbr.rel (0) target = $region37
  $region36: #{perceiver_io_encoder.4} parent=0 // pred_region
    _
  $region37: #{perceiver_io_encoder.4} parent=0 // pred_fallthru
    _
  // Predicated region
  $region38: #{perceiver_io_encoder.4} parent=0 // pred_check
    _
  $region39: #{perceiver_io_encoder.4} parent=0 // pred_check_branch
    %40 = sbr.rel (0) target = $region41
  $region40: #{perceiver_io_encoder.4} parent=0 // pred_region
    _
  $region41: #{perceiver_io_encoder.4} parent=0 // pred_fallthru
    _
  // Predicated region
  $region42: #{perceiver_io_encoder.4} parent=0 // pred_check
    _
  $region43: #{perceiver_io_encoder.4} parent=0 // pred_check_branch
    %42 = sbr.rel (0) target = $region45
  $region44: #{perceiver_io_encoder.4} parent=0 // pred_region
    _
  $region45: #{perceiver_io_encoder.4} parent=0 // pred_fallthru
    _
  // Predicated region
  $region46: #{perceiver_io_encoder.4} parent=0 // pred_check
    _
  $region47: #{perceiver_io_encoder.4} parent=0 // pred_check_branch
    %44 = sbr.rel (0) target = $region49
  $region48: #{perceiver_io_encoder.4} parent=0 // pred_region
    _
  $region49: #{perceiver_io_encoder.4} parent=0 // pred_fallthru
    _
  // Predicated region
  $region50: #{perceiver_io_encoder.4} parent=0 // pred_check
    _
  $region51: #{perceiver_io_encoder.4} parent=0 // pred_check_branch
    %46 = sbr.rel (0) target = $region53
  $region52: #{perceiver_io_encoder.4} parent=0 // pred_region
    _
  $region53: #{perceiver_io_encoder.4} parent=0 // pred_fallthru
    _
  // Predicated region
  $region54: #{perceiver_io_encoder.4} parent=0 // pred_check
    _
  $region55: #{perceiver_io_encoder.4} parent=0 // pred_check_branch
    %48 = sbr.rel (0) target = $region57
  $region56: #{perceiver_io_encoder.4} parent=0 // pred_region
    _
  $region57: #{perceiver_io_encoder.4} parent=0 // pred_fallthru
    _
  // Predicated region
  $region58: #{perceiver_io_encoder.4} parent=0 // pred_check
    _
  $region59: #{perceiver_io_encoder.4} parent=0 // pred_check_branch
    %50 = sbr.rel (0) target = $region61
  $region60: #{perceiver_io_encoder.4} parent=0 // pred_region
    _
  $region61: #{perceiver_io_encoder.4} parent=0 // pred_fallthru
    _
  // Predicated region
  $region62: #{perceiver_io_encoder.4} parent=0 // pred_check
    _
  $region63: #{perceiver_io_encoder.4} parent=0 // pred_check_branch
    %52 = sbr.rel (0) target = $region65
  $region64: #{perceiver_io_encoder.4} parent=0 // pred_region
    _
  $region65: #{perceiver_io_encoder.4} parent=0 // pred_fallthru
    _
  %v54 = vld [vmem:[%s0] sm:$0xff]
  %v55 = vld [vmem:[%s0 + $0x8] sm:$0xff]
  %v56 = vld [vmem:[%s0 + $0x10] sm:$0xff]
  %v57 = vld [vmem:[%s0 + $0x18] sm:$0xff]
  %v58 = vld [vmem:[%s1] sm:$0x1]
  %v59 = vld [vmem:[%s2] sm:$0x1]
  %vm60 = vcmask 261120
  %v61 = vsel %vm60, %v54, 0.0
  %62 = vadd.xlane.f32.xlu0 %v61
  %v63 = vpop.xlane.xlu0 %62
  %v64 = vsel %vm60, %v55, 0.0
  %65 = vadd.xlane.f32.xlu0 %v64
  %v66 = vpop.xlane.xlu0 %65
  %v67 = vsel %vm60, %v56, 0.0
  %68 = vadd.xlane.f32.xlu0 %v67
  %v69 = vpop.xlane.xlu0 %68
  %v70 = vsel %vm60, %v57, 0.0
  %71 = vadd.xlane.f32.xlu0 %v70
  %v72 = vpop.xlane.xlu0 %71
  %v73 = vrcp.pop 32.0
  %v74 = vmul.f32 %v63, %v73
  %v75 = vmul.f32 %v66, %v73
  %v76 = vmul.f32 %v69, %v73
  %v77 = vmul.f32 %v72, %v73
  %v78 = vsub.f32 %v54, %v74
  %v79 = vsub.f32 %v55, %v75
  %v80 = vsub.f32 %v56, %v76
  %v81 = vsub.f32 %v57, %v77
  %v82 = vmul.f32 %v78, %v78
  %v83 = vmul.f32 %v79, %v79
  %v84 = vmul.f32 %v80, %v80
  %v85 = vmul.f32 %v81, %v81
  %v86 = vsel %vm60, %v82, 0.0
  %87 = vadd.xlane.f32.xlu0 %v86
  %v88 = vpop.xlane.xlu0 %87
  %v89 = vsel %vm60, %v83, 0.0
  %90 = vadd.xlane.f32.xlu0 %v89
  %v91 = vpop.xlane.xlu0 %90
  %v92 = vsel %vm60, %v84, 0.0
  %93 = vadd.xlane.f32.xlu0 %v92
  %v94 = vpop.xlane.xlu0 %93
  %v95 = vsel %vm60, %v85, 0.0
  %96 = vadd.xlane.f32.xlu0 %v95
  %v97 = vpop.xlane.xlu0 %96
  %v98 = vmul.f32 %v88, %v73
  %v99 = vmul.f32 %v91, %v73
  %v100 = vmul.f32 %v94, %v73
  %v101 = vmul.f32 %v97, %v73
  %v102 = vadd.f32 %v98, 1e-05
  %v103 = vadd.f32 %v99, 1e-05
  %v104 = vadd.f32 %v100, 1e-05
  %v105 = vadd.f32 %v101, 1e-05
  %v106 = vrsqrt.pop %v102
  %v107 = vrsqrt.pop %v103
  %v108 = vrsqrt.pop %v104
  %v109 = vrsqrt.pop %v105
  %v110 = vmul.f32 %v78, %v106
  %v111 = vmul.f32 %v79, %v107
  %v112 = vmul.f32 %v80, %v108
  %v113 = vmul.f32 %v81, %v109
  %v115 = vlaneseq
  %v116 = vshrl.u32 %v115, 7
  %v117 = vsub.s32 0, %v116
  %v118 = vrot.slane %v58, %v117
  %v120 = vmul.f32 %v110, %v118
  %v121 = vmul.f32 %v111, %v118
  %v122 = vmul.f32 %v112, %v118
  %v123 = vmul.f32 %v113, %v118
  %v125 = vlaneseq
  %v126 = vshrl.u32 %v125, 7
  %v127 = vsub.s32 0, %v126
  %v128 = vrot.slane %v59, %v127
  %v130 = vadd.f32 %v120, %v128
  %v131 = vadd.f32 %v121, %v128
  %v132 = vadd.f32 %v122, %v128
  %v133 = vadd.f32 %v123, %v128
  %v134 = vpack.c.bf16 %v131, %v130
  %v135 = vpack.c.bf16 %v133, %v132
  %v136 = vld [vmem:[%s3] sm:$0xf]
  %v137 = vld [vmem:[%s3 + $0x4] sm:$0xf]
  %v138 = vld [vmem:[%s3 + $0x8] sm:$0xf]
  %v139 = vld [vmem:[%s3 + $0xc] sm:$0xf]
  %v144 = vunpack.c.l.b16 %v136
  %v145 = vunpack.c.l.b16 %v137
  %v146 = vunpack.c.l.b16 %v138
  %v147 = vunpack.c.l.b16 %v139
  %v148 = vpack.c.b16 %v145, %v144
  %v149 = vpack.c.b16 %v147, %v146
  %v153 = vsel %vm60, %v134, 0
  %v156 = vsel %vm60, %v135, 0
  %158 = vmatprep.subr.bf16.mxu0 0
  %159 = vmatpush1.bf16.msra.mxu0 %v148
  %160 = vmatprep.subr.bf16.mxu0 0
  %161 = vmatpush1.bf16.msra.mxu0 %v149
  %162 = vmatprep.subr.bf16.mxu0 0
  %163 = vmatpush1.bf16.msra.mxu0 0
  %164 = vmatprep.subr.bf16.mxu0 0
  %165 = vmatpush1.bf16.msra.mxu0 0
  %166 = vmatprep.subr.bf16.mxu0 0
  %167 = vmatpush1.bf16.msra.mxu0 0
  %168 = vmatprep.subr.bf16.mxu0 0
  %169 = vmatpush1.bf16.msra.mxu0 0
  %170 = vmatprep.subr.bf16.mxu0 0
  %171 = vmatpush1.bf16.msra.mxu0 0
  %172 = vmatprep.subr.bf16.mxu0 0
  %173 = vmatpush1.bf16.msra.mxu0 0
  %174 = vmatprep.subr.bf16.mxu0 0
  %175 = vmatpush1.bf16.msra.mxu0 0
  %176 = vmatprep.subr.bf16.mxu0 0
  %177 = vmatpush1.bf16.msra.mxu0 0
  %178 = vmatprep.subr.bf16.mxu0 0
  %179 = vmatpush1.bf16.msra.mxu0 0
  %180 = vmatprep.subr.bf16.mxu0 0
  %181 = vmatpush1.bf16.msra.mxu0 0
  %182 = vmatprep.subr.bf16.mxu0 0
  %183 = vmatpush1.bf16.msra.mxu0 0
  %184 = vmatprep.subr.bf16.mxu0 0
  %185 = vmatpush1.bf16.msra.mxu0 0
  %186 = vmatprep.subr.bf16.mxu0 0
  %187 = vmatpush1.bf16.msra.mxu0 0
  %188 = vmatprep.subr.bf16.mxu0 0
  %189 = vmatpush1.bf16.msra.mxu0 0
  %190 = vmatprep.mubr.bf16.mxu0 0
  %191 = vmatmul.mubr.bf16.gmra.mrb[0].mxu0 %v153
  %v192 = vpop.f32.mrb[0].mxu0
  %v193 = vadd.f32 0.0, %v192
  %v194 = vpop.f32.mrb[0].mxu0
  %v195 = vpop.f32.mrb[0].mxu0
  %v196 = vadd.f32 0.0, %v195
  %v197 = vpop.f32.mrb[0].mxu0
  %198 = vmatprep.mubr.bf16.mxu0 0
  %199 = vmatmul.mubr.bf16.gmra.mrb[0].mxu0 %v156
  %v200 = vpop.f32.mrb[0].mxu0
  %v201 = vadd.f32 0.0, %v200
  %v202 = vpop.f32.mrb[0].mxu0
  %v203 = vpop.f32.mrb[0].mxu0
  %v204 = vadd.f32 0.0, %v203
  %v205 = vpop.f32.mrb[0].mxu0
  %206 = vdwg.mxu0
  %v207 = vpack.c.bf16 %v196, %v193
  %v208 = vpack.c.bf16 %v204, %v201
  %s209 = scalar_lea.vmem %s3, 16
  %v210 = vld [vmem:[%s209] sm:$0xf]
  %v211 = vld [vmem:[%s209 + $0x4] sm:$0xf]
  %v212 = vld [vmem:[%s209 + $0x8] sm:$0xf]
  %v213 = vld [vmem:[%s209 + $0xc] sm:$0xf]
  %v218 = vunpack.c.l.b16 %v210
  %v219 = vunpack.c.l.b16 %v211
  %v220 = vunpack.c.l.b16 %v212
  %v221 = vunpack.c.l.b16 %v213
  %v222 = vpack.c.b16 %v219, %v218
  %v223 = vpack.c.b16 %v221, %v220
  %226 = vmatprep.subr.bf16.mxu0 0
  %227 = vmatpush1.bf16.msra.mxu0 %v222
  %228 = vmatprep.subr.bf16.mxu0 0
  %229 = vmatpush1.bf16.msra.mxu0 %v223
  %230 = vmatprep.subr.bf16.mxu0 0
  %231 = vmatpush1.bf16.msra.mxu0 0
  %232 = vmatprep.subr.bf16.mxu0 0
  %233 = vmatpush1.bf16.msra.mxu0 0
  %234 = vmatprep.subr.bf16.mxu0 0
  %235 = vmatpush1.bf16.msra.mxu0 0
  %236 = vmatprep.subr.bf16.mxu0 0
  %237 = vmatpush1.bf16.msra.mxu0 0
  %238 = vmatprep.subr.bf16.mxu0 0
  %239 = vmatpush1.bf16.msra.mxu0 0
  %240 = vmatprep.subr.bf16.mxu0 0
  %241 = vmatpush1.bf16.msra.mxu0 0
  %242 = vmatprep.subr.bf16.mxu0 0
  %243 = vmatpush1.bf16.msra.mxu0 0
  %244 = vmatprep.subr.bf16.mxu0 0
  %245 = vmatpush1.bf16.msra.mxu0 0
  %246 = vmatprep.subr.bf16.mxu0 0
  %247 = vmatpush1.bf16.msra.mxu0 0
  %248 = vmatprep.subr.bf16.mxu0 0
  %249 = vmatpush1.bf16.msra.mxu0 0
  %250 = vmatprep.subr.bf16.mxu0 0
  %251 = vmatpush1.bf16.msra.mxu0 0
  %252 = vmatprep.subr.bf16.mxu0 0
  %253 = vmatpush1.bf16.msra.mxu0 0
  %254 = vmatprep.subr.bf16.mxu0 0
  %255 = vmatpush1.bf16.msra.mxu0 0
  %256 = vmatprep.subr.bf16.mxu0 0
  %257 = vmatpush1.bf16.msra.mxu0 0
  %258 = vmatprep.mubr.bf16.mxu0 0
  %259 = vmatmul.mubr.bf16.gmra.mrb[0].mxu0 %v153
  %v260 = vpop.f32.mrb[0].mxu0
  %v261 = vadd.f32 0.0, %v260
  %v262 = vpop.f32.mrb[0].mxu0
  %v263 = vpop.f32.mrb[0].mxu0
  %v264 = vadd.f32 0.0, %v263
  %v265 = vpop.f32.mrb[0].mxu0
  %266 = vmatprep.mubr.bf16.mxu0 0
  %267 = vmatmul.mubr.bf16.gmra.mrb[0].mxu0 %v156
  %v268 = vpop.f32.mrb[0].mxu0
  %v269 = vadd.f32 0.0, %v268
  %v270 = vpop.f32.mrb[0].mxu0
  %v271 = vpop.f32.mrb[0].mxu0
  %v272 = vadd.f32 0.0, %v271
  %v273 = vpop.f32.mrb[0].mxu0
  %274 = vdwg.mxu0
  %v275 = vpack.c.bf16 %v264, %v261
  %v276 = vpack.c.bf16 %v272, %v269
  %s277 = scalar_lea.vmem %s3, 32
  %v278 = vld [vmem:[%s277] sm:$0xf]
  %v279 = vld [vmem:[%s277 + $0x4] sm:$0xf]
  %v280 = vld [vmem:[%s277 + $0x8] sm:$0xf]
  %v281 = vld [vmem:[%s277 + $0xc] sm:$0xf]
  %v286 = vunpack.c.l.b16 %v278
  %v287 = vunpack.c.l.b16 %v279
  %v288 = vunpack.c.l.b16 %v280
  %v289 = vunpack.c.l.b16 %v281
  %v290 = vpack.c.b16 %v287, %v286
  %v291 = vpack.c.b16 %v289, %v288
  %294 = vmatprep.subr.bf16.mxu0 0
  %295 = vmatpush1.bf16.msra.mxu0 %v290
  %296 = vmatprep.subr.bf16.mxu0 0
  %297 = vmatpush1.bf16.msra.mxu0 %v291
  %298 = vmatprep.subr.bf16.mxu0 0
  %299 = vmatpush1.bf16.msra.mxu0 0
  %300 = vmatprep.subr.bf16.mxu0 0
  %301 = vmatpush1.bf16.msra.mxu0 0
  %302 = vmatprep.subr.bf16.mxu0 0
  %303 = vmatpush1.bf16.msra.mxu0 0
  %304 = vmatprep.subr.bf16.mxu0 0
  %305 = vmatpush1.bf16.msra.mxu0 0
  %306 = vmatprep.subr.bf16.mxu0 0
  %307 = vmatpush1.bf16.msra.mxu0 0
  %308 = vmatprep.subr.bf16.mxu0 0
  %309 = vmatpush1.bf16.msra.mxu0 0
  %310 = vmatprep.subr.bf16.mxu0 0
  %311 = vmatpush1.bf16.msra.mxu0 0
  %312 = vmatprep.subr.bf16.mxu0 0
  %313 = vmatpush1.bf16.msra.mxu0 0
  %314 = vmatprep.subr.bf16.mxu0 0
  %315 = vmatpush1.bf16.msra.mxu0 0
  %316 = vmatprep.subr.bf16.mxu0 0
  %317 = vmatpush1.bf16.msra.mxu0 0
  %318 = vmatprep.subr.bf16.mxu0 0
  %319 = vmatpush1.bf16.msra.mxu0 0
  %320 = vmatprep.subr.bf16.mxu0 0
  %321 = vmatpush1.bf16.msra.mxu0 0
  %322 = vmatprep.subr.bf16.mxu0 0
  %323 = vmatpush1.bf16.msra.mxu0 0
  %324 = vmatprep.subr.bf16.mxu0 0
  %325 = vmatpush1.bf16.msra.mxu0 0
  %326 = vmatprep.mubr.bf16.mxu0 0
  %327 = vmatmul.mubr.bf16.gmra.mrb[0].mxu0 %v153
  %v328 = vpop.f32.mrb[0].mxu0
  %v329 = vadd.f32 0.0, %v328
  %v330 = vpop.f32.mrb[0].mxu0
  %v331 = vpop.f32.mrb[0].mxu0
  %v332 = vadd.f32 0.0, %v331
  %v333 = vpop.f32.mrb[0].mxu0
  %334 = vmatprep.mubr.bf16.mxu0 0
  %335 = vmatmul.mubr.bf16.gmra.mrb[0].mxu0 %v156
  %v336 = vpop.f32.mrb[0].mxu0
  %v337 = vadd.f32 0.0, %v336
  %v338 = vpop.f32.mrb[0].mxu0
  %v339 = vpop.f32.mrb[0].mxu0
  %v340 = vadd.f32 0.0, %v339
  %v341 = vpop.f32.mrb[0].mxu0
  %342 = vdwg.mxu0
  %v343 = vpack.c.bf16 %v332, %v329
  %v344 = vpack.c.bf16 %v340, %v337
  %s345 = scalar_lea.vmem %s3, 48
  %v346 = vld [vmem:[%s345] sm:$0xf]
  %v347 = vld [vmem:[%s345 + $0x4] sm:$0xf]
  %v348 = vld [vmem:[%s345 + $0x8] sm:$0xf]
  %v349 = vld [vmem:[%s345 + $0xc] sm:$0xf]
  %v354 = vunpack.c.l.b16 %v346
  %v355 = vunpack.c.l.b16 %v347
  %v356 = vunpack.c.l.b16 %v348
  %v357 = vunpack.c.l.b16 %v349
  %v358 = vpack.c.b16 %v355, %v354
  %v359 = vpack.c.b16 %v357, %v356
  %362 = vmatprep.subr.bf16.mxu0 0
  %363 = vmatpush1.bf16.msra.mxu0 %v358
  %364 = vmatprep.subr.bf16.mxu0 0
  %365 = vmatpush1.bf16.msra.mxu0 %v359
  %366 = vmatprep.subr.bf16.mxu0 0
  %367 = vmatpush1.bf16.msra.mxu0 0
  %368 = vmatprep.subr.bf16.mxu0 0
  %369 = vmatpush1.bf16.msra.mxu0 0
  %370 = vmatprep.subr.bf16.mxu0 0
  %371 = vmatpush1.bf16.msra.mxu0 0
  %372 = vmatprep.subr.bf16.mxu0 0
  %373 = vmatpush1.bf16.msra.mxu0 0
  %374 = vmatprep.subr.bf16.mxu0 0
  %375 = vmatpush1.bf16.msra.mxu0 0
  %376 = vmatprep.subr.bf16.mxu0 0
  %377 = vmatpush1.bf16.msra.mxu0 0
  %378 = vmatprep.subr.bf16.mxu0 0
  %379 = vmatpush1.bf16.msra.mxu0 0
  %380 = vmatprep.subr.bf16.mxu0 0
  %381 = vmatpush1.bf16.msra.mxu0 0
  %382 = vmatprep.subr.bf16.mxu0 0
  %383 = vmatpush1.bf16.msra.mxu0 0
  %384 = vmatprep.subr.bf16.mxu0 0
  %385 = vmatpush1.bf16.msra.mxu0 0
  %386 = vmatprep.subr.bf16.mxu0 0
  %387 = vmatpush1.bf16.msra.mxu0 0
  %388 = vmatprep.subr.bf16.mxu0 0
  %389 = vmatpush1.bf16.msra.mxu0 0
  %390 = vmatprep.subr.bf16.mxu0 0
  %391 = vmatpush1.bf16.msra.mxu0 0
  %392 = vmatprep.subr.bf16.mxu0 0
  %393 = vmatpush1.bf16.msra.mxu0 0
  %394 = vmatprep.mubr.bf16.mxu0 0
  %395 = vmatmul.mubr.bf16.gmra.mrb[0].mxu0 %v153
  %v396 = vpop.f32.mrb[0].mxu0
  %v397 = vadd.f32 0.0, %v396
  %v398 = vpop.f32.mrb[0].mxu0
  %v399 = vpop.f32.mrb[0].mxu0
  %v400 = vadd.f32 0.0, %v399
  %v401 = vpop.f32.mrb[0].mxu0
  %402 = vmatprep.mubr.bf16.mxu0 0
  %403 = vmatmul.mubr.bf16.gmra.mrb[0].mxu0 %v156
  %v404 = vpop.f32.mrb[0].mxu0
  %v405 = vadd.f32 0.0, %v404
  %v406 = vpop.f32.mrb[0].mxu0
  %v407 = vpop.f32.mrb[0].mxu0
  %v408 = vadd.f32 0.0, %v407
  %v409 = vpop.f32.mrb[0].mxu0
  %410 = vdwg.mxu0
  %v411 = vpack.c.bf16 %v400, %v397
  %v412 = vpack.c.bf16 %v408, %v405
  %v413 = vld [vmem:[%s4] sm:$0xf]
  %v414 = vld [vmem:[%s4 + $0x4] sm:$0xf]
  %v415 = vld [vmem:[%s4 + $0x8] sm:$0xf]
  %v416 = vld [vmem:[%s4 + $0xc] sm:$0xf]
  %v421 = vunpack.c.l.b16 %v413
  %v422 = vunpack.c.l.b16 %v414
  %v423 = vunpack.c.l.b16 %v415
  %v424 = vunpack.c.l.b16 %v416
  %v425 = vpack.c.b16 %v422, %v421
  %v426 = vpack.c.b16 %v424, %v423
  %429 = vmatprep.subr.bf16.mxu0 0
  %430 = vmatpush1.bf16.msra.mxu0 %v425
  %431 = vmatprep.subr.bf16.mxu0 0
  %432 = vmatpush1.bf16.msra.mxu0 %v426
  %433 = vmatprep.subr.bf16.mxu0 0
  %434 = vmatpush1.bf16.msra.mxu0 0
  %435 = vmatprep.subr.bf16.mxu0 0
  %436 = vmatpush1.bf16.msra.mxu0 0
  %437 = vmatprep.subr.bf16.mxu0 0
  %438 = vmatpush1.bf16.msra.mxu0 0
  %439 = vmatprep.subr.bf16.mxu0 0
  %440 = vmatpush1.bf16.msra.mxu0 0
  %441 = vmatprep.subr.bf16.mxu0 0
  %442 = vmatpush1.bf16.msra.mxu0 0
  %443 = vmatprep.subr.bf16.mxu0 0
  %444 = vmatpush1.bf16.msra.mxu0 0
  %445 = vmatprep.subr.bf16.mxu0 0
  %446 = vmatpush1.bf16.msra.mxu0 0
  %447 = vmatprep.subr.bf16.mxu0 0
  %448 = vmatpush1.bf16.msra.mxu0 0
  %449 = vmatprep.subr.bf16.mxu0 0
  %450 = vmatpush1.bf16.msra.mxu0 0
  %451 = vmatprep.subr.bf16.mxu0 0
  %452 = vmatpush1.bf16.msra.mxu0 0
  %453 = vmatprep.subr.bf16.mxu0 0
  %454 = vmatpush1.bf16.msra.mxu0 0
  %455 = vmatprep.subr.bf16.mxu0 0
  %456 = vmatpush1.bf16.msra.mxu0 0
  %457 = vmatprep.subr.bf16.mxu0 0
  %458 = vmatpush1.bf16.msra.mxu0 0
  %459 = vmatprep.subr.bf16.mxu0 0
  %460 = vmatpush1.bf16.msra.mxu0 0
  %461 = vmatprep.mubr.bf16.mxu0 0
  %462 = vmatmul.mubr.bf16.gmra.mrb[0].mxu0 %v153
  %v463 = vpop.f32.mrb[0].mxu0
  %v464 = vadd.f32 0.0, %v463
  %v465 = vpop.f32.mrb[0].mxu0
  %v466 = vpop.f32.mrb[0].mxu0
  %v467 = vadd.f32 0.0, %v466
  %v468 = vpop.f32.mrb[0].mxu0
  %469 = vmatprep.mubr.bf16.mxu0 0
  %470 = vmatmul.mubr.bf16.gmra.mrb[0].mxu0 %v156
  %v471 = vpop.f32.mrb[0].mxu0
  %v472 = vadd.f32 0.0, %v471
  %v473 = vpop.f32.mrb[0].mxu0
  %v474 = vpop.f32.mrb[0].mxu0
  %v475 = vadd.f32 0.0, %v474
  %v476 = vpop.f32.mrb[0].mxu0
  %477 = vdwg.mxu0
  %v478 = vpack.c.bf16 %v467, %v464
  %v479 = vpack.c.bf16 %v475, %v472
  %s480 = scalar_lea.vmem %s4, 16
  %v481 = vld [vmem:[%s480] sm:$0xf]
  %v482 = vld [vmem:[%s480 + $0x4] sm:$0xf]
  %v483 = vld [vmem:[%s480 + $0x8] sm:$0xf]
  %v484 = vld [vmem:[%s480 + $0xc] sm:$0xf]
  %v489 = vunpack.c.l.b16 %v481
  %v490 = vunpack.c.l.b16 %v482
  %v491 = vunpack.c.l.b16 %v483
  %v492 = vunpack.c.l.b16 %v484
  %v493 = vpack.c.b16 %v490, %v489
  %v494 = vpack.c.b16 %v492, %v491
  %497 = vmatprep.subr.bf16.mxu0 0
  %498 = vmatpush1.bf16.msra.mxu0 %v493
  %499 = vmatprep.subr.bf16.mxu0 0
  %500 = vmatpush1.bf16.msra.mxu0 %v494
  %501 = vmatprep.subr.bf16.mxu0 0
  %502 = vmatpush1.bf16.msra.mxu0 0
  %503 = vmatprep.subr.bf16.mxu0 0
  %504 = vmatpush1.bf16.msra.mxu0 0
  %505 = vmatprep.subr.bf16.mxu0 0
  %506 = vmatpush1.bf16.msra.mxu0 0
  %507 = vmatprep.subr.bf16.mxu0 0
  %508 = vmatpush1.bf16.msra.mxu0 0
  %509 = vmatprep.subr.bf16.mxu0 0
  %510 = vmatpush1.bf16.msra.mxu0 0
  %511 = vmatprep.subr.bf16.mxu0 0
  %512 = vmatpush1.bf16.msra.mxu0 0
  %513 = vmatprep.subr.bf16.mxu0 0
  %514 = vmatpush1.bf16.msra.mxu0 0
  %515 = vmatprep.subr.bf16.mxu0 0
  %516 = vmatpush1.bf16.msra.mxu0 0
  %517 = vmatprep.subr.bf16.mxu0 0
  %518 = vmatpush1.bf16.msra.mxu0 0
  %519 = vmatprep.subr.bf16.mxu0 0
  %520 = vmatpush1.bf16.msra.mxu0 0
  %521 = vmatprep.subr.bf16.mxu0 0
  %522 = vmatpush1.bf16.msra.mxu0 0
  %523 = vmatprep.subr.bf16.mxu0 0
  %524 = vmatpush1.bf16.msra.mxu0 0
  %525 = vmatprep.subr.bf16.mxu0 0
  %526 = vmatpush1.bf16.msra.mxu0 0
  %527 = vmatprep.subr.bf16.mxu0 0
  %528 = vmatpush1.bf16.msra.mxu0 0
  %529 = vmatprep.mubr.bf16.mxu0 0
  %530 = vmatmul.mubr.bf16.gmra.mrb[0].mxu0 %v153
  %v531 = vpop.f32.mrb[0].mxu0
  %v532 = vadd.f32 0.0, %v531
  %v533 = vpop.f32.mrb[0].mxu0
  %v534 = vpop.f32.mrb[0].mxu0
  %v535 = vadd.f32 0.0, %v534
  %v536 = vpop.f32.mrb[0].mxu0
  %537 = vmatprep.mubr.bf16.mxu0 0
  %538 = vmatmul.mubr.bf16.gmra.mrb[0].mxu0 %v156
  %v539 = vpop.f32.mrb[0].mxu0
  %v540 = vadd.f32 0.0, %v539
  %v541 = vpop.f32.mrb[0].mxu0
  %v542 = vpop.f32.mrb[0].mxu0
  %v543 = vadd.f32 0.0, %v542
  %v544 = vpop.f32.mrb[0].mxu0
  %545 = vdwg.mxu0
  %v546 = vpack.c.bf16 %v535, %v532
  %v547 = vpack.c.bf16 %v543, %v540
  %s548 = scalar_lea.vmem %s4, 32
  %v549 = vld [vmem:[%s548] sm:$0xf]
  %v550 = vld [vmem:[%s548 + $0x4] sm:$0xf]
  %v551 = vld [vmem:[%s548 + $0x8] sm:$0xf]
  %v552 = vld [vmem:[%s548 + $0xc] sm:$0xf]
  %v557 = vunpack.c.l.b16 %v549
  %v558 = vunpack.c.l.b16 %v550
  %v559 = vunpack.c.l.b16 %v551
  %v560 = vunpack.c.l.b16 %v552
  %v561 = vpack.c.b16 %v558, %v557
  %v562 = vpack.c.b16 %v560, %v559
  %565 = vmatprep.subr.bf16.mxu0 0
  %566 = vmatpush1.bf16.msra.mxu0 %v561
  %567 = vmatprep.subr.bf16.mxu0 0
  %568 = vmatpush1.bf16.msra.mxu0 %v562
  %569 = vmatprep.subr.bf16.mxu0 0
  %570 = vmatpush1.bf16.msra.mxu0 0
  %571 = vmatprep.subr.bf16.mxu0 0
  %572 = vmatpush1.bf16.msra.mxu0 0
  %573 = vmatprep.subr.bf16.mxu0 0
  %574 = vmatpush1.bf16.msra.mxu0 0
  %575 = vmatprep.subr.bf16.mxu0 0
  %576 = vmatpush1.bf16.msra.mxu0 0
  %577 = vmatprep.subr.bf16.mxu0 0
  %578 = vmatpush1.bf16.msra.mxu0 0
  %579 = vmatprep.subr.bf16.mxu0 0
  %580 = vmatpush1.bf16.msra.mxu0 0
  %581 = vmatprep.subr.bf16.mxu0 0
  %582 = vmatpush1.bf16.msra.mxu0 0
  %583 = vmatprep.subr.bf16.mxu0 0
  %584 = vmatpush1.bf16.msra.mxu0 0
  %585 = vmatprep.subr.bf16.mxu0 0
  %586 = vmatpush1.bf16.msra.mxu0 0
  %587 = vmatprep.subr.bf16.mxu0 0
  %588 = vmatpush1.bf16.msra.mxu0 0
  %589 = vmatprep.subr.bf16.mxu0 0
  %590 = vmatpush1.bf16.msra.mxu0 0
  %591 = vmatprep.subr.bf16.mxu0 0
  %592 = vmatpush1.bf16.msra.mxu0 0
  %593 = vmatprep.subr.bf16.mxu0 0
  %594 = vmatpush1.bf16.msra.mxu0 0
  %595 = vmatprep.subr.bf16.mxu0 0
  %596 = vmatpush1.bf16.msra.mxu0 0
  %597 = vmatprep.mubr.bf16.mxu0 0
  %598 = vmatmul.mubr.bf16.gmra.mrb[0].mxu0 %v153
  %v599 = vpop.f32.mrb[0].mxu0
  %v600 = vadd.f32 0.0, %v599
  %v601 = vpop.f32.mrb[0].mxu0
  %v602 = vpop.f32.mrb[0].mxu0
  %v603 = vadd.f32 0.0, %v602
  %v604 = vpop.f32.mrb[0].mxu0
  %605 = vmatprep.mubr.bf16.mxu0 0
  %606 = vmatmul.mubr.bf16.gmra.mrb[0].mxu0 %v156
  %v607 = vpop.f32.mrb[0].mxu0
  %v608 = vadd.f32 0.0, %v607
  %v609 = vpop.f32.mrb[0].mxu0
  %v610 = vpop.f32.mrb[0].mxu0
  %v611 = vadd.f32 0.0, %v610
  %v612 = vpop.f32.mrb[0].mxu0
  %613 = vdwg.mxu0
  %v614 = vpack.c.bf16 %v603, %v600
  %v615 = vpack.c.bf16 %v611, %v608
  %s616 = scalar_lea.vmem %s4, 48
  %v617 = vld [vmem:[%s616] sm:$0xf]
  %v618 = vld [vmem:[%s616 + $0x4] sm:$0xf]
  %v619 = vld [vmem:[%s616 + $0x8] sm:$0xf]
  %v620 = vld [vmem:[%s616 + $0xc] sm:$0xf]
  %v625 = vunpack.c.l.b16 %v617
  %v626 = vunpack.c.l.b16 %v618
  %v627 = vunpack.c.l.b16 %v619
  %v628 = vunpack.c.l.b16 %v620
  %v629 = vpack.c.b16 %v626, %v625
  %v630 = vpack.c.b16 %v628, %v627
  %633 = vmatprep.subr.bf16.mxu0 0
  %634 = vmatpush1.bf16.msra.mxu0 %v629
  %635 = vmatprep.subr.bf16.mxu0 0
  %636 = vmatpush1.bf16.msra.mxu0 %v630
  %637 = vmatprep.subr.bf16.mxu0 0
  %638 = vmatpush1.bf16.msra.mxu0 0
  %639 = vmatprep.subr.bf16.mxu0 0
  %640 = vmatpush1.bf16.msra.mxu0 0
  %641 = vmatprep.subr.bf16.mxu0 0
  %642 = vmatpush1.bf16.msra.mxu0 0
  %643 = vmatprep.subr.bf16.mxu0 0
  %644 = vmatpush1.bf16.msra.mxu0 0
  %645 = vmatprep.subr.bf16.mxu0 0
  %646 = vmatpush1.bf16.msra.mxu0 0
  %647 = vmatprep.subr.bf16.mxu0 0
  %648 = vmatpush1.bf16.msra.mxu0 0
  %649 = vmatprep.subr.bf16.mxu0 0
  %650 = vmatpush1.bf16.msra.mxu0 0
  %651 = vmatprep.subr.bf16.mxu0 0
  %652 = vmatpush1.bf16.msra.mxu0 0
  %653 = vmatprep.subr.bf16.mxu0 0
  %654 = vmatpush1.bf16.msra.mxu0 0
  %655 = vmatprep.subr.bf16.mxu0 0
  %656 = vmatpush1.bf16.msra.mxu0 0
  %657 = vmatprep.subr.bf16.mxu0 0
  %658 = vmatpush1.bf16.msra.mxu0 0
  %659 = vmatprep.subr.bf16.mxu0 0
  %660 = vmatpush1.bf16.msra.mxu0 0
  %661 = vmatprep.subr.bf16.mxu0 0
  %662 = vmatpush1.bf16.msra.mxu0 0
  %663 = vmatprep.subr.bf16.mxu0 0
  %664 = vmatpush1.bf16.msra.mxu0 0
  %665 = vmatprep.mubr.bf16.mxu0 0
  %666 = vmatmul.mubr.bf16.gmra.mrb[0].mxu0 %v153
  %v667 = vpop.f32.mrb[0].mxu0
  %v668 = vadd.f32 0.0, %v667
  %v669 = vpop.f32.mrb[0].mxu0
  %v670 = vpop.f32.mrb[0].mxu0
  %v671 = vadd.f32 0.0, %v670
  %v672 = vpop.f32.mrb[0].mxu0
  %673 = vmatprep.mubr.bf16.mxu0 0
  %674 = vmatmul.mubr.bf16.gmra.mrb[0].mxu0 %v156
  %v675 = vpop.f32.mrb[0].mxu0
  %v676 = vadd.f32 0.0, %v675
  %v677 = vpop.f32.mrb[0].mxu0
  %v678 = vpop.f32.mrb[0].mxu0
  %v679 = vadd.f32 0.0, %v678
  %v680 = vpop.f32.mrb[0].mxu0
  %681 = vdwg.mxu0
  %v682 = vpack.c.bf16 %v671, %v668
  %v683 = vpack.c.bf16 %v679, %v676
  %v684 = vld [vmem:[%s5] sm:$0xf]
  %v685 = vld [vmem:[%s5 + $0x4] sm:$0xf]
  %v686 = vld [vmem:[%s5 + $0x8] sm:$0xf]
  %v687 = vld [vmem:[%s5 + $0xc] sm:$0xf]
  %v692 = vunpack.c.l.b16 %v684
  %v693 = vunpack.c.l.b16 %v685
  %v694 = vunpack.c.l.b16 %v686
  %v695 = vunpack.c.l.b16 %v687
  %v696 = vpack.c.b16 %v693, %v692
  %v697 = vpack.c.b16 %v695, %v694
  %700 = vmatprep.subr.bf16.mxu0 0
  %701 = vmatpush1.bf16.msra.mxu0 %v696
  %702 = vmatprep.subr.bf16.mxu0 0
  %703 = vmatpush1.bf16.msra.mxu0 %v697
  %704 = vmatprep.subr.bf16.mxu0 0
  %705 = vmatpush1.bf16.msra.mxu0 0
  %706 = vmatprep.subr.bf16.mxu0 0
  %707 = vmatpush1.bf16.msra.mxu0 0
  %708 = vmatprep.subr.bf16.mxu0 0
  %709 = vmatpush1.bf16.msra.mxu0 0
  %710 = vmatprep.subr.bf16.mxu0 0
  %711 = vmatpush1.bf16.msra.mxu0 0
  %712 = vmatprep.subr.bf16.mxu0 0
  %713 = vmatpush1.bf16.msra.mxu0 0
  %714 = vmatprep.subr.bf16.mxu0 0
  %715 = vmatpush1.bf16.msra.mxu0 0
  %716 = vmatprep.subr.bf16.mxu0 0
  %717 = vmatpush1.bf16.msra.mxu0 0
  %718 = vmatprep.subr.bf16.mxu0 0
  %719 = vmatpush1.bf16.msra.mxu0 0
  %720 = vmatprep.subr.bf16.mxu0 0
  %721 = vmatpush1.bf16.msra.mxu0 0
  %722 = vmatprep.subr.bf16.mxu0 0
  %723 = vmatpush1.bf16.msra.mxu0 0
  %724 = vmatprep.subr.bf16.mxu0 0
  %725 = vmatpush1.bf16.msra.mxu0 0
  %726 = vmatprep.subr.bf16.mxu0 0
  %727 = vmatpush1.bf16.msra.mxu0 0
  %728 = vmatprep.subr.bf16.mxu0 0
  %729 = vmatpush1.bf16.msra.mxu0 0
  %730 = vmatprep.subr.bf16.mxu0 0
  %731 = vmatpush1.bf16.msra.mxu0 0
  %732 = vmatprep.mubr.bf16.mxu0 0
  %733 = vmatmul.mubr.bf16.gmra.mrb[0].mxu0 %v153
  %v734 = vpop.f32.mrb[0].mxu0
  %v735 = vadd.f32 0.0, %v734
  %v736 = vpop.f32.mrb[0].mxu0
  %v737 = vpop.f32.mrb[0].mxu0
  %v738 = vadd.f32 0.0, %v737
  %v739 = vpop.f32.mrb[0].mxu0
  %740 = vmatprep.mubr.bf16.mxu0 0
  %741 = vmatmul.mubr.bf16.gmra.mrb[0].mxu0 %v156
  %v742 = vpop.f32.mrb[0].mxu0
  %v743 = vadd.f32 0.0, %v742
  %v744 = vpop.f32.mrb[0].mxu0
  %v745 = vpop.f32.mrb[0].mxu0
  %v746 = vadd.f32 0.0, %v745
  %v747 = vpop.f32.mrb[0].mxu0
  %748 = vdwg.mxu0
  %v749 = vpack.c.bf16 %v738, %v735
  %v750 = vpack.c.bf16 %v746, %v743
  %s751 = scalar_lea.vmem %s5, 16
  %v752 = vld [vmem:[%s751] sm:$0xf]
  %v753 = vld [vmem:[%s751 + $0x4] sm:$0xf]
  %v754 = vld [vmem:[%s751 + $0x8] sm:$0xf]
  %v755 = vld [vmem:[%s751 + $0xc] sm:$0xf]
  %v760 = vunpack.c.l.b16 %v752
  %v761 = vunpack.c.l.b16 %v753
  %v762 = vunpack.c.l.b16 %v754
  %v763 = vunpack.c.l.b16 %v755
  %v764 = vpack.c.b16 %v761, %v760
  %v765 = vpack.c.b16 %v763, %v762
  %768 = vmatprep.subr.bf16.mxu0 0
  %769 = vmatpush1.bf16.msra.mxu0 %v764
  %770 = vmatprep.subr.bf16.mxu0 0
  %771 = vmatpush1.bf16.msra.mxu0 %v765
  %772 = vmatprep.subr.bf16.mxu0 0
  %773 = vmatpush1.bf16.msra.mxu0 0
  %774 = vmatprep.subr.bf16.mxu0 0
  %775 = vmatpush1.bf16.msra.mxu0 0
  %776 = vmatprep.subr.bf16.mxu0 0
  %777 = vmatpush1.bf16.msra.mxu0 0
  %778 = vmatprep.subr.bf16.mxu0 0
  %779 = vmatpush1.bf16.msra.mxu0 0
  %780 = vmatprep.subr.bf16.mxu0 0
  %781 = vmatpush1.bf16.msra.mxu0 0
  %782 = vmatprep.subr.bf16.mxu0 0
  %783 = vmatpush1.bf16.msra.mxu0 0
  %784 = vmatprep.subr.bf16.mxu0 0
  %785 = vmatpush1.bf16.msra.mxu0 0
  %786 = vmatprep.subr.bf16.mxu0 0
  %787 = vmatpush1.bf16.msra.mxu0 0
  %788 = vmatprep.subr.bf16.mxu0 0
  %789 = vmatpush1.bf16.msra.mxu0 0
  %790 = vmatprep.subr.bf16.mxu0 0
  %791 = vmatpush1.bf16.msra.mxu0 0
  %792 = vmatprep.subr.bf16.mxu0 0
  %793 = vmatpush1.bf16.msra.mxu0 0
  %794 = vmatprep.subr.bf16.mxu0 0
  %795 = vmatpush1.bf16.msra.mxu0 0
  %796 = vmatprep.subr.bf16.mxu0 0
  %797 = vmatpush1.bf16.msra.mxu0 0
  %798 = vmatprep.subr.bf16.mxu0 0
  %799 = vmatpush1.bf16.msra.mxu0 0
  %800 = vmatprep.mubr.bf16.mxu0 0
  %801 = vmatmul.mubr.bf16.gmra.mrb[0].mxu0 %v153
  %v802 = vpop.f32.mrb[0].mxu0
  %v803 = vadd.f32 0.0, %v802
  %v804 = vpop.f32.mrb[0].mxu0
  %v805 = vpop.f32.mrb[0].mxu0
  %v806 = vadd.f32 0.0, %v805
  %v807 = vpop.f32.mrb[0].mxu0
  %808 = vmatprep.mubr.bf16.mxu0 0
  %809 = vmatmul.mubr.bf16.gmra.mrb[0].mxu0 %v156
  %v810 = vpop.f32.mrb[0].mxu0
  %v811 = vadd.f32 0.0, %v810
  %v812 = vpop.f32.mrb[0].mxu0
  %v813 = vpop.f32.mrb[0].mxu0
  %v814 = vadd.f32 0.0, %v813
  %v815 = vpop.f32.mrb[0].mxu0
  %816 = vdwg.mxu0
  %v817 = vpack.c.bf16 %v806, %v803
  %v818 = vpack.c.bf16 %v814, %v811
  %s819 = scalar_lea.vmem %s5, 32
  %v820 = vld [vmem:[%s819] sm:$0xf]
  %v821 = vld [vmem:[%s819 + $0x4] sm:$0xf]
  %v822 = vld [vmem:[%s819 + $0x8] sm:$0xf]
  %v823 = vld [vmem:[%s819 + $0xc] sm:$0xf]
  %v828 = vunpack.c.l.b16 %v820
  %v829 = vunpack.c.l.b16 %v821
  %v830 = vunpack.c.l.b16 %v822
  %v831 = vunpack.c.l.b16 %v823
  %v832 = vpack.c.b16 %v829, %v828
  %v833 = vpack.c.b16 %v831, %v830
  %836 = vmatprep.subr.bf16.mxu0 0
  %837 = vmatpush1.bf16.msra.mxu0 %v832
  %838 = vmatprep.subr.bf16.mxu0 0
  %839 = vmatpush1.bf16.msra.mxu0 %v833
  %840 = vmatprep.subr.bf16.mxu0 0
  %841 = vmatpush1.bf16.msra.mxu0 0
  %842 = vmatprep.subr.bf16.mxu0 0
  %843 = vmatpush1.bf16.msra.mxu0 0
  %844 = vmatprep.subr.bf16.mxu0 0
  %845 = vmatpush1.bf16.msra.mxu0 0
  %846 = vmatprep.subr.bf16.mxu0 0
  %847 = vmatpush1.bf16.msra.mxu0 0
  %848 = vmatprep.subr.bf16.mxu0 0
  %849 = vmatpush1.bf16.msra.mxu0 0
  %850 = vmatprep.subr.bf16.mxu0 0
  %851 = vmatpush1.bf16.msra.mxu0 0
  %852 = vmatprep.subr.bf16.mxu0 0
  %853 = vmatpush1.bf16.msra.mxu0 0
  %854 = vmatprep.subr.bf16.mxu0 0
  %855 = vmatpush1.bf16.msra.mxu0 0
  %856 = vmatprep.subr.bf16.mxu0 0
  %857 = vmatpush1.bf16.msra.mxu0 0
  %858 = vmatprep.subr.bf16.mxu0 0
  %859 = vmatpush1.bf16.msra.mxu0 0
  %860 = vmatprep.subr.bf16.mxu0 0
  %861 = vmatpush1.bf16.msra.mxu0 0
  %862 = vmatprep.subr.bf16.mxu0 0
  %863 = vmatpush1.bf16.msra.mxu0 0
  %864 = vmatprep.subr.bf16.mxu0 0
  %865 = vmatpush1.bf16.msra.mxu0 0
  %866 = vmatprep.subr.bf16.mxu0 0
  %867 = vmatpush1.bf16.msra.mxu0 0
  %868 = vmatprep.mubr.bf16.mxu0 0
  %869 = vmatmul.mubr.bf16.gmra.mrb[0].mxu0 %v153
  %v870 = vpop.f32.mrb[0].mxu0
  %v871 = vadd.f32 0.0, %v870
  %v872 = vpop.f32.mrb[0].mxu0
  %v873 = vpop.f32.mrb[0].mxu0
  %v874 = vadd.f32 0.0, %v873
  %v875 = vpop.f32.mrb[0].mxu0
  %876 = vmatprep.mubr.bf16.mxu0 0
  %877 = vmatmul.mubr.bf16.gmra.mrb[0].mxu0 %v156
  %v878 = vpop.f32.mrb[0].mxu0
  %v879 = vadd.f32 0.0, %v878
  %v880 = vpop.f32.mrb[0].mxu0
  %v881 = vpop.f32.mrb[0].mxu0
  %v882 = vadd.f32 0.0, %v881
  %v883 = vpop.f32.mrb[0].mxu0
  %884 = vdwg.mxu0
  %v885 = vpack.c.bf16 %v874, %v871
  %v886 = vpack.c.bf16 %v882, %v879
  %s887 = scalar_lea.vmem %s5, 48
  %v888 = vld [vmem:[%s887] sm:$0xf]
  %v889 = vld [vmem:[%s887 + $0x4] sm:$0xf]
  %v890 = vld [vmem:[%s887 + $0x8] sm:$0xf]
  %v891 = vld [vmem:[%s887 + $0xc] sm:$0xf]
  %v896 = vunpack.c.l.b16 %v888
  %v897 = vunpack.c.l.b16 %v889
  %v898 = vunpack.c.l.b16 %v890
  %v899 = vunpack.c.l.b16 %v891
  %v900 = vpack.c.b16 %v897, %v896
  %v901 = vpack.c.b16 %v899, %v898
  %904 = vmatprep.subr.bf16.mxu0 0
  %905 = vmatpush1.bf16.msra.mxu0 %v900
  %906 = vmatprep.subr.bf16.mxu0 0
  %907 = vmatpush1.bf16.msra.mxu0 %v901
  %908 = vmatprep.subr.bf16.mxu0 0
  %909 = vmatpush1.bf16.msra.mxu0 0
  %910 = vmatprep.subr.bf16.mxu0 0
  %911 = vmatpush1.bf16.msra.mxu0 0
  %912 = vmatprep.subr.bf16.mxu0 0
  %913 = vmatpush1.bf16.msra.mxu0 0
  %914 = vmatprep.subr.bf16.mxu0 0
  %915 = vmatpush1.bf16.msra.mxu0 0
  %916 = vmatprep.subr.bf16.mxu0 0
  %917 = vmatpush1.bf16.msra.mxu0 0
  %918 = vmatprep.subr.bf16.mxu0 0
  %919 = vmatpush1.bf16.msra.mxu0 0
  %920 = vmatprep.subr.bf16.mxu0 0
  %921 = vmatpush1.bf16.msra.mxu0 0
  %922 = vmatprep.subr.bf16.mxu0 0
  %923 = vmatpush1.bf16.msra.mxu0 0
  %924 = vmatprep.subr.bf16.mxu0 0
  %925 = vmatpush1.bf16.msra.mxu0 0
  %926 = vmatprep.subr.bf16.mxu0 0
  %927 = vmatpush1.bf16.msra.mxu0 0
  %928 = vmatprep.subr.bf16.mxu0 0
  %929 = vmatpush1.bf16.msra.mxu0 0
  %930 = vmatprep.subr.bf16.mxu0 0
  %931 = vmatpush1.bf16.msra.mxu0 0
  %932 = vmatprep.subr.bf16.mxu0 0
  %933 = vmatpush1.bf16.msra.mxu0 0
  %934 = vmatprep.subr.bf16.mxu0 0
  %935 = vmatpush1.bf16.msra.mxu0 0
  %936 = vmatprep.mubr.bf16.mxu0 0
  %937 = vmatmul.mubr.bf16.gmra.mrb[0].mxu0 %v153
  %v938 = vpop.f32.mrb[0].mxu0
  %v939 = vadd.f32 0.0, %v938
  %v940 = vpop.f32.mrb[0].mxu0
  %v941 = vpop.f32.mrb[0].mxu0
  %v942 = vadd.f32 0.0, %v941
  %v943 = vpop.f32.mrb[0].mxu0
  %944 = vmatprep.mubr.bf16.mxu0 0
  %945 = vmatmul.mubr.bf16.gmra.mrb[0].mxu0 %v156
  %v946 = vpop.f32.mrb[0].mxu0
  %v947 = vadd.f32 0.0, %v946
  %v948 = vpop.f32.mrb[0].mxu0
  %v949 = vpop.f32.mrb[0].mxu0
  %v950 = vadd.f32 0.0, %v949
  %v951 = vpop.f32.mrb[0].mxu0
  %952 = vdwg.mxu0
  %v953 = vpack.c.bf16 %v942, %v939
  %v954 = vpack.c.bf16 %v950, %v947
  %v955 = vld [vmem:[%s6] sm:$0xf]
  %v956 = vld [vmem:[%s6 + $0x4] sm:$0xf]
  %s957 = scalar_lea.vmem %s6, 8
  %v958 = vld [vmem:[%s957] sm:$0xf]
  %v959 = vld [vmem:[%s957 + $0x4] sm:$0xf]
  %s960 = scalar_lea.vmem %s6, 16
  %v961 = vld [vmem:[%s960] sm:$0xf]
  %v962 = vld [vmem:[%s960 + $0x4] sm:$0xf]
  %s963 = scalar_lea.vmem %s6, 24
  %v964 = vld [vmem:[%s963] sm:$0xf]
  %v965 = vld [vmem:[%s963 + $0x4] sm:$0xf]
  %v966 = vld [vmem:[%s7] sm:$0x1]
  %v968 = vlaneseq
  %v969 = vshrl.u32 %v968, 7
  %v970 = vsub.s32 0, %v969
  %v971 = vrot.slane %v966, %v970
  %vm973 = vcmask 130048
  %v975 = vsel %vm973, %v207, 0
  %v978 = vsel %vm973, %v478, 0
  %980 = vmatprep.subr.bf16.mxu0 0
  %981 = vmatpush1.bf16.xpose.msra.mxu0 %v978
  %982 = vmatprep.subr.bf16.mxu0 0
  %983 = vmatpush1.bf16.xpose.msra.mxu0 0
  %984 = vmatprep.subr.bf16.mxu0 0
  %985 = vmatpush1.bf16.xpose.msra.mxu0 0
  %986 = vmatprep.subr.bf16.mxu0 0
  %987 = vmatpush1.bf16.xpose.msra.mxu0 0
  %988 = vmatprep.subr.bf16.mxu0 0
  %989 = vmatpush1.bf16.xpose.msra.mxu0 0
  %990 = vmatprep.subr.bf16.mxu0 0
  %991 = vmatpush1.bf16.xpose.msra.mxu0 0
  %992 = vmatprep.subr.bf16.mxu0 0
  %993 = vmatpush1.bf16.xpose.msra.mxu0 0
  %994 = vmatprep.subr.bf16.mxu0 0
  %995 = vmatpush1.bf16.xpose.msra.mxu0 0
  %996 = vmatprep.subr.bf16.mxu0 0
  %997 = vmatpush1.bf16.xpose.msra.mxu0 0
  %998 = vmatprep.subr.bf16.mxu0 0
  %999 = vmatpush1.bf16.xpose.msra.mxu0 0
  %1000 = vmatprep.subr.bf16.mxu0 0
  %1001 = vmatpush1.bf16.xpose.msra.mxu0 0
  %1002 = vmatprep.subr.bf16.mxu0 0
  %1003 = vmatpush1.bf16.xpose.msra.mxu0 0
  %1004 = vmatprep.subr.bf16.mxu0 0
  %1005 = vmatpush1.bf16.xpose.msra.mxu0 0
  %1006 = vmatprep.subr.bf16.mxu0 0
  %1007 = vmatpush1.bf16.xpose.msra.mxu0 0
  %1008 = vmatprep.subr.bf16.mxu0 0
  %1009 = vmatpush1.bf16.xpose.msra.mxu0 0
  %1010 = vmatprep.subr.bf16.mxu0 0
  %1011 = vmatpush1.bf16.xpose.msra.mxu0 0
  %1012 = vmatprep.mubr.bf16.mxu0 0
  %1013 = vmatmul.mubr.bf16.gmra.mrb[0].mxu0 %v975
  %v1014 = vpop.f32.mrb[0].mxu0
  %v1015 = vadd.f32 0.0, %v1014
  %v1016 = vpop.f32.mrb[0].mxu0
  %v1017 = vpop.f32.mrb[0].mxu0
  %v1018 = vadd.f32 0.0, %v1017
  %v1019 = vpop.f32.mrb[0].mxu0
  %1020 = vdwg.mxu0
  %v1021 = vsel %vm973, %v1015, -inf
  %1022 = vmax.xlane.f32.xlu0 %v1021
  %v1023 = vpop.xlane.xlu0 %1022
  %v1024 = vsel %vm973, %v1018, -inf
  %1025 = vmax.xlane.f32.xlu0 %v1024
  %v1026 = vpop.xlane.xlu0 %1025
  %v1027 = vsub.f32 %v1015, %v1023
  %v1028 = vsub.f32 %v1018, %v1026
  %v1029 = vmul.f32 %v1027, 1.442695
  %v1030 = vpow.pop %v1029
  %v1031 = vmul.f32 %v1028, 1.442695
  %v1032 = vpow.pop %v1031
  %v1033 = vsel %vm973, %v1030, 0.0
  %1034 = vadd.xlane.f32.xlu0 %v1033
  %v1035 = vpop.xlane.xlu0 %1034
  %v1036 = vsel %vm973, %v1032, 0.0
  %1037 = vadd.xlane.f32.xlu0 %v1036
  %v1038 = vpop.xlane.xlu0 %1037
  %v1039 = vrcp.pop %v1035
  %v1040 = vrcp.pop %v1038
  %v1041 = vmul.f32 %v1030, %v1039
  %v1042 = vmul.f32 %v1032, %v1040
  %v1043 = vpack.c.bf16 %v1042, %v1041
  %v1045 = vsel %vm973, %v1043, 0
  %1047 = vmatprep.subr.bf16.mxu0 0
  %1048 = vmatpush1.bf16.msra.mxu0 %v749
  %1049 = vmatprep.subr.bf16.mxu0 0
  %1050 = vmatpush1.bf16.msra.mxu0 0
  %1051 = vmatprep.subr.bf16.mxu0 0
  %1052 = vmatpush1.bf16.msra.mxu0 0
  %1053 = vmatprep.subr.bf16.mxu0 0
  %1054 = vmatpush1.bf16.msra.mxu0 0
  %1055 = vmatprep.subr.bf16.mxu0 0
  %1056 = vmatpush1.bf16.msra.mxu0 0
  %1057 = vmatprep.subr.bf16.mxu0 0
  %1058 = vmatpush1.bf16.msra.mxu0 0
  %1059 = vmatprep.subr.bf16.mxu0 0
  %1060 = vmatpush1.bf16.msra.mxu0 0
  %1061 = vmatprep.subr.bf16.mxu0 0
  %1062 = vmatpush1.bf16.msra.mxu0 0
  %1063 = vmatprep.subr.bf16.mxu0 0
  %1064 = vmatpush1.bf16.msra.mxu0 0
  %1065 = vmatprep.subr.bf16.mxu0 0
  %1066 = vmatpush1.bf16.msra.mxu0 0
  %1067 = vmatprep.subr.bf16.mxu0 0
  %1068 = vmatpush1.bf16.msra.mxu0 0
  %1069 = vmatprep.subr.bf16.mxu0 0
  %1070 = vmatpush1.bf16.msra.mxu0 0
  %1071 = vmatprep.subr.bf16.mxu0 0
  %1072 = vmatpush1.bf16.msra.mxu0 0
  %1073 = vmatprep.subr.bf16.mxu0 0
  %1074 = vmatpush1.bf16.msra.mxu0 0
  %1075 = vmatprep.subr.bf16.mxu0 0
  %1076 = vmatpush1.bf16.msra.mxu0 0
  %1077 = vmatprep.subr.bf16.mxu0 0
  %1078 = vmatpush1.bf16.msra.mxu0 0
  %1079 = vmatprep.mubr.bf16.mxu0 0
  %1080 = vmatmul.mubr.bf16.gmra.mrb[0].mxu0 %v1045
  %v1081 = vpop.f32.mrb[0].mxu0
  %v1082 = vadd.f32 0.0, %v1081
  %v1083 = vpop.f32.mrb[0].mxu0
  %v1084 = vpop.f32.mrb[0].mxu0
  %v1085 = vadd.f32 0.0, %v1084
  %v1086 = vpop.f32.mrb[0].mxu0
  %1087 = vdwg.mxu0
  %v1088 = vpack.c.bf16 %v1085, %v1082
  %v1091 = vunpack.c.l.b16 %v955
  %v1092 = vunpack.c.l.b16 %v956
  %v1093 = vpack.c.b16 %v1092, %v1091
  %v1096 = vsel %vm973, %v1088, 0
  %1098 = vmatprep.subr.bf16.mxu0 0
  %1099 = vmatpush1.bf16.msra.mxu0 %v1093
  %1100 = vmatprep.subr.bf16.mxu0 0
  %1101 = vmatpush1.bf16.msra.mxu0 0
  %1102 = vmatprep.subr.bf16.mxu0 0
  %1103 = vmatpush1.bf16.msra.mxu0 0
  %1104 = vmatprep.subr.bf16.mxu0 0
  %1105 = vmatpush1.bf16.msra.mxu0 0
  %1106 = vmatprep.subr.bf16.mxu0 0
  %1107 = vmatpush1.bf16.msra.mxu0 0
  %1108 = vmatprep.subr.bf16.mxu0 0
  %1109 = vmatpush1.bf16.msra.mxu0 0
  %1110 = vmatprep.subr.bf16.mxu0 0
  %1111 = vmatpush1.bf16.msra.mxu0 0
  %1112 = vmatprep.subr.bf16.mxu0 0
  %1113 = vmatpush1.bf16.msra.mxu0 0
  %1114 = vmatprep.subr.bf16.mxu0 0
  %1115 = vmatpush1.bf16.msra.mxu0 0
  %1116 = vmatprep.subr.bf16.mxu0 0
  %1117 = vmatpush1.bf16.msra.mxu0 0
  %1118 = vmatprep.subr.bf16.mxu0 0
  %1119 = vmatpush1.bf16.msra.mxu0 0
  %1120 = vmatprep.subr.bf16.mxu0 0
  %1121 = vmatpush1.bf16.msra.mxu0 0
  %1122 = vmatprep.subr.bf16.mxu0 0
  %1123 = vmatpush1.bf16.msra.mxu0 0
  %1124 = vmatprep.subr.bf16.mxu0 0
  %1125 = vmatpush1.bf16.msra.mxu0 0
  %1126 = vmatprep.subr.bf16.mxu0 0
  %1127 = vmatpush1.bf16.msra.mxu0 0
  %1128 = vmatprep.subr.bf16.mxu0 0
  %1129 = vmatpush1.bf16.msra.mxu0 0
  %1130 = vmatprep.mubr.bf16.mxu0 0
  %1131 = vmatmul.mubr.bf16.gmra.mrb[0].mxu0 %v1096
  %v1132 = vpop.f32.mrb[0].mxu0
  %v1133 = vadd.f32 0.0, %v1132
  %v1134 = vpop.f32.mrb[0].mxu0
  %v1135 = vpop.f32.mrb[0].mxu0
  %v1136 = vadd.f32 0.0, %v1135
  %v1137 = vpop.f32.mrb[0].mxu0
  %1138 = vdwg.mxu0
  %v1139 = vadd.f32 %v971, %v1133
  %v1140 = vadd.f32 %v971, %v1136
  %v1142 = vsel %vm973, %v275, 0
  %v1145 = vsel %vm973, %v546, 0
  %1147 = vmatprep.subr.bf16.mxu0 0
  %1148 = vmatpush1.bf16.xpose.msra.mxu0 %v1145
  %1149 = vmatprep.subr.bf16.mxu0 0
  %1150 = vmatpush1.bf16.xpose.msra.mxu0 0
  %1151 = vmatprep.subr.bf16.mxu0 0
  %1152 = vmatpush1.bf16.xpose.msra.mxu0 0
  %1153 = vmatprep.subr.bf16.mxu0 0
  %1154 = vmatpush1.bf16.xpose.msra.mxu0 0
  %1155 = vmatprep.subr.bf16.mxu0 0
  %1156 = vmatpush1.bf16.xpose.msra.mxu0 0
  %1157 = vmatprep.subr.bf16.mxu0 0
  %1158 = vmatpush1.bf16.xpose.msra.mxu0 0
  %1159 = vmatprep.subr.bf16.mxu0 0
  %1160 = vmatpush1.bf16.xpose.msra.mxu0 0
  %1161 = vmatprep.subr.bf16.mxu0 0
  %1162 = vmatpush1.bf16.xpose.msra.mxu0 0
  %1163 = vmatprep.subr.bf16.mxu0 0
  %1164 = vmatpush1.bf16.xpose.msra.mxu0 0
  %1165 = vmatprep.subr.bf16.mxu0 0
  %1166 = vmatpush1.bf16.xpose.msra.mxu0 0
  %1167 = vmatprep.subr.bf16.mxu0 0
  %1168 = vmatpush1.bf16.xpose.msra.mxu0 0
  %1169 = vmatprep.subr.bf16.mxu0 0
  %1170 = vmatpush1.bf16.xpose.msra.mxu0 0
  %1171 = vmatprep.subr.bf16.mxu0 0
  %1172 = vmatpush1.bf16.xpose.msra.mxu0 0
  %1173 = vmatprep.subr.bf16.mxu0 0
  %1174 = vmatpush1.bf16.xpose.msra.mxu0 0
  %1175 = vmatprep.subr.bf16.mxu0 0
  %1176 = vmatpush1.bf16.xpose.msra.mxu0 0
  %1177 = vmatprep.subr.bf16.mxu0 0
  %1178 = vmatpush1.bf16.xpose.msra.mxu0 0
  %1179 = vmatprep.mubr.bf16.mxu0 0
  %1180 = vmatmul.mubr.bf16.gmra.mrb[0].mxu0 %v1142
  %v1181 = vpop.f32.mrb[0].mxu0
  %v1182 = vadd.f32 0.0, %v1181
  %v1183 = vpop.f32.mrb[0].mxu0
  %v1184 = vpop.f32.mrb[0].mxu0
  %v1185 = vadd.f32 0.0, %v1184
  %v1186 = vpop.f32.mrb[0].mxu0
  %1187 = vdwg.mxu0
  %v1188 = vsel %vm973, %v1182, -inf
  %1189 = vmax.xlane.f32.xlu0 %v1188
  %v1190 = vpop.xlane.xlu0 %1189
  %v1191 = vsel %vm973, %v1185, -inf
  %1192 = vmax.xlane.f32.xlu0 %v1191
  %v1193 = vpop.xlane.xlu0 %1192
  %v1194 = vsub.f32 %v1182, %v1190
  %v1195 = vsub.f32 %v1185, %v1193
  %v1196 = vmul.f32 %v1194, 1.442695
  %v1197 = vpow.pop %v1196
  %v1198 = vmul.f32 %v1195, 1.442695
  %v1199 = vpow.pop %v1198
  %v1200 = vsel %vm973, %v1197, 0.0
  %1201 = vadd.xlane.f32.xlu0 %v1200
  %v1202 = vpop.xlane.xlu0 %1201
  %v1203 = vsel %vm973, %v1199, 0.0
  %1204 = vadd.xlane.f32.xlu0 %v1203
  %v1205 = vpop.xlane.xlu0 %1204
  %v1206 = vrcp.pop %v1202
  %v1207 = vrcp.pop %v1205
  %v1208 = vmul.f32 %v1197, %v1206
  %v1209 = vmul.f32 %v1199, %v1207
  %v1210 = vpack.c.bf16 %v1209, %v1208
  %v1212 = vsel %vm973, %v1210, 0
  %1214 = vmatprep.subr.bf16.mxu0 0
  %1215 = vmatpush1.bf16.msra.mxu0 %v817
  %1216 = vmatprep.subr.bf16.mxu0 0
  %1217 = vmatpush1.bf16.msra.mxu0 0
  %1218 = vmatprep.subr.bf16.mxu0 0
  %1219 = vmatpush1.bf16.msra.mxu0 0
  %1220 = vmatprep.subr.bf16.mxu0 0
  %1221 = vmatpush1.bf16.msra.mxu0 0
  %1222 = vmatprep.subr.bf16.mxu0 0
  %1223 = vmatpush1.bf16.msra.mxu0 0
  %1224 = vmatprep.subr.bf16.mxu0 0
  %1225 = vmatpush1.bf16.msra.mxu0 0
  %1226 = vmatprep.subr.bf16.mxu0 0
  %1227 = vmatpush1.bf16.msra.mxu0 0
  %1228 = vmatprep.subr.bf16.mxu0 0
  %1229 = vmatpush1.bf16.msra.mxu0 0
  %1230 = vmatprep.subr.bf16.mxu0 0
  %1231 = vmatpush1.bf16.msra.mxu0 0
  %1232 = vmatprep.subr.bf16.mxu0 0
  %1233 = vmatpush1.bf16.msra.mxu0 0
  %1234 = vmatprep.subr.bf16.mxu0 0
  %1235 = vmatpush1.bf16.msra.mxu0 0
  %1236 = vmatprep.subr.bf16.mxu0 0
  %1237 = vmatpush1.bf16.msra.mxu0 0
  %1238 = vmatprep.subr.bf16.mxu0 0
  %1239 = vmatpush1.bf16.msra.mxu0 0
  %1240 = vmatprep.subr.bf16.mxu0 0
  %1241 = vmatpush1.bf16.msra.mxu0 0
  %1242 = vmatprep.subr.bf16.mxu0 0
  %1243 = vmatpush1.bf16.msra.mxu0 0
  %1244 = vmatprep.subr.bf16.mxu0 0
  %1245 = vmatpush1.bf16.msra.mxu0 0
  %1246 = vmatprep.mubr.bf16.mxu0 0
  %1247 = vmatmul.mubr.bf16.gmra.mrb[0].mxu0 %v1212
  %v1248 = vpop.f32.mrb[0].mxu0
  %v1249 = vadd.f32 0.0, %v1248
  %v1250 = vpop.f32.mrb[0].mxu0
  %v1251 = vpop.f32.mrb[0].mxu0
  %v1252 = vadd.f32 0.0, %v1251
  %v1253 = vpop.f32.mrb[0].mxu0
  %1254 = vdwg.mxu0
  %v1255 = vpack.c.bf16 %v1252, %v1249
  %v1258 = vunpack.c.l.b16 %v958
  %v1259 = vunpack.c.l.b16 %v959
  %v1260 = vpack.c.b16 %v1259, %v1258
  %v1263 = vsel %vm973, %v1255, 0
  %1265 = vmatprep.subr.bf16.mxu0 0
  %1266 = vmatpush1.bf16.msra.mxu0 %v1260
  %1267 = vmatprep.subr.bf16.mxu0 0
  %1268 = vmatpush1.bf16.msra.mxu0 0
  %1269 = vmatprep.subr.bf16.mxu0 0
  %1270 = vmatpush1.bf16.msra.mxu0 0
  %1271 = vmatprep.subr.bf16.mxu0 0
  %1272 = vmatpush1.bf16.msra.mxu0 0
  %1273 = vmatprep.subr.bf16.mxu0 0
  %1274 = vmatpush1.bf16.msra.mxu0 0
  %1275 = vmatprep.subr.bf16.mxu0 0
  %1276 = vmatpush1.bf16.msra.mxu0 0
  %1277 = vmatprep.subr.bf16.mxu0 0
  %1278 = vmatpush1.bf16.msra.mxu0 0
  %1279 = vmatprep.subr.bf16.mxu0 0
  %1280 = vmatpush1.bf16.msra.mxu0 0
  %1281 = vmatprep.subr.bf16.mxu0 0
  %1282 = vmatpush1.bf16.msra.mxu0 0
  %1283 = vmatprep.subr.bf16.mxu0 0
  %1284 = vmatpush1.bf16.msra.mxu0 0
  %1285 = vmatprep.subr.bf16.mxu0 0
  %1286 = vmatpush1.bf16.msra.mxu0 0
  %1287 = vmatprep.subr.bf16.mxu0 0
  %1288 = vmatpush1.bf16.msra.mxu0 0
  %1289 = vmatprep.subr.bf16.mxu0 0
  %1290 = vmatpush1.bf16.msra.mxu0 0
  %1291 = vmatprep.subr.bf16.mxu0 0
  %1292 = vmatpush1.bf16.msra.mxu0 0
  %1293 = vmatprep.subr.bf16.mxu0 0
  %1294 = vmatpush1.bf16.msra.mxu0 0
  %1295 = vmatprep.subr.bf16.mxu0 0
  %1296 = vmatpush1.bf16.msra.mxu0 0
  %1297 = vmatprep.mubr.bf16.mxu0 0
  %1298 = vmatmul.mubr.bf16.gmra.mrb[0].mxu0 %v1263
  %v1299 = vpop.f32.mrb[0].mxu0
  %v1300 = vadd.f32 0.0, %v1299
  %v1301 = vpop.f32.mrb[0].mxu0
  %v1302 = vpop.f32.mrb[0].mxu0
  %v1303 = vadd.f32 0.0, %v1302
  %v1304 = vpop.f32.mrb[0].mxu0
  %1305 = vdwg.mxu0
  %v1306 = vadd.f32 %v1139, %v1300
  %v1307 = vadd.f32 %v1140, %v1303
  %v1309 = vsel %vm973, %v343, 0
  %v1312 = vsel %vm973, %v614, 0
  %1314 = vmatprep.subr.bf16.mxu0 0
  %1315 = vmatpush1.bf16.xpose.msra.mxu0 %v1312
  %1316 = vmatprep.subr.bf16.mxu0 0
  %1317 = vmatpush1.bf16.xpose.msra.mxu0 0
  %1318 = vmatprep.subr.bf16.mxu0 0
  %1319 = vmatpush1.bf16.xpose.msra.mxu0 0
  %1320 = vmatprep.subr.bf16.mxu0 0
  %1321 = vmatpush1.bf16.xpose.msra.mxu0 0
  %1322 = vmatprep.subr.bf16.mxu0 0
  %1323 = vmatpush1.bf16.xpose.msra.mxu0 0
  %1324 = vmatprep.subr.bf16.mxu0 0
  %1325 = vmatpush1.bf16.xpose.msra.mxu0 0
  %1326 = vmatprep.subr.bf16.mxu0 0
  %1327 = vmatpush1.bf16.xpose.msra.mxu0 0
  %1328 = vmatprep.subr.bf16.mxu0 0
  %1329 = vmatpush1.bf16.xpose.msra.mxu0 0
  %1330 = vmatprep.subr.bf16.mxu0 0
  %1331 = vmatpush1.bf16.xpose.msra.mxu0 0
  %1332 = vmatprep.subr.bf16.mxu0 0
  %1333 = vmatpush1.bf16.xpose.msra.mxu0 0
  %1334 = vmatprep.subr.bf16.mxu0 0
  %1335 = vmatpush1.bf16.xpose.msra.mxu0 0
  %1336 = vmatprep.subr.bf16.mxu0 0
  %1337 = vmatpush1.bf16.xpose.msra.mxu0 0
  %1338 = vmatprep.subr.bf16.mxu0 0
  %1339 = vmatpush1.bf16.xpose.msra.mxu0 0
  %1340 = vmatprep.subr.bf16.mxu0 0
  %1341 = vmatpush1.bf16.xpose.msra.mxu0 0
  %1342 = vmatprep.subr.bf16.mxu0 0
  %1343 = vmatpush1.bf16.xpose.msra.mxu0 0
  %1344 = vmatprep.subr.bf16.mxu0 0
  %1345 = vmatpush1.bf16.xpose.msra.mxu0 0
  %1346 = vmatprep.mubr.bf16.mxu0 0
  %1347 = vmatmul.mubr.bf16.gmra.mrb[0].mxu0 %v1309
  %v1348 = vpop.f32.mrb[0].mxu0
  %v1349 = vadd.f32 0.0, %v1348
  %v1350 = vpop.f32.mrb[0].mxu0
  %v1351 = vpop.f32.mrb[0].mxu0
  %v1352 = vadd.f32 0.0, %v1351
  %v1353 = vpop.f32.mrb[0].mxu0
  %1354 = vdwg.mxu0
  %v1355 = vsel %vm973, %v1349, -inf
  %1356 = vmax.xlane.f32.xlu0 %v1355
  %v1357 = vpop.xlane.xlu0 %1356
  %v1358 = vsel %vm973, %v1352, -inf
  %1359 = vmax.xlane.f32.xlu0 %v1358
  %v1360 = vpop.xlane.xlu0 %1359
  %v1361 = vsub.f32 %v1349, %v1357
  %v1362 = vsub.f32 %v1352, %v1360
  %v1363 = vmul.f32 %v1361, 1.442695
  %v1364 = vpow.pop %v1363
  %v1365 = vmul.f32 %v1362, 1.442695
  %v1366 = vpow.pop %v1365
  %v1367 = vsel %vm973, %v1364, 0.0
  %1368 = vadd.xlane.f32.xlu0 %v1367
  %v1369 = vpop.xlane.xlu0 %1368
  %v1370 = vsel %vm973, %v1366, 0.0
  %1371 = vadd.xlane.f32.xlu0 %v1370
  %v1372 = vpop.xlane.xlu0 %1371
  %v1373 = vrcp.pop %v1369
  %v1374 = vrcp.pop %v1372
  %v1375 = vmul.f32 %v1364, %v1373
  %v1376 = vmul.f32 %v1366, %v1374
  %v1377 = vpack.c.bf16 %v1376, %v1375
  %v1379 = vsel %vm973, %v1377, 0
  %1381 = vmatprep.subr.bf16.mxu0 0
  %1382 = vmatpush1.bf16.msra.mxu0 %v885
  %1383 = vmatprep.subr.bf16.mxu0 0
  %1384 = vmatpush1.bf16.msra.mxu0 0
  %1385 = vmatprep.subr.bf16.mxu0 0
  %1386 = vmatpush1.bf16.msra.mxu0 0
  %1387 = vmatprep.subr.bf16.mxu0 0
  %1388 = vmatpush1.bf16.msra.mxu0 0
  %1389 = vmatprep.subr.bf16.mxu0 0
  %1390 = vmatpush1.bf16.msra.mxu0 0
  %1391 = vmatprep.subr.bf16.mxu0 0
  %1392 = vmatpush1.bf16.msra.mxu0 0
  %1393 = vmatprep.subr.bf16.mxu0 0
  %1394 = vmatpush1.bf16.msra.mxu0 0
  %1395 = vmatprep.subr.bf16.mxu0 0
  %1396 = vmatpush1.bf16.msra.mxu0 0
  %1397 = vmatprep.subr.bf16.mxu0 0
  %1398 = vmatpush1.bf16.msra.mxu0 0
  %1399 = vmatprep.subr.bf16.mxu0 0
  %1400 = vmatpush1.bf16.msra.mxu0 0
  %1401 = vmatprep.subr.bf16.mxu0 0
  %1402 = vmatpush1.bf16.msra.mxu0 0
  %1403 = vmatprep.subr.bf16.mxu0 0
  %1404 = vmatpush1.bf16.msra.mxu0 0
  %1405 = vmatprep.subr.bf16.mxu0 0
  %1406 = vmatpush1.bf16.msra.mxu0 0
  %1407 = vmatprep.subr.bf16.mxu0 0
  %1408 = vmatpush1.bf16.msra.mxu0 0
  %1409 = vmatprep.subr.bf16.mxu0 0
  %1410 = vmatpush1.bf16.msra.mxu0 0
  %1411 = vmatprep.subr.bf16.mxu0 0
  %1412 = vmatpush1.bf16.msra.mxu0 0
  %1413 = vmatprep.mubr.bf16.mxu0 0
  %1414 = vmatmul.mubr.bf16.gmra.mrb[0].mxu0 %v1379
  %v1415 = vpop.f32.mrb[0].mxu0
  %v1416 = vadd.f32 0.0, %v1415
  %v1417 = vpop.f32.mrb[0].mxu0
  %v1418 = vpop.f32.mrb[0].mxu0
  %v1419 = vadd.f32 0.0, %v1418
  %v1420 = vpop.f32.mrb[0].mxu0
  %1421 = vdwg.mxu0
  %v1422 = vpack.c.bf16 %v1419, %v1416
  %v1425 = vunpack.c.l.b16 %v961
  %v1426 = vunpack.c.l.b16 %v962
  %v1427 = vpack.c.b16 %v1426, %v1425
  %v1430 = vsel %vm973, %v1422, 0
  %1432 = vmatprep.subr.bf16.mxu0 0
  %1433 = vmatpush1.bf16.msra.mxu0 %v1427
  %1434 = vmatprep.subr.bf16.mxu0 0
  %1435 = vmatpush1.bf16.msra.mxu0 0
  %1436 = vmatprep.subr.bf16.mxu0 0
  %1437 = vmatpush1.bf16.msra.mxu0 0
  %1438 = vmatprep.subr.bf16.mxu0 0
  %1439 = vmatpush1.bf16.msra.mxu0 0
  %1440 = vmatprep.subr.bf16.mxu0 0
  %1441 = vmatpush1.bf16.msra.mxu0 0
  %1442 = vmatprep.subr.bf16.mxu0 0
  %1443 = vmatpush1.bf16.msra.mxu0 0
  %1444 = vmatprep.subr.bf16.mxu0 0
  %1445 = vmatpush1.bf16.msra.mxu0 0
  %1446 = vmatprep.subr.bf16.mxu0 0
  %1447 = vmatpush1.bf16.msra.mxu0 0
  %1448 = vmatprep.subr.bf16.mxu0 0
  %1449 = vmatpush1.bf16.msra.mxu0 0
  %1450 = vmatprep.subr.bf16.mxu0 0
  %1451 = vmatpush1.bf16.msra.mxu0 0
  %1452 = vmatprep.subr.bf16.mxu0 0
  %1453 = vmatpush1.bf16.msra.mxu0 0
  %1454 = vmatprep.subr.bf16.mxu0 0
  %1455 = vmatpush1.bf16.msra.mxu0 0
  %1456 = vmatprep.subr.bf16.mxu0 0
  %1457 = vmatpush1.bf16.msra.mxu0 0
  %1458 = vmatprep.subr.bf16.mxu0 0
  %1459 = vmatpush1.bf16.msra.mxu0 0
  %1460 = vmatprep.subr.bf16.mxu0 0
  %1461 = vmatpush1.bf16.msra.mxu0 0
  %1462 = vmatprep.subr.bf16.mxu0 0
  %1463 = vmatpush1.bf16.msra.mxu0 0
  %1464 = vmatprep.mubr.bf16.mxu0 0
  %1465 = vmatmul.mubr.bf16.gmra.mrb[0].mxu0 %v1430
  %v1466 = vpop.f32.mrb[0].mxu0
  %v1467 = vadd.f32 0.0, %v1466
  %v1468 = vpop.f32.mrb[0].mxu0
  %v1469 = vpop.f32.mrb[0].mxu0
  %v1470 = vadd.f32 0.0, %v1469
  %v1471 = vpop.f32.mrb[0].mxu0
  %1472 = vdwg.mxu0
  %v1473 = vadd.f32 %v1306, %v1467
  %v1474 = vadd.f32 %v1307, %v1470
  %v1476 = vsel %vm973, %v411, 0
  %v1479 = vsel %vm973, %v682, 0
  %1481 = vmatprep.subr.bf16.mxu0 0
  %1482 = vmatpush1.bf16.xpose.msra.mxu0 %v1479
  %1483 = vmatprep.subr.bf16.mxu0 0
  %1484 = vmatpush1.bf16.xpose.msra.mxu0 0
  %1485 = vmatprep.subr.bf16.mxu0 0
  %1486 = vmatpush1.bf16.xpose.msra.mxu0 0
  %1487 = vmatprep.subr.bf16.mxu0 0
  %1488 = vmatpush1.bf16.xpose.msra.mxu0 0
  %1489 = vmatprep.subr.bf16.mxu0 0
  %1490 = vmatpush1.bf16.xpose.msra.mxu0 0
  %1491 = vmatprep.subr.bf16.mxu0 0
  %1492 = vmatpush1.bf16.xpose.msra.mxu0 0
  %1493 = vmatprep.subr.bf16.mxu0 0
  %1494 = vmatpush1.bf16.xpose.msra.mxu0 0
  %1495 = vmatprep.subr.bf16.mxu0 0
  %1496 = vmatpush1.bf16.xpose.msra.mxu0 0
  %1497 = vmatprep.subr.bf16.mxu0 0
  %1498 = vmatpush1.bf16.xpose.msra.mxu0 0
  %1499 = vmatprep.subr.bf16.mxu0 0
  %1500 = vmatpush1.bf16.xpose.msra.mxu0 0
  %1501 = vmatprep.subr.bf16.mxu0 0
  %1502 = vmatpush1.bf16.xpose.msra.mxu0 0
  %1503 = vmatprep.subr.bf16.mxu0 0
  %1504 = vmatpush1.bf16.xpose.msra.mxu0 0
  %1505 = vmatprep.subr.bf16.mxu0 0
  %1506 = vmatpush1.bf16.xpose.msra.mxu0 0
  %1507 = vmatprep.subr.bf16.mxu0 0
  %1508 = vmatpush1.bf16.xpose.msra.mxu0 0
  %1509 = vmatprep.subr.bf16.mxu0 0
  %1510 = vmatpush1.bf16.xpose.msra.mxu0 0
  %1511 = vmatprep.subr.bf16.mxu0 0
  %1512 = vmatpush1.bf16.xpose.msra.mxu0 0
  %1513 = vmatprep.mubr.bf16.mxu0 0
  %1514 = vmatmul.mubr.bf16.gmra.mrb[0].mxu0 %v1476
  %v1515 = vpop.f32.mrb[0].mxu0
  %v1516 = vadd.f32 0.0, %v1515
  %v1517 = vpop.f32.mrb[0].mxu0
  %v1518 = vpop.f32.mrb[0].mxu0
  %v1519 = vadd.f32 0.0, %v1518
  %v1520 = vpop.f32.mrb[0].mxu0
  %1521 = vdwg.mxu0
  %v1522 = vsel %vm973, %v1516, -inf
  %1523 = vmax.xlane.f32.xlu0 %v1522
  %v1524 = vpop.xlane.xlu0 %1523
  %v1525 = vsel %vm973, %v1519, -inf
  %1526 = vmax.xlane.f32.xlu0 %v1525
  %v1527 = vpop.xlane.xlu0 %1526
  %v1528 = vsub.f32 %v1516, %v1524
  %v1529 = vsub.f32 %v1519, %v1527
  %v1530 = vmul.f32 %v1528, 1.442695
  %v1531 = vpow.pop %v1530
  %v1532 = vmul.f32 %v1529, 1.442695
  %v1533 = vpow.pop %v1532
  %v1534 = vsel %vm973, %v1531, 0.0
  %1535 = vadd.xlane.f32.xlu0 %v1534
  %v1536 = vpop.xlane.xlu0 %1535
  %v1537 = vsel %vm973, %v1533, 0.0
  %1538 = vadd.xlane.f32.xlu0 %v1537
  %v1539 = vpop.xlane.xlu0 %1538
  %v1540 = vrcp.pop %v1536
  %v1541 = vrcp.pop %v1539
  %v1542 = vmul.f32 %v1531, %v1540
  %v1543 = vmul.f32 %v1533, %v1541
  %v1544 = vpack.c.bf16 %v1543, %v1542
  %v1546 = vsel %vm973, %v1544, 0
  %1548 = vmatprep.subr.bf16.mxu0 0
  %1549 = vmatpush1.bf16.msra.mxu0 %v953
  %1550 = vmatprep.subr.bf16.mxu0 0
  %1551 = vmatpush1.bf16.msra.mxu0 0
  %1552 = vmatprep.subr.bf16.mxu0 0
  %1553 = vmatpush1.bf16.msra.mxu0 0
  %1554 = vmatprep.subr.bf16.mxu0 0
  %1555 = vmatpush1.bf16.msra.mxu0 0
  %1556 = vmatprep.subr.bf16.mxu0 0
  %1557 = vmatpush1.bf16.msra.mxu0 0
  %1558 = vmatprep.subr.bf16.mxu0 0
  %1559 = vmatpush1.bf16.msra.mxu0 0
  %1560 = vmatprep.subr.bf16.mxu0 0
  %1561 = vmatpush1.bf16.msra.mxu0 0
  %1562 = vmatprep.subr.bf16.mxu0 0
  %1563 = vmatpush1.bf16.msra.mxu0 0
  %1564 = vmatprep.subr.bf16.mxu0 0
  %1565 = vmatpush1.bf16.msra.mxu0 0
  %1566 = vmatprep.subr.bf16.mxu0 0
  %1567 = vmatpush1.bf16.msra.mxu0 0
  %1568 = vmatprep.subr.bf16.mxu0 0
  %1569 = vmatpush1.bf16.msra.mxu0 0
  %1570 = vmatprep.subr.bf16.mxu0 0
  %1571 = vmatpush1.bf16.msra.mxu0 0
  %1572 = vmatprep.subr.bf16.mxu0 0
  %1573 = vmatpush1.bf16.msra.mxu0 0
  %1574 = vmatprep.subr.bf16.mxu0 0
  %1575 = vmatpush1.bf16.msra.mxu0 0
  %1576 = vmatprep.subr.bf16.mxu0 0
  %1577 = vmatpush1.bf16.msra.mxu0 0
  %1578 = vmatprep.subr.bf16.mxu0 0
  %1579 = vmatpush1.bf16.msra.mxu0 0
  %1580 = vmatprep.mubr.bf16.mxu0 0
  %1581 = vmatmul.mubr.bf16.gmra.mrb[0].mxu0 %v1546
  %v1582 = vpop.f32.mrb[0].mxu0
  %v1583 = vadd.f32 0.0, %v1582
  %v1584 = vpop.f32.mrb[0].mxu0
  %v1585 = vpop.f32.mrb[0].mxu0
  %v1586 = vadd.f32 0.0, %v1585
  %v1587 = vpop.f32.mrb[0].mxu0
  %1588 = vdwg.mxu0
  %v1589 = vpack.c.bf16 %v1586, %v1583
  %v1592 = vunpack.c.l.b16 %v964
  %v1593 = vunpack.c.l.b16 %v965
  %v1594 = vpack.c.b16 %v1593, %v1592
  %v1597 = vsel %vm973, %v1589, 0
  %1599 = vmatprep.subr.bf16.mxu0 0
  %1600 = vmatpush1.bf16.msra.mxu0 %v1594
  %1601 = vmatprep.subr.bf16.mxu0 0
  %1602 = vmatpush1.bf16.msra.mxu0 0
  %1603 = vmatprep.subr.bf16.mxu0 0
  %1604 = vmatpush1.bf16.msra.mxu0 0
  %1605 = vmatprep.subr.bf16.mxu0 0
  %1606 = vmatpush1.bf16.msra.mxu0 0
  %1607 = vmatprep.subr.bf16.mxu0 0
  %1608 = vmatpush1.bf16.msra.mxu0 0
  %1609 = vmatprep.subr.bf16.mxu0 0
  %1610 = vmatpush1.bf16.msra.mxu0 0
  %1611 = vmatprep.subr.bf16.mxu0 0
  %1612 = vmatpush1.bf16.msra.mxu0 0
  %1613 = vmatprep.subr.bf16.mxu0 0
  %1614 = vmatpush1.bf16.msra.mxu0 0
  %1615 = vmatprep.subr.bf16.mxu0 0
  %1616 = vmatpush1.bf16.msra.mxu0 0
  %1617 = vmatprep.subr.bf16.mxu0 0
  %1618 = vmatpush1.bf16.msra.mxu0 0
  %1619 = vmatprep.subr.bf16.mxu0 0
  %1620 = vmatpush1.bf16.msra.mxu0 0
  %1621 = vmatprep.subr.bf16.mxu0 0
  %1622 = vmatpush1.bf16.msra.mxu0 0
  %1623 = vmatprep.subr.bf16.mxu0 0
  %1624 = vmatpush1.bf16.msra.mxu0 0
  %1625 = vmatprep.subr.bf16.mxu0 0
  %1626 = vmatpush1.bf16.msra.mxu0 0
  %1627 = vmatprep.subr.bf16.mxu0 0
  %1628 = vmatpush1.bf16.msra.mxu0 0
  %1629 = vmatprep.subr.bf16.mxu0 0
  %1630 = vmatpush1.bf16.msra.mxu0 0
  %1631 = vmatprep.mubr.bf16.mxu0 0
  %1632 = vmatmul.mubr.bf16.gmra.mrb[0].mxu0 %v1597
  %v1633 = vpop.f32.mrb[0].mxu0
  %v1634 = vadd.f32 0.0, %v1633
  %v1635 = vpop.f32.mrb[0].mxu0
  %v1636 = vpop.f32.mrb[0].mxu0
  %v1637 = vadd.f32 0.0, %v1636
  %v1638 = vpop.f32.mrb[0].mxu0
  %1639 = vdwg.mxu0
  %v1640 = vadd.f32 %v1473, %v1634
  %v1641 = vadd.f32 %v1474, %v1637
  %v1643 = vsel %vm973, %v208, 0
  %v1646 = vsel %vm973, %v479, 0
  %1648 = vmatprep.subr.bf16.mxu0 0
  %1649 = vmatpush1.bf16.xpose.msra.mxu0 %v1646
  %1650 = vmatprep.subr.bf16.mxu0 0
  %1651 = vmatpush1.bf16.xpose.msra.mxu0 0
  %1652 = vmatprep.subr.bf16.mxu0 0
  %1653 = vmatpush1.bf16.xpose.msra.mxu0 0
  %1654 = vmatprep.subr.bf16.mxu0 0
  %1655 = vmatpush1.bf16.xpose.msra.mxu0 0
  %1656 = vmatprep.subr.bf16.mxu0 0
  %1657 = vmatpush1.bf16.xpose.msra.mxu0 0
  %1658 = vmatprep.subr.bf16.mxu0 0
  %1659 = vmatpush1.bf16.xpose.msra.mxu0 0
  %1660 = vmatprep.subr.bf16.mxu0 0
  %1661 = vmatpush1.bf16.xpose.msra.mxu0 0
  %1662 = vmatprep.subr.bf16.mxu0 0
  %1663 = vmatpush1.bf16.xpose.msra.mxu0 0
  %1664 = vmatprep.subr.bf16.mxu0 0
  %1665 = vmatpush1.bf16.xpose.msra.mxu0 0
  %1666 = vmatprep.subr.bf16.mxu0 0
  %1667 = vmatpush1.bf16.xpose.msra.mxu0 0
  %1668 = vmatprep.subr.bf16.mxu0 0
  %1669 = vmatpush1.bf16.xpose.msra.mxu0 0
  %1670 = vmatprep.subr.bf16.mxu0 0
  %1671 = vmatpush1.bf16.xpose.msra.mxu0 0
  %1672 = vmatprep.subr.bf16.mxu0 0
  %1673 = vmatpush1.bf16.xpose.msra.mxu0 0
  %1674 = vmatprep.subr.bf16.mxu0 0
  %1675 = vmatpush1.bf16.xpose.msra.mxu0 0
  %1676 = vmatprep.subr.bf16.mxu0 0
  %1677 = vmatpush1.bf16.xpose.msra.mxu0 0
  %1678 = vmatprep.subr.bf16.mxu0 0
  %1679 = vmatpush1.bf16.xpose.msra.mxu0 0
  %1680 = vmatprep.mubr.bf16.mxu0 0
  %1681 = vmatmul.mubr.bf16.gmra.mrb[0].mxu0 %v1643
  %v1682 = vpop.f32.mrb[0].mxu0
  %v1683 = vadd.f32 0.0, %v1682
  %v1684 = vpop.f32.mrb[0].mxu0
  %v1685 = vpop.f32.mrb[0].mxu0
  %v1686 = vadd.f32 0.0, %v1685
  %v1687 = vpop.f32.mrb[0].mxu0
  %1688 = vdwg.mxu0
  %v1689 = vsel %vm973, %v1683, -inf
  %1690 = vmax.xlane.f32.xlu0 %v1689
  %v1691 = vpop.xlane.xlu0 %1690
  %v1692 = vsel %vm973, %v1686, -inf
  %1693 = vmax.xlane.f32.xlu0 %v1692
  %v1694 = vpop.xlane.xlu0 %1693
  %v1695 = vsub.f32 %v1683, %v1691
  %v1696 = vsub.f32 %v1686, %v1694
  %v1697 = vmul.f32 %v1695, 1.442695
  %v1698 = vpow.pop %v1697
  %v1699 = vmul.f32 %v1696, 1.442695
  %v1700 = vpow.pop %v1699
  %v1701 = vsel %vm973, %v1698, 0.0
  %1702 = vadd.xlane.f32.xlu0 %v1701
  %v1703 = vpop.xlane.xlu0 %1702
  %v1704 = vsel %vm973, %v1700, 0.0
  %1705 = vadd.xlane.f32.xlu0 %v1704
  %v1706 = vpop.xlane.xlu0 %1705
  %v1707 = vrcp.pop %v1703
  %v1708 = vrcp.pop %v1706
  %v1709 = vmul.f32 %v1698, %v1707
  %v1710 = vmul.f32 %v1700, %v1708
  %v1711 = vpack.c.bf16 %v1710, %v1709
  %v1713 = vsel %vm973, %v1711, 0
  %1715 = vmatprep.subr.bf16.mxu0 0
  %1716 = vmatpush1.bf16.msra.mxu0 %v750
  %1717 = vmatprep.subr.bf16.mxu0 0
  %1718 = vmatpush1.bf16.msra.mxu0 0
  %1719 = vmatprep.subr.bf16.mxu0 0
  %1720 = vmatpush1.bf16.msra.mxu0 0
  %1721 = vmatprep.subr.bf16.mxu0 0
  %1722 = vmatpush1.bf16.msra.mxu0 0
  %1723 = vmatprep.subr.bf16.mxu0 0
  %1724 = vmatpush1.bf16.msra.mxu0 0
  %1725 = vmatprep.subr.bf16.mxu0 0
  %1726 = vmatpush1.bf16.msra.mxu0 0
  %1727 = vmatprep.subr.bf16.mxu0 0
  %1728 = vmatpush1.bf16.msra.mxu0 0
  %1729 = vmatprep.subr.bf16.mxu0 0
  %1730 = vmatpush1.bf16.msra.mxu0 0
  %1731 = vmatprep.subr.bf16.mxu0 0
  %1732 = vmatpush1.bf16.msra.mxu0 0
  %1733 = vmatprep.subr.bf16.mxu0 0
  %1734 = vmatpush1.bf16.msra.mxu0 0
  %1735 = vmatprep.subr.bf16.mxu0 0
  %1736 = vmatpush1.bf16.msra.mxu0 0
  %1737 = vmatprep.subr.bf16.mxu0 0
  %1738 = vmatpush1.bf16.msra.mxu0 0
  %1739 = vmatprep.subr.bf16.mxu0 0
  %1740 = vmatpush1.bf16.msra.mxu0 0
  %1741 = vmatprep.subr.bf16.mxu0 0
  %1742 = vmatpush1.bf16.msra.mxu0 0
  %1743 = vmatprep.subr.bf16.mxu0 0
  %1744 = vmatpush1.bf16.msra.mxu0 0
  %1745 = vmatprep.subr.bf16.mxu0 0
  %1746 = vmatpush1.bf16.msra.mxu0 0
  %1747 = vmatprep.mubr.bf16.mxu0 0
  %1748 = vmatmul.mubr.bf16.gmra.mrb[0].mxu0 %v1713
  %v1749 = vpop.f32.mrb[0].mxu0
  %v1750 = vadd.f32 0.0, %v1749
  %v1751 = vpop.f32.mrb[0].mxu0
  %v1752 = vpop.f32.mrb[0].mxu0
  %v1753 = vadd.f32 0.0, %v1752
  %v1754 = vpop.f32.mrb[0].mxu0
  %1755 = vdwg.mxu0
  %v1756 = vpack.c.bf16 %v1753, %v1750
  %v1758 = vsel %vm973, %v1756, 0
  %1760 = vmatprep.subr.bf16.mxu0 0
  %1761 = vmatpush1.bf16.msra.mxu0 %v1093
  %1762 = vmatprep.subr.bf16.mxu0 0
  %1763 = vmatpush1.bf16.msra.mxu0 0
  %1764 = vmatprep.subr.bf16.mxu0 0
  %1765 = vmatpush1.bf16.msra.mxu0 0
  %1766 = vmatprep.subr.bf16.mxu0 0
  %1767 = vmatpush1.bf16.msra.mxu0 0
  %1768 = vmatprep.subr.bf16.mxu0 0
  %1769 = vmatpush1.bf16.msra.mxu0 0
  %1770 = vmatprep.subr.bf16.mxu0 0
  %1771 = vmatpush1.bf16.msra.mxu0 0
  %1772 = vmatprep.subr.bf16.mxu0 0
  %1773 = vmatpush1.bf16.msra.mxu0 0
  %1774 = vmatprep.subr.bf16.mxu0 0
  %1775 = vmatpush1.bf16.msra.mxu0 0
  %1776 = vmatprep.subr.bf16.mxu0 0
  %1777 = vmatpush1.bf16.msra.mxu0 0
  %1778 = vmatprep.subr.bf16.mxu0 0
  %1779 = vmatpush1.bf16.msra.mxu0 0
  %1780 = vmatprep.subr.bf16.mxu0 0
  %1781 = vmatpush1.bf16.msra.mxu0 0
  %1782 = vmatprep.subr.bf16.mxu0 0
  %1783 = vmatpush1.bf16.msra.mxu0 0
  %1784 = vmatprep.subr.bf16.mxu0 0
  %1785 = vmatpush1.bf16.msra.mxu0 0
  %1786 = vmatprep.subr.bf16.mxu0 0
  %1787 = vmatpush1.bf16.msra.mxu0 0
  %1788 = vmatprep.subr.bf16.mxu0 0
  %1789 = vmatpush1.bf16.msra.mxu0 0
  %1790 = vmatprep.subr.bf16.mxu0 0
  %1791 = vmatpush1.bf16.msra.mxu0 0
  %1792 = vmatprep.mubr.bf16.mxu0 0
  %1793 = vmatmul.mubr.bf16.gmra.mrb[0].mxu0 %v1758
  %v1794 = vpop.f32.mrb[0].mxu0
  %v1795 = vadd.f32 0.0, %v1794
  %v1796 = vpop.f32.mrb[0].mxu0
  %v1797 = vpop.f32.mrb[0].mxu0
  %v1798 = vadd.f32 0.0, %v1797
  %v1799 = vpop.f32.mrb[0].mxu0
  %1800 = vdwg.mxu0
  %v1801 = vadd.f32 %v971, %v1795
  %v1802 = vadd.f32 %v971, %v1798
  %v1804 = vsel %vm973, %v276, 0
  %v1807 = vsel %vm973, %v547, 0
  %1809 = vmatprep.subr.bf16.mxu0 0
  %1810 = vmatpush1.bf16.xpose.msra.mxu0 %v1807
  %1811 = vmatprep.subr.bf16.mxu0 0
  %1812 = vmatpush1.bf16.xpose.msra.mxu0 0
  %1813 = vmatprep.subr.bf16.mxu0 0
  %1814 = vmatpush1.bf16.xpose.msra.mxu0 0
  %1815 = vmatprep.subr.bf16.mxu0 0
  %1816 = vmatpush1.bf16.xpose.msra.mxu0 0
  %1817 = vmatprep.subr.bf16.mxu0 0
  %1818 = vmatpush1.bf16.xpose.msra.mxu0 0
  %1819 = vmatprep.subr.bf16.mxu0 0
  %1820 = vmatpush1.bf16.xpose.msra.mxu0 0
  %1821 = vmatprep.subr.bf16.mxu0 0
  %1822 = vmatpush1.bf16.xpose.msra.mxu0 0
  %1823 = vmatprep.subr.bf16.mxu0 0
  %1824 = vmatpush1.bf16.xpose.msra.mxu0 0
  %1825 = vmatprep.subr.bf16.mxu0 0
  %1826 = vmatpush1.bf16.xpose.msra.mxu0 0
  %1827 = vmatprep.subr.bf16.mxu0 0
  %1828 = vmatpush1.bf16.xpose.msra.mxu0 0
  %1829 = vmatprep.subr.bf16.mxu0 0
  %1830 = vmatpush1.bf16.xpose.msra.mxu0 0
  %1831 = vmatprep.subr.bf16.mxu0 0
  %1832 = vmatpush1.bf16.xpose.msra.mxu0 0
  %1833 = vmatprep.subr.bf16.mxu0 0
  %1834 = vmatpush1.bf16.xpose.msra.mxu0 0
  %1835 = vmatprep.subr.bf16.mxu0 0
  %1836 = vmatpush1.bf16.xpose.msra.mxu0 0
  %1837 = vmatprep.subr.bf16.mxu0 0
  %1838 = vmatpush1.bf16.xpose.msra.mxu0 0
  %1839 = vmatprep.subr.bf16.mxu0 0
  %1840 = vmatpush1.bf16.xpose.msra.mxu0 0
  %1841 = vmatprep.mubr.bf16.mxu0 0
  %1842 = vmatmul.mubr.bf16.gmra.mrb[0].mxu0 %v1804
  %v1843 = vpop.f32.mrb[0].mxu0
  %v1844 = vadd.f32 0.0, %v1843
  %v1845 = vpop.f32.mrb[0].mxu0
  %v1846 = vpop.f32.mrb[0].mxu0
  %v1847 = vadd.f32 0.0, %v1846
  %v1848 = vpop.f32.mrb[0].mxu0
  %1849 = vdwg.mxu0
  %v1850 = vsel %vm973, %v1844, -inf
  %1851 = vmax.xlane.f32.xlu0 %v1850
  %v1852 = vpop.xlane.xlu0 %1851
  %v1853 = vsel %vm973, %v1847, -inf
  %1854 = vmax.xlane.f32.xlu0 %v1853
  %v1855 = vpop.xlane.xlu0 %1854
  %v1856 = vsub.f32 %v1844, %v1852
  %v1857 = vsub.f32 %v1847, %v1855
  %v1858 = vmul.f32 %v1856, 1.442695
  %v1859 = vpow.pop %v1858
  %v1860 = vmul.f32 %v1857, 1.442695
  %v1861 = vpow.pop %v1860
  %v1862 = vsel %vm973, %v1859, 0.0
  %1863 = vadd.xlane.f32.xlu0 %v1862
  %v1864 = vpop.xlane.xlu0 %1863
  %v1865 = vsel %vm973, %v1861, 0.0
  %1866 = vadd.xlane.f32.xlu0 %v1865
  %v1867 = vpop.xlane.xlu0 %1866
  %v1868 = vrcp.pop %v1864
  %v1869 = vrcp.pop %v1867
  %v1870 = vmul.f32 %v1859, %v1868
  %v1871 = vmul.f32 %v1861, %v1869
  %v1872 = vpack.c.bf16 %v1871, %v1870
  %v1874 = vsel %vm973, %v1872, 0
  %1876 = vmatprep.subr.bf16.mxu0 0
  %1877 = vmatpush1.bf16.msra.mxu0 %v818
  %1878 = vmatprep.subr.bf16.mxu0 0
  %1879 = vmatpush1.bf16.msra.mxu0 0
  %1880 = vmatprep.subr.bf16.mxu0 0
  %1881 = vmatpush1.bf16.msra.mxu0 0
  %1882 = vmatprep.subr.bf16.mxu0 0
  %1883 = vmatpush1.bf16.msra.mxu0 0
  %1884 = vmatprep.subr.bf16.mxu0 0
  %1885 = vmatpush1.bf16.msra.mxu0 0
  %1886 = vmatprep.subr.bf16.mxu0 0
  %1887 = vmatpush1.bf16.msra.mxu0 0
  %1888 = vmatprep.subr.bf16.mxu0 0
  %1889 = vmatpush1.bf16.msra.mxu0 0
  %1890 = vmatprep.subr.bf16.mxu0 0
  %1891 = vmatpush1.bf16.msra.mxu0 0
  %1892 = vmatprep.subr.bf16.mxu0 0
  %1893 = vmatpush1.bf16.msra.mxu0 0
  %1894 = vmatprep.subr.bf16.mxu0 0
  %1895 = vmatpush1.bf16.msra.mxu0 0
  %1896 = vmatprep.subr.bf16.mxu0 0
  %1897 = vmatpush1.bf16.msra.mxu0 0
  %1898 = vmatprep.subr.bf16.mxu0 0
  %1899 = vmatpush1.bf16.msra.mxu0 0
  %1900 = vmatprep.subr.bf16.mxu0 0
  %1901 = vmatpush1.bf16.msra.mxu0 0
  %1902 = vmatprep.subr.bf16.mxu0 0
  %1903 = vmatpush1.bf16.msra.mxu0 0
  %1904 = vmatprep.subr.bf16.mxu0 0
  %1905 = vmatpush1.bf16.msra.mxu0 0
  %1906 = vmatprep.subr.bf16.mxu0 0
  %1907 = vmatpush1.bf16.msra.mxu0 0
  %1908 = vmatprep.mubr.bf16.mxu0 0
  %1909 = vmatmul.mubr.bf16.gmra.mrb[0].mxu0 %v1874
  %v1910 = vpop.f32.mrb[0].mxu0
  %v1911 = vadd.f32 0.0, %v1910
  %v1912 = vpop.f32.mrb[0].mxu0
  %v1913 = vpop.f32.mrb[0].mxu0
  %v1914 = vadd.f32 0.0, %v1913
  %v1915 = vpop.f32.mrb[0].mxu0
  %1916 = vdwg.mxu0
  %v1917 = vpack.c.bf16 %v1914, %v1911
  %v1919 = vsel %vm973, %v1917, 0
  %1921 = vmatprep.subr.bf16.mxu0 0
  %1922 = vmatpush1.bf16.msra.mxu0 %v1260
  %1923 = vmatprep.subr.bf16.mxu0 0
  %1924 = vmatpush1.bf16.msra.mxu0 0
  %1925 = vmatprep.subr.bf16.mxu0 0
  %1926 = vmatpush1.bf16.msra.mxu0 0
  %1927 = vmatprep.subr.bf16.mxu0 0
  %1928 = vmatpush1.bf16.msra.mxu0 0
  %1929 = vmatprep.subr.bf16.mxu0 0
  %1930 = vmatpush1.bf16.msra.mxu0 0
  %1931 = vmatprep.subr.bf16.mxu0 0
  %1932 = vmatpush1.bf16.msra.mxu0 0
  %1933 = vmatprep.subr.bf16.mxu0 0
  %1934 = vmatpush1.bf16.msra.mxu0 0
  %1935 = vmatprep.subr.bf16.mxu0 0
  %1936 = vmatpush1.bf16.msra.mxu0 0
  %1937 = vmatprep.subr.bf16.mxu0 0
  %1938 = vmatpush1.bf16.msra.mxu0 0
  %1939 = vmatprep.subr.bf16.mxu0 0
  %1940 = vmatpush1.bf16.msra.mxu0 0
  %1941 = vmatprep.subr.bf16.mxu0 0
  %1942 = vmatpush1.bf16.msra.mxu0 0
  %1943 = vmatprep.subr.bf16.mxu0 0
  %1944 = vmatpush1.bf16.msra.mxu0 0
  %1945 = vmatprep.subr.bf16.mxu0 0
  %1946 = vmatpush1.bf16.msra.mxu0 0
  %1947 = vmatprep.subr.bf16.mxu0 0
  %1948 = vmatpush1.bf16.msra.mxu0 0
  %1949 = vmatprep.subr.bf16.mxu0 0
  %1950 = vmatpush1.bf16.msra.mxu0 0
  %1951 = vmatprep.subr.bf16.mxu0 0
  %1952 = vmatpush1.bf16.msra.mxu0 0
  %1953 = vmatprep.mubr.bf16.mxu0 0
  %1954 = vmatmul.mubr.bf16.gmra.mrb[0].mxu0 %v1919
  %v1955 = vpop.f32.mrb[0].mxu0
  %v1956 = vadd.f32 0.0, %v1955
  %v1957 = vpop.f32.mrb[0].mxu0
  %v1958 = vpop.f32.mrb[0].mxu0
  %v1959 = vadd.f32 0.0, %v1958
  %v1960 = vpop.f32.mrb[0].mxu0
  %1961 = vdwg.mxu0
  %v1962 = vadd.f32 %v1801, %v1956
  %v1963 = vadd.f32 %v1802, %v1959
  %v1965 = vsel %vm973, %v344, 0
  %v1968 = vsel %vm973, %v615, 0
  %1970 = vmatprep.subr.bf16.mxu0 0
  %1971 = vmatpush1.bf16.xpose.msra.mxu0 %v1968
  %1972 = vmatprep.subr.bf16.mxu0 0
  %1973 = vmatpush1.bf16.xpose.msra.mxu0 0
  %1974 = vmatprep.subr.bf16.mxu0 0
  %1975 = vmatpush1.bf16.xpose.msra.mxu0 0
  %1976 = vmatprep.subr.bf16.mxu0 0
  %1977 = vmatpush1.bf16.xpose.msra.mxu0 0
  %1978 = vmatprep.subr.bf16.mxu0 0
  %1979 = vmatpush1.bf16.xpose.msra.mxu0 0
  %1980 = vmatprep.subr.bf16.mxu0 0
  %1981 = vmatpush1.bf16.xpose.msra.mxu0 0
  %1982 = vmatprep.subr.bf16.mxu0 0
  %1983 = vmatpush1.bf16.xpose.msra.mxu0 0
  %1984 = vmatprep.subr.bf16.mxu0 0
  %1985 = vmatpush1.bf16.xpose.msra.mxu0 0
  %1986 = vmatprep.subr.bf16.mxu0 0
  %1987 = vmatpush1.bf16.xpose.msra.mxu0 0
  %1988 = vmatprep.subr.bf16.mxu0 0
  %1989 = vmatpush1.bf16.xpose.msra.mxu0 0
  %1990 = vmatprep.subr.bf16.mxu0 0
  %1991 = vmatpush1.bf16.xpose.msra.mxu0 0
  %1992 = vmatprep.subr.bf16.mxu0 0
  %1993 = vmatpush1.bf16.xpose.msra.mxu0 0
  %1994 = vmatprep.subr.bf16.mxu0 0
  %1995 = vmatpush1.bf16.xpose.msra.mxu0 0
  %1996 = vmatprep.subr.bf16.mxu0 0
  %1997 = vmatpush1.bf16.xpose.msra.mxu0 0
  %1998 = vmatprep.subr.bf16.mxu0 0
  %1999 = vmatpush1.bf16.xpose.msra.mxu0 0
  %2000 = vmatprep.subr.bf16.mxu0 0
  %2001 = vmatpush1.bf16.xpose.msra.mxu0 0
  %2002 = vmatprep.mubr.bf16.mxu0 0
  %2003 = vmatmul.mubr.bf16.gmra.mrb[0].mxu0 %v1965
  %v2004 = vpop.f32.mrb[0].mxu0
  %v2005 = vadd.f32 0.0, %v2004
  %v2006 = vpop.f32.mrb[0].mxu0
  %v2007 = vpop.f32.mrb[0].mxu0
  %v2008 = vadd.f32 0.0, %v2007
  %v2009 = vpop.f32.mrb[0].mxu0
  %2010 = vdwg.mxu0
  %v2011 = vsel %vm973, %v2005, -inf
  %2012 = vmax.xlane.f32.xlu0 %v2011
  %v2013 = vpop.xlane.xlu0 %2012
  %v2014 = vsel %vm973, %v2008, -inf
  %2015 = vmax.xlane.f32.xlu0 %v2014
  %v2016 = vpop.xlane.xlu0 %2015
  %v2017 = vsub.f32 %v2005, %v2013
  %v2018 = vsub.f32 %v2008, %v2016
  %v2019 = vmul.f32 %v2017, 1.442695
  %v2020 = vpow.pop %v2019
  %v2021 = vmul.f32 %v2018, 1.442695
  %v2022 = vpow.pop %v2021
  %v2023 = vsel %vm973, %v2020, 0.0
  %2024 = vadd.xlane.f32.xlu0 %v2023
  %v2025 = vpop.xlane.xlu0 %2024
  %v2026 = vsel %vm973, %v2022, 0.0
  %2027 = vadd.xlane.f32.xlu0 %v2026
  %v2028 = vpop.xlane.xlu0 %2027
  %v2029 = vrcp.pop %v2025
  %v2030 = vrcp.pop %v2028
  %v2031 = vmul.f32 %v2020, %v2029
  %v2032 = vmul.f32 %v2022, %v2030
  %v2033 = vpack.c.bf16 %v2032, %v2031
  %v2035 = vsel %vm973, %v2033, 0
  %2037 = vmatprep.subr.bf16.mxu0 0
  %2038 = vmatpush1.bf16.msra.mxu0 %v886
  %2039 = vmatprep.subr.bf16.mxu0 0
  %2040 = vmatpush1.bf16.msra.mxu0 0
  %2041 = vmatprep.subr.bf16.mxu0 0
  %2042 = vmatpush1.bf16.msra.mxu0 0
  %2043 = vmatprep.subr.bf16.mxu0 0
  %2044 = vmatpush1.bf16.msra.mxu0 0
  %2045 = vmatprep.subr.bf16.mxu0 0
  %2046 = vmatpush1.bf16.msra.mxu0 0
  %2047 = vmatprep.subr.bf16.mxu0 0
  %2048 = vmatpush1.bf16.msra.mxu0 0
  %2049 = vmatprep.subr.bf16.mxu0 0
  %2050 = vmatpush1.bf16.msra.mxu0 0
  %2051 = vmatprep.subr.bf16.mxu0 0
  %2052 = vmatpush1.bf16.msra.mxu0 0
  %2053 = vmatprep.subr.bf16.mxu0 0
  %2054 = vmatpush1.bf16.msra.mxu0 0
  %2055 = vmatprep.subr.bf16.mxu0 0
  %2056 = vmatpush1.bf16.msra.mxu0 0
  %2057 = vmatprep.subr.bf16.mxu0 0
  %2058 = vmatpush1.bf16.msra.mxu0 0
  %2059 = vmatprep.subr.bf16.mxu0 0
  %2060 = vmatpush1.bf16.msra.mxu0 0
  %2061 = vmatprep.subr.bf16.mxu0 0
  %2062 = vmatpush1.bf16.msra.mxu0 0
  %2063 = vmatprep.subr.bf16.mxu0 0
  %2064 = vmatpush1.bf16.msra.mxu0 0
  %2065 = vmatprep.subr.bf16.mxu0 0
  %2066 = vmatpush1.bf16.msra.mxu0 0
  %2067 = vmatprep.subr.bf16.mxu0 0
  %2068 = vmatpush1.bf16.msra.mxu0 0
  %2069 = vmatprep.mubr.bf16.mxu0 0
  %2070 = vmatmul.mubr.bf16.gmra.mrb[0].mxu0 %v2035
  %v2071 = vpop.f32.mrb[0].mxu0
  %v2072 = vadd.f32 0.0, %v2071
  %v2073 = vpop.f32.mrb[0].mxu0
  %v2074 = vpop.f32.mrb[0].mxu0
  %v2075 = vadd.f32 0.0, %v2074
  %v2076 = vpop.f32.mrb[0].mxu0
  %2077 = vdwg.mxu0
  %v2078 = vpack.c.bf16 %v2075, %v2072
  %v2080 = vsel %vm973, %v2078, 0
  %2082 = vmatprep.subr.bf16.mxu0 0
  %2083 = vmatpush1.bf16.msra.mxu0 %v1427
  %2084 = vmatprep.subr.bf16.mxu0 0
  %2085 = vmatpush1.bf16.msra.mxu0 0
  %2086 = vmatprep.subr.bf16.mxu0 0
  %2087 = vmatpush1.bf16.msra.mxu0 0
  %2088 = vmatprep.subr.bf16.mxu0 0
  %2089 = vmatpush1.bf16.msra.mxu0 0
  %2090 = vmatprep.subr.bf16.mxu0 0
  %2091 = vmatpush1.bf16.msra.mxu0 0
  %2092 = vmatprep.subr.bf16.mxu0 0
  %2093 = vmatpush1.bf16.msra.mxu0 0
  %2094 = vmatprep.subr.bf16.mxu0 0
  %2095 = vmatpush1.bf16.msra.mxu0 0
  %2096 = vmatprep.subr.bf16.mxu0 0
  %2097 = vmatpush1.bf16.msra.mxu0 0
  %2098 = vmatprep.subr.bf16.mxu0 0
  %2099 = vmatpush1.bf16.msra.mxu0 0
  %2100 = vmatprep.subr.bf16.mxu0 0
  %2101 = vmatpush1.bf16.msra.mxu0 0
  %2102 = vmatprep.subr.bf16.mxu0 0
  %2103 = vmatpush1.bf16.msra.mxu0 0
  %2104 = vmatprep.subr.bf16.mxu0 0
  %2105 = vmatpush1.bf16.msra.mxu0 0
  %2106 = vmatprep.subr.bf16.mxu0 0
  %2107 = vmatpush1.bf16.msra.mxu0 0
  %2108 = vmatprep.subr.bf16.mxu0 0
  %2109 = vmatpush1.bf16.msra.mxu0 0
  %2110 = vmatprep.subr.bf16.mxu0 0
  %2111 = vmatpush1.bf16.msra.mxu0 0
  %2112 = vmatprep.subr.bf16.mxu0 0
  %2113 = vmatpush1.bf16.msra.mxu0 0
  %2114 = vmatprep.mubr.bf16.mxu0 0
  %2115 = vmatmul.mubr.bf16.gmra.mrb[0].mxu0 %v2080
  %v2116 = vpop.f32.mrb[0].mxu0
  %v2117 = vadd.f32 0.0, %v2116
  %v2118 = vpop.f32.mrb[0].mxu0
  %v2119 = vpop.f32.mrb[0].mxu0
  %v2120 = vadd.f32 0.0, %v2119
  %v2121 = vpop.f32.mrb[0].mxu0
  %2122 = vdwg.mxu0
  %v2123 = vadd.f32 %v1962, %v2117
  %v2124 = vadd.f32 %v1963, %v2120
  %v2126 = vsel %vm973, %v412, 0
  %v2129 = vsel %vm973, %v683, 0
  %2131 = vmatprep.subr.bf16.mxu0 0
  %2132 = vmatpush1.bf16.xpose.msra.mxu0 %v2129
  %2133 = vmatprep.subr.bf16.mxu0 0
  %2134 = vmatpush1.bf16.xpose.msra.mxu0 0
  %2135 = vmatprep.subr.bf16.mxu0 0
  %2136 = vmatpush1.bf16.xpose.msra.mxu0 0
  %2137 = vmatprep.subr.bf16.mxu0 0
  %2138 = vmatpush1.bf16.xpose.msra.mxu0 0
  %2139 = vmatprep.subr.bf16.mxu0 0
  %2140 = vmatpush1.bf16.xpose.msra.mxu0 0
  %2141 = vmatprep.subr.bf16.mxu0 0
  %2142 = vmatpush1.bf16.xpose.msra.mxu0 0
  %2143 = vmatprep.subr.bf16.mxu0 0
  %2144 = vmatpush1.bf16.xpose.msra.mxu0 0
  %2145 = vmatprep.subr.bf16.mxu0 0
  %2146 = vmatpush1.bf16.xpose.msra.mxu0 0
  %2147 = vmatprep.subr.bf16.mxu0 0
  %2148 = vmatpush1.bf16.xpose.msra.mxu0 0
  %2149 = vmatprep.subr.bf16.mxu0 0
  %2150 = vmatpush1.bf16.xpose.msra.mxu0 0
  %2151 = vmatprep.subr.bf16.mxu0 0
  %2152 = vmatpush1.bf16.xpose.msra.mxu0 0
  %2153 = vmatprep.subr.bf16.mxu0 0
  %2154 = vmatpush1.bf16.xpose.msra.mxu0 0
  %2155 = vmatprep.subr.bf16.mxu0 0
  %2156 = vmatpush1.bf16.xpose.msra.mxu0 0
  %2157 = vmatprep.subr.bf16.mxu0 0
  %2158 = vmatpush1.bf16.xpose.msra.mxu0 0
  %2159 = vmatprep.subr.bf16.mxu0 0
  %2160 = vmatpush1.bf16.xpose.msra.mxu0 0
  %2161 = vmatprep.subr.bf16.mxu0 0
  %2162 = vmatpush1.bf16.xpose.msra.mxu0 0
  %2163 = vmatprep.mubr.bf16.mxu0 0
  %2164 = vmatmul.mubr.bf16.gmra.mrb[0].mxu0 %v2126
  %v2165 = vpop.f32.mrb[0].mxu0
  %v2166 = vadd.f32 0.0, %v2165
  %v2167 = vpop.f32.mrb[0].mxu0
  %v2168 = vpop.f32.mrb[0].mxu0
  %v2169 = vadd.f32 0.0, %v2168
  %v2170 = vpop.f32.mrb[0].mxu0
  %2171 = vdwg.mxu0
  %v2172 = vsel %vm973, %v2166, -inf
  %2173 = vmax.xlane.f32.xlu0 %v2172
  %v2174 = vpop.xlane.xlu0 %2173
  %v2175 = vsel %vm973, %v2169, -inf
  %2176 = vmax.xlane.f32.xlu0 %v2175
  %v2177 = vpop.xlane.xlu0 %2176
  %v2178 = vsub.f32 %v2166, %v2174
  %v2179 = vsub.f32 %v2169, %v2177
  %v2180 = vmul.f32 %v2178, 1.442695
  %v2181 = vpow.pop %v2180
  %v2182 = vmul.f32 %v2179, 1.442695
  %v2183 = vpow.pop %v2182
  %v2184 = vsel %vm973, %v2181, 0.0
  %2185 = vadd.xlane.f32.xlu0 %v2184
  %v2186 = vpop.xlane.xlu0 %2185
  %v2187 = vsel %vm973, %v2183, 0.0
  %2188 = vadd.xlane.f32.xlu0 %v2187
  %v2189 = vpop.xlane.xlu0 %2188
  %v2190 = vrcp.pop %v2186
  %v2191 = vrcp.pop %v2189
  %v2192 = vmul.f32 %v2181, %v2190
  %v2193 = vmul.f32 %v2183, %v2191
  %v2194 = vpack.c.bf16 %v2193, %v2192
  %v2196 = vsel %vm973, %v2194, 0
  %2198 = vmatprep.subr.bf16.mxu0 0
  %2199 = vmatpush1.bf16.msra.mxu0 %v954
  %2200 = vmatprep.subr.bf16.mxu0 0
  %2201 = vmatpush1.bf16.msra.mxu0 0
  %2202 = vmatprep.subr.bf16.mxu0 0
  %2203 = vmatpush1.bf16.msra.mxu0 0
  %2204 = vmatprep.subr.bf16.mxu0 0
  %2205 = vmatpush1.bf16.msra.mxu0 0
  %2206 = vmatprep.subr.bf16.mxu0 0
  %2207 = vmatpush1.bf16.msra.mxu0 0
  %2208 = vmatprep.subr.bf16.mxu0 0
  %2209 = vmatpush1.bf16.msra.mxu0 0
  %2210 = vmatprep.subr.bf16.mxu0 0
  %2211 = vmatpush1.bf16.msra.mxu0 0
  %2212 = vmatprep.subr.bf16.mxu0 0
  %2213 = vmatpush1.bf16.msra.mxu0 0
  %2214 = vmatprep.subr.bf16.mxu0 0
  %2215 = vmatpush1.bf16.msra.mxu0 0
  %2216 = vmatprep.subr.bf16.mxu0 0
  %2217 = vmatpush1.bf16.msra.mxu0 0
  %2218 = vmatprep.subr.bf16.mxu0 0
  %2219 = vmatpush1.bf16.msra.mxu0 0
  %2220 = vmatprep.subr.bf16.mxu0 0
  %2221 = vmatpush1.bf16.msra.mxu0 0
  %2222 = vmatprep.subr.bf16.mxu0 0
  %2223 = vmatpush1.bf16.msra.mxu0 0
  %2224 = vmatprep.subr.bf16.mxu0 0
  %2225 = vmatpush1.bf16.msra.mxu0 0
  %2226 = vmatprep.subr.bf16.mxu0 0
  %2227 = vmatpush1.bf16.msra.mxu0 0
  %2228 = vmatprep.subr.bf16.mxu0 0
  %2229 = vmatpush1.bf16.msra.mxu0 0
  %2230 = vmatprep.mubr.bf16.mxu0 0
  %2231 = vmatmul.mubr.bf16.gmra.mrb[0].mxu0 %v2196
  %v2232 = vpop.f32.mrb[0].mxu0
  %v2233 = vadd.f32 0.0, %v2232
  %v2234 = vpop.f32.mrb[0].mxu0
  %v2235 = vpop.f32.mrb[0].mxu0
  %v2236 = vadd.f32 0.0, %v2235
  %v2237 = vpop.f32.mrb[0].mxu0
  %2238 = vdwg.mxu0
  %v2239 = vpack.c.bf16 %v2236, %v2233
  %v2241 = vsel %vm973, %v2239, 0
  %2243 = vmatprep.subr.bf16.mxu0 0
  %2244 = vmatpush1.bf16.msra.mxu0 %v1594
  %2245 = vmatprep.subr.bf16.mxu0 0
  %2246 = vmatpush1.bf16.msra.mxu0 0
  %2247 = vmatprep.subr.bf16.mxu0 0
  %2248 = vmatpush1.bf16.msra.mxu0 0
  %2249 = vmatprep.subr.bf16.mxu0 0
  %2250 = vmatpush1.bf16.msra.mxu0 0
  %2251 = vmatprep.subr.bf16.mxu0 0
  %2252 = vmatpush1.bf16.msra.mxu0 0
  %2253 = vmatprep.subr.bf16.mxu0 0
  %2254 = vmatpush1.bf16.msra.mxu0 0
  %2255 = vmatprep.subr.bf16.mxu0 0
  %2256 = vmatpush1.bf16.msra.mxu0 0
  %2257 = vmatprep.subr.bf16.mxu0 0
  %2258 = vmatpush1.bf16.msra.mxu0 0
  %2259 = vmatprep.subr.bf16.mxu0 0
  %2260 = vmatpush1.bf16.msra.mxu0 0
  %2261 = vmatprep.subr.bf16.mxu0 0
  %2262 = vmatpush1.bf16.msra.mxu0 0
  %2263 = vmatprep.subr.bf16.mxu0 0
  %2264 = vmatpush1.bf16.msra.mxu0 0
  %2265 = vmatprep.subr.bf16.mxu0 0
  %2266 = vmatpush1.bf16.msra.mxu0 0
  %2267 = vmatprep.subr.bf16.mxu0 0
  %2268 = vmatpush1.bf16.msra.mxu0 0
  %2269 = vmatprep.subr.bf16.mxu0 0
  %2270 = vmatpush1.bf16.msra.mxu0 0
  %2271 = vmatprep.subr.bf16.mxu0 0
  %2272 = vmatpush1.bf16.msra.mxu0 0
  %2273 = vmatprep.subr.bf16.mxu0 0
  %2274 = vmatpush1.bf16.msra.mxu0 0
  %2275 = vmatprep.mubr.bf16.mxu0 0
  %2276 = vmatmul.mubr.bf16.gmra.mrb[0].mxu0 %v2241
  %v2277 = vpop.f32.mrb[0].mxu0
  %v2278 = vadd.f32 0.0, %v2277
  %v2279 = vpop.f32.mrb[0].mxu0
  %v2280 = vpop.f32.mrb[0].mxu0
  %v2281 = vadd.f32 0.0, %v2280
  %v2282 = vpop.f32.mrb[0].mxu0
  %2283 = vdwg.mxu0
  %v2284 = vadd.f32 %v2123, %v2278
  %v2285 = vadd.f32 %v2124, %v2281
  %v2286 = vadd.f32 %v54, %v1640
  %v2287 = vadd.f32 %v55, %v1641
  %v2288 = vadd.f32 %v56, %v2284
  %v2289 = vadd.f32 %v57, %v2285
  %v2290 = vld [vmem:[%s8] sm:$0x1]
  %v2291 = vld [vmem:[%s9] sm:$0x1]
  %v2292 = vsel %vm60, %v2286, 0.0
  %2293 = vadd.xlane.f32.xlu0 %v2292
  %v2294 = vpop.xlane.xlu0 %2293
  %v2295 = vsel %vm60, %v2287, 0.0
  %2296 = vadd.xlane.f32.xlu0 %v2295
  %v2297 = vpop.xlane.xlu0 %2296
  %v2298 = vsel %vm60, %v2288, 0.0
  %2299 = vadd.xlane.f32.xlu0 %v2298
  %v2300 = vpop.xlane.xlu0 %2299
  %v2301 = vsel %vm60, %v2289, 0.0
  %2302 = vadd.xlane.f32.xlu0 %v2301
  %v2303 = vpop.xlane.xlu0 %2302
  %v2304 = vmul.f32 %v2294, %v73
  %v2305 = vmul.f32 %v2297, %v73
  %v2306 = vmul.f32 %v2300, %v73
  %v2307 = vmul.f32 %v2303, %v73
  %v2308 = vsub.f32 %v2286, %v2304
  %v2309 = vsub.f32 %v2287, %v2305
  %v2310 = vsub.f32 %v2288, %v2306
  %v2311 = vsub.f32 %v2289, %v2307
  %v2312 = vmul.f32 %v2308, %v2308
  %v2313 = vmul.f32 %v2309, %v2309
  %v2314 = vmul.f32 %v2310, %v2310
  %v2315 = vmul.f32 %v2311, %v2311
  %v2316 = vsel %vm60, %v2312, 0.0
  %2317 = vadd.xlane.f32.xlu0 %v2316
  %v2318 = vpop.xlane.xlu0 %2317
  %v2319 = vsel %vm60, %v2313, 0.0
  %2320 = vadd.xlane.f32.xlu0 %v2319
  %v2321 = vpop.xlane.xlu0 %2320
  %v2322 = vsel %vm60, %v2314, 0.0
  %2323 = vadd.xlane.f32.xlu0 %v2322
  %v2324 = vpop.xlane.xlu0 %2323
  %v2325 = vsel %vm60, %v2315, 0.0
  %2326 = vadd.xlane.f32.xlu0 %v2325
  %v2327 = vpop.xlane.xlu0 %2326
  %v2328 = vmul.f32 %v2318, %v73
  %v2329 = vmul.f32 %v2321, %v73
  %v2330 = vmul.f32 %v2324, %v73
  %v2331 = vmul.f32 %v2327, %v73
  %v2332 = vadd.f32 %v2328, 1e-05
  %v2333 = vadd.f32 %v2329, 1e-05
  %v2334 = vadd.f32 %v2330, 1e-05
  %v2335 = vadd.f32 %v2331, 1e-05
  %v2336 = vrsqrt.pop %v2332
  %v2337 = vrsqrt.pop %v2333
  %v2338 = vrsqrt.pop %v2334
  %v2339 = vrsqrt.pop %v2335
  %v2340 = vmul.f32 %v2308, %v2336
  %v2341 = vmul.f32 %v2309, %v2337
  %v2342 = vmul.f32 %v2310, %v2338
  %v2343 = vmul.f32 %v2311, %v2339
  %v2345 = vlaneseq
  %v2346 = vshrl.u32 %v2345, 7
  %v2347 = vsub.s32 0, %v2346
  %v2348 = vrot.slane %v2290, %v2347
  %v2350 = vmul.f32 %v2340, %v2348
  %v2351 = vmul.f32 %v2341, %v2348
  %v2352 = vmul.f32 %v2342, %v2348
  %v2353 = vmul.f32 %v2343, %v2348
  %v2355 = vlaneseq
  %v2356 = vshrl.u32 %v2355, 7
  %v2357 = vsub.s32 0, %v2356
  %v2358 = vrot.slane %v2291, %v2357
  %v2360 = vadd.f32 %v2350, %v2358
  %v2361 = vadd.f32 %v2351, %v2358
  %v2362 = vadd.f32 %v2352, %v2358
  %v2363 = vadd.f32 %v2353, %v2358
  %v2364 = vld [vmem:[%s10] sm:$0xf]
  %v2365 = vld [vmem:[%s10 + $0x4] sm:$0xf]
  %v2366 = vld [vmem:[%s10 + $0x8] sm:$0xf]
  %v2367 = vld [vmem:[%s10 + $0xc] sm:$0xf]
  %v2368 = vld [vmem:[%s11] sm:$0x1]
  %v2369 = vld [vmem:[%s12] sm:$0xf]
  %v2370 = vld [vmem:[%s12 + $0x4] sm:$0xf]
  %v2371 = vld [vmem:[%s12 + $0x8] sm:$0xf]
  %v2372 = vld [vmem:[%s12 + $0xc] sm:$0xf]
  %v2373 = vld [vmem:[%s13] sm:$0x1]
  %v2374 = vld [vmem:[%s14] sm:$0xf]
  %v2375 = vld [vmem:[%s14 + $0x4] sm:$0xf]
  %v2376 = vld [vmem:[%s14 + $0x8] sm:$0xf]
  %v2377 = vld [vmem:[%s14 + $0xc] sm:$0xf]
  %v2378 = vld [vmem:[%s14 + $0x10] sm:$0xf]
  %v2379 = vld [vmem:[%s14 + $0x14] sm:$0xf]
  %v2380 = vld [vmem:[%s14 + $0x18] sm:$0xf]
  %v2381 = vld [vmem:[%s14 + $0x1c] sm:$0xf]
  %v2382 = vld [vmem:[%s14 + $0x20] sm:$0xf]
  %v2383 = vld [vmem:[%s14 + $0x24] sm:$0xf]
  %v2384 = vld [vmem:[%s14 + $0x28] sm:$0xf]
  %v2385 = vld [vmem:[%s14 + $0x2c] sm:$0xf]
  %v2386 = vld [vmem:[%s14 + $0x30] sm:$0xf]
  %v2387 = vld [vmem:[%s14 + $0x34] sm:$0xf]
  %v2388 = vld [vmem:[%s14 + $0x38] sm:$0xf]
  %v2389 = vld [vmem:[%s14 + $0x3c] sm:$0xf]
  %v2390 = vld [vmem:[%s15] sm:$0x1]
  %v2391 = vpack.c.bf16 %v2361, %v2360
  %v2392 = vpack.c.bf16 %v2363, %v2362
  %v2394 = vlaneseq
  %v2395 = vshrl.u32 %v2394, 7
  %v2396 = vsub.s32 0, %v2395
  %v2397 = vrot.slane %v2368, %v2396
  %v2403 = vunpack.c.l.b16 %v2364
  %v2404 = vunpack.c.l.b16 %v2365
  %v2405 = vunpack.c.l.b16 %v2366
  %v2406 = vunpack.c.l.b16 %v2367
  %v2407 = vpack.c.b16 %v2404, %v2403
  %v2408 = vpack.c.b16 %v2406, %v2405
  %v2412 = vsel %vm60, %v2391, 0
  %v2415 = vsel %vm60, %v2392, 0
  %2417 = vmatprep.subr.bf16.mxu0 0
  %2418 = vmatpush1.bf16.msra.mxu0 %v2407
  %2419 = vmatprep.subr.bf16.mxu0 0
  %2420 = vmatpush1.bf16.msra.mxu0 %v2408
  %2421 = vmatprep.subr.bf16.mxu0 0
  %2422 = vmatpush1.bf16.msra.mxu0 0
  %2423 = vmatprep.subr.bf16.mxu0 0
  %2424 = vmatpush1.bf16.msra.mxu0 0
  %2425 = vmatprep.subr.bf16.mxu0 0
  %2426 = vmatpush1.bf16.msra.mxu0 0
  %2427 = vmatprep.subr.bf16.mxu0 0
  %2428 = vmatpush1.bf16.msra.mxu0 0
  %2429 = vmatprep.subr.bf16.mxu0 0
  %2430 = vmatpush1.bf16.msra.mxu0 0
  %2431 = vmatprep.subr.bf16.mxu0 0
  %2432 = vmatpush1.bf16.msra.mxu0 0
  %2433 = vmatprep.subr.bf16.mxu0 0
  %2434 = vmatpush1.bf16.msra.mxu0 0
  %2435 = vmatprep.subr.bf16.mxu0 0
  %2436 = vmatpush1.bf16.msra.mxu0 0
  %2437 = vmatprep.subr.bf16.mxu0 0
  %2438 = vmatpush1.bf16.msra.mxu0 0
  %2439 = vmatprep.subr.bf16.mxu0 0
  %2440 = vmatpush1.bf16.msra.mxu0 0
  %2441 = vmatprep.subr.bf16.mxu0 0
  %2442 = vmatpush1.bf16.msra.mxu0 0
  %2443 = vmatprep.subr.bf16.mxu0 0
  %2444 = vmatpush1.bf16.msra.mxu0 0
  %2445 = vmatprep.subr.bf16.mxu0 0
  %2446 = vmatpush1.bf16.msra.mxu0 0
  %2447 = vmatprep.subr.bf16.mxu0 0
  %2448 = vmatpush1.bf16.msra.mxu0 0
  %2449 = vmatprep.mubr.bf16.mxu0 0
  %2450 = vmatmul.mubr.bf16.gmra.mrb[0].mxu0 %v2412
  %v2451 = vpop.f32.mrb[0].mxu0
  %v2452 = vadd.f32 %v2397, %v2451
  %v2453 = vpop.f32.mrb[0].mxu0
  %v2454 = vpop.f32.mrb[0].mxu0
  %v2455 = vadd.f32 %v2397, %v2454
  %v2456 = vpop.f32.mrb[0].mxu0
  %2457 = vmatprep.mubr.bf16.mxu0 0
  %2458 = vmatmul.mubr.bf16.gmra.mrb[0].mxu0 %v2415
  %v2459 = vpop.f32.mrb[0].mxu0
  %v2460 = vadd.f32 %v2397, %v2459
  %v2461 = vpop.f32.mrb[0].mxu0
  %v2462 = vpop.f32.mrb[0].mxu0
  %v2463 = vadd.f32 %v2397, %v2462
  %v2464 = vpop.f32.mrb[0].mxu0
  %2465 = vdwg.mxu0
  %v2467 = vlaneseq
  %v2468 = vshrl.u32 %v2467, 7
  %v2469 = vsub.s32 0, %v2468
  %v2470 = vrot.slane %v2373, %v2469
  %v2476 = vunpack.c.l.b16 %v2369
  %v2477 = vunpack.c.l.b16 %v2370
  %v2478 = vunpack.c.l.b16 %v2371
  %v2479 = vunpack.c.l.b16 %v2372
  %v2480 = vpack.c.b16 %v2477, %v2476
  %v2481 = vpack.c.b16 %v2479, %v2478
  %2484 = vmatprep.subr.bf16.mxu0 0
  %2485 = vmatpush1.bf16.msra.mxu0 %v2480
  %2486 = vmatprep.subr.bf16.mxu0 0
  %2487 = vmatpush1.bf16.msra.mxu0 %v2481
  %2488 = vmatprep.subr.bf16.mxu0 0
  %2489 = vmatpush1.bf16.msra.mxu0 0
  %2490 = vmatprep.subr.bf16.mxu0 0
  %2491 = vmatpush1.bf16.msra.mxu0 0
  %2492 = vmatprep.subr.bf16.mxu0 0
  %2493 = vmatpush1.bf16.msra.mxu0 0
  %2494 = vmatprep.subr.bf16.mxu0 0
  %2495 = vmatpush1.bf16.msra.mxu0 0
  %2496 = vmatprep.subr.bf16.mxu0 0
  %2497 = vmatpush1.bf16.msra.mxu0 0
  %2498 = vmatprep.subr.bf16.mxu0 0
  %2499 = vmatpush1.bf16.msra.mxu0 0
  %2500 = vmatprep.subr.bf16.mxu0 0
  %2501 = vmatpush1.bf16.msra.mxu0 0
  %2502 = vmatprep.subr.bf16.mxu0 0
  %2503 = vmatpush1.bf16.msra.mxu0 0
  %2504 = vmatprep.subr.bf16.mxu0 0
  %2505 = vmatpush1.bf16.msra.mxu0 0
  %2506 = vmatprep.subr.bf16.mxu0 0
  %2507 = vmatpush1.bf16.msra.mxu0 0
  %2508 = vmatprep.subr.bf16.mxu0 0
  %2509 = vmatpush1.bf16.msra.mxu0 0
  %2510 = vmatprep.subr.bf16.mxu0 0
  %2511 = vmatpush1.bf16.msra.mxu0 0
  %2512 = vmatprep.subr.bf16.mxu0 0
  %2513 = vmatpush1.bf16.msra.mxu0 0
  %2514 = vmatprep.subr.bf16.mxu0 0
  %2515 = vmatpush1.bf16.msra.mxu0 0
  %2516 = vmatprep.mubr.bf16.mxu0 0
  %2517 = vmatmul.mubr.bf16.gmra.mrb[0].mxu0 %v2412
  %v2518 = vpop.f32.mrb[0].mxu0
  %v2519 = vadd.f32 %v2470, %v2518
  %v2520 = vpop.f32.mrb[0].mxu0
  %v2521 = vpop.f32.mrb[0].mxu0
  %v2522 = vadd.f32 %v2470, %v2521
  %v2523 = vpop.f32.mrb[0].mxu0
  %2524 = vmatprep.mubr.bf16.mxu0 0
  %2525 = vmatmul.mubr.bf16.gmra.mrb[0].mxu0 %v2415
  %v2526 = vpop.f32.mrb[0].mxu0
  %v2527 = vadd.f32 %v2470, %v2526
  %v2528 = vpop.f32.mrb[0].mxu0
  %v2529 = vpop.f32.mrb[0].mxu0
  %v2530 = vadd.f32 %v2470, %v2529
  %v2531 = vpop.f32.mrb[0].mxu0
  %2532 = vdwg.mxu0
  %v2533 = vmul.f32 %v2519, 0.5
  %v2534 = vmul.f32 %v2522, 0.5
  %v2535 = vmul.f32 %v2527, 0.5
  %v2536 = vmul.f32 %v2530, 0.5
  %v2537 = vmul.f32 %v2519, 0.044715
  %v2538 = vmul.f32 %v2522, 0.044715
  %v2539 = vmul.f32 %v2527, 0.044715
  %v2540 = vmul.f32 %v2530, 0.044715
  %v2541 = vmul.f32 %v2537, %v2519
  %v2542 = vmul.f32 %v2538, %v2522
  %v2543 = vmul.f32 %v2539, %v2527
  %v2544 = vmul.f32 %v2540, %v2530
  %v2545 = vmul.f32 %v2541, %v2519
  %v2546 = vmul.f32 %v2542, %v2522
  %v2547 = vmul.f32 %v2543, %v2527
  %v2548 = vmul.f32 %v2544, %v2530
  %v2549 = vadd.f32 %v2519, %v2545
  %v2550 = vadd.f32 %v2522, %v2546
  %v2551 = vadd.f32 %v2527, %v2547
  %v2552 = vadd.f32 %v2530, %v2548
  %v2553 = vmul.f32 %v2549, 0.7978846
  %v2554 = vmul.f32 %v2550, 0.7978846
  %v2555 = vmul.f32 %v2551, 0.7978846
  %v2556 = vmul.f32 %v2552, 0.7978846
  %v2557 = vtanh.pop %v2553
  %v2558 = vtanh.pop %v2554
  %v2559 = vtanh.pop %v2555
  %v2560 = vtanh.pop %v2556
  %v2561 = vadd.f32 %v2557, 1.0
  %v2562 = vadd.f32 %v2558, 1.0
  %v2563 = vadd.f32 %v2559, 1.0
  %v2564 = vadd.f32 %v2560, 1.0
  %v2565 = vmul.f32 %v2533, %v2561
  %v2566 = vmul.f32 %v2534, %v2562
  %v2567 = vmul.f32 %v2535, %v2563
  %v2568 = vmul.f32 %v2536, %v2564
  %v2569 = vmul.f32 %v2452, %v2565
  %v2570 = vmul.f32 %v2455, %v2566
  %v2571 = vmul.f32 %v2460, %v2567
  %v2572 = vmul.f32 %v2463, %v2568
  %v2573 = vpack.c.bf16 %v2570, %v2569
  %v2574 = vpack.c.bf16 %v2572, %v2571
  %v2576 = vlaneseq
  %v2577 = vshrl.u32 %v2576, 7
  %v2578 = vsub.s32 0, %v2577
  %v2579 = vrot.slane %v2390, %v2578
  %v2597 = vunpack.c.l.b16 %v2374
  %v2598 = vunpack.c.l.b16 %v2375
  %v2599 = vunpack.c.l.b16 %v2376
  %v2600 = vunpack.c.l.b16 %v2377
  %v2601 = vunpack.c.l.b16 %v2378
  %v2602 = vunpack.c.l.b16 %v2379
  %v2603 = vunpack.c.l.b16 %v2380
  %v2604 = vunpack.c.l.b16 %v2381
  %v2605 = vunpack.c.l.b16 %v2382
  %v2606 = vunpack.c.l.b16 %v2383
  %v2607 = vunpack.c.l.b16 %v2384
  %v2608 = vunpack.c.l.b16 %v2385
  %v2609 = vunpack.c.l.b16 %v2386
  %v2610 = vunpack.c.l.b16 %v2387
  %v2611 = vunpack.c.l.b16 %v2388
  %v2612 = vunpack.c.l.b16 %v2389
  %v2613 = vpack.c.b16 %v2598, %v2597
  %v2614 = vpack.c.b16 %v2600, %v2599
  %v2615 = vpack.c.b16 %v2602, %v2601
  %v2616 = vpack.c.b16 %v2604, %v2603
  %v2617 = vpack.c.b16 %v2606, %v2605
  %v2618 = vpack.c.b16 %v2608, %v2607
  %v2619 = vpack.c.b16 %v2610, %v2609
  %v2620 = vpack.c.b16 %v2612, %v2611
  %2629 = vmatprep.subr.bf16.mxu0 0
  %2630 = vmatpush1.bf16.msra.mxu0 %v2613
  %2631 = vmatprep.subr.bf16.mxu0 0
  %2632 = vmatpush1.bf16.msra.mxu0 %v2614
  %2633 = vmatprep.subr.bf16.mxu0 0
  %2634 = vmatpush1.bf16.msra.mxu0 %v2615
  %2635 = vmatprep.subr.bf16.mxu0 0
  %2636 = vmatpush1.bf16.msra.mxu0 %v2616
  %2637 = vmatprep.subr.bf16.mxu0 0
  %2638 = vmatpush1.bf16.msra.mxu0 %v2617
  %2639 = vmatprep.subr.bf16.mxu0 0
  %2640 = vmatpush1.bf16.msra.mxu0 %v2618
  %2641 = vmatprep.subr.bf16.mxu0 0
  %2642 = vmatpush1.bf16.msra.mxu0 %v2619
  %2643 = vmatprep.subr.bf16.mxu0 0
  %2644 = vmatpush1.bf16.msra.mxu0 %v2620
  %2645 = vmatprep.subr.bf16.mxu0 0
  %2646 = vmatpush1.bf16.msra.mxu0 0
  %2647 = vmatprep.subr.bf16.mxu0 0
  %2648 = vmatpush1.bf16.msra.mxu0 0
  %2649 = vmatprep.subr.bf16.mxu0 0
  %2650 = vmatpush1.bf16.msra.mxu0 0
  %2651 = vmatprep.subr.bf16.mxu0 0
  %2652 = vmatpush1.bf16.msra.mxu0 0
  %2653 = vmatprep.subr.bf16.mxu0 0
  %2654 = vmatpush1.bf16.msra.mxu0 0
  %2655 = vmatprep.subr.bf16.mxu0 0
  %2656 = vmatpush1.bf16.msra.mxu0 0
  %2657 = vmatprep.subr.bf16.mxu0 0
  %2658 = vmatpush1.bf16.msra.mxu0 0
  %2659 = vmatprep.subr.bf16.mxu0 0
  %2660 = vmatpush1.bf16.msra.mxu0 0
  %2661 = vmatprep.mubr.bf16.mxu0 0
  %2662 = vmatmul.mubr.bf16.gmra.mrb[0].mxu0 %v2573
  %v2663 = vpop.f32.mrb[0].mxu0
  %v2664 = vadd.f32 %v2579, %v2663
  %v2665 = vpop.f32.mrb[0].mxu0
  %v2666 = vpop.f32.mrb[0].mxu0
  %v2667 = vadd.f32 %v2579, %v2666
  %v2668 = vpop.f32.mrb[0].mxu0
  %2669 = vmatprep.mubr.bf16.mxu0 0
  %2670 = vmatmul.mubr.bf16.gmra.mrb[0].mxu0 %v2574
  %v2671 = vpop.f32.mrb[0].mxu0
  %v2672 = vadd.f32 %v2579, %v2671
  %v2673 = vpop.f32.mrb[0].mxu0
  %v2674 = vpop.f32.mrb[0].mxu0
  %v2675 = vadd.f32 %v2579, %v2674
  %v2676 = vpop.f32.mrb[0].mxu0
  %2677 = vdwg.mxu0
  %v2678 = vadd.f32 %v2286, %v2664
  %v2679 = vadd.f32 %v2287, %v2667
  %v2680 = vadd.f32 %v2288, %v2672
  %v2681 = vadd.f32 %v2289, %v2675
  %2682 = vst.msk [vmem:[%s16] sm:$0xff] %vm60, %v2678
  %2683 = vst.msk [vmem:[%s16 + $0x8] sm:$0xff] %vm60, %v2679
  %2684 = vst.msk [vmem:[%s16 + $0x10] sm:$0xff] %vm60, %v2680
  %2685 = vst.msk [vmem:[%s16 + $0x18] sm:$0xff] %vm60, %v2681
  // Predicated region
  $region66: #{perceiver_io_encoder.4} parent=0 // pred_check
    _
  $region67: #{perceiver_io_encoder.4} parent=0 // pred_check_branch
    %2687 = sbr.rel (0) target = $region69
  $region68: #{perceiver_io_encoder.4} parent=0 // pred_region
    _
  $region69: #{perceiver_io_encoder.4} parent=0 // pred_fallthru
    _
  // Predicated region
  $region70: #{perceiver_io_encoder.4} parent=0 // pred_check
    _
  $region71: #{perceiver_io_encoder.4} parent=0 // pred_check_branch
    %2689 = sbr.rel (0) target = $region73
  $region72: #{perceiver_io_encoder.4} parent=0 // pred_region
    _
  $region73: #{perceiver_io_encoder.4} parent=0 // pred_fallthru
    _

// kernel: perceiver_io_encoder.5
$region0: #{perceiver_io_encoder.5}
  #allocation0 [shape = 'u32[]', space=smem, size = 0x4, offset = 0x4, fixed_abs, tag = 'smem constant byte address 0x4 - core index']
  #allocation1 [shape = 'u32[144,128]{1,0:T(1,128)}', space=vmem, size = 0x12000, scoped, tag = 'internal scratch']
  %s0 = inlined_call_operand.vmem [shape: f32[1,2,16,32], index: 0, kind: input, shape index: {}]
  %s1 = inlined_call_operand.vmem [shape: f32[1,32], index: 1, kind: input, shape index: {}]
  %s2 = inlined_call_operand.vmem [shape: f32[1,32], index: 2, kind: input, shape index: {}]
  %s3 = inlined_call_operand.vmem [shape: bf16[4,32,16], index: 3, kind: input, shape index: {}]
  %s4 = inlined_call_operand.vmem [shape: bf16[4,32,16], index: 4, kind: input, shape index: {}]
  %s5 = inlined_call_operand.vmem [shape: bf16[4,32,16], index: 5, kind: input, shape index: {}]
  %s6 = inlined_call_operand.vmem [shape: bf16[4,16,32], index: 6, kind: input, shape index: {}]
  %s7 = inlined_call_operand.vmem [shape: f32[1,32], index: 7, kind: input, shape index: {}]
  %s8 = inlined_call_operand.vmem [shape: f32[1,32], index: 8, kind: input, shape index: {}]
  %s9 = inlined_call_operand.vmem [shape: f32[1,32], index: 9, kind: input, shape index: {}]
  %s10 = inlined_call_operand.vmem [shape: bf16[32,128], index: 10, kind: input, shape index: {}]
  %s11 = inlined_call_operand.vmem [shape: f32[1,128], index: 11, kind: input, shape index: {}]
  %s12 = inlined_call_operand.vmem [shape: bf16[32,128], index: 12, kind: input, shape index: {}]
  %s13 = inlined_call_operand.vmem [shape: f32[1,128], index: 13, kind: input, shape index: {}]
  %s14 = inlined_call_operand.vmem [shape: bf16[128,32], index: 14, kind: input, shape index: {}]
  %s15 = inlined_call_operand.vmem [shape: f32[1,32], index: 15, kind: input, shape index: {}]
  %s16 = inlined_call_operand.hbm [shape: f32[1,2,16,32], index: 16, kind: output, shape index: {}]
  %s17 = sld [smem:[#allocation0]]
  $region74: #{perceiver_io_encoder.5} parent=0
    _
  %s19 = ssub.s32 1, %s17
  %s20 = scalar_select 0, %s19, %s17
  $region1: #{perceiver_io_encoder.5} parent=0
    #allocation2 [shape = 'u8[16384]{0}', space=vmem, size = 0x4000, scoped, tag = 'output window, operand 0, single buffered']
    #allocation3 [shape = 's32[1]{0}', space=sflag, size = 0x4, scoped, tag = 'scoped memory for perceiver_io_encoder.5']
    %21 = vsyncpa [#allocation3], 0
    // Predicated region
    $region2: #{perceiver_io_encoder.5} parent=1 // pred_check
      _
    $region3: #{perceiver_io_encoder.5} parent=1 // pred_check_branch
      %23 = sbr.rel (0) target = $region5
    $region4: #{perceiver_io_encoder.5} parent=1 // pred_region
      _
    $region5: #{perceiver_io_encoder.5} parent=1 // pred_fallthru
      _
    // Predicated region
    $region6: #{perceiver_io_encoder.5} parent=1 // pred_check
      _
    $region7: #{perceiver_io_encoder.5} parent=1 // pred_check_branch
      %25 = sbr.rel (0) target = $region9
    $region8: #{perceiver_io_encoder.5} parent=1 // pred_region
      _
    $region9: #{perceiver_io_encoder.5} parent=1 // pred_fallthru
      _
    // Predicated region
    $region10: #{perceiver_io_encoder.5} parent=1 // pred_check
      _
    $region11: #{perceiver_io_encoder.5} parent=1 // pred_check_branch
      %27 = sbr.rel (0) target = $region13
    $region12: #{perceiver_io_encoder.5} parent=1 // pred_region
      _
    $region13: #{perceiver_io_encoder.5} parent=1 // pred_fallthru
      _
    // Predicated region
    $region14: #{perceiver_io_encoder.5} parent=1 // pred_check
      _
    $region15: #{perceiver_io_encoder.5} parent=1 // pred_check_branch
      %29 = sbr.rel (0) target = $region17
    $region16: #{perceiver_io_encoder.5} parent=1 // pred_region
      _
    $region17: #{perceiver_io_encoder.5} parent=1 // pred_fallthru
      _
    // Predicated region
    $region18: #{perceiver_io_encoder.5} parent=1 // pred_check
      _
    $region19: #{perceiver_io_encoder.5} parent=1 // pred_check_branch
      %31 = sbr.rel (0) target = $region21
    $region20: #{perceiver_io_encoder.5} parent=1 // pred_region
      _
    $region21: #{perceiver_io_encoder.5} parent=1 // pred_fallthru
      _
    // Predicated region
    $region22: #{perceiver_io_encoder.5} parent=1 // pred_check
      _
    $region23: #{perceiver_io_encoder.5} parent=1 // pred_check_branch
      %33 = sbr.rel (0) target = $region25
    $region24: #{perceiver_io_encoder.5} parent=1 // pred_region
      _
    $region25: #{perceiver_io_encoder.5} parent=1 // pred_fallthru
      _
    // Predicated region
    $region26: #{perceiver_io_encoder.5} parent=1 // pred_check
      _
    $region27: #{perceiver_io_encoder.5} parent=1 // pred_check_branch
      %35 = sbr.rel (0) target = $region29
    $region28: #{perceiver_io_encoder.5} parent=1 // pred_region
      _
    $region29: #{perceiver_io_encoder.5} parent=1 // pred_fallthru
      _
    // Predicated region
    $region30: #{perceiver_io_encoder.5} parent=1 // pred_check
      _
    $region31: #{perceiver_io_encoder.5} parent=1 // pred_check_branch
      %37 = sbr.rel (0) target = $region33
    $region32: #{perceiver_io_encoder.5} parent=1 // pred_region
      _
    $region33: #{perceiver_io_encoder.5} parent=1 // pred_fallthru
      _
    // Predicated region
    $region34: #{perceiver_io_encoder.5} parent=1 // pred_check
      _
    $region35: #{perceiver_io_encoder.5} parent=1 // pred_check_branch
      %39 = sbr.rel (0) target = $region37
    $region36: #{perceiver_io_encoder.5} parent=1 // pred_region
      _
    $region37: #{perceiver_io_encoder.5} parent=1 // pred_fallthru
      _
    // Predicated region
    $region38: #{perceiver_io_encoder.5} parent=1 // pred_check
      _
    $region39: #{perceiver_io_encoder.5} parent=1 // pred_check_branch
      %41 = sbr.rel (0) target = $region41
    $region40: #{perceiver_io_encoder.5} parent=1 // pred_region
      _
    $region41: #{perceiver_io_encoder.5} parent=1 // pred_fallthru
      _
    // Predicated region
    $region42: #{perceiver_io_encoder.5} parent=1 // pred_check
      _
    $region43: #{perceiver_io_encoder.5} parent=1 // pred_check_branch
      %43 = sbr.rel (0) target = $region45
    $region44: #{perceiver_io_encoder.5} parent=1 // pred_region
      _
    $region45: #{perceiver_io_encoder.5} parent=1 // pred_fallthru
      _
    // Predicated region
    $region46: #{perceiver_io_encoder.5} parent=1 // pred_check
      _
    $region47: #{perceiver_io_encoder.5} parent=1 // pred_check_branch
      %45 = sbr.rel (0) target = $region49
    $region48: #{perceiver_io_encoder.5} parent=1 // pred_region
      _
    $region49: #{perceiver_io_encoder.5} parent=1 // pred_fallthru
      _
    // Predicated region
    $region50: #{perceiver_io_encoder.5} parent=1 // pred_check
      _
    $region51: #{perceiver_io_encoder.5} parent=1 // pred_check_branch
      %47 = sbr.rel (0) target = $region53
    $region52: #{perceiver_io_encoder.5} parent=1 // pred_region
      _
    $region53: #{perceiver_io_encoder.5} parent=1 // pred_fallthru
      _
    // Predicated region
    $region54: #{perceiver_io_encoder.5} parent=1 // pred_check
      _
    $region55: #{perceiver_io_encoder.5} parent=1 // pred_check_branch
      %49 = sbr.rel (0) target = $region57
    $region56: #{perceiver_io_encoder.5} parent=1 // pred_region
      _
    $region57: #{perceiver_io_encoder.5} parent=1 // pred_fallthru
      _
    // Predicated region
    $region58: #{perceiver_io_encoder.5} parent=1 // pred_check
      _
    $region59: #{perceiver_io_encoder.5} parent=1 // pred_check_branch
      %51 = sbr.rel (0) target = $region61
    $region60: #{perceiver_io_encoder.5} parent=1 // pred_region
      _
    $region61: #{perceiver_io_encoder.5} parent=1 // pred_fallthru
      _
    // Predicated region
    $region62: #{perceiver_io_encoder.5} parent=1 // pred_check
      _
    $region63: #{perceiver_io_encoder.5} parent=1 // pred_check_branch
      %53 = sbr.rel (0) target = $region65
    $region64: #{perceiver_io_encoder.5} parent=1 // pred_region
      _
    $region65: #{perceiver_io_encoder.5} parent=1 // pred_fallthru
      _
    %v55 = vld [vmem:[%s0] sm:$0xff]
    %v56 = vld [vmem:[%s0 + $0x8] sm:$0xff]
    %v57 = vld [vmem:[%s0 + $0x10] sm:$0xff]
    %v58 = vld [vmem:[%s0 + $0x18] sm:$0xff]
    %v59 = vld [vmem:[%s1] sm:$0x1]
    %v60 = vld [vmem:[%s2] sm:$0x1]
    %vm61 = vcmask 261120
    %v62 = vsel %vm61, %v55, 0.0
    %63 = vadd.xlane.f32.xlu0 %v62
    %v64 = vpop.xlane.xlu0 %63
    %v65 = vsel %vm61, %v56, 0.0
    %66 = vadd.xlane.f32.xlu0 %v65
    %v67 = vpop.xlane.xlu0 %66
    %v68 = vsel %vm61, %v57, 0.0
    %69 = vadd.xlane.f32.xlu0 %v68
    %v70 = vpop.xlane.xlu0 %69
    %v71 = vsel %vm61, %v58, 0.0
    %72 = vadd.xlane.f32.xlu0 %v71
    %v73 = vpop.xlane.xlu0 %72
    %v74 = vrcp.pop 32.0
    %v75 = vmul.f32 %v64, %v74
    %v76 = vmul.f32 %v67, %v74
    %v77 = vmul.f32 %v70, %v74
    %v78 = vmul.f32 %v73, %v74
    %v79 = vsub.f32 %v55, %v75
    %v80 = vsub.f32 %v56, %v76
    %v81 = vsub.f32 %v57, %v77
    %v82 = vsub.f32 %v58, %v78
    %v83 = vmul.f32 %v79, %v79
    %v84 = vmul.f32 %v80, %v80
    %v85 = vmul.f32 %v81, %v81
    %v86 = vmul.f32 %v82, %v82
    %v87 = vsel %vm61, %v83, 0.0
    %88 = vadd.xlane.f32.xlu0 %v87
    %v89 = vpop.xlane.xlu0 %88
    %v90 = vsel %vm61, %v84, 0.0
    %91 = vadd.xlane.f32.xlu0 %v90
    %v92 = vpop.xlane.xlu0 %91
    %v93 = vsel %vm61, %v85, 0.0
    %94 = vadd.xlane.f32.xlu0 %v93
    %v95 = vpop.xlane.xlu0 %94
    %v96 = vsel %vm61, %v86, 0.0
    %97 = vadd.xlane.f32.xlu0 %v96
    %v98 = vpop.xlane.xlu0 %97
    %v99 = vmul.f32 %v89, %v74
    %v100 = vmul.f32 %v92, %v74
    %v101 = vmul.f32 %v95, %v74
    %v102 = vmul.f32 %v98, %v74
    %v103 = vadd.f32 %v99, 1e-05
    %v104 = vadd.f32 %v100, 1e-05
    %v105 = vadd.f32 %v101, 1e-05
    %v106 = vadd.f32 %v102, 1e-05
    %v107 = vrsqrt.pop %v103
    %v108 = vrsqrt.pop %v104
    %v109 = vrsqrt.pop %v105
    %v110 = vrsqrt.pop %v106
    %v111 = vmul.f32 %v79, %v107
    %v112 = vmul.f32 %v80, %v108
    %v113 = vmul.f32 %v81, %v109
    %v114 = vmul.f32 %v82, %v110
    %v116 = vlaneseq
    %v117 = vshrl.u32 %v116, 7
    %v118 = vsub.s32 0, %v117
    %v119 = vrot.slane %v59, %v118
    %v121 = vmul.f32 %v111, %v119
    %v122 = vmul.f32 %v112, %v119
    %v123 = vmul.f32 %v113, %v119
    %v124 = vmul.f32 %v114, %v119
    %v126 = vlaneseq
    %v127 = vshrl.u32 %v126, 7
    %v128 = vsub.s32 0, %v127
    %v129 = vrot.slane %v60, %v128
    %v131 = vadd.f32 %v121, %v129
    %v132 = vadd.f32 %v122, %v129
    %v133 = vadd.f32 %v123, %v129
    %v134 = vadd.f32 %v124, %v129
    %v135 = vpack.c.bf16 %v132, %v131
    %v136 = vpack.c.bf16 %v134, %v133
    %v137 = vld [vmem:[%s3] sm:$0xf]
    %v138 = vld [vmem:[%s3 + $0x4] sm:$0xf]
    %v139 = vld [vmem:[%s3 + $0x8] sm:$0xf]
    %v140 = vld [vmem:[%s3 + $0xc] sm:$0xf]
    %v145 = vunpack.c.l.b16 %v137
    %v146 = vunpack.c.l.b16 %v138
    %v147 = vunpack.c.l.b16 %v139
    %v148 = vunpack.c.l.b16 %v140
    %v149 = vpack.c.b16 %v146, %v145
    %v150 = vpack.c.b16 %v148, %v147
    %v154 = vsel %vm61, %v135, 0
    %v157 = vsel %vm61, %v136, 0
    %159 = vmatprep.subr.bf16.mxu0 0
    %160 = vmatpush1.bf16.msra.mxu0 %v149
    %161 = vmatprep.subr.bf16.mxu0 0
    %162 = vmatpush1.bf16.msra.mxu0 %v150
    %163 = vmatprep.subr.bf16.mxu0 0
    %164 = vmatpush1.bf16.msra.mxu0 0
    %165 = vmatprep.subr.bf16.mxu0 0
    %166 = vmatpush1.bf16.msra.mxu0 0
    %167 = vmatprep.subr.bf16.mxu0 0
    %168 = vmatpush1.bf16.msra.mxu0 0
    %169 = vmatprep.subr.bf16.mxu0 0
    %170 = vmatpush1.bf16.msra.mxu0 0
    %171 = vmatprep.subr.bf16.mxu0 0
    %172 = vmatpush1.bf16.msra.mxu0 0
    %173 = vmatprep.subr.bf16.mxu0 0
    %174 = vmatpush1.bf16.msra.mxu0 0
    %175 = vmatprep.subr.bf16.mxu0 0
    %176 = vmatpush1.bf16.msra.mxu0 0
    %177 = vmatprep.subr.bf16.mxu0 0
    %178 = vmatpush1.bf16.msra.mxu0 0
    %179 = vmatprep.subr.bf16.mxu0 0
    %180 = vmatpush1.bf16.msra.mxu0 0
    %181 = vmatprep.subr.bf16.mxu0 0
    %182 = vmatpush1.bf16.msra.mxu0 0
    %183 = vmatprep.subr.bf16.mxu0 0
    %184 = vmatpush1.bf16.msra.mxu0 0
    %185 = vmatprep.subr.bf16.mxu0 0
    %186 = vmatpush1.bf16.msra.mxu0 0
    %187 = vmatprep.subr.bf16.mxu0 0
    %188 = vmatpush1.bf16.msra.mxu0 0
    %189 = vmatprep.subr.bf16.mxu0 0
    %190 = vmatpush1.bf16.msra.mxu0 0
    %191 = vmatprep.mubr.bf16.mxu0 0
    %192 = vmatmul.mubr.bf16.gmra.mrb[0].mxu0 %v154
    %v193 = vpop.f32.mrb[0].mxu0
    %v194 = vadd.f32 0.0, %v193
    %v195 = vpop.f32.mrb[0].mxu0
    %v196 = vpop.f32.mrb[0].mxu0
    %v197 = vadd.f32 0.0, %v196
    %v198 = vpop.f32.mrb[0].mxu0
    %199 = vmatprep.mubr.bf16.mxu0 0
    %200 = vmatmul.mubr.bf16.gmra.mrb[0].mxu0 %v157
    %v201 = vpop.f32.mrb[0].mxu0
    %v202 = vadd.f32 0.0, %v201
    %v203 = vpop.f32.mrb[0].mxu0
    %v204 = vpop.f32.mrb[0].mxu0
    %v205 = vadd.f32 0.0, %v204
    %v206 = vpop.f32.mrb[0].mxu0
    %207 = vdwg.mxu0
    %v208 = vpack.c.bf16 %v197, %v194
    %v209 = vpack.c.bf16 %v205, %v202
    %s210 = scalar_lea.vmem %s3, 16
    %v211 = vld [vmem:[%s210] sm:$0xf]
    %v212 = vld [vmem:[%s210 + $0x4] sm:$0xf]
    %v213 = vld [vmem:[%s210 + $0x8] sm:$0xf]
    %v214 = vld [vmem:[%s210 + $0xc] sm:$0xf]
    %v219 = vunpack.c.l.b16 %v211
    %v220 = vunpack.c.l.b16 %v212
    %v221 = vunpack.c.l.b16 %v213
    %v222 = vunpack.c.l.b16 %v214
    %v223 = vpack.c.b16 %v220, %v219
    %v224 = vpack.c.b16 %v222, %v221
    %227 = vmatprep.subr.bf16.mxu0 0
    %228 = vmatpush1.bf16.msra.mxu0 %v223
    %229 = vmatprep.subr.bf16.mxu0 0
    %230 = vmatpush1.bf16.msra.mxu0 %v224
    %231 = vmatprep.subr.bf16.mxu0 0
    %232 = vmatpush1.bf16.msra.mxu0 0
    %233 = vmatprep.subr.bf16.mxu0 0
    %234 = vmatpush1.bf16.msra.mxu0 0
    %235 = vmatprep.subr.bf16.mxu0 0
    %236 = vmatpush1.bf16.msra.mxu0 0
    %237 = vmatprep.subr.bf16.mxu0 0
    %238 = vmatpush1.bf16.msra.mxu0 0
    %239 = vmatprep.subr.bf16.mxu0 0
    %240 = vmatpush1.bf16.msra.mxu0 0
    %241 = vmatprep.subr.bf16.mxu0 0
    %242 = vmatpush1.bf16.msra.mxu0 0
    %243 = vmatprep.subr.bf16.mxu0 0
    %244 = vmatpush1.bf16.msra.mxu0 0
    %245 = vmatprep.subr.bf16.mxu0 0
    %246 = vmatpush1.bf16.msra.mxu0 0
    %247 = vmatprep.subr.bf16.mxu0 0
    %248 = vmatpush1.bf16.msra.mxu0 0
    %249 = vmatprep.subr.bf16.mxu0 0
    %250 = vmatpush1.bf16.msra.mxu0 0
    %251 = vmatprep.subr.bf16.mxu0 0
    %252 = vmatpush1.bf16.msra.mxu0 0
    %253 = vmatprep.subr.bf16.mxu0 0
    %254 = vmatpush1.bf16.msra.mxu0 0
    %255 = vmatprep.subr.bf16.mxu0 0
    %256 = vmatpush1.bf16.msra.mxu0 0
    %257 = vmatprep.subr.bf16.mxu0 0
    %258 = vmatpush1.bf16.msra.mxu0 0
    %259 = vmatprep.mubr.bf16.mxu0 0
    %260 = vmatmul.mubr.bf16.gmra.mrb[0].mxu0 %v154
    %v261 = vpop.f32.mrb[0].mxu0
    %v262 = vadd.f32 0.0, %v261
    %v263 = vpop.f32.mrb[0].mxu0
    %v264 = vpop.f32.mrb[0].mxu0
    %v265 = vadd.f32 0.0, %v264
    %v266 = vpop.f32.mrb[0].mxu0
    %267 = vmatprep.mubr.bf16.mxu0 0
    %268 = vmatmul.mubr.bf16.gmra.mrb[0].mxu0 %v157
    %v269 = vpop.f32.mrb[0].mxu0
    %v270 = vadd.f32 0.0, %v269
    %v271 = vpop.f32.mrb[0].mxu0
    %v272 = vpop.f32.mrb[0].mxu0
    %v273 = vadd.f32 0.0, %v272
    %v274 = vpop.f32.mrb[0].mxu0
    %275 = vdwg.mxu0
    %v276 = vpack.c.bf16 %v265, %v262
    %v277 = vpack.c.bf16 %v273, %v270
    %s278 = scalar_lea.vmem %s3, 32
    %v279 = vld [vmem:[%s278] sm:$0xf]
    %v280 = vld [vmem:[%s278 + $0x4] sm:$0xf]
    %v281 = vld [vmem:[%s278 + $0x8] sm:$0xf]
    %v282 = vld [vmem:[%s278 + $0xc] sm:$0xf]
    %v287 = vunpack.c.l.b16 %v279
    %v288 = vunpack.c.l.b16 %v280
    %v289 = vunpack.c.l.b16 %v281
    %v290 = vunpack.c.l.b16 %v282
    %v291 = vpack.c.b16 %v288, %v287
    %v292 = vpack.c.b16 %v290, %v289
    %295 = vmatprep.subr.bf16.mxu0 0
    %296 = vmatpush1.bf16.msra.mxu0 %v291
    %297 = vmatprep.subr.bf16.mxu0 0
    %298 = vmatpush1.bf16.msra.mxu0 %v292
    %299 = vmatprep.subr.bf16.mxu0 0
    %300 = vmatpush1.bf16.msra.mxu0 0
    %301 = vmatprep.subr.bf16.mxu0 0
    %302 = vmatpush1.bf16.msra.mxu0 0
    %303 = vmatprep.subr.bf16.mxu0 0
    %304 = vmatpush1.bf16.msra.mxu0 0
    %305 = vmatprep.subr.bf16.mxu0 0
    %306 = vmatpush1.bf16.msra.mxu0 0
    %307 = vmatprep.subr.bf16.mxu0 0
    %308 = vmatpush1.bf16.msra.mxu0 0
    %309 = vmatprep.subr.bf16.mxu0 0
    %310 = vmatpush1.bf16.msra.mxu0 0
    %311 = vmatprep.subr.bf16.mxu0 0
    %312 = vmatpush1.bf16.msra.mxu0 0
    %313 = vmatprep.subr.bf16.mxu0 0
    %314 = vmatpush1.bf16.msra.mxu0 0
    %315 = vmatprep.subr.bf16.mxu0 0
    %316 = vmatpush1.bf16.msra.mxu0 0
    %317 = vmatprep.subr.bf16.mxu0 0
    %318 = vmatpush1.bf16.msra.mxu0 0
    %319 = vmatprep.subr.bf16.mxu0 0
    %320 = vmatpush1.bf16.msra.mxu0 0
    %321 = vmatprep.subr.bf16.mxu0 0
    %322 = vmatpush1.bf16.msra.mxu0 0
    %323 = vmatprep.subr.bf16.mxu0 0
    %324 = vmatpush1.bf16.msra.mxu0 0
    %325 = vmatprep.subr.bf16.mxu0 0
    %326 = vmatpush1.bf16.msra.mxu0 0
    %327 = vmatprep.mubr.bf16.mxu0 0
    %328 = vmatmul.mubr.bf16.gmra.mrb[0].mxu0 %v154
    %v329 = vpop.f32.mrb[0].mxu0
    %v330 = vadd.f32 0.0, %v329
    %v331 = vpop.f32.mrb[0].mxu0
    %v332 = vpop.f32.mrb[0].mxu0
    %v333 = vadd.f32 0.0, %v332
    %v334 = vpop.f32.mrb[0].mxu0
    %335 = vmatprep.mubr.bf16.mxu0 0
    %336 = vmatmul.mubr.bf16.gmra.mrb[0].mxu0 %v157
    %v337 = vpop.f32.mrb[0].mxu0
    %v338 = vadd.f32 0.0, %v337
    %v339 = vpop.f32.mrb[0].mxu0
    %v340 = vpop.f32.mrb[0].mxu0
    %v341 = vadd.f32 0.0, %v340
    %v342 = vpop.f32.mrb[0].mxu0
    %343 = vdwg.mxu0
    %v344 = vpack.c.bf16 %v333, %v330
    %v345 = vpack.c.bf16 %v341, %v338
    %s346 = scalar_lea.vmem %s3, 48
    %v347 = vld [vmem:[%s346] sm:$0xf]
    %v348 = vld [vmem:[%s346 + $0x4] sm:$0xf]
    %v349 = vld [vmem:[%s346 + $0x8] sm:$0xf]
    %v350 = vld [vmem:[%s346 + $0xc] sm:$0xf]
    %v355 = vunpack.c.l.b16 %v347
    %v356 = vunpack.c.l.b16 %v348
    %v357 = vunpack.c.l.b16 %v349
    %v358 = vunpack.c.l.b16 %v350
    %v359 = vpack.c.b16 %v356, %v355
    %v360 = vpack.c.b16 %v358, %v357
    %363 = vmatprep.subr.bf16.mxu0 0
    %364 = vmatpush1.bf16.msra.mxu0 %v359
    %365 = vmatprep.subr.bf16.mxu0 0
    %366 = vmatpush1.bf16.msra.mxu0 %v360
    %367 = vmatprep.subr.bf16.mxu0 0
    %368 = vmatpush1.bf16.msra.mxu0 0
    %369 = vmatprep.subr.bf16.mxu0 0
    %370 = vmatpush1.bf16.msra.mxu0 0
    %371 = vmatprep.subr.bf16.mxu0 0
    %372 = vmatpush1.bf16.msra.mxu0 0
    %373 = vmatprep.subr.bf16.mxu0 0
    %374 = vmatpush1.bf16.msra.mxu0 0
    %375 = vmatprep.subr.bf16.mxu0 0
    %376 = vmatpush1.bf16.msra.mxu0 0
    %377 = vmatprep.subr.bf16.mxu0 0
    %378 = vmatpush1.bf16.msra.mxu0 0
    %379 = vmatprep.subr.bf16.mxu0 0
    %380 = vmatpush1.bf16.msra.mxu0 0
    %381 = vmatprep.subr.bf16.mxu0 0
    %382 = vmatpush1.bf16.msra.mxu0 0
    %383 = vmatprep.subr.bf16.mxu0 0
    %384 = vmatpush1.bf16.msra.mxu0 0
    %385 = vmatprep.subr.bf16.mxu0 0
    %386 = vmatpush1.bf16.msra.mxu0 0
    %387 = vmatprep.subr.bf16.mxu0 0
    %388 = vmatpush1.bf16.msra.mxu0 0
    %389 = vmatprep.subr.bf16.mxu0 0
    %390 = vmatpush1.bf16.msra.mxu0 0
    %391 = vmatprep.subr.bf16.mxu0 0
    %392 = vmatpush1.bf16.msra.mxu0 0
    %393 = vmatprep.subr.bf16.mxu0 0
    %394 = vmatpush1.bf16.msra.mxu0 0
    %395 = vmatprep.mubr.bf16.mxu0 0
    %396 = vmatmul.mubr.bf16.gmra.mrb[0].mxu0 %v154
    %v397 = vpop.f32.mrb[0].mxu0
    %v398 = vadd.f32 0.0, %v397
    %v399 = vpop.f32.mrb[0].mxu0
    %v400 = vpop.f32.mrb[0].mxu0
    %v401 = vadd.f32 0.0, %v400
    %v402 = vpop.f32.mrb[0].mxu0
    %403 = vmatprep.mubr.bf16.mxu0 0
    %404 = vmatmul.mubr.bf16.gmra.mrb[0].mxu0 %v157
    %v405 = vpop.f32.mrb[0].mxu0
    %v406 = vadd.f32 0.0, %v405
    %v407 = vpop.f32.mrb[0].mxu0
    %v408 = vpop.f32.mrb[0].mxu0
    %v409 = vadd.f32 0.0, %v408
    %v410 = vpop.f32.mrb[0].mxu0
    %411 = vdwg.mxu0
    %v412 = vpack.c.bf16 %v401, %v398
    %v413 = vpack.c.bf16 %v409, %v406
    %v414 = vld [vmem:[%s4] sm:$0xf]
    %v415 = vld [vmem:[%s4 + $0x4] sm:$0xf]
    %v416 = vld [vmem:[%s4 + $0x8] sm:$0xf]
    %v417 = vld [vmem:[%s4 + $0xc] sm:$0xf]
    %v422 = vunpack.c.l.b16 %v414
    %v423 = vunpack.c.l.b16 %v415
    %v424 = vunpack.c.l.b16 %v416
    %v425 = vunpack.c.l.b16 %v417
    %v426 = vpack.c.b16 %v423, %v422
    %v427 = vpack.c.b16 %v425, %v424
    %430 = vmatprep.subr.bf16.mxu0 0
    %431 = vmatpush1.bf16.msra.mxu0 %v426
    %432 = vmatprep.subr.bf16.mxu0 0
    %433 = vmatpush1.bf16.msra.mxu0 %v427
    %434 = vmatprep.subr.bf16.mxu0 0
    %435 = vmatpush1.bf16.msra.mxu0 0
    %436 = vmatprep.subr.bf16.mxu0 0
    %437 = vmatpush1.bf16.msra.mxu0 0
    %438 = vmatprep.subr.bf16.mxu0 0
    %439 = vmatpush1.bf16.msra.mxu0 0
    %440 = vmatprep.subr.bf16.mxu0 0
    %441 = vmatpush1.bf16.msra.mxu0 0
    %442 = vmatprep.subr.bf16.mxu0 0
    %443 = vmatpush1.bf16.msra.mxu0 0
    %444 = vmatprep.subr.bf16.mxu0 0
    %445 = vmatpush1.bf16.msra.mxu0 0
    %446 = vmatprep.subr.bf16.mxu0 0
    %447 = vmatpush1.bf16.msra.mxu0 0
    %448 = vmatprep.subr.bf16.mxu0 0
    %449 = vmatpush1.bf16.msra.mxu0 0
    %450 = vmatprep.subr.bf16.mxu0 0
    %451 = vmatpush1.bf16.msra.mxu0 0
    %452 = vmatprep.subr.bf16.mxu0 0
    %453 = vmatpush1.bf16.msra.mxu0 0
    %454 = vmatprep.subr.bf16.mxu0 0
    %455 = vmatpush1.bf16.msra.mxu0 0
    %456 = vmatprep.subr.bf16.mxu0 0
    %457 = vmatpush1.bf16.msra.mxu0 0
    %458 = vmatprep.subr.bf16.mxu0 0
    %459 = vmatpush1.bf16.msra.mxu0 0
    %460 = vmatprep.subr.bf16.mxu0 0
    %461 = vmatpush1.bf16.msra.mxu0 0
    %462 = vmatprep.mubr.bf16.mxu0 0
    %463 = vmatmul.mubr.bf16.gmra.mrb[0].mxu0 %v154
    %v464 = vpop.f32.mrb[0].mxu0
    %v465 = vadd.f32 0.0, %v464
    %v466 = vpop.f32.mrb[0].mxu0
    %v467 = vpop.f32.mrb[0].mxu0
    %v468 = vadd.f32 0.0, %v467
    %v469 = vpop.f32.mrb[0].mxu0
    %470 = vmatprep.mubr.bf16.mxu0 0
    %471 = vmatmul.mubr.bf16.gmra.mrb[0].mxu0 %v157
    %v472 = vpop.f32.mrb[0].mxu0
    %v473 = vadd.f32 0.0, %v472
    %v474 = vpop.f32.mrb[0].mxu0
    %v475 = vpop.f32.mrb[0].mxu0
    %v476 = vadd.f32 0.0, %v475
    %v477 = vpop.f32.mrb[0].mxu0
    %478 = vdwg.mxu0
    %v479 = vpack.c.bf16 %v468, %v465
    %v480 = vpack.c.bf16 %v476, %v473
    %s481 = scalar_lea.vmem %s4, 16
    %v482 = vld [vmem:[%s481] sm:$0xf]
    %v483 = vld [vmem:[%s481 + $0x4] sm:$0xf]
    %v484 = vld [vmem:[%s481 + $0x8] sm:$0xf]
    %v485 = vld [vmem:[%s481 + $0xc] sm:$0xf]
    %v490 = vunpack.c.l.b16 %v482
    %v491 = vunpack.c.l.b16 %v483
    %v492 = vunpack.c.l.b16 %v484
    %v493 = vunpack.c.l.b16 %v485
    %v494 = vpack.c.b16 %v491, %v490
    %v495 = vpack.c.b16 %v493, %v492
    %498 = vmatprep.subr.bf16.mxu0 0
    %499 = vmatpush1.bf16.msra.mxu0 %v494
    %500 = vmatprep.subr.bf16.mxu0 0
    %501 = vmatpush1.bf16.msra.mxu0 %v495
    %502 = vmatprep.subr.bf16.mxu0 0
    %503 = vmatpush1.bf16.msra.mxu0 0
    %504 = vmatprep.subr.bf16.mxu0 0
    %505 = vmatpush1.bf16.msra.mxu0 0
    %506 = vmatprep.subr.bf16.mxu0 0
    %507 = vmatpush1.bf16.msra.mxu0 0
    %508 = vmatprep.subr.bf16.mxu0 0
    %509 = vmatpush1.bf16.msra.mxu0 0
    %510 = vmatprep.subr.bf16.mxu0 0
    %511 = vmatpush1.bf16.msra.mxu0 0
    %512 = vmatprep.subr.bf16.mxu0 0
    %513 = vmatpush1.bf16.msra.mxu0 0
    %514 = vmatprep.subr.bf16.mxu0 0
    %515 = vmatpush1.bf16.msra.mxu0 0
    %516 = vmatprep.subr.bf16.mxu0 0
    %517 = vmatpush1.bf16.msra.mxu0 0
    %518 = vmatprep.subr.bf16.mxu0 0
    %519 = vmatpush1.bf16.msra.mxu0 0
    %520 = vmatprep.subr.bf16.mxu0 0
    %521 = vmatpush1.bf16.msra.mxu0 0
    %522 = vmatprep.subr.bf16.mxu0 0
    %523 = vmatpush1.bf16.msra.mxu0 0
    %524 = vmatprep.subr.bf16.mxu0 0
    %525 = vmatpush1.bf16.msra.mxu0 0
    %526 = vmatprep.subr.bf16.mxu0 0
    %527 = vmatpush1.bf16.msra.mxu0 0
    %528 = vmatprep.subr.bf16.mxu0 0
    %529 = vmatpush1.bf16.msra.mxu0 0
    %530 = vmatprep.mubr.bf16.mxu0 0
    %531 = vmatmul.mubr.bf16.gmra.mrb[0].mxu0 %v154
    %v532 = vpop.f32.mrb[0].mxu0
    %v533 = vadd.f32 0.0, %v532
    %v534 = vpop.f32.mrb[0].mxu0
    %v535 = vpop.f32.mrb[0].mxu0
    %v536 = vadd.f32 0.0, %v535
    %v537 = vpop.f32.mrb[0].mxu0
    %538 = vmatprep.mubr.bf16.mxu0 0
    %539 = vmatmul.mubr.bf16.gmra.mrb[0].mxu0 %v157
    %v540 = vpop.f32.mrb[0].mxu0
    %v541 = vadd.f32 0.0, %v540
    %v542 = vpop.f32.mrb[0].mxu0
    %v543 = vpop.f32.mrb[0].mxu0
    %v544 = vadd.f32 0.0, %v543
    %v545 = vpop.f32.mrb[0].mxu0
    %546 = vdwg.mxu0
    %v547 = vpack.c.bf16 %v536, %v533
    %v548 = vpack.c.bf16 %v544, %v541
    %s549 = scalar_lea.vmem %s4, 32
    %v550 = vld [vmem:[%s549] sm:$0xf]
    %v551 = vld [vmem:[%s549 + $0x4] sm:$0xf]
    %v552 = vld [vmem:[%s549 + $0x8] sm:$0xf]
    %v553 = vld [vmem:[%s549 + $0xc] sm:$0xf]
    %v558 = vunpack.c.l.b16 %v550
    %v559 = vunpack.c.l.b16 %v551
    %v560 = vunpack.c.l.b16 %v552
    %v561 = vunpack.c.l.b16 %v553
    %v562 = vpack.c.b16 %v559, %v558
    %v563 = vpack.c.b16 %v561, %v560
    %566 = vmatprep.subr.bf16.mxu0 0
    %567 = vmatpush1.bf16.msra.mxu0 %v562
    %568 = vmatprep.subr.bf16.mxu0 0
    %569 = vmatpush1.bf16.msra.mxu0 %v563
    %570 = vmatprep.subr.bf16.mxu0 0
    %571 = vmatpush1.bf16.msra.mxu0 0
    %572 = vmatprep.subr.bf16.mxu0 0
    %573 = vmatpush1.bf16.msra.mxu0 0
    %574 = vmatprep.subr.bf16.mxu0 0
    %575 = vmatpush1.bf16.msra.mxu0 0
    %576 = vmatprep.subr.bf16.mxu0 0
    %577 = vmatpush1.bf16.msra.mxu0 0
    %578 = vmatprep.subr.bf16.mxu0 0
    %579 = vmatpush1.bf16.msra.mxu0 0
    %580 = vmatprep.subr.bf16.mxu0 0
    %581 = vmatpush1.bf16.msra.mxu0 0
    %582 = vmatprep.subr.bf16.mxu0 0
    %583 = vmatpush1.bf16.msra.mxu0 0
    %584 = vmatprep.subr.bf16.mxu0 0
    %585 = vmatpush1.bf16.msra.mxu0 0
    %586 = vmatprep.subr.bf16.mxu0 0
    %587 = vmatpush1.bf16.msra.mxu0 0
    %588 = vmatprep.subr.bf16.mxu0 0
    %589 = vmatpush1.bf16.msra.mxu0 0
    %590 = vmatprep.subr.bf16.mxu0 0
    %591 = vmatpush1.bf16.msra.mxu0 0
    %592 = vmatprep.subr.bf16.mxu0 0
    %593 = vmatpush1.bf16.msra.mxu0 0
    %594 = vmatprep.subr.bf16.mxu0 0
    %595 = vmatpush1.bf16.msra.mxu0 0
    %596 = vmatprep.subr.bf16.mxu0 0
    %597 = vmatpush1.bf16.msra.mxu0 0
    %598 = vmatprep.mubr.bf16.mxu0 0
    %599 = vmatmul.mubr.bf16.gmra.mrb[0].mxu0 %v154
    %v600 = vpop.f32.mrb[0].mxu0
    %v601 = vadd.f32 0.0, %v600
    %v602 = vpop.f32.mrb[0].mxu0
    %v603 = vpop.f32.mrb[0].mxu0
    %v604 = vadd.f32 0.0, %v603
    %v605 = vpop.f32.mrb[0].mxu0
    %606 = vmatprep.mubr.bf16.mxu0 0
    %607 = vmatmul.mubr.bf16.gmra.mrb[0].mxu0 %v157
    %v608 = vpop.f32.mrb[0].mxu0
    %v609 = vadd.f32 0.0, %v608
    %v610 = vpop.f32.mrb[0].mxu0
    %v611 = vpop.f32.mrb[0].mxu0
    %v612 = vadd.f32 0.0, %v611
    %v613 = vpop.f32.mrb[0].mxu0
    %614 = vdwg.mxu0
    %v615 = vpack.c.bf16 %v604, %v601
    %v616 = vpack.c.bf16 %v612, %v609
    %s617 = scalar_lea.vmem %s4, 48
    %v618 = vld [vmem:[%s617] sm:$0xf]
    %v619 = vld [vmem:[%s617 + $0x4] sm:$0xf]
    %v620 = vld [vmem:[%s617 + $0x8] sm:$0xf]
    %v621 = vld [vmem:[%s617 + $0xc] sm:$0xf]
    %v626 = vunpack.c.l.b16 %v618
    %v627 = vunpack.c.l.b16 %v619
    %v628 = vunpack.c.l.b16 %v620
    %v629 = vunpack.c.l.b16 %v621
    %v630 = vpack.c.b16 %v627, %v626
    %v631 = vpack.c.b16 %v629, %v628
    %634 = vmatprep.subr.bf16.mxu0 0
    %635 = vmatpush1.bf16.msra.mxu0 %v630
    %636 = vmatprep.subr.bf16.mxu0 0
    %637 = vmatpush1.bf16.msra.mxu0 %v631
    %638 = vmatprep.subr.bf16.mxu0 0
    %639 = vmatpush1.bf16.msra.mxu0 0
    %640 = vmatprep.subr.bf16.mxu0 0
    %641 = vmatpush1.bf16.msra.mxu0 0
    %642 = vmatprep.subr.bf16.mxu0 0
    %643 = vmatpush1.bf16.msra.mxu0 0
    %644 = vmatprep.subr.bf16.mxu0 0
    %645 = vmatpush1.bf16.msra.mxu0 0
    %646 = vmatprep.subr.bf16.mxu0 0
    %647 = vmatpush1.bf16.msra.mxu0 0
    %648 = vmatprep.subr.bf16.mxu0 0
    %649 = vmatpush1.bf16.msra.mxu0 0
    %650 = vmatprep.subr.bf16.mxu0 0
    %651 = vmatpush1.bf16.msra.mxu0 0
    %652 = vmatprep.subr.bf16.mxu0 0
    %653 = vmatpush1.bf16.msra.mxu0 0
    %654 = vmatprep.subr.bf16.mxu0 0
    %655 = vmatpush1.bf16.msra.mxu0 0
    %656 = vmatprep.subr.bf16.mxu0 0
    %657 = vmatpush1.bf16.msra.mxu0 0
    %658 = vmatprep.subr.bf16.mxu0 0
    %659 = vmatpush1.bf16.msra.mxu0 0
    %660 = vmatprep.subr.bf16.mxu0 0
    %661 = vmatpush1.bf16.msra.mxu0 0
    %662 = vmatprep.subr.bf16.mxu0 0
    %663 = vmatpush1.bf16.msra.mxu0 0
    %664 = vmatprep.subr.bf16.mxu0 0
    %665 = vmatpush1.bf16.msra.mxu0 0
    %666 = vmatprep.mubr.bf16.mxu0 0
    %667 = vmatmul.mubr.bf16.gmra.mrb[0].mxu0 %v154
    %v668 = vpop.f32.mrb[0].mxu0
    %v669 = vadd.f32 0.0, %v668
    %v670 = vpop.f32.mrb[0].mxu0
    %v671 = vpop.f32.mrb[0].mxu0
    %v672 = vadd.f32 0.0, %v671
    %v673 = vpop.f32.mrb[0].mxu0
    %674 = vmatprep.mubr.bf16.mxu0 0
    %675 = vmatmul.mubr.bf16.gmra.mrb[0].mxu0 %v157
    %v676 = vpop.f32.mrb[0].mxu0
    %v677 = vadd.f32 0.0, %v676
    %v678 = vpop.f32.mrb[0].mxu0
    %v679 = vpop.f32.mrb[0].mxu0
    %v680 = vadd.f32 0.0, %v679
    %v681 = vpop.f32.mrb[0].mxu0
    %682 = vdwg.mxu0
    %v683 = vpack.c.bf16 %v672, %v669
    %v684 = vpack.c.bf16 %v680, %v677
    %v685 = vld [vmem:[%s5] sm:$0xf]
    %v686 = vld [vmem:[%s5 + $0x4] sm:$0xf]
    %v687 = vld [vmem:[%s5 + $0x8] sm:$0xf]
    %v688 = vld [vmem:[%s5 + $0xc] sm:$0xf]
    %v693 = vunpack.c.l.b16 %v685
    %v694 = vunpack.c.l.b16 %v686
    %v695 = vunpack.c.l.b16 %v687
    %v696 = vunpack.c.l.b16 %v688
    %v697 = vpack.c.b16 %v694, %v693
    %v698 = vpack.c.b16 %v696, %v695
    %701 = vmatprep.subr.bf16.mxu0 0
    %702 = vmatpush1.bf16.msra.mxu0 %v697
    %703 = vmatprep.subr.bf16.mxu0 0
    %704 = vmatpush1.bf16.msra.mxu0 %v698
    %705 = vmatprep.subr.bf16.mxu0 0
    %706 = vmatpush1.bf16.msra.mxu0 0
    %707 = vmatprep.subr.bf16.mxu0 0
    %708 = vmatpush1.bf16.msra.mxu0 0
    %709 = vmatprep.subr.bf16.mxu0 0
    %710 = vmatpush1.bf16.msra.mxu0 0
    %711 = vmatprep.subr.bf16.mxu0 0
    %712 = vmatpush1.bf16.msra.mxu0 0
    %713 = vmatprep.subr.bf16.mxu0 0
    %714 = vmatpush1.bf16.msra.mxu0 0
    %715 = vmatprep.subr.bf16.mxu0 0
    %716 = vmatpush1.bf16.msra.mxu0 0
    %717 = vmatprep.subr.bf16.mxu0 0
    %718 = vmatpush1.bf16.msra.mxu0 0
    %719 = vmatprep.subr.bf16.mxu0 0
    %720 = vmatpush1.bf16.msra.mxu0 0
    %721 = vmatprep.subr.bf16.mxu0 0
    %722 = vmatpush1.bf16.msra.mxu0 0
    %723 = vmatprep.subr.bf16.mxu0 0
    %724 = vmatpush1.bf16.msra.mxu0 0
    %725 = vmatprep.subr.bf16.mxu0 0
    %726 = vmatpush1.bf16.msra.mxu0 0
    %727 = vmatprep.subr.bf16.mxu0 0
    %728 = vmatpush1.bf16.msra.mxu0 0
    %729 = vmatprep.subr.bf16.mxu0 0
    %730 = vmatpush1.bf16.msra.mxu0 0
    %731 = vmatprep.subr.bf16.mxu0 0
    %732 = vmatpush1.bf16.msra.mxu0 0
    %733 = vmatprep.mubr.bf16.mxu0 0
    %734 = vmatmul.mubr.bf16.gmra.mrb[0].mxu0 %v154
    %v735 = vpop.f32.mrb[0].mxu0
    %v736 = vadd.f32 0.0, %v735
    %v737 = vpop.f32.mrb[0].mxu0
    %v738 = vpop.f32.mrb[0].mxu0
    %v739 = vadd.f32 0.0, %v738
    %v740 = vpop.f32.mrb[0].mxu0
    %741 = vmatprep.mubr.bf16.mxu0 0
    %742 = vmatmul.mubr.bf16.gmra.mrb[0].mxu0 %v157
    %v743 = vpop.f32.mrb[0].mxu0
    %v744 = vadd.f32 0.0, %v743
    %v745 = vpop.f32.mrb[0].mxu0
    %v746 = vpop.f32.mrb[0].mxu0
    %v747 = vadd.f32 0.0, %v746
    %v748 = vpop.f32.mrb[0].mxu0
    %749 = vdwg.mxu0
    %v750 = vpack.c.bf16 %v739, %v736
    %v751 = vpack.c.bf16 %v747, %v744
    %s752 = scalar_lea.vmem %s5, 16
    %v753 = vld [vmem:[%s752] sm:$0xf]
    %v754 = vld [vmem:[%s752 + $0x4] sm:$0xf]
    %v755 = vld [vmem:[%s752 + $0x8] sm:$0xf]
    %v756 = vld [vmem:[%s752 + $0xc] sm:$0xf]
    %v761 = vunpack.c.l.b16 %v753
    %v762 = vunpack.c.l.b16 %v754
    %v763 = vunpack.c.l.b16 %v755
    %v764 = vunpack.c.l.b16 %v756
    %v765 = vpack.c.b16 %v762, %v761
    %v766 = vpack.c.b16 %v764, %v763
    %769 = vmatprep.subr.bf16.mxu0 0
    %770 = vmatpush1.bf16.msra.mxu0 %v765
    %771 = vmatprep.subr.bf16.mxu0 0
    %772 = vmatpush1.bf16.msra.mxu0 %v766
    %773 = vmatprep.subr.bf16.mxu0 0
    %774 = vmatpush1.bf16.msra.mxu0 0
    %775 = vmatprep.subr.bf16.mxu0 0
    %776 = vmatpush1.bf16.msra.mxu0 0
    %777 = vmatprep.subr.bf16.mxu0 0
    %778 = vmatpush1.bf16.msra.mxu0 0
    %779 = vmatprep.subr.bf16.mxu0 0
    %780 = vmatpush1.bf16.msra.mxu0 0
    %781 = vmatprep.subr.bf16.mxu0 0
    %782 = vmatpush1.bf16.msra.mxu0 0
    %783 = vmatprep.subr.bf16.mxu0 0
    %784 = vmatpush1.bf16.msra.mxu0 0
    %785 = vmatprep.subr.bf16.mxu0 0
    %786 = vmatpush1.bf16.msra.mxu0 0
    %787 = vmatprep.subr.bf16.mxu0 0
    %788 = vmatpush1.bf16.msra.mxu0 0
    %789 = vmatprep.subr.bf16.mxu0 0
    %790 = vmatpush1.bf16.msra.mxu0 0
    %791 = vmatprep.subr.bf16.mxu0 0
    %792 = vmatpush1.bf16.msra.mxu0 0
    %793 = vmatprep.subr.bf16.mxu0 0
    %794 = vmatpush1.bf16.msra.mxu0 0
    %795 = vmatprep.subr.bf16.mxu0 0
    %796 = vmatpush1.bf16.msra.mxu0 0
    %797 = vmatprep.subr.bf16.mxu0 0
    %798 = vmatpush1.bf16.msra.mxu0 0
    %799 = vmatprep.subr.bf16.mxu0 0
    %800 = vmatpush1.bf16.msra.mxu0 0
    %801 = vmatprep.mubr.bf16.mxu0 0
    %802 = vmatmul.mubr.bf16.gmra.mrb[0].mxu0 %v154
    %v803 = vpop.f32.mrb[0].mxu0
    %v804 = vadd.f32 0.0, %v803
    %v805 = vpop.f32.mrb[0].mxu0
    %v806 = vpop.f32.mrb[0].mxu0
    %v807 = vadd.f32 0.0, %v806
    %v808 = vpop.f32.mrb[0].mxu0
    %809 = vmatprep.mubr.bf16.mxu0 0
    %810 = vmatmul.mubr.bf16.gmra.mrb[0].mxu0 %v157
    %v811 = vpop.f32.mrb[0].mxu0
    %v812 = vadd.f32 0.0, %v811
    %v813 = vpop.f32.mrb[0].mxu0
    %v814 = vpop.f32.mrb[0].mxu0
    %v815 = vadd.f32 0.0, %v814
    %v816 = vpop.f32.mrb[0].mxu0
    %817 = vdwg.mxu0
    %v818 = vpack.c.bf16 %v807, %v804
    %v819 = vpack.c.bf16 %v815, %v812
    %s820 = scalar_lea.vmem %s5, 32
    %v821 = vld [vmem:[%s820] sm:$0xf]
    %v822 = vld [vmem:[%s820 + $0x4] sm:$0xf]
    %v823 = vld [vmem:[%s820 + $0x8] sm:$0xf]
    %v824 = vld [vmem:[%s820 + $0xc] sm:$0xf]
    %v829 = vunpack.c.l.b16 %v821
    %v830 = vunpack.c.l.b16 %v822
    %v831 = vunpack.c.l.b16 %v823
    %v832 = vunpack.c.l.b16 %v824
    %v833 = vpack.c.b16 %v830, %v829
    %v834 = vpack.c.b16 %v832, %v831
    %837 = vmatprep.subr.bf16.mxu0 0
    %838 = vmatpush1.bf16.msra.mxu0 %v833
    %839 = vmatprep.subr.bf16.mxu0 0
    %840 = vmatpush1.bf16.msra.mxu0 %v834
    %841 = vmatprep.subr.bf16.mxu0 0
    %842 = vmatpush1.bf16.msra.mxu0 0
    %843 = vmatprep.subr.bf16.mxu0 0
    %844 = vmatpush1.bf16.msra.mxu0 0
    %845 = vmatprep.subr.bf16.mxu0 0
    %846 = vmatpush1.bf16.msra.mxu0 0
    %847 = vmatprep.subr.bf16.mxu0 0
    %848 = vmatpush1.bf16.msra.mxu0 0
    %849 = vmatprep.subr.bf16.mxu0 0
    %850 = vmatpush1.bf16.msra.mxu0 0
    %851 = vmatprep.subr.bf16.mxu0 0
    %852 = vmatpush1.bf16.msra.mxu0 0
    %853 = vmatprep.subr.bf16.mxu0 0
    %854 = vmatpush1.bf16.msra.mxu0 0
    %855 = vmatprep.subr.bf16.mxu0 0
    %856 = vmatpush1.bf16.msra.mxu0 0
    %857 = vmatprep.subr.bf16.mxu0 0
    %858 = vmatpush1.bf16.msra.mxu0 0
    %859 = vmatprep.subr.bf16.mxu0 0
    %860 = vmatpush1.bf16.msra.mxu0 0
    %861 = vmatprep.subr.bf16.mxu0 0
    %862 = vmatpush1.bf16.msra.mxu0 0
    %863 = vmatprep.subr.bf16.mxu0 0
    %864 = vmatpush1.bf16.msra.mxu0 0
    %865 = vmatprep.subr.bf16.mxu0 0
    %866 = vmatpush1.bf16.msra.mxu0 0
    %867 = vmatprep.subr.bf16.mxu0 0
    %868 = vmatpush1.bf16.msra.mxu0 0
    %869 = vmatprep.mubr.bf16.mxu0 0
    %870 = vmatmul.mubr.bf16.gmra.mrb[0].mxu0 %v154
    %v871 = vpop.f32.mrb[0].mxu0
    %v872 = vadd.f32 0.0, %v871
    %v873 = vpop.f32.mrb[0].mxu0
    %v874 = vpop.f32.mrb[0].mxu0
    %v875 = vadd.f32 0.0, %v874
    %v876 = vpop.f32.mrb[0].mxu0
    %877 = vmatprep.mubr.bf16.mxu0 0
    %878 = vmatmul.mubr.bf16.gmra.mrb[0].mxu0 %v157
    %v879 = vpop.f32.mrb[0].mxu0
    %v880 = vadd.f32 0.0, %v879
    %v881 = vpop.f32.mrb[0].mxu0
    %v882 = vpop.f32.mrb[0].mxu0
    %v883 = vadd.f32 0.0, %v882
    %v884 = vpop.f32.mrb[0].mxu0
    %885 = vdwg.mxu0
    %v886 = vpack.c.bf16 %v875, %v872
    %v887 = vpack.c.bf16 %v883, %v880
    %s888 = scalar_lea.vmem %s5, 48
    %v889 = vld [vmem:[%s888] sm:$0xf]
    %v890 = vld [vmem:[%s888 + $0x4] sm:$0xf]
    %v891 = vld [vmem:[%s888 + $0x8] sm:$0xf]
    %v892 = vld [vmem:[%s888 + $0xc] sm:$0xf]
    %v897 = vunpack.c.l.b16 %v889
    %v898 = vunpack.c.l.b16 %v890
    %v899 = vunpack.c.l.b16 %v891
    %v900 = vunpack.c.l.b16 %v892
    %v901 = vpack.c.b16 %v898, %v897
    %v902 = vpack.c.b16 %v900, %v899
    %905 = vmatprep.subr.bf16.mxu0 0
    %906 = vmatpush1.bf16.msra.mxu0 %v901
    %907 = vmatprep.subr.bf16.mxu0 0
    %908 = vmatpush1.bf16.msra.mxu0 %v902
    %909 = vmatprep.subr.bf16.mxu0 0
    %910 = vmatpush1.bf16.msra.mxu0 0
    %911 = vmatprep.subr.bf16.mxu0 0
    %912 = vmatpush1.bf16.msra.mxu0 0
    %913 = vmatprep.subr.bf16.mxu0 0
    %914 = vmatpush1.bf16.msra.mxu0 0
    %915 = vmatprep.subr.bf16.mxu0 0
    %916 = vmatpush1.bf16.msra.mxu0 0
    %917 = vmatprep.subr.bf16.mxu0 0
    %918 = vmatpush1.bf16.msra.mxu0 0
    %919 = vmatprep.subr.bf16.mxu0 0
    %920 = vmatpush1.bf16.msra.mxu0 0
    %921 = vmatprep.subr.bf16.mxu0 0
    %922 = vmatpush1.bf16.msra.mxu0 0
    %923 = vmatprep.subr.bf16.mxu0 0
    %924 = vmatpush1.bf16.msra.mxu0 0
    %925 = vmatprep.subr.bf16.mxu0 0
    %926 = vmatpush1.bf16.msra.mxu0 0
    %927 = vmatprep.subr.bf16.mxu0 0
    %928 = vmatpush1.bf16.msra.mxu0 0
    %929 = vmatprep.subr.bf16.mxu0 0
    %930 = vmatpush1.bf16.msra.mxu0 0
    %931 = vmatprep.subr.bf16.mxu0 0
    %932 = vmatpush1.bf16.msra.mxu0 0
    %933 = vmatprep.subr.bf16.mxu0 0
    %934 = vmatpush1.bf16.msra.mxu0 0
    %935 = vmatprep.subr.bf16.mxu0 0
    %936 = vmatpush1.bf16.msra.mxu0 0
    %937 = vmatprep.mubr.bf16.mxu0 0
    %938 = vmatmul.mubr.bf16.gmra.mrb[0].mxu0 %v154
    %v939 = vpop.f32.mrb[0].mxu0
    %v940 = vadd.f32 0.0, %v939
    %v941 = vpop.f32.mrb[0].mxu0
    %v942 = vpop.f32.mrb[0].mxu0
    %v943 = vadd.f32 0.0, %v942
    %v944 = vpop.f32.mrb[0].mxu0
    %945 = vmatprep.mubr.bf16.mxu0 0
    %946 = vmatmul.mubr.bf16.gmra.mrb[0].mxu0 %v157
    %v947 = vpop.f32.mrb[0].mxu0
    %v948 = vadd.f32 0.0, %v947
    %v949 = vpop.f32.mrb[0].mxu0
    %v950 = vpop.f32.mrb[0].mxu0
    %v951 = vadd.f32 0.0, %v950
    %v952 = vpop.f32.mrb[0].mxu0
    %953 = vdwg.mxu0
    %v954 = vpack.c.bf16 %v943, %v940
    %v955 = vpack.c.bf16 %v951, %v948
    %v956 = vld [vmem:[%s6] sm:$0xf]
    %v957 = vld [vmem:[%s6 + $0x4] sm:$0xf]
    %s958 = scalar_lea.vmem %s6, 8
    %v959 = vld [vmem:[%s958] sm:$0xf]
    %v960 = vld [vmem:[%s958 + $0x4] sm:$0xf]
    %s961 = scalar_lea.vmem %s6, 16
    %v962 = vld [vmem:[%s961] sm:$0xf]
    %v963 = vld [vmem:[%s961 + $0x4] sm:$0xf]
    %s964 = scalar_lea.vmem %s6, 24
    %v965 = vld [vmem:[%s964] sm:$0xf]
    %v966 = vld [vmem:[%s964 + $0x4] sm:$0xf]
    %v967 = vld [vmem:[%s7] sm:$0x1]
    %v969 = vlaneseq
    %v970 = vshrl.u32 %v969, 7
    %v971 = vsub.s32 0, %v970
    %v972 = vrot.slane %v967, %v971
    %vm974 = vcmask 130048
    %v976 = vsel %vm974, %v208, 0
    %v979 = vsel %vm974, %v479, 0
    %981 = vmatprep.subr.bf16.mxu0 0
    %982 = vmatpush1.bf16.xpose.msra.mxu0 %v979
    %983 = vmatprep.subr.bf16.mxu0 0
    %984 = vmatpush1.bf16.xpose.msra.mxu0 0
    %985 = vmatprep.subr.bf16.mxu0 0
    %986 = vmatpush1.bf16.xpose.msra.mxu0 0
    %987 = vmatprep.subr.bf16.mxu0 0
    %988 = vmatpush1.bf16.xpose.msra.mxu0 0
    %989 = vmatprep.subr.bf16.mxu0 0
    %990 = vmatpush1.bf16.xpose.msra.mxu0 0
    %991 = vmatprep.subr.bf16.mxu0 0
    %992 = vmatpush1.bf16.xpose.msra.mxu0 0
    %993 = vmatprep.subr.bf16.mxu0 0
    %994 = vmatpush1.bf16.xpose.msra.mxu0 0
    %995 = vmatprep.subr.bf16.mxu0 0
    %996 = vmatpush1.bf16.xpose.msra.mxu0 0
    %997 = vmatprep.subr.bf16.mxu0 0
    %998 = vmatpush1.bf16.xpose.msra.mxu0 0
    %999 = vmatprep.subr.bf16.mxu0 0
    %1000 = vmatpush1.bf16.xpose.msra.mxu0 0
    %1001 = vmatprep.subr.bf16.mxu0 0
    %1002 = vmatpush1.bf16.xpose.msra.mxu0 0
    %1003 = vmatprep.subr.bf16.mxu0 0
    %1004 = vmatpush1.bf16.xpose.msra.mxu0 0
    %1005 = vmatprep.subr.bf16.mxu0 0
    %1006 = vmatpush1.bf16.xpose.msra.mxu0 0
    %1007 = vmatprep.subr.bf16.mxu0 0
    %1008 = vmatpush1.bf16.xpose.msra.mxu0 0
    %1009 = vmatprep.subr.bf16.mxu0 0
    %1010 = vmatpush1.bf16.xpose.msra.mxu0 0
    %1011 = vmatprep.subr.bf16.mxu0 0
    %1012 = vmatpush1.bf16.xpose.msra.mxu0 0
    %1013 = vmatprep.mubr.bf16.mxu0 0
    %1014 = vmatmul.mubr.bf16.gmra.mrb[0].mxu0 %v976
    %v1015 = vpop.f32.mrb[0].mxu0
    %v1016 = vadd.f32 0.0, %v1015
    %v1017 = vpop.f32.mrb[0].mxu0
    %v1018 = vpop.f32.mrb[0].mxu0
    %v1019 = vadd.f32 0.0, %v1018
    %v1020 = vpop.f32.mrb[0].mxu0
    %1021 = vdwg.mxu0
    %v1022 = vsel %vm974, %v1016, -inf
    %1023 = vmax.xlane.f32.xlu0 %v1022
    %v1024 = vpop.xlane.xlu0 %1023
    %v1025 = vsel %vm974, %v1019, -inf
    %1026 = vmax.xlane.f32.xlu0 %v1025
    %v1027 = vpop.xlane.xlu0 %1026
    %v1028 = vsub.f32 %v1016, %v1024
    %v1029 = vsub.f32 %v1019, %v1027
    %v1030 = vmul.f32 %v1028, 1.442695
    %v1031 = vpow.pop %v1030
    %v1032 = vmul.f32 %v1029, 1.442695
    %v1033 = vpow.pop %v1032
    %v1034 = vsel %vm974, %v1031, 0.0
    %1035 = vadd.xlane.f32.xlu0 %v1034
    %v1036 = vpop.xlane.xlu0 %1035
    %v1037 = vsel %vm974, %v1033, 0.0
    %1038 = vadd.xlane.f32.xlu0 %v1037
    %v1039 = vpop.xlane.xlu0 %1038
    %v1040 = vrcp.pop %v1036
    %v1041 = vrcp.pop %v1039
    %v1042 = vmul.f32 %v1031, %v1040
    %v1043 = vmul.f32 %v1033, %v1041
    %v1044 = vpack.c.bf16 %v1043, %v1042
    %v1046 = vsel %vm974, %v1044, 0
    %1048 = vmatprep.subr.bf16.mxu0 0
    %1049 = vmatpush1.bf16.msra.mxu0 %v750
    %1050 = vmatprep.subr.bf16.mxu0 0
    %1051 = vmatpush1.bf16.msra.mxu0 0
    %1052 = vmatprep.subr.bf16.mxu0 0
    %1053 = vmatpush1.bf16.msra.mxu0 0
    %1054 = vmatprep.subr.bf16.mxu0 0
    %1055 = vmatpush1.bf16.msra.mxu0 0
    %1056 = vmatprep.subr.bf16.mxu0 0
    %1057 = vmatpush1.bf16.msra.mxu0 0
    %1058 = vmatprep.subr.bf16.mxu0 0
    %1059 = vmatpush1.bf16.msra.mxu0 0
    %1060 = vmatprep.subr.bf16.mxu0 0
    %1061 = vmatpush1.bf16.msra.mxu0 0
    %1062 = vmatprep.subr.bf16.mxu0 0
    %1063 = vmatpush1.bf16.msra.mxu0 0
    %1064 = vmatprep.subr.bf16.mxu0 0
    %1065 = vmatpush1.bf16.msra.mxu0 0
    %1066 = vmatprep.subr.bf16.mxu0 0
    %1067 = vmatpush1.bf16.msra.mxu0 0
    %1068 = vmatprep.subr.bf16.mxu0 0
    %1069 = vmatpush1.bf16.msra.mxu0 0
    %1070 = vmatprep.subr.bf16.mxu0 0
    %1071 = vmatpush1.bf16.msra.mxu0 0
    %1072 = vmatprep.subr.bf16.mxu0 0
    %1073 = vmatpush1.bf16.msra.mxu0 0
    %1074 = vmatprep.subr.bf16.mxu0 0
    %1075 = vmatpush1.bf16.msra.mxu0 0
    %1076 = vmatprep.subr.bf16.mxu0 0
    %1077 = vmatpush1.bf16.msra.mxu0 0
    %1078 = vmatprep.subr.bf16.mxu0 0
    %1079 = vmatpush1.bf16.msra.mxu0 0
    %1080 = vmatprep.mubr.bf16.mxu0 0
    %1081 = vmatmul.mubr.bf16.gmra.mrb[0].mxu0 %v1046
    %v1082 = vpop.f32.mrb[0].mxu0
    %v1083 = vadd.f32 0.0, %v1082
    %v1084 = vpop.f32.mrb[0].mxu0
    %v1085 = vpop.f32.mrb[0].mxu0
    %v1086 = vadd.f32 0.0, %v1085
    %v1087 = vpop.f32.mrb[0].mxu0
    %1088 = vdwg.mxu0
    %v1089 = vpack.c.bf16 %v1086, %v1083
    %v1092 = vunpack.c.l.b16 %v956
    %v1093 = vunpack.c.l.b16 %v957
    %v1094 = vpack.c.b16 %v1093, %v1092
    %v1097 = vsel %vm974, %v1089, 0
    %1099 = vmatprep.subr.bf16.mxu0 0
    %1100 = vmatpush1.bf16.msra.mxu0 %v1094
    %1101 = vmatprep.subr.bf16.mxu0 0
    %1102 = vmatpush1.bf16.msra.mxu0 0
    %1103 = vmatprep.subr.bf16.mxu0 0
    %1104 = vmatpush1.bf16.msra.mxu0 0
    %1105 = vmatprep.subr.bf16.mxu0 0
    %1106 = vmatpush1.bf16.msra.mxu0 0
    %1107 = vmatprep.subr.bf16.mxu0 0
    %1108 = vmatpush1.bf16.msra.mxu0 0
    %1109 = vmatprep.subr.bf16.mxu0 0
    %1110 = vmatpush1.bf16.msra.mxu0 0
    %1111 = vmatprep.subr.bf16.mxu0 0
    %1112 = vmatpush1.bf16.msra.mxu0 0
    %1113 = vmatprep.subr.bf16.mxu0 0
    %1114 = vmatpush1.bf16.msra.mxu0 0
    %1115 = vmatprep.subr.bf16.mxu0 0
    %1116 = vmatpush1.bf16.msra.mxu0 0
    %1117 = vmatprep.subr.bf16.mxu0 0
    %1118 = vmatpush1.bf16.msra.mxu0 0
    %1119 = vmatprep.subr.bf16.mxu0 0
    %1120 = vmatpush1.bf16.msra.mxu0 0
    %1121 = vmatprep.subr.bf16.mxu0 0
    %1122 = vmatpush1.bf16.msra.mxu0 0
    %1123 = vmatprep.subr.bf16.mxu0 0
    %1124 = vmatpush1.bf16.msra.mxu0 0
    %1125 = vmatprep.subr.bf16.mxu0 0
    %1126 = vmatpush1.bf16.msra.mxu0 0
    %1127 = vmatprep.subr.bf16.mxu0 0
    %1128 = vmatpush1.bf16.msra.mxu0 0
    %1129 = vmatprep.subr.bf16.mxu0 0
    %1130 = vmatpush1.bf16.msra.mxu0 0
    %1131 = vmatprep.mubr.bf16.mxu0 0
    %1132 = vmatmul.mubr.bf16.gmra.mrb[0].mxu0 %v1097
    %v1133 = vpop.f32.mrb[0].mxu0
    %v1134 = vadd.f32 0.0, %v1133
    %v1135 = vpop.f32.mrb[0].mxu0
    %v1136 = vpop.f32.mrb[0].mxu0
    %v1137 = vadd.f32 0.0, %v1136
    %v1138 = vpop.f32.mrb[0].mxu0
    %1139 = vdwg.mxu0
    %v1140 = vadd.f32 %v972, %v1134
    %v1141 = vadd.f32 %v972, %v1137
    %v1143 = vsel %vm974, %v276, 0
    %v1146 = vsel %vm974, %v547, 0
    %1148 = vmatprep.subr.bf16.mxu0 0
    %1149 = vmatpush1.bf16.xpose.msra.mxu0 %v1146
    %1150 = vmatprep.subr.bf16.mxu0 0
    %1151 = vmatpush1.bf16.xpose.msra.mxu0 0
    %1152 = vmatprep.subr.bf16.mxu0 0
    %1153 = vmatpush1.bf16.xpose.msra.mxu0 0
    %1154 = vmatprep.subr.bf16.mxu0 0
    %1155 = vmatpush1.bf16.xpose.msra.mxu0 0
    %1156 = vmatprep.subr.bf16.mxu0 0
    %1157 = vmatpush1.bf16.xpose.msra.mxu0 0
    %1158 = vmatprep.subr.bf16.mxu0 0
    %1159 = vmatpush1.bf16.xpose.msra.mxu0 0
    %1160 = vmatprep.subr.bf16.mxu0 0
    %1161 = vmatpush1.bf16.xpose.msra.mxu0 0
    %1162 = vmatprep.subr.bf16.mxu0 0
    %1163 = vmatpush1.bf16.xpose.msra.mxu0 0
    %1164 = vmatprep.subr.bf16.mxu0 0
    %1165 = vmatpush1.bf16.xpose.msra.mxu0 0
    %1166 = vmatprep.subr.bf16.mxu0 0
    %1167 = vmatpush1.bf16.xpose.msra.mxu0 0
    %1168 = vmatprep.subr.bf16.mxu0 0
    %1169 = vmatpush1.bf16.xpose.msra.mxu0 0
    %1170 = vmatprep.subr.bf16.mxu0 0
    %1171 = vmatpush1.bf16.xpose.msra.mxu0 0
    %1172 = vmatprep.subr.bf16.mxu0 0
    %1173 = vmatpush1.bf16.xpose.msra.mxu0 0
    %1174 = vmatprep.subr.bf16.mxu0 0
    %1175 = vmatpush1.bf16.xpose.msra.mxu0 0
    %1176 = vmatprep.subr.bf16.mxu0 0
    %1177 = vmatpush1.bf16.xpose.msra.mxu0 0
    %1178 = vmatprep.subr.bf16.mxu0 0
    %1179 = vmatpush1.bf16.xpose.msra.mxu0 0
    %1180 = vmatprep.mubr.bf16.mxu0 0
    %1181 = vmatmul.mubr.bf16.gmra.mrb[0].mxu0 %v1143
    %v1182 = vpop.f32.mrb[0].mxu0
    %v1183 = vadd.f32 0.0, %v1182
    %v1184 = vpop.f32.mrb[0].mxu0
    %v1185 = vpop.f32.mrb[0].mxu0
    %v1186 = vadd.f32 0.0, %v1185
    %v1187 = vpop.f32.mrb[0].mxu0
    %1188 = vdwg.mxu0
    %v1189 = vsel %vm974, %v1183, -inf
    %1190 = vmax.xlane.f32.xlu0 %v1189
    %v1191 = vpop.xlane.xlu0 %1190
    %v1192 = vsel %vm974, %v1186, -inf
    %1193 = vmax.xlane.f32.xlu0 %v1192
    %v1194 = vpop.xlane.xlu0 %1193
    %v1195 = vsub.f32 %v1183, %v1191
    %v1196 = vsub.f32 %v1186, %v1194
    %v1197 = vmul.f32 %v1195, 1.442695
    %v1198 = vpow.pop %v1197
    %v1199 = vmul.f32 %v1196, 1.442695
    %v1200 = vpow.pop %v1199
    %v1201 = vsel %vm974, %v1198, 0.0
    %1202 = vadd.xlane.f32.xlu0 %v1201
    %v1203 = vpop.xlane.xlu0 %1202
    %v1204 = vsel %vm974, %v1200, 0.0
    %1205 = vadd.xlane.f32.xlu0 %v1204
    %v1206 = vpop.xlane.xlu0 %1205
    %v1207 = vrcp.pop %v1203
    %v1208 = vrcp.pop %v1206
    %v1209 = vmul.f32 %v1198, %v1207
    %v1210 = vmul.f32 %v1200, %v1208
    %v1211 = vpack.c.bf16 %v1210, %v1209
    %v1213 = vsel %vm974, %v1211, 0
    %1215 = vmatprep.subr.bf16.mxu0 0
    %1216 = vmatpush1.bf16.msra.mxu0 %v818
    %1217 = vmatprep.subr.bf16.mxu0 0
    %1218 = vmatpush1.bf16.msra.mxu0 0
    %1219 = vmatprep.subr.bf16.mxu0 0
    %1220 = vmatpush1.bf16.msra.mxu0 0
    %1221 = vmatprep.subr.bf16.mxu0 0
    %1222 = vmatpush1.bf16.msra.mxu0 0
    %1223 = vmatprep.subr.bf16.mxu0 0
    %1224 = vmatpush1.bf16.msra.mxu0 0
    %1225 = vmatprep.subr.bf16.mxu0 0
    %1226 = vmatpush1.bf16.msra.mxu0 0
    %1227 = vmatprep.subr.bf16.mxu0 0
    %1228 = vmatpush1.bf16.msra.mxu0 0
    %1229 = vmatprep.subr.bf16.mxu0 0
    %1230 = vmatpush1.bf16.msra.mxu0 0
    %1231 = vmatprep.subr.bf16.mxu0 0
    %1232 = vmatpush1.bf16.msra.mxu0 0
    %1233 = vmatprep.subr.bf16.mxu0 0
    %1234 = vmatpush1.bf16.msra.mxu0 0
    %1235 = vmatprep.subr.bf16.mxu0 0
    %1236 = vmatpush1.bf16.msra.mxu0 0
    %1237 = vmatprep.subr.bf16.mxu0 0
    %1238 = vmatpush1.bf16.msra.mxu0 0
    %1239 = vmatprep.subr.bf16.mxu0 0
    %1240 = vmatpush1.bf16.msra.mxu0 0
    %1241 = vmatprep.subr.bf16.mxu0 0
    %1242 = vmatpush1.bf16.msra.mxu0 0
    %1243 = vmatprep.subr.bf16.mxu0 0
    %1244 = vmatpush1.bf16.msra.mxu0 0
    %1245 = vmatprep.subr.bf16.mxu0 0
    %1246 = vmatpush1.bf16.msra.mxu0 0
    %1247 = vmatprep.mubr.bf16.mxu0 0
    %1248 = vmatmul.mubr.bf16.gmra.mrb[0].mxu0 %v1213
    %v1249 = vpop.f32.mrb[0].mxu0
    %v1250 = vadd.f32 0.0, %v1249
    %v1251 = vpop.f32.mrb[0].mxu0
    %v1252 = vpop.f32.mrb[0].mxu0
    %v1253 = vadd.f32 0.0, %v1252
    %v1254 = vpop.f32.mrb[0].mxu0
    %1255 = vdwg.mxu0
    %v1256 = vpack.c.bf16 %v1253, %v1250
    %v1259 = vunpack.c.l.b16 %v959
    %v1260 = vunpack.c.l.b16 %v960
    %v1261 = vpack.c.b16 %v1260, %v1259
    %v1264 = vsel %vm974, %v1256, 0
    %1266 = vmatprep.subr.bf16.mxu0 0
    %1267 = vmatpush1.bf16.msra.mxu0 %v1261
    %1268 = vmatprep.subr.bf16.mxu0 0
    %1269 = vmatpush1.bf16.msra.mxu0 0
    %1270 = vmatprep.subr.bf16.mxu0 0
    %1271 = vmatpush1.bf16.msra.mxu0 0
    %1272 = vmatprep.subr.bf16.mxu0 0
    %1273 = vmatpush1.bf16.msra.mxu0 0
    %1274 = vmatprep.subr.bf16.mxu0 0
    %1275 = vmatpush1.bf16.msra.mxu0 0
    %1276 = vmatprep.subr.bf16.mxu0 0
    %1277 = vmatpush1.bf16.msra.mxu0 0
    %1278 = vmatprep.subr.bf16.mxu0 0
    %1279 = vmatpush1.bf16.msra.mxu0 0
    %1280 = vmatprep.subr.bf16.mxu0 0
    %1281 = vmatpush1.bf16.msra.mxu0 0
    %1282 = vmatprep.subr.bf16.mxu0 0
    %1283 = vmatpush1.bf16.msra.mxu0 0
    %1284 = vmatprep.subr.bf16.mxu0 0
    %1285 = vmatpush1.bf16.msra.mxu0 0
    %1286 = vmatprep.subr.bf16.mxu0 0
    %1287 = vmatpush1.bf16.msra.mxu0 0
    %1288 = vmatprep.subr.bf16.mxu0 0
    %1289 = vmatpush1.bf16.msra.mxu0 0
    %1290 = vmatprep.subr.bf16.mxu0 0
    %1291 = vmatpush1.bf16.msra.mxu0 0
    %1292 = vmatprep.subr.bf16.mxu0 0
    %1293 = vmatpush1.bf16.msra.mxu0 0
    %1294 = vmatprep.subr.bf16.mxu0 0
    %1295 = vmatpush1.bf16.msra.mxu0 0
    %1296 = vmatprep.subr.bf16.mxu0 0
    %1297 = vmatpush1.bf16.msra.mxu0 0
    %1298 = vmatprep.mubr.bf16.mxu0 0
    %1299 = vmatmul.mubr.bf16.gmra.mrb[0].mxu0 %v1264
    %v1300 = vpop.f32.mrb[0].mxu0
    %v1301 = vadd.f32 0.0, %v1300
    %v1302 = vpop.f32.mrb[0].mxu0
    %v1303 = vpop.f32.mrb[0].mxu0
    %v1304 = vadd.f32 0.0, %v1303
    %v1305 = vpop.f32.mrb[0].mxu0
    %1306 = vdwg.mxu0
    %v1307 = vadd.f32 %v1140, %v1301
    %v1308 = vadd.f32 %v1141, %v1304
    %v1310 = vsel %vm974, %v344, 0
    %v1313 = vsel %vm974, %v615, 0
    %1315 = vmatprep.subr.bf16.mxu0 0
    %1316 = vmatpush1.bf16.xpose.msra.mxu0 %v1313
    %1317 = vmatprep.subr.bf16.mxu0 0
    %1318 = vmatpush1.bf16.xpose.msra.mxu0 0
    %1319 = vmatprep.subr.bf16.mxu0 0
    %1320 = vmatpush1.bf16.xpose.msra.mxu0 0
    %1321 = vmatprep.subr.bf16.mxu0 0
    %1322 = vmatpush1.bf16.xpose.msra.mxu0 0
    %1323 = vmatprep.subr.bf16.mxu0 0
    %1324 = vmatpush1.bf16.xpose.msra.mxu0 0
    %1325 = vmatprep.subr.bf16.mxu0 0
    %1326 = vmatpush1.bf16.xpose.msra.mxu0 0
    %1327 = vmatprep.subr.bf16.mxu0 0
    %1328 = vmatpush1.bf16.xpose.msra.mxu0 0
    %1329 = vmatprep.subr.bf16.mxu0 0
    %1330 = vmatpush1.bf16.xpose.msra.mxu0 0
    %1331 = vmatprep.subr.bf16.mxu0 0
    %1332 = vmatpush1.bf16.xpose.msra.mxu0 0
    %1333 = vmatprep.subr.bf16.mxu0 0
    %1334 = vmatpush1.bf16.xpose.msra.mxu0 0
    %1335 = vmatprep.subr.bf16.mxu0 0
    %1336 = vmatpush1.bf16.xpose.msra.mxu0 0
    %1337 = vmatprep.subr.bf16.mxu0 0
    %1338 = vmatpush1.bf16.xpose.msra.mxu0 0
    %1339 = vmatprep.subr.bf16.mxu0 0
    %1340 = vmatpush1.bf16.xpose.msra.mxu0 0
    %1341 = vmatprep.subr.bf16.mxu0 0
    %1342 = vmatpush1.bf16.xpose.msra.mxu0 0
    %1343 = vmatprep.subr.bf16.mxu0 0
    %1344 = vmatpush1.bf16.xpose.msra.mxu0 0
    %1345 = vmatprep.subr.bf16.mxu0 0
    %1346 = vmatpush1.bf16.xpose.msra.mxu0 0
    %1347 = vmatprep.mubr.bf16.mxu0 0
    %1348 = vmatmul.mubr.bf16.gmra.mrb[0].mxu0 %v1310
    %v1349 = vpop.f32.mrb[0].mxu0
    %v1350 = vadd.f32 0.0, %v1349
    %v1351 = vpop.f32.mrb[0].mxu0
    %v1352 = vpop.f32.mrb[0].mxu0
    %v1353 = vadd.f32 0.0, %v1352
    %v1354 = vpop.f32.mrb[0].mxu0
    %1355 = vdwg.mxu0
    %v1356 = vsel %vm974, %v1350, -inf
    %1357 = vmax.xlane.f32.xlu0 %v1356
    %v1358 = vpop.xlane.xlu0 %1357
    %v1359 = vsel %vm974, %v1353, -inf
    %1360 = vmax.xlane.f32.xlu0 %v1359
    %v1361 = vpop.xlane.xlu0 %1360
    %v1362 = vsub.f32 %v1350, %v1358
    %v1363 = vsub.f32 %v1353, %v1361
    %v1364 = vmul.f32 %v1362, 1.442695
    %v1365 = vpow.pop %v1364
    %v1366 = vmul.f32 %v1363, 1.442695
    %v1367 = vpow.pop %v1366
    %v1368 = vsel %vm974, %v1365, 0.0
    %1369 = vadd.xlane.f32.xlu0 %v1368
    %v1370 = vpop.xlane.xlu0 %1369
    %v1371 = vsel %vm974, %v1367, 0.0
    %1372 = vadd.xlane.f32.xlu0 %v1371
    %v1373 = vpop.xlane.xlu0 %1372
    %v1374 = vrcp.pop %v1370
    %v1375 = vrcp.pop %v1373
    %v1376 = vmul.f32 %v1365, %v1374
    %v1377 = vmul.f32 %v1367, %v1375
    %v1378 = vpack.c.bf16 %v1377, %v1376
    %v1380 = vsel %vm974, %v1378, 0
    %1382 = vmatprep.subr.bf16.mxu0 0
    %1383 = vmatpush1.bf16.msra.mxu0 %v886
    %1384 = vmatprep.subr.bf16.mxu0 0
    %1385 = vmatpush1.bf16.msra.mxu0 0
    %1386 = vmatprep.subr.bf16.mxu0 0
    %1387 = vmatpush1.bf16.msra.mxu0 0
    %1388 = vmatprep.subr.bf16.mxu0 0
    %1389 = vmatpush1.bf16.msra.mxu0 0
    %1390 = vmatprep.subr.bf16.mxu0 0
    %1391 = vmatpush1.bf16.msra.mxu0 0
    %1392 = vmatprep.subr.bf16.mxu0 0
    %1393 = vmatpush1.bf16.msra.mxu0 0
    %1394 = vmatprep.subr.bf16.mxu0 0
    %1395 = vmatpush1.bf16.msra.mxu0 0
    %1396 = vmatprep.subr.bf16.mxu0 0
    %1397 = vmatpush1.bf16.msra.mxu0 0
    %1398 = vmatprep.subr.bf16.mxu0 0
    %1399 = vmatpush1.bf16.msra.mxu0 0
    %1400 = vmatprep.subr.bf16.mxu0 0
    %1401 = vmatpush1.bf16.msra.mxu0 0
    %1402 = vmatprep.subr.bf16.mxu0 0
    %1403 = vmatpush1.bf16.msra.mxu0 0
    %1404 = vmatprep.subr.bf16.mxu0 0
    %1405 = vmatpush1.bf16.msra.mxu0 0
    %1406 = vmatprep.subr.bf16.mxu0 0
    %1407 = vmatpush1.bf16.msra.mxu0 0
    %1408 = vmatprep.subr.bf16.mxu0 0
    %1409 = vmatpush1.bf16.msra.mxu0 0
    %1410 = vmatprep.subr.bf16.mxu0 0
    %1411 = vmatpush1.bf16.msra.mxu0 0
    %1412 = vmatprep.subr.bf16.mxu0 0
    %1413 = vmatpush1.bf16.msra.mxu0 0
    %1414 = vmatprep.mubr.bf16.mxu0 0
    %1415 = vmatmul.mubr.bf16.gmra.mrb[0].mxu0 %v1380
    %v1416 = vpop.f32.mrb[0].mxu0
    %v1417 = vadd.f32 0.0, %v1416
    %v1418 = vpop.f32.mrb[0].mxu0
    %v1419 = vpop.f32.mrb[0].mxu0
    %v1420 = vadd.f32 0.0, %v1419
    %v1421 = vpop.f32.mrb[0].mxu0
    %1422 = vdwg.mxu0
    %v1423 = vpack.c.bf16 %v1420, %v1417
    %v1426 = vunpack.c.l.b16 %v962
    %v1427 = vunpack.c.l.b16 %v963
    %v1428 = vpack.c.b16 %v1427, %v1426
    %v1431 = vsel %vm974, %v1423, 0
    %1433 = vmatprep.subr.bf16.mxu0 0
    %1434 = vmatpush1.bf16.msra.mxu0 %v1428
    %1435 = vmatprep.subr.bf16.mxu0 0
    %1436 = vmatpush1.bf16.msra.mxu0 0
    %1437 = vmatprep.subr.bf16.mxu0 0
    %1438 = vmatpush1.bf16.msra.mxu0 0
    %1439 = vmatprep.subr.bf16.mxu0 0
    %1440 = vmatpush1.bf16.msra.mxu0 0
    %1441 = vmatprep.subr.bf16.mxu0 0
    %1442 = vmatpush1.bf16.msra.mxu0 0
    %1443 = vmatprep.subr.bf16.mxu0 0
    %1444 = vmatpush1.bf16.msra.mxu0 0
    %1445 = vmatprep.subr.bf16.mxu0 0
    %1446 = vmatpush1.bf16.msra.mxu0 0
    %1447 = vmatprep.subr.bf16.mxu0 0
    %1448 = vmatpush1.bf16.msra.mxu0 0
    %1449 = vmatprep.subr.bf16.mxu0 0
    %1450 = vmatpush1.bf16.msra.mxu0 0
    %1451 = vmatprep.subr.bf16.mxu0 0
    %1452 = vmatpush1.bf16.msra.mxu0 0
    %1453 = vmatprep.subr.bf16.mxu0 0
    %1454 = vmatpush1.bf16.msra.mxu0 0
    %1455 = vmatprep.subr.bf16.mxu0 0
    %1456 = vmatpush1.bf16.msra.mxu0 0
    %1457 = vmatprep.subr.bf16.mxu0 0
    %1458 = vmatpush1.bf16.msra.mxu0 0
    %1459 = vmatprep.subr.bf16.mxu0 0
    %1460 = vmatpush1.bf16.msra.mxu0 0
    %1461 = vmatprep.subr.bf16.mxu0 0
    %1462 = vmatpush1.bf16.msra.mxu0 0
    %1463 = vmatprep.subr.bf16.mxu0 0
    %1464 = vmatpush1.bf16.msra.mxu0 0
    %1465 = vmatprep.mubr.bf16.mxu0 0
    %1466 = vmatmul.mubr.bf16.gmra.mrb[0].mxu0 %v1431
    %v1467 = vpop.f32.mrb[0].mxu0
    %v1468 = vadd.f32 0.0, %v1467
    %v1469 = vpop.f32.mrb[0].mxu0
    %v1470 = vpop.f32.mrb[0].mxu0
    %v1471 = vadd.f32 0.0, %v1470
    %v1472 = vpop.f32.mrb[0].mxu0
    %1473 = vdwg.mxu0
    %v1474 = vadd.f32 %v1307, %v1468
    %v1475 = vadd.f32 %v1308, %v1471
    %v1477 = vsel %vm974, %v412, 0
    %v1480 = vsel %vm974, %v683, 0
    %1482 = vmatprep.subr.bf16.mxu0 0
    %1483 = vmatpush1.bf16.xpose.msra.mxu0 %v1480
    %1484 = vmatprep.subr.bf16.mxu0 0
    %1485 = vmatpush1.bf16.xpose.msra.mxu0 0
    %1486 = vmatprep.subr.bf16.mxu0 0
    %1487 = vmatpush1.bf16.xpose.msra.mxu0 0
    %1488 = vmatprep.subr.bf16.mxu0 0
    %1489 = vmatpush1.bf16.xpose.msra.mxu0 0
    %1490 = vmatprep.subr.bf16.mxu0 0
    %1491 = vmatpush1.bf16.xpose.msra.mxu0 0
    %1492 = vmatprep.subr.bf16.mxu0 0
    %1493 = vmatpush1.bf16.xpose.msra.mxu0 0
    %1494 = vmatprep.subr.bf16.mxu0 0
    %1495 = vmatpush1.bf16.xpose.msra.mxu0 0
    %1496 = vmatprep.subr.bf16.mxu0 0
    %1497 = vmatpush1.bf16.xpose.msra.mxu0 0
    %1498 = vmatprep.subr.bf16.mxu0 0
    %1499 = vmatpush1.bf16.xpose.msra.mxu0 0
    %1500 = vmatprep.subr.bf16.mxu0 0
    %1501 = vmatpush1.bf16.xpose.msra.mxu0 0
    %1502 = vmatprep.subr.bf16.mxu0 0
    %1503 = vmatpush1.bf16.xpose.msra.mxu0 0
    %1504 = vmatprep.subr.bf16.mxu0 0
    %1505 = vmatpush1.bf16.xpose.msra.mxu0 0
    %1506 = vmatprep.subr.bf16.mxu0 0
    %1507 = vmatpush1.bf16.xpose.msra.mxu0 0
    %1508 = vmatprep.subr.bf16.mxu0 0
    %1509 = vmatpush1.bf16.xpose.msra.mxu0 0
    %1510 = vmatprep.subr.bf16.mxu0 0
    %1511 = vmatpush1.bf16.xpose.msra.mxu0 0
    %1512 = vmatprep.subr.bf16.mxu0 0
    %1513 = vmatpush1.bf16.xpose.msra.mxu0 0
    %1514 = vmatprep.mubr.bf16.mxu0 0
    %1515 = vmatmul.mubr.bf16.gmra.mrb[0].mxu0 %v1477
    %v1516 = vpop.f32.mrb[0].mxu0
    %v1517 = vadd.f32 0.0, %v1516
    %v1518 = vpop.f32.mrb[0].mxu0
    %v1519 = vpop.f32.mrb[0].mxu0
    %v1520 = vadd.f32 0.0, %v1519
    %v1521 = vpop.f32.mrb[0].mxu0
    %1522 = vdwg.mxu0
    %v1523 = vsel %vm974, %v1517, -inf
    %1524 = vmax.xlane.f32.xlu0 %v1523
    %v1525 = vpop.xlane.xlu0 %1524
    %v1526 = vsel %vm974, %v1520, -inf
    %1527 = vmax.xlane.f32.xlu0 %v1526
    %v1528 = vpop.xlane.xlu0 %1527
    %v1529 = vsub.f32 %v1517, %v1525
    %v1530 = vsub.f32 %v1520, %v1528
    %v1531 = vmul.f32 %v1529, 1.442695
    %v1532 = vpow.pop %v1531
    %v1533 = vmul.f32 %v1530, 1.442695
    %v1534 = vpow.pop %v1533
    %v1535 = vsel %vm974, %v1532, 0.0
    %1536 = vadd.xlane.f32.xlu0 %v1535
    %v1537 = vpop.xlane.xlu0 %1536
    %v1538 = vsel %vm974, %v1534, 0.0
    %1539 = vadd.xlane.f32.xlu0 %v1538
    %v1540 = vpop.xlane.xlu0 %1539
    %v1541 = vrcp.pop %v1537
    %v1542 = vrcp.pop %v1540
    %v1543 = vmul.f32 %v1532, %v1541
    %v1544 = vmul.f32 %v1534, %v1542
    %v1545 = vpack.c.bf16 %v1544, %v1543
    %v1547 = vsel %vm974, %v1545, 0
    %1549 = vmatprep.subr.bf16.mxu0 0
    %1550 = vmatpush1.bf16.msra.mxu0 %v954
    %1551 = vmatprep.subr.bf16.mxu0 0
    %1552 = vmatpush1.bf16.msra.mxu0 0
    %1553 = vmatprep.subr.bf16.mxu0 0
    %1554 = vmatpush1.bf16.msra.mxu0 0
    %1555 = vmatprep.subr.bf16.mxu0 0
    %1556 = vmatpush1.bf16.msra.mxu0 0
    %1557 = vmatprep.subr.bf16.mxu0 0
    %1558 = vmatpush1.bf16.msra.mxu0 0
    %1559 = vmatprep.subr.bf16.mxu0 0
    %1560 = vmatpush1.bf16.msra.mxu0 0
    %1561 = vmatprep.subr.bf16.mxu0 0
    %1562 = vmatpush1.bf16.msra.mxu0 0
    %1563 = vmatprep.subr.bf16.mxu0 0
    %1564 = vmatpush1.bf16.msra.mxu0 0
    %1565 = vmatprep.subr.bf16.mxu0 0
    %1566 = vmatpush1.bf16.msra.mxu0 0
    %1567 = vmatprep.subr.bf16.mxu0 0
    %1568 = vmatpush1.bf16.msra.mxu0 0
    %1569 = vmatprep.subr.bf16.mxu0 0
    %1570 = vmatpush1.bf16.msra.mxu0 0
    %1571 = vmatprep.subr.bf16.mxu0 0
    %1572 = vmatpush1.bf16.msra.mxu0 0
    %1573 = vmatprep.subr.bf16.mxu0 0
    %1574 = vmatpush1.bf16.msra.mxu0 0
    %1575 = vmatprep.subr.bf16.mxu0 0
    %1576 = vmatpush1.bf16.msra.mxu0 0
    %1577 = vmatprep.subr.bf16.mxu0 0
    %1578 = vmatpush1.bf16.msra.mxu0 0
    %1579 = vmatprep.subr.bf16.mxu0 0
    %1580 = vmatpush1.bf16.msra.mxu0 0
    %1581 = vmatprep.mubr.bf16.mxu0 0
    %1582 = vmatmul.mubr.bf16.gmra.mrb[0].mxu0 %v1547
    %v1583 = vpop.f32.mrb[0].mxu0
    %v1584 = vadd.f32 0.0, %v1583
    %v1585 = vpop.f32.mrb[0].mxu0
    %v1586 = vpop.f32.mrb[0].mxu0
    %v1587 = vadd.f32 0.0, %v1586
    %v1588 = vpop.f32.mrb[0].mxu0
    %1589 = vdwg.mxu0
    %v1590 = vpack.c.bf16 %v1587, %v1584
    %v1593 = vunpack.c.l.b16 %v965
    %v1594 = vunpack.c.l.b16 %v966
    %v1595 = vpack.c.b16 %v1594, %v1593
    %v1598 = vsel %vm974, %v1590, 0
    %1600 = vmatprep.subr.bf16.mxu0 0
    %1601 = vmatpush1.bf16.msra.mxu0 %v1595
    %1602 = vmatprep.subr.bf16.mxu0 0
    %1603 = vmatpush1.bf16.msra.mxu0 0
    %1604 = vmatprep.subr.bf16.mxu0 0
    %1605 = vmatpush1.bf16.msra.mxu0 0
    %1606 = vmatprep.subr.bf16.mxu0 0
    %1607 = vmatpush1.bf16.msra.mxu0 0
    %1608 = vmatprep.subr.bf16.mxu0 0
    %1609 = vmatpush1.bf16.msra.mxu0 0
    %1610 = vmatprep.subr.bf16.mxu0 0
    %1611 = vmatpush1.bf16.msra.mxu0 0
    %1612 = vmatprep.subr.bf16.mxu0 0
    %1613 = vmatpush1.bf16.msra.mxu0 0
    %1614 = vmatprep.subr.bf16.mxu0 0
    %1615 = vmatpush1.bf16.msra.mxu0 0
    %1616 = vmatprep.subr.bf16.mxu0 0
    %1617 = vmatpush1.bf16.msra.mxu0 0
    %1618 = vmatprep.subr.bf16.mxu0 0
    %1619 = vmatpush1.bf16.msra.mxu0 0
    %1620 = vmatprep.subr.bf16.mxu0 0
    %1621 = vmatpush1.bf16.msra.mxu0 0
    %1622 = vmatprep.subr.bf16.mxu0 0
    %1623 = vmatpush1.bf16.msra.mxu0 0
    %1624 = vmatprep.subr.bf16.mxu0 0
    %1625 = vmatpush1.bf16.msra.mxu0 0
    %1626 = vmatprep.subr.bf16.mxu0 0
    %1627 = vmatpush1.bf16.msra.mxu0 0
    %1628 = vmatprep.subr.bf16.mxu0 0
    %1629 = vmatpush1.bf16.msra.mxu0 0
    %1630 = vmatprep.subr.bf16.mxu0 0
    %1631 = vmatpush1.bf16.msra.mxu0 0
    %1632 = vmatprep.mubr.bf16.mxu0 0
    %1633 = vmatmul.mubr.bf16.gmra.mrb[0].mxu0 %v1598
    %v1634 = vpop.f32.mrb[0].mxu0
    %v1635 = vadd.f32 0.0, %v1634
    %v1636 = vpop.f32.mrb[0].mxu0
    %v1637 = vpop.f32.mrb[0].mxu0
    %v1638 = vadd.f32 0.0, %v1637
    %v1639 = vpop.f32.mrb[0].mxu0
    %1640 = vdwg.mxu0
    %v1641 = vadd.f32 %v1474, %v1635
    %v1642 = vadd.f32 %v1475, %v1638
    %v1644 = vsel %vm974, %v209, 0
    %v1647 = vsel %vm974, %v480, 0
    %1649 = vmatprep.subr.bf16.mxu0 0
    %1650 = vmatpush1.bf16.xpose.msra.mxu0 %v1647
    %1651 = vmatprep.subr.bf16.mxu0 0
    %1652 = vmatpush1.bf16.xpose.msra.mxu0 0
    %1653 = vmatprep.subr.bf16.mxu0 0
    %1654 = vmatpush1.bf16.xpose.msra.mxu0 0
    %1655 = vmatprep.subr.bf16.mxu0 0
    %1656 = vmatpush1.bf16.xpose.msra.mxu0 0
    %1657 = vmatprep.subr.bf16.mxu0 0
    %1658 = vmatpush1.bf16.xpose.msra.mxu0 0
    %1659 = vmatprep.subr.bf16.mxu0 0
    %1660 = vmatpush1.bf16.xpose.msra.mxu0 0
    %1661 = vmatprep.subr.bf16.mxu0 0
    %1662 = vmatpush1.bf16.xpose.msra.mxu0 0
    %1663 = vmatprep.subr.bf16.mxu0 0
    %1664 = vmatpush1.bf16.xpose.msra.mxu0 0
    %1665 = vmatprep.subr.bf16.mxu0 0
    %1666 = vmatpush1.bf16.xpose.msra.mxu0 0
    %1667 = vmatprep.subr.bf16.mxu0 0
    %1668 = vmatpush1.bf16.xpose.msra.mxu0 0
    %1669 = vmatprep.subr.bf16.mxu0 0
    %1670 = vmatpush1.bf16.xpose.msra.mxu0 0
    %1671 = vmatprep.subr.bf16.mxu0 0
    %1672 = vmatpush1.bf16.xpose.msra.mxu0 0
    %1673 = vmatprep.subr.bf16.mxu0 0
    %1674 = vmatpush1.bf16.xpose.msra.mxu0 0
    %1675 = vmatprep.subr.bf16.mxu0 0
    %1676 = vmatpush1.bf16.xpose.msra.mxu0 0
    %1677 = vmatprep.subr.bf16.mxu0 0
    %1678 = vmatpush1.bf16.xpose.msra.mxu0 0
    %1679 = vmatprep.subr.bf16.mxu0 0
    %1680 = vmatpush1.bf16.xpose.msra.mxu0 0
    %1681 = vmatprep.mubr.bf16.mxu0 0
    %1682 = vmatmul.mubr.bf16.gmra.mrb[0].mxu0 %v1644
    %v1683 = vpop.f32.mrb[0].mxu0
    %v1684 = vadd.f32 0.0, %v1683
    %v1685 = vpop.f32.mrb[0].mxu0
    %v1686 = vpop.f32.mrb[0].mxu0
    %v1687 = vadd.f32 0.0, %v1686
    %v1688 = vpop.f32.mrb[0].mxu0
    %1689 = vdwg.mxu0
    %v1690 = vsel %vm974, %v1684, -inf
    %1691 = vmax.xlane.f32.xlu0 %v1690
    %v1692 = vpop.xlane.xlu0 %1691
    %v1693 = vsel %vm974, %v1687, -inf
    %1694 = vmax.xlane.f32.xlu0 %v1693
    %v1695 = vpop.xlane.xlu0 %1694
    %v1696 = vsub.f32 %v1684, %v1692
    %v1697 = vsub.f32 %v1687, %v1695
    %v1698 = vmul.f32 %v1696, 1.442695
    %v1699 = vpow.pop %v1698
    %v1700 = vmul.f32 %v1697, 1.442695
    %v1701 = vpow.pop %v1700
    %v1702 = vsel %vm974, %v1699, 0.0
    %1703 = vadd.xlane.f32.xlu0 %v1702
    %v1704 = vpop.xlane.xlu0 %1703
    %v1705 = vsel %vm974, %v1701, 0.0
    %1706 = vadd.xlane.f32.xlu0 %v1705
    %v1707 = vpop.xlane.xlu0 %1706
    %v1708 = vrcp.pop %v1704
    %v1709 = vrcp.pop %v1707
    %v1710 = vmul.f32 %v1699, %v1708
    %v1711 = vmul.f32 %v1701, %v1709
    %v1712 = vpack.c.bf16 %v1711, %v1710
    %v1714 = vsel %vm974, %v1712, 0
    %1716 = vmatprep.subr.bf16.mxu0 0
    %1717 = vmatpush1.bf16.msra.mxu0 %v751
    %1718 = vmatprep.subr.bf16.mxu0 0
    %1719 = vmatpush1.bf16.msra.mxu0 0
    %1720 = vmatprep.subr.bf16.mxu0 0
    %1721 = vmatpush1.bf16.msra.mxu0 0
    %1722 = vmatprep.subr.bf16.mxu0 0
    %1723 = vmatpush1.bf16.msra.mxu0 0
    %1724 = vmatprep.subr.bf16.mxu0 0
    %1725 = vmatpush1.bf16.msra.mxu0 0
    %1726 = vmatprep.subr.bf16.mxu0 0
    %1727 = vmatpush1.bf16.msra.mxu0 0
    %1728 = vmatprep.subr.bf16.mxu0 0
    %1729 = vmatpush1.bf16.msra.mxu0 0
    %1730 = vmatprep.subr.bf16.mxu0 0
    %1731 = vmatpush1.bf16.msra.mxu0 0
    %1732 = vmatprep.subr.bf16.mxu0 0
    %1733 = vmatpush1.bf16.msra.mxu0 0
    %1734 = vmatprep.subr.bf16.mxu0 0
    %1735 = vmatpush1.bf16.msra.mxu0 0
    %1736 = vmatprep.subr.bf16.mxu0 0
    %1737 = vmatpush1.bf16.msra.mxu0 0
    %1738 = vmatprep.subr.bf16.mxu0 0
    %1739 = vmatpush1.bf16.msra.mxu0 0
    %1740 = vmatprep.subr.bf16.mxu0 0
    %1741 = vmatpush1.bf16.msra.mxu0 0
    %1742 = vmatprep.subr.bf16.mxu0 0
    %1743 = vmatpush1.bf16.msra.mxu0 0
    %1744 = vmatprep.subr.bf16.mxu0 0
    %1745 = vmatpush1.bf16.msra.mxu0 0
    %1746 = vmatprep.subr.bf16.mxu0 0
    %1747 = vmatpush1.bf16.msra.mxu0 0
    %1748 = vmatprep.mubr.bf16.mxu0 0
    %1749 = vmatmul.mubr.bf16.gmra.mrb[0].mxu0 %v1714
    %v1750 = vpop.f32.mrb[0].mxu0
    %v1751 = vadd.f32 0.0, %v1750
    %v1752 = vpop.f32.mrb[0].mxu0
    %v1753 = vpop.f32.mrb[0].mxu0
    %v1754 = vadd.f32 0.0, %v1753
    %v1755 = vpop.f32.mrb[0].mxu0
    %1756 = vdwg.mxu0
    %v1757 = vpack.c.bf16 %v1754, %v1751
    %v1759 = vsel %vm974, %v1757, 0
    %1761 = vmatprep.subr.bf16.mxu0 0
    %1762 = vmatpush1.bf16.msra.mxu0 %v1094
    %1763 = vmatprep.subr.bf16.mxu0 0
    %1764 = vmatpush1.bf16.msra.mxu0 0
    %1765 = vmatprep.subr.bf16.mxu0 0
    %1766 = vmatpush1.bf16.msra.mxu0 0
    %1767 = vmatprep.subr.bf16.mxu0 0
    %1768 = vmatpush1.bf16.msra.mxu0 0
    %1769 = vmatprep.subr.bf16.mxu0 0
    %1770 = vmatpush1.bf16.msra.mxu0 0
    %1771 = vmatprep.subr.bf16.mxu0 0
    %1772 = vmatpush1.bf16.msra.mxu0 0
    %1773 = vmatprep.subr.bf16.mxu0 0
    %1774 = vmatpush1.bf16.msra.mxu0 0
    %1775 = vmatprep.subr.bf16.mxu0 0
    %1776 = vmatpush1.bf16.msra.mxu0 0
    %1777 = vmatprep.subr.bf16.mxu0 0
    %1778 = vmatpush1.bf16.msra.mxu0 0
    %1779 = vmatprep.subr.bf16.mxu0 0
    %1780 = vmatpush1.bf16.msra.mxu0 0
    %1781 = vmatprep.subr.bf16.mxu0 0
    %1782 = vmatpush1.bf16.msra.mxu0 0
    %1783 = vmatprep.subr.bf16.mxu0 0
    %1784 = vmatpush1.bf16.msra.mxu0 0
    %1785 = vmatprep.subr.bf16.mxu0 0
    %1786 = vmatpush1.bf16.msra.mxu0 0
    %1787 = vmatprep.subr.bf16.mxu0 0
    %1788 = vmatpush1.bf16.msra.mxu0 0
    %1789 = vmatprep.subr.bf16.mxu0 0
    %1790 = vmatpush1.bf16.msra.mxu0 0
    %1791 = vmatprep.subr.bf16.mxu0 0
    %1792 = vmatpush1.bf16.msra.mxu0 0
    %1793 = vmatprep.mubr.bf16.mxu0 0
    %1794 = vmatmul.mubr.bf16.gmra.mrb[0].mxu0 %v1759
    %v1795 = vpop.f32.mrb[0].mxu0
    %v1796 = vadd.f32 0.0, %v1795
    %v1797 = vpop.f32.mrb[0].mxu0
    %v1798 = vpop.f32.mrb[0].mxu0
    %v1799 = vadd.f32 0.0, %v1798
    %v1800 = vpop.f32.mrb[0].mxu0
    %1801 = vdwg.mxu0
    %v1802 = vadd.f32 %v972, %v1796
    %v1803 = vadd.f32 %v972, %v1799
    %v1805 = vsel %vm974, %v277, 0
    %v1808 = vsel %vm974, %v548, 0
    %1810 = vmatprep.subr.bf16.mxu0 0
    %1811 = vmatpush1.bf16.xpose.msra.mxu0 %v1808
    %1812 = vmatprep.subr.bf16.mxu0 0
    %1813 = vmatpush1.bf16.xpose.msra.mxu0 0
    %1814 = vmatprep.subr.bf16.mxu0 0
    %1815 = vmatpush1.bf16.xpose.msra.mxu0 0
    %1816 = vmatprep.subr.bf16.mxu0 0
    %1817 = vmatpush1.bf16.xpose.msra.mxu0 0
    %1818 = vmatprep.subr.bf16.mxu0 0
    %1819 = vmatpush1.bf16.xpose.msra.mxu0 0
    %1820 = vmatprep.subr.bf16.mxu0 0
    %1821 = vmatpush1.bf16.xpose.msra.mxu0 0
    %1822 = vmatprep.subr.bf16.mxu0 0
    %1823 = vmatpush1.bf16.xpose.msra.mxu0 0
    %1824 = vmatprep.subr.bf16.mxu0 0
    %1825 = vmatpush1.bf16.xpose.msra.mxu0 0
    %1826 = vmatprep.subr.bf16.mxu0 0
    %1827 = vmatpush1.bf16.xpose.msra.mxu0 0
    %1828 = vmatprep.subr.bf16.mxu0 0
    %1829 = vmatpush1.bf16.xpose.msra.mxu0 0
    %1830 = vmatprep.subr.bf16.mxu0 0
    %1831 = vmatpush1.bf16.xpose.msra.mxu0 0
    %1832 = vmatprep.subr.bf16.mxu0 0
    %1833 = vmatpush1.bf16.xpose.msra.mxu0 0
    %1834 = vmatprep.subr.bf16.mxu0 0
    %1835 = vmatpush1.bf16.xpose.msra.mxu0 0
    %1836 = vmatprep.subr.bf16.mxu0 0
    %1837 = vmatpush1.bf16.xpose.msra.mxu0 0
    %1838 = vmatprep.subr.bf16.mxu0 0
    %1839 = vmatpush1.bf16.xpose.msra.mxu0 0
    %1840 = vmatprep.subr.bf16.mxu0 0
    %1841 = vmatpush1.bf16.xpose.msra.mxu0 0
    %1842 = vmatprep.mubr.bf16.mxu0 0
    %1843 = vmatmul.mubr.bf16.gmra.mrb[0].mxu0 %v1805
    %v1844 = vpop.f32.mrb[0].mxu0
    %v1845 = vadd.f32 0.0, %v1844
    %v1846 = vpop.f32.mrb[0].mxu0
    %v1847 = vpop.f32.mrb[0].mxu0
    %v1848 = vadd.f32 0.0, %v1847
    %v1849 = vpop.f32.mrb[0].mxu0
    %1850 = vdwg.mxu0
    %v1851 = vsel %vm974, %v1845, -inf
    %1852 = vmax.xlane.f32.xlu0 %v1851
    %v1853 = vpop.xlane.xlu0 %1852
    %v1854 = vsel %vm974, %v1848, -inf
    %1855 = vmax.xlane.f32.xlu0 %v1854
    %v1856 = vpop.xlane.xlu0 %1855
    %v1857 = vsub.f32 %v1845, %v1853
    %v1858 = vsub.f32 %v1848, %v1856
    %v1859 = vmul.f32 %v1857, 1.442695
    %v1860 = vpow.pop %v1859
    %v1861 = vmul.f32 %v1858, 1.442695
    %v1862 = vpow.pop %v1861
    %v1863 = vsel %vm974, %v1860, 0.0
    %1864 = vadd.xlane.f32.xlu0 %v1863
    %v1865 = vpop.xlane.xlu0 %1864
    %v1866 = vsel %vm974, %v1862, 0.0
    %1867 = vadd.xlane.f32.xlu0 %v1866
    %v1868 = vpop.xlane.xlu0 %1867
    %v1869 = vrcp.pop %v1865
    %v1870 = vrcp.pop %v1868
    %v1871 = vmul.f32 %v1860, %v1869
    %v1872 = vmul.f32 %v1862, %v1870
    %v1873 = vpack.c.bf16 %v1872, %v1871
    %v1875 = vsel %vm974, %v1873, 0
    %1877 = vmatprep.subr.bf16.mxu0 0
    %1878 = vmatpush1.bf16.msra.mxu0 %v819
    %1879 = vmatprep.subr.bf16.mxu0 0
    %1880 = vmatpush1.bf16.msra.mxu0 0
    %1881 = vmatprep.subr.bf16.mxu0 0
    %1882 = vmatpush1.bf16.msra.mxu0 0
    %1883 = vmatprep.subr.bf16.mxu0 0
    %1884 = vmatpush1.bf16.msra.mxu0 0
    %1885 = vmatprep.subr.bf16.mxu0 0
    %1886 = vmatpush1.bf16.msra.mxu0 0
    %1887 = vmatprep.subr.bf16.mxu0 0
    %1888 = vmatpush1.bf16.msra.mxu0 0
    %1889 = vmatprep.subr.bf16.mxu0 0
    %1890 = vmatpush1.bf16.msra.mxu0 0
    %1891 = vmatprep.subr.bf16.mxu0 0
    %1892 = vmatpush1.bf16.msra.mxu0 0
    %1893 = vmatprep.subr.bf16.mxu0 0
    %1894 = vmatpush1.bf16.msra.mxu0 0
    %1895 = vmatprep.subr.bf16.mxu0 0
    %1896 = vmatpush1.bf16.msra.mxu0 0
    %1897 = vmatprep.subr.bf16.mxu0 0
    %1898 = vmatpush1.bf16.msra.mxu0 0
    %1899 = vmatprep.subr.bf16.mxu0 0
    %1900 = vmatpush1.bf16.msra.mxu0 0
    %1901 = vmatprep.subr.bf16.mxu0 0
    %1902 = vmatpush1.bf16.msra.mxu0 0
    %1903 = vmatprep.subr.bf16.mxu0 0
    %1904 = vmatpush1.bf16.msra.mxu0 0
    %1905 = vmatprep.subr.bf16.mxu0 0
    %1906 = vmatpush1.bf16.msra.mxu0 0
    %1907 = vmatprep.subr.bf16.mxu0 0
    %1908 = vmatpush1.bf16.msra.mxu0 0
    %1909 = vmatprep.mubr.bf16.mxu0 0
    %1910 = vmatmul.mubr.bf16.gmra.mrb[0].mxu0 %v1875
    %v1911 = vpop.f32.mrb[0].mxu0
    %v1912 = vadd.f32 0.0, %v1911
    %v1913 = vpop.f32.mrb[0].mxu0
    %v1914 = vpop.f32.mrb[0].mxu0
    %v1915 = vadd.f32 0.0, %v1914
    %v1916 = vpop.f32.mrb[0].mxu0
    %1917 = vdwg.mxu0
    %v1918 = vpack.c.bf16 %v1915, %v1912
    %v1920 = vsel %vm974, %v1918, 0
    %1922 = vmatprep.subr.bf16.mxu0 0
    %1923 = vmatpush1.bf16.msra.mxu0 %v1261
    %1924 = vmatprep.subr.bf16.mxu0 0
    %1925 = vmatpush1.bf16.msra.mxu0 0
    %1926 = vmatprep.subr.bf16.mxu0 0
    %1927 = vmatpush1.bf16.msra.mxu0 0
    %1928 = vmatprep.subr.bf16.mxu0 0
    %1929 = vmatpush1.bf16.msra.mxu0 0
    %1930 = vmatprep.subr.bf16.mxu0 0
    %1931 = vmatpush1.bf16.msra.mxu0 0
    %1932 = vmatprep.subr.bf16.mxu0 0
    %1933 = vmatpush1.bf16.msra.mxu0 0
    %1934 = vmatprep.subr.bf16.mxu0 0
    %1935 = vmatpush1.bf16.msra.mxu0 0
    %1936 = vmatprep.subr.bf16.mxu0 0
    %1937 = vmatpush1.bf16.msra.mxu0 0
    %1938 = vmatprep.subr.bf16.mxu0 0
    %1939 = vmatpush1.bf16.msra.mxu0 0
    %1940 = vmatprep.subr.bf16.mxu0 0
    %1941 = vmatpush1.bf16.msra.mxu0 0
    %1942 = vmatprep.subr.bf16.mxu0 0
    %1943 = vmatpush1.bf16.msra.mxu0 0
    %1944 = vmatprep.subr.bf16.mxu0 0
    %1945 = vmatpush1.bf16.msra.mxu0 0
    %1946 = vmatprep.subr.bf16.mxu0 0
    %1947 = vmatpush1.bf16.msra.mxu0 0
    %1948 = vmatprep.subr.bf16.mxu0 0
    %1949 = vmatpush1.bf16.msra.mxu0 0
    %1950 = vmatprep.subr.bf16.mxu0 0
    %1951 = vmatpush1.bf16.msra.mxu0 0
    %1952 = vmatprep.subr.bf16.mxu0 0
    %1953 = vmatpush1.bf16.msra.mxu0 0
    %1954 = vmatprep.mubr.bf16.mxu0 0
    %1955 = vmatmul.mubr.bf16.gmra.mrb[0].mxu0 %v1920
    %v1956 = vpop.f32.mrb[0].mxu0
    %v1957 = vadd.f32 0.0, %v1956
    %v1958 = vpop.f32.mrb[0].mxu0
    %v1959 = vpop.f32.mrb[0].mxu0
    %v1960 = vadd.f32 0.0, %v1959
    %v1961 = vpop.f32.mrb[0].mxu0
    %1962 = vdwg.mxu0
    %v1963 = vadd.f32 %v1802, %v1957
    %v1964 = vadd.f32 %v1803, %v1960
    %v1966 = vsel %vm974, %v345, 0
    %v1969 = vsel %vm974, %v616, 0
    %1971 = vmatprep.subr.bf16.mxu0 0
    %1972 = vmatpush1.bf16.xpose.msra.mxu0 %v1969
    %1973 = vmatprep.subr.bf16.mxu0 0
    %1974 = vmatpush1.bf16.xpose.msra.mxu0 0
    %1975 = vmatprep.subr.bf16.mxu0 0
    %1976 = vmatpush1.bf16.xpose.msra.mxu0 0
    %1977 = vmatprep.subr.bf16.mxu0 0
    %1978 = vmatpush1.bf16.xpose.msra.mxu0 0
    %1979 = vmatprep.subr.bf16.mxu0 0
    %1980 = vmatpush1.bf16.xpose.msra.mxu0 0
    %1981 = vmatprep.subr.bf16.mxu0 0
    %1982 = vmatpush1.bf16.xpose.msra.mxu0 0
    %1983 = vmatprep.subr.bf16.mxu0 0
    %1984 = vmatpush1.bf16.xpose.msra.mxu0 0
    %1985 = vmatprep.subr.bf16.mxu0 0
    %1986 = vmatpush1.bf16.xpose.msra.mxu0 0
    %1987 = vmatprep.subr.bf16.mxu0 0
    %1988 = vmatpush1.bf16.xpose.msra.mxu0 0
    %1989 = vmatprep.subr.bf16.mxu0 0
    %1990 = vmatpush1.bf16.xpose.msra.mxu0 0
    %1991 = vmatprep.subr.bf16.mxu0 0
    %1992 = vmatpush1.bf16.xpose.msra.mxu0 0
    %1993 = vmatprep.subr.bf16.mxu0 0
    %1994 = vmatpush1.bf16.xpose.msra.mxu0 0
    %1995 = vmatprep.subr.bf16.mxu0 0
    %1996 = vmatpush1.bf16.xpose.msra.mxu0 0
    %1997 = vmatprep.subr.bf16.mxu0 0
    %1998 = vmatpush1.bf16.xpose.msra.mxu0 0
    %1999 = vmatprep.subr.bf16.mxu0 0
    %2000 = vmatpush1.bf16.xpose.msra.mxu0 0
    %2001 = vmatprep.subr.bf16.mxu0 0
    %2002 = vmatpush1.bf16.xpose.msra.mxu0 0
    %2003 = vmatprep.mubr.bf16.mxu0 0
    %2004 = vmatmul.mubr.bf16.gmra.mrb[0].mxu0 %v1966
    %v2005 = vpop.f32.mrb[0].mxu0
    %v2006 = vadd.f32 0.0, %v2005
    %v2007 = vpop.f32.mrb[0].mxu0
    %v2008 = vpop.f32.mrb[0].mxu0
    %v2009 = vadd.f32 0.0, %v2008
    %v2010 = vpop.f32.mrb[0].mxu0
    %2011 = vdwg.mxu0
    %v2012 = vsel %vm974, %v2006, -inf
    %2013 = vmax.xlane.f32.xlu0 %v2012
    %v2014 = vpop.xlane.xlu0 %2013
    %v2015 = vsel %vm974, %v2009, -inf
    %2016 = vmax.xlane.f32.xlu0 %v2015
    %v2017 = vpop.xlane.xlu0 %2016
    %v2018 = vsub.f32 %v2006, %v2014
    %v2019 = vsub.f32 %v2009, %v2017
    %v2020 = vmul.f32 %v2018, 1.442695
    %v2021 = vpow.pop %v2020
    %v2022 = vmul.f32 %v2019, 1.442695
    %v2023 = vpow.pop %v2022
    %v2024 = vsel %vm974, %v2021, 0.0
    %2025 = vadd.xlane.f32.xlu0 %v2024
    %v2026 = vpop.xlane.xlu0 %2025
    %v2027 = vsel %vm974, %v2023, 0.0
    %2028 = vadd.xlane.f32.xlu0 %v2027
    %v2029 = vpop.xlane.xlu0 %2028
    %v2030 = vrcp.pop %v2026
    %v2031 = vrcp.pop %v2029
    %v2032 = vmul.f32 %v2021, %v2030
    %v2033 = vmul.f32 %v2023, %v2031
    %v2034 = vpack.c.bf16 %v2033, %v2032
    %v2036 = vsel %vm974, %v2034, 0
    %2038 = vmatprep.subr.bf16.mxu0 0
    %2039 = vmatpush1.bf16.msra.mxu0 %v887
    %2040 = vmatprep.subr.bf16.mxu0 0
    %2041 = vmatpush1.bf16.msra.mxu0 0
    %2042 = vmatprep.subr.bf16.mxu0 0
    %2043 = vmatpush1.bf16.msra.mxu0 0
    %2044 = vmatprep.subr.bf16.mxu0 0
    %2045 = vmatpush1.bf16.msra.mxu0 0
    %2046 = vmatprep.subr.bf16.mxu0 0
    %2047 = vmatpush1.bf16.msra.mxu0 0
    %2048 = vmatprep.subr.bf16.mxu0 0
    %2049 = vmatpush1.bf16.msra.mxu0 0
    %2050 = vmatprep.subr.bf16.mxu0 0
    %2051 = vmatpush1.bf16.msra.mxu0 0
    %2052 = vmatprep.subr.bf16.mxu0 0
    %2053 = vmatpush1.bf16.msra.mxu0 0
    %2054 = vmatprep.subr.bf16.mxu0 0
    %2055 = vmatpush1.bf16.msra.mxu0 0
    %2056 = vmatprep.subr.bf16.mxu0 0
    %2057 = vmatpush1.bf16.msra.mxu0 0
    %2058 = vmatprep.subr.bf16.mxu0 0
    %2059 = vmatpush1.bf16.msra.mxu0 0
    %2060 = vmatprep.subr.bf16.mxu0 0
    %2061 = vmatpush1.bf16.msra.mxu0 0
    %2062 = vmatprep.subr.bf16.mxu0 0
    %2063 = vmatpush1.bf16.msra.mxu0 0
    %2064 = vmatprep.subr.bf16.mxu0 0
    %2065 = vmatpush1.bf16.msra.mxu0 0
    %2066 = vmatprep.subr.bf16.mxu0 0
    %2067 = vmatpush1.bf16.msra.mxu0 0
    %2068 = vmatprep.subr.bf16.mxu0 0
    %2069 = vmatpush1.bf16.msra.mxu0 0
    %2070 = vmatprep.mubr.bf16.mxu0 0
    %2071 = vmatmul.mubr.bf16.gmra.mrb[0].mxu0 %v2036
    %v2072 = vpop.f32.mrb[0].mxu0
    %v2073 = vadd.f32 0.0, %v2072
    %v2074 = vpop.f32.mrb[0].mxu0
    %v2075 = vpop.f32.mrb[0].mxu0
    %v2076 = vadd.f32 0.0, %v2075
    %v2077 = vpop.f32.mrb[0].mxu0
    %2078 = vdwg.mxu0
    %v2079 = vpack.c.bf16 %v2076, %v2073
    %v2081 = vsel %vm974, %v2079, 0
    %2083 = vmatprep.subr.bf16.mxu0 0
    %2084 = vmatpush1.bf16.msra.mxu0 %v1428
    %2085 = vmatprep.subr.bf16.mxu0 0
    %2086 = vmatpush1.bf16.msra.mxu0 0
    %2087 = vmatprep.subr.bf16.mxu0 0
    %2088 = vmatpush1.bf16.msra.mxu0 0
    %2089 = vmatprep.subr.bf16.mxu0 0
    %2090 = vmatpush1.bf16.msra.mxu0 0
    %2091 = vmatprep.subr.bf16.mxu0 0
    %2092 = vmatpush1.bf16.msra.mxu0 0
    %2093 = vmatprep.subr.bf16.mxu0 0
    %2094 = vmatpush1.bf16.msra.mxu0 0
    %2095 = vmatprep.subr.bf16.mxu0 0
    %2096 = vmatpush1.bf16.msra.mxu0 0
    %2097 = vmatprep.subr.bf16.mxu0 0
    %2098 = vmatpush1.bf16.msra.mxu0 0
    %2099 = vmatprep.subr.bf16.mxu0 0
    %2100 = vmatpush1.bf16.msra.mxu0 0
    %2101 = vmatprep.subr.bf16.mxu0 0
    %2102 = vmatpush1.bf16.msra.mxu0 0
    %2103 = vmatprep.subr.bf16.mxu0 0
    %2104 = vmatpush1.bf16.msra.mxu0 0
    %2105 = vmatprep.subr.bf16.mxu0 0
    %2106 = vmatpush1.bf16.msra.mxu0 0
    %2107 = vmatprep.subr.bf16.mxu0 0
    %2108 = vmatpush1.bf16.msra.mxu0 0
    %2109 = vmatprep.subr.bf16.mxu0 0
    %2110 = vmatpush1.bf16.msra.mxu0 0
    %2111 = vmatprep.subr.bf16.mxu0 0
    %2112 = vmatpush1.bf16.msra.mxu0 0
    %2113 = vmatprep.subr.bf16.mxu0 0
    %2114 = vmatpush1.bf16.msra.mxu0 0
    %2115 = vmatprep.mubr.bf16.mxu0 0
    %2116 = vmatmul.mubr.bf16.gmra.mrb[0].mxu0 %v2081
    %v2117 = vpop.f32.mrb[0].mxu0
    %v2118 = vadd.f32 0.0, %v2117
    %v2119 = vpop.f32.mrb[0].mxu0
    %v2120 = vpop.f32.mrb[0].mxu0
    %v2121 = vadd.f32 0.0, %v2120
    %v2122 = vpop.f32.mrb[0].mxu0
    %2123 = vdwg.mxu0
    %v2124 = vadd.f32 %v1963, %v2118
    %v2125 = vadd.f32 %v1964, %v2121
    %v2127 = vsel %vm974, %v413, 0
    %v2130 = vsel %vm974, %v684, 0
    %2132 = vmatprep.subr.bf16.mxu0 0
    %2133 = vmatpush1.bf16.xpose.msra.mxu0 %v2130
    %2134 = vmatprep.subr.bf16.mxu0 0
    %2135 = vmatpush1.bf16.xpose.msra.mxu0 0
    %2136 = vmatprep.subr.bf16.mxu0 0
    %2137 = vmatpush1.bf16.xpose.msra.mxu0 0
    %2138 = vmatprep.subr.bf16.mxu0 0
    %2139 = vmatpush1.bf16.xpose.msra.mxu0 0
    %2140 = vmatprep.subr.bf16.mxu0 0
    %2141 = vmatpush1.bf16.xpose.msra.mxu0 0
    %2142 = vmatprep.subr.bf16.mxu0 0
    %2143 = vmatpush1.bf16.xpose.msra.mxu0 0
    %2144 = vmatprep.subr.bf16.mxu0 0
    %2145 = vmatpush1.bf16.xpose.msra.mxu0 0
    %2146 = vmatprep.subr.bf16.mxu0 0
    %2147 = vmatpush1.bf16.xpose.msra.mxu0 0
    %2148 = vmatprep.subr.bf16.mxu0 0
    %2149 = vmatpush1.bf16.xpose.msra.mxu0 0
    %2150 = vmatprep.subr.bf16.mxu0 0
    %2151 = vmatpush1.bf16.xpose.msra.mxu0 0
    %2152 = vmatprep.subr.bf16.mxu0 0
    %2153 = vmatpush1.bf16.xpose.msra.mxu0 0
    %2154 = vmatprep.subr.bf16.mxu0 0
    %2155 = vmatpush1.bf16.xpose.msra.mxu0 0
    %2156 = vmatprep.subr.bf16.mxu0 0
    %2157 = vmatpush1.bf16.xpose.msra.mxu0 0
    %2158 = vmatprep.subr.bf16.mxu0 0
    %2159 = vmatpush1.bf16.xpose.msra.mxu0 0
    %2160 = vmatprep.subr.bf16.mxu0 0
    %2161 = vmatpush1.bf16.xpose.msra.mxu0 0
    %2162 = vmatprep.subr.bf16.mxu0 0
    %2163 = vmatpush1.bf16.xpose.msra.mxu0 0
    %2164 = vmatprep.mubr.bf16.mxu0 0
    %2165 = vmatmul.mubr.bf16.gmra.mrb[0].mxu0 %v2127
    %v2166 = vpop.f32.mrb[0].mxu0
    %v2167 = vadd.f32 0.0, %v2166
    %v2168 = vpop.f32.mrb[0].mxu0
    %v2169 = vpop.f32.mrb[0].mxu0
    %v2170 = vadd.f32 0.0, %v2169
    %v2171 = vpop.f32.mrb[0].mxu0
    %2172 = vdwg.mxu0
    %v2173 = vsel %vm974, %v2167, -inf
    %2174 = vmax.xlane.f32.xlu0 %v2173
    %v2175 = vpop.xlane.xlu0 %2174
    %v2176 = vsel %vm974, %v2170, -inf
    %2177 = vmax.xlane.f32.xlu0 %v2176
    %v2178 = vpop.xlane.xlu0 %2177
    %v2179 = vsub.f32 %v2167, %v2175
    %v2180 = vsub.f32 %v2170, %v2178
    %v2181 = vmul.f32 %v2179, 1.442695
    %v2182 = vpow.pop %v2181
    %v2183 = vmul.f32 %v2180, 1.442695
    %v2184 = vpow.pop %v2183
    %v2185 = vsel %vm974, %v2182, 0.0
    %2186 = vadd.xlane.f32.xlu0 %v2185
    %v2187 = vpop.xlane.xlu0 %2186
    %v2188 = vsel %vm974, %v2184, 0.0
    %2189 = vadd.xlane.f32.xlu0 %v2188
    %v2190 = vpop.xlane.xlu0 %2189
    %v2191 = vrcp.pop %v2187
    %v2192 = vrcp.pop %v2190
    %v2193 = vmul.f32 %v2182, %v2191
    %v2194 = vmul.f32 %v2184, %v2192
    %v2195 = vpack.c.bf16 %v2194, %v2193
    %v2197 = vsel %vm974, %v2195, 0
    %2199 = vmatprep.subr.bf16.mxu0 0
    %2200 = vmatpush1.bf16.msra.mxu0 %v955
    %2201 = vmatprep.subr.bf16.mxu0 0
    %2202 = vmatpush1.bf16.msra.mxu0 0
    %2203 = vmatprep.subr.bf16.mxu0 0
    %2204 = vmatpush1.bf16.msra.mxu0 0
    %2205 = vmatprep.subr.bf16.mxu0 0
    %2206 = vmatpush1.bf16.msra.mxu0 0
    %2207 = vmatprep.subr.bf16.mxu0 0
    %2208 = vmatpush1.bf16.msra.mxu0 0
    %2209 = vmatprep.subr.bf16.mxu0 0
    %2210 = vmatpush1.bf16.msra.mxu0 0
    %2211 = vmatprep.subr.bf16.mxu0 0
    %2212 = vmatpush1.bf16.msra.mxu0 0
    %2213 = vmatprep.subr.bf16.mxu0 0
    %2214 = vmatpush1.bf16.msra.mxu0 0
    %2215 = vmatprep.subr.bf16.mxu0 0
    %2216 = vmatpush1.bf16.msra.mxu0 0
    %2217 = vmatprep.subr.bf16.mxu0 0
    %2218 = vmatpush1.bf16.msra.mxu0 0
    %2219 = vmatprep.subr.bf16.mxu0 0
    %2220 = vmatpush1.bf16.msra.mxu0 0
    %2221 = vmatprep.subr.bf16.mxu0 0
    %2222 = vmatpush1.bf16.msra.mxu0 0
    %2223 = vmatprep.subr.bf16.mxu0 0
    %2224 = vmatpush1.bf16.msra.mxu0 0
    %2225 = vmatprep.subr.bf16.mxu0 0
    %2226 = vmatpush1.bf16.msra.mxu0 0
    %2227 = vmatprep.subr.bf16.mxu0 0
    %2228 = vmatpush1.bf16.msra.mxu0 0
    %2229 = vmatprep.subr.bf16.mxu0 0
    %2230 = vmatpush1.bf16.msra.mxu0 0
    %2231 = vmatprep.mubr.bf16.mxu0 0
    %2232 = vmatmul.mubr.bf16.gmra.mrb[0].mxu0 %v2197
    %v2233 = vpop.f32.mrb[0].mxu0
    %v2234 = vadd.f32 0.0, %v2233
    %v2235 = vpop.f32.mrb[0].mxu0
    %v2236 = vpop.f32.mrb[0].mxu0
    %v2237 = vadd.f32 0.0, %v2236
    %v2238 = vpop.f32.mrb[0].mxu0
    %2239 = vdwg.mxu0
    %v2240 = vpack.c.bf16 %v2237, %v2234
    %v2242 = vsel %vm974, %v2240, 0
    %2244 = vmatprep.subr.bf16.mxu0 0
    %2245 = vmatpush1.bf16.msra.mxu0 %v1595
    %2246 = vmatprep.subr.bf16.mxu0 0
    %2247 = vmatpush1.bf16.msra.mxu0 0
    %2248 = vmatprep.subr.bf16.mxu0 0
    %2249 = vmatpush1.bf16.msra.mxu0 0
    %2250 = vmatprep.subr.bf16.mxu0 0
    %2251 = vmatpush1.bf16.msra.mxu0 0
    %2252 = vmatprep.subr.bf16.mxu0 0
    %2253 = vmatpush1.bf16.msra.mxu0 0
    %2254 = vmatprep.subr.bf16.mxu0 0
    %2255 = vmatpush1.bf16.msra.mxu0 0
    %2256 = vmatprep.subr.bf16.mxu0 0
    %2257 = vmatpush1.bf16.msra.mxu0 0
    %2258 = vmatprep.subr.bf16.mxu0 0
    %2259 = vmatpush1.bf16.msra.mxu0 0
    %2260 = vmatprep.subr.bf16.mxu0 0
    %2261 = vmatpush1.bf16.msra.mxu0 0
    %2262 = vmatprep.subr.bf16.mxu0 0
    %2263 = vmatpush1.bf16.msra.mxu0 0
    %2264 = vmatprep.subr.bf16.mxu0 0
    %2265 = vmatpush1.bf16.msra.mxu0 0
    %2266 = vmatprep.subr.bf16.mxu0 0
    %2267 = vmatpush1.bf16.msra.mxu0 0
    %2268 = vmatprep.subr.bf16.mxu0 0
    %2269 = vmatpush1.bf16.msra.mxu0 0
    %2270 = vmatprep.subr.bf16.mxu0 0
    %2271 = vmatpush1.bf16.msra.mxu0 0
    %2272 = vmatprep.subr.bf16.mxu0 0
    %2273 = vmatpush1.bf16.msra.mxu0 0
    %2274 = vmatprep.subr.bf16.mxu0 0
    %2275 = vmatpush1.bf16.msra.mxu0 0
    %2276 = vmatprep.mubr.bf16.mxu0 0
    %2277 = vmatmul.mubr.bf16.gmra.mrb[0].mxu0 %v2242
    %v2278 = vpop.f32.mrb[0].mxu0
    %v2279 = vadd.f32 0.0, %v2278
    %v2280 = vpop.f32.mrb[0].mxu0
    %v2281 = vpop.f32.mrb[0].mxu0
    %v2282 = vadd.f32 0.0, %v2281
    %v2283 = vpop.f32.mrb[0].mxu0
    %2284 = vdwg.mxu0
    %v2285 = vadd.f32 %v2124, %v2279
    %v2286 = vadd.f32 %v2125, %v2282
    %v2287 = vadd.f32 %v55, %v1641
    %v2288 = vadd.f32 %v56, %v1642
    %v2289 = vadd.f32 %v57, %v2285
    %v2290 = vadd.f32 %v58, %v2286
    %v2291 = vld [vmem:[%s8] sm:$0x1]
    %v2292 = vld [vmem:[%s9] sm:$0x1]
    %v2293 = vsel %vm61, %v2287, 0.0
    %2294 = vadd.xlane.f32.xlu0 %v2293
    %v2295 = vpop.xlane.xlu0 %2294
    %v2296 = vsel %vm61, %v2288, 0.0
    %2297 = vadd.xlane.f32.xlu0 %v2296
    %v2298 = vpop.xlane.xlu0 %2297
    %v2299 = vsel %vm61, %v2289, 0.0
    %2300 = vadd.xlane.f32.xlu0 %v2299
    %v2301 = vpop.xlane.xlu0 %2300
    %v2302 = vsel %vm61, %v2290, 0.0
    %2303 = vadd.xlane.f32.xlu0 %v2302
    %v2304 = vpop.xlane.xlu0 %2303
    %v2305 = vmul.f32 %v2295, %v74
    %v2306 = vmul.f32 %v2298, %v74
    %v2307 = vmul.f32 %v2301, %v74
    %v2308 = vmul.f32 %v2304, %v74
    %v2309 = vsub.f32 %v2287, %v2305
    %v2310 = vsub.f32 %v2288, %v2306
    %v2311 = vsub.f32 %v2289, %v2307
    %v2312 = vsub.f32 %v2290, %v2308
    %v2313 = vmul.f32 %v2309, %v2309
    %v2314 = vmul.f32 %v2310, %v2310
    %v2315 = vmul.f32 %v2311, %v2311
    %v2316 = vmul.f32 %v2312, %v2312
    %v2317 = vsel %vm61, %v2313, 0.0
    %2318 = vadd.xlane.f32.xlu0 %v2317
    %v2319 = vpop.xlane.xlu0 %2318
    %v2320 = vsel %vm61, %v2314, 0.0
    %2321 = vadd.xlane.f32.xlu0 %v2320
    %v2322 = vpop.xlane.xlu0 %2321
    %v2323 = vsel %vm61, %v2315, 0.0
    %2324 = vadd.xlane.f32.xlu0 %v2323
    %v2325 = vpop.xlane.xlu0 %2324
    %v2326 = vsel %vm61, %v2316, 0.0
    %2327 = vadd.xlane.f32.xlu0 %v2326
    %v2328 = vpop.xlane.xlu0 %2327
    %v2329 = vmul.f32 %v2319, %v74
    %v2330 = vmul.f32 %v2322, %v74
    %v2331 = vmul.f32 %v2325, %v74
    %v2332 = vmul.f32 %v2328, %v74
    %v2333 = vadd.f32 %v2329, 1e-05
    %v2334 = vadd.f32 %v2330, 1e-05
    %v2335 = vadd.f32 %v2331, 1e-05
    %v2336 = vadd.f32 %v2332, 1e-05
    %v2337 = vrsqrt.pop %v2333
    %v2338 = vrsqrt.pop %v2334
    %v2339 = vrsqrt.pop %v2335
    %v2340 = vrsqrt.pop %v2336
    %v2341 = vmul.f32 %v2309, %v2337
    %v2342 = vmul.f32 %v2310, %v2338
    %v2343 = vmul.f32 %v2311, %v2339
    %v2344 = vmul.f32 %v2312, %v2340
    %v2346 = vlaneseq
    %v2347 = vshrl.u32 %v2346, 7
    %v2348 = vsub.s32 0, %v2347
    %v2349 = vrot.slane %v2291, %v2348
    %v2351 = vmul.f32 %v2341, %v2349
    %v2352 = vmul.f32 %v2342, %v2349
    %v2353 = vmul.f32 %v2343, %v2349
    %v2354 = vmul.f32 %v2344, %v2349
    %v2356 = vlaneseq
    %v2357 = vshrl.u32 %v2356, 7
    %v2358 = vsub.s32 0, %v2357
    %v2359 = vrot.slane %v2292, %v2358
    %v2361 = vadd.f32 %v2351, %v2359
    %v2362 = vadd.f32 %v2352, %v2359
    %v2363 = vadd.f32 %v2353, %v2359
    %v2364 = vadd.f32 %v2354, %v2359
    %v2365 = vld [vmem:[%s10] sm:$0xf]
    %v2366 = vld [vmem:[%s10 + $0x4] sm:$0xf]
    %v2367 = vld [vmem:[%s10 + $0x8] sm:$0xf]
    %v2368 = vld [vmem:[%s10 + $0xc] sm:$0xf]
    %v2369 = vld [vmem:[%s11] sm:$0x1]
    %v2370 = vld [vmem:[%s12] sm:$0xf]
    %v2371 = vld [vmem:[%s12 + $0x4] sm:$0xf]
    %v2372 = vld [vmem:[%s12 + $0x8] sm:$0xf]
    %v2373 = vld [vmem:[%s12 + $0xc] sm:$0xf]
    %v2374 = vld [vmem:[%s13] sm:$0x1]
    %v2375 = vld [vmem:[%s14] sm:$0xf]
    %v2376 = vld [vmem:[%s14 + $0x4] sm:$0xf]
    %v2377 = vld [vmem:[%s14 + $0x8] sm:$0xf]
    %v2378 = vld [vmem:[%s14 + $0xc] sm:$0xf]
    %v2379 = vld [vmem:[%s14 + $0x10] sm:$0xf]
    %v2380 = vld [vmem:[%s14 + $0x14] sm:$0xf]
    %v2381 = vld [vmem:[%s14 + $0x18] sm:$0xf]
    %v2382 = vld [vmem:[%s14 + $0x1c] sm:$0xf]
    %v2383 = vld [vmem:[%s14 + $0x20] sm:$0xf]
    %v2384 = vld [vmem:[%s14 + $0x24] sm:$0xf]
    %v2385 = vld [vmem:[%s14 + $0x28] sm:$0xf]
    %v2386 = vld [vmem:[%s14 + $0x2c] sm:$0xf]
    %v2387 = vld [vmem:[%s14 + $0x30] sm:$0xf]
    %v2388 = vld [vmem:[%s14 + $0x34] sm:$0xf]
    %v2389 = vld [vmem:[%s14 + $0x38] sm:$0xf]
    %v2390 = vld [vmem:[%s14 + $0x3c] sm:$0xf]
    %v2391 = vld [vmem:[%s15] sm:$0x1]
    %v2392 = vpack.c.bf16 %v2362, %v2361
    %v2393 = vpack.c.bf16 %v2364, %v2363
    %v2395 = vlaneseq
    %v2396 = vshrl.u32 %v2395, 7
    %v2397 = vsub.s32 0, %v2396
    %v2398 = vrot.slane %v2369, %v2397
    %v2404 = vunpack.c.l.b16 %v2365
    %v2405 = vunpack.c.l.b16 %v2366
    %v2406 = vunpack.c.l.b16 %v2367
    %v2407 = vunpack.c.l.b16 %v2368
    %v2408 = vpack.c.b16 %v2405, %v2404
    %v2409 = vpack.c.b16 %v2407, %v2406
    %v2413 = vsel %vm61, %v2392, 0
    %v2416 = vsel %vm61, %v2393, 0
    %2418 = vmatprep.subr.bf16.mxu0 0
    %2419 = vmatpush1.bf16.msra.mxu0 %v2408
    %2420 = vmatprep.subr.bf16.mxu0 0
    %2421 = vmatpush1.bf16.msra.mxu0 %v2409
    %2422 = vmatprep.subr.bf16.mxu0 0
    %2423 = vmatpush1.bf16.msra.mxu0 0
    %2424 = vmatprep.subr.bf16.mxu0 0
    %2425 = vmatpush1.bf16.msra.mxu0 0
    %2426 = vmatprep.subr.bf16.mxu0 0
    %2427 = vmatpush1.bf16.msra.mxu0 0
    %2428 = vmatprep.subr.bf16.mxu0 0
    %2429 = vmatpush1.bf16.msra.mxu0 0
    %2430 = vmatprep.subr.bf16.mxu0 0
    %2431 = vmatpush1.bf16.msra.mxu0 0
    %2432 = vmatprep.subr.bf16.mxu0 0
    %2433 = vmatpush1.bf16.msra.mxu0 0
    %2434 = vmatprep.subr.bf16.mxu0 0
    %2435 = vmatpush1.bf16.msra.mxu0 0
    %2436 = vmatprep.subr.bf16.mxu0 0
    %2437 = vmatpush1.bf16.msra.mxu0 0
    %2438 = vmatprep.subr.bf16.mxu0 0
    %2439 = vmatpush1.bf16.msra.mxu0 0
    %2440 = vmatprep.subr.bf16.mxu0 0
    %2441 = vmatpush1.bf16.msra.mxu0 0
    %2442 = vmatprep.subr.bf16.mxu0 0
    %2443 = vmatpush1.bf16.msra.mxu0 0
    %2444 = vmatprep.subr.bf16.mxu0 0
    %2445 = vmatpush1.bf16.msra.mxu0 0
    %2446 = vmatprep.subr.bf16.mxu0 0
    %2447 = vmatpush1.bf16.msra.mxu0 0
    %2448 = vmatprep.subr.bf16.mxu0 0
    %2449 = vmatpush1.bf16.msra.mxu0 0
    %2450 = vmatprep.mubr.bf16.mxu0 0
    %2451 = vmatmul.mubr.bf16.gmra.mrb[0].mxu0 %v2413
    %v2452 = vpop.f32.mrb[0].mxu0
    %v2453 = vadd.f32 %v2398, %v2452
    %v2454 = vpop.f32.mrb[0].mxu0
    %v2455 = vpop.f32.mrb[0].mxu0
    %v2456 = vadd.f32 %v2398, %v2455
    %v2457 = vpop.f32.mrb[0].mxu0
    %2458 = vmatprep.mubr.bf16.mxu0 0
    %2459 = vmatmul.mubr.bf16.gmra.mrb[0].mxu0 %v2416
    %v2460 = vpop.f32.mrb[0].mxu0
    %v2461 = vadd.f32 %v2398, %v2460
    %v2462 = vpop.f32.mrb[0].mxu0
    %v2463 = vpop.f32.mrb[0].mxu0
    %v2464 = vadd.f32 %v2398, %v2463
    %v2465 = vpop.f32.mrb[0].mxu0
    %2466 = vdwg.mxu0
    %v2468 = vlaneseq
    %v2469 = vshrl.u32 %v2468, 7
    %v2470 = vsub.s32 0, %v2469
    %v2471 = vrot.slane %v2374, %v2470
    %v2477 = vunpack.c.l.b16 %v2370
    %v2478 = vunpack.c.l.b16 %v2371
    %v2479 = vunpack.c.l.b16 %v2372
    %v2480 = vunpack.c.l.b16 %v2373
    %v2481 = vpack.c.b16 %v2478, %v2477
    %v2482 = vpack.c.b16 %v2480, %v2479
    %2485 = vmatprep.subr.bf16.mxu0 0
    %2486 = vmatpush1.bf16.msra.mxu0 %v2481
    %2487 = vmatprep.subr.bf16.mxu0 0
    %2488 = vmatpush1.bf16.msra.mxu0 %v2482
    %2489 = vmatprep.subr.bf16.mxu0 0
    %2490 = vmatpush1.bf16.msra.mxu0 0
    %2491 = vmatprep.subr.bf16.mxu0 0
    %2492 = vmatpush1.bf16.msra.mxu0 0
    %2493 = vmatprep.subr.bf16.mxu0 0
    %2494 = vmatpush1.bf16.msra.mxu0 0
    %2495 = vmatprep.subr.bf16.mxu0 0
    %2496 = vmatpush1.bf16.msra.mxu0 0
    %2497 = vmatprep.subr.bf16.mxu0 0
    %2498 = vmatpush1.bf16.msra.mxu0 0
    %2499 = vmatprep.subr.bf16.mxu0 0
    %2500 = vmatpush1.bf16.msra.mxu0 0
    %2501 = vmatprep.subr.bf16.mxu0 0
    %2502 = vmatpush1.bf16.msra.mxu0 0
    %2503 = vmatprep.subr.bf16.mxu0 0
    %2504 = vmatpush1.bf16.msra.mxu0 0
    %2505 = vmatprep.subr.bf16.mxu0 0
    %2506 = vmatpush1.bf16.msra.mxu0 0
    %2507 = vmatprep.subr.bf16.mxu0 0
    %2508 = vmatpush1.bf16.msra.mxu0 0
    %2509 = vmatprep.subr.bf16.mxu0 0
    %2510 = vmatpush1.bf16.msra.mxu0 0
    %2511 = vmatprep.subr.bf16.mxu0 0
    %2512 = vmatpush1.bf16.msra.mxu0 0
    %2513 = vmatprep.subr.bf16.mxu0 0
    %2514 = vmatpush1.bf16.msra.mxu0 0
    %2515 = vmatprep.subr.bf16.mxu0 0
    %2516 = vmatpush1.bf16.msra.mxu0 0
    %2517 = vmatprep.mubr.bf16.mxu0 0
    %2518 = vmatmul.mubr.bf16.gmra.mrb[0].mxu0 %v2413
    %v2519 = vpop.f32.mrb[0].mxu0
    %v2520 = vadd.f32 %v2471, %v2519
    %v2521 = vpop.f32.mrb[0].mxu0
    %v2522 = vpop.f32.mrb[0].mxu0
    %v2523 = vadd.f32 %v2471, %v2522
    %v2524 = vpop.f32.mrb[0].mxu0
    %2525 = vmatprep.mubr.bf16.mxu0 0
    %2526 = vmatmul.mubr.bf16.gmra.mrb[0].mxu0 %v2416
    %v2527 = vpop.f32.mrb[0].mxu0
    %v2528 = vadd.f32 %v2471, %v2527
    %v2529 = vpop.f32.mrb[0].mxu0
    %v2530 = vpop.f32.mrb[0].mxu0
    %v2531 = vadd.f32 %v2471, %v2530
    %v2532 = vpop.f32.mrb[0].mxu0
    %2533 = vdwg.mxu0
    %v2534 = vmul.f32 %v2520, 0.5
    %v2535 = vmul.f32 %v2523, 0.5
    %v2536 = vmul.f32 %v2528, 0.5
    %v2537 = vmul.f32 %v2531, 0.5
    %v2538 = vmul.f32 %v2520, 0.044715
    %v2539 = vmul.f32 %v2523, 0.044715
    %v2540 = vmul.f32 %v2528, 0.044715
    %v2541 = vmul.f32 %v2531, 0.044715
    %v2542 = vmul.f32 %v2538, %v2520
    %v2543 = vmul.f32 %v2539, %v2523
    %v2544 = vmul.f32 %v2540, %v2528
    %v2545 = vmul.f32 %v2541, %v2531
    %v2546 = vmul.f32 %v2542, %v2520
    %v2547 = vmul.f32 %v2543, %v2523
    %v2548 = vmul.f32 %v2544, %v2528
    %v2549 = vmul.f32 %v2545, %v2531
    %v2550 = vadd.f32 %v2520, %v2546
    %v2551 = vadd.f32 %v2523, %v2547
    %v2552 = vadd.f32 %v2528, %v2548
    %v2553 = vadd.f32 %v2531, %v2549
    %v2554 = vmul.f32 %v2550, 0.7978846
    %v2555 = vmul.f32 %v2551, 0.7978846
    %v2556 = vmul.f32 %v2552, 0.7978846
    %v2557 = vmul.f32 %v2553, 0.7978846
    %v2558 = vtanh.pop %v2554
    %v2559 = vtanh.pop %v2555
    %v2560 = vtanh.pop %v2556
    %v2561 = vtanh.pop %v2557
    %v2562 = vadd.f32 %v2558, 1.0
    %v2563 = vadd.f32 %v2559, 1.0
    %v2564 = vadd.f32 %v2560, 1.0
    %v2565 = vadd.f32 %v2561, 1.0
    %v2566 = vmul.f32 %v2534, %v2562
    %v2567 = vmul.f32 %v2535, %v2563
    %v2568 = vmul.f32 %v2536, %v2564
    %v2569 = vmul.f32 %v2537, %v2565
    %v2570 = vmul.f32 %v2453, %v2566
    %v2571 = vmul.f32 %v2456, %v2567
    %v2572 = vmul.f32 %v2461, %v2568
    %v2573 = vmul.f32 %v2464, %v2569
    %v2574 = vpack.c.bf16 %v2571, %v2570
    %v2575 = vpack.c.bf16 %v2573, %v2572
    %v2577 = vlaneseq
    %v2578 = vshrl.u32 %v2577, 7
    %v2579 = vsub.s32 0, %v2578
    %v2580 = vrot.slane %v2391, %v2579
    %v2598 = vunpack.c.l.b16 %v2375
    %v2599 = vunpack.c.l.b16 %v2376
    %v2600 = vunpack.c.l.b16 %v2377
    %v2601 = vunpack.c.l.b16 %v2378
    %v2602 = vunpack.c.l.b16 %v2379
    %v2603 = vunpack.c.l.b16 %v2380
    %v2604 = vunpack.c.l.b16 %v2381
    %v2605 = vunpack.c.l.b16 %v2382
    %v2606 = vunpack.c.l.b16 %v2383
    %v2607 = vunpack.c.l.b16 %v2384
    %v2608 = vunpack.c.l.b16 %v2385
    %v2609 = vunpack.c.l.b16 %v2386
    %v2610 = vunpack.c.l.b16 %v2387
    %v2611 = vunpack.c.l.b16 %v2388
    %v2612 = vunpack.c.l.b16 %v2389
    %v2613 = vunpack.c.l.b16 %v2390
    %v2614 = vpack.c.b16 %v2599, %v2598
    %v2615 = vpack.c.b16 %v2601, %v2600
    %v2616 = vpack.c.b16 %v2603, %v2602
    %v2617 = vpack.c.b16 %v2605, %v2604
    %v2618 = vpack.c.b16 %v2607, %v2606
    %v2619 = vpack.c.b16 %v2609, %v2608
    %v2620 = vpack.c.b16 %v2611, %v2610
    %v2621 = vpack.c.b16 %v2613, %v2612
    %2630 = vmatprep.subr.bf16.mxu0 0
    %2631 = vmatpush1.bf16.msra.mxu0 %v2614
    %2632 = vmatprep.subr.bf16.mxu0 0
    %2633 = vmatpush1.bf16.msra.mxu0 %v2615
    %2634 = vmatprep.subr.bf16.mxu0 0
    %2635 = vmatpush1.bf16.msra.mxu0 %v2616
    %2636 = vmatprep.subr.bf16.mxu0 0
    %2637 = vmatpush1.bf16.msra.mxu0 %v2617
    %2638 = vmatprep.subr.bf16.mxu0 0
    %2639 = vmatpush1.bf16.msra.mxu0 %v2618
    %2640 = vmatprep.subr.bf16.mxu0 0
    %2641 = vmatpush1.bf16.msra.mxu0 %v2619
    %2642 = vmatprep.subr.bf16.mxu0 0
    %2643 = vmatpush1.bf16.msra.mxu0 %v2620
    %2644 = vmatprep.subr.bf16.mxu0 0
    %2645 = vmatpush1.bf16.msra.mxu0 %v2621
    %2646 = vmatprep.subr.bf16.mxu0 0
    %2647 = vmatpush1.bf16.msra.mxu0 0
    %2648 = vmatprep.subr.bf16.mxu0 0
    %2649 = vmatpush1.bf16.msra.mxu0 0
    %2650 = vmatprep.subr.bf16.mxu0 0
    %2651 = vmatpush1.bf16.msra.mxu0 0
    %2652 = vmatprep.subr.bf16.mxu0 0
    %2653 = vmatpush1.bf16.msra.mxu0 0
    %2654 = vmatprep.subr.bf16.mxu0 0
    %2655 = vmatpush1.bf16.msra.mxu0 0
    %2656 = vmatprep.subr.bf16.mxu0 0
    %2657 = vmatpush1.bf16.msra.mxu0 0
    %2658 = vmatprep.subr.bf16.mxu0 0
    %2659 = vmatpush1.bf16.msra.mxu0 0
    %2660 = vmatprep.subr.bf16.mxu0 0
    %2661 = vmatpush1.bf16.msra.mxu0 0
    %2662 = vmatprep.mubr.bf16.mxu0 0
    %2663 = vmatmul.mubr.bf16.gmra.mrb[0].mxu0 %v2574
    %v2664 = vpop.f32.mrb[0].mxu0
    %v2665 = vadd.f32 %v2580, %v2664
    %v2666 = vpop.f32.mrb[0].mxu0
    %v2667 = vpop.f32.mrb[0].mxu0
    %v2668 = vadd.f32 %v2580, %v2667
    %v2669 = vpop.f32.mrb[0].mxu0
    %2670 = vmatprep.mubr.bf16.mxu0 0
    %2671 = vmatmul.mubr.bf16.gmra.mrb[0].mxu0 %v2575
    %v2672 = vpop.f32.mrb[0].mxu0
    %v2673 = vadd.f32 %v2580, %v2672
    %v2674 = vpop.f32.mrb[0].mxu0
    %v2675 = vpop.f32.mrb[0].mxu0
    %v2676 = vadd.f32 %v2580, %v2675
    %v2677 = vpop.f32.mrb[0].mxu0
    %2678 = vdwg.mxu0
    %v2679 = vadd.f32 %v2287, %v2665
    %v2680 = vadd.f32 %v2288, %v2668
    %v2681 = vadd.f32 %v2289, %v2673
    %v2682 = vadd.f32 %v2290, %v2676
    %2683 = vst.msk [vmem:[#allocation2] sm:$0xff] %vm61, %v2679
    %2684 = vst.msk [vmem:[#allocation2 + $0x8] sm:$0xff] %vm61, %v2680
    %2685 = vst.msk [vmem:[#allocation2 + $0x10] sm:$0xff] %vm61, %v2681
    %2686 = vst.msk [vmem:[#allocation2 + $0x18] sm:$0xff] %vm61, %v2682
    // Predicated region
    $region66: #{perceiver_io_encoder.5} parent=1 // pred_check
      _
    $region67: #{perceiver_io_encoder.5} parent=1 // pred_check_branch
      %2688 = sbr.rel (0) target = $region69
    $region68: #{perceiver_io_encoder.5} parent=1 // pred_region
      %s2690 = ssub.s32 512, 512
      %2691 = vsyncadd [#allocation3], %s2690
      %s2692 = sshll.u32 [#allocation2], 4
      %s2693 = int_to_ptr.vmem [resolvable:$true] %s2692
      %2698 = dma.vmem_to_hbm [thread:$0]  %s2693, 512, %s16, [#allocation3], 128, 128, 8
    $region69: #{perceiver_io_encoder.5} parent=1 // pred_fallthru
      _
    // Predicated region
    $region70: #{perceiver_io_encoder.5} parent=1 // pred_check
      _
    $region71: #{perceiver_io_encoder.5} parent=1 // pred_check_branch
      %2700 = sbr.rel (0) target = $region73
    $region72: #{perceiver_io_encoder.5} parent=1 // pred_region
      %2701 = dma.done [#allocation3], 512
    $region73: #{perceiver_io_encoder.5} parent=1 // pred_fallthru
      _
    %2702 = vsyncpa [#allocation3], 1

</llo_original>
